<compile_context>
chip_gen: v7x
topology: tpu7x:2x2x1
jax: 0.10.0
libtpu: 0.0.40
codegen_flags: <defaults>
</compile_context>

<pallas_src>
import functools

import jax
import jax.numpy as jnp
from jax.experimental import pallas as pl
from jax.experimental.pallas import tpu as pltpu

BN_EPS = 1e-5
LANES = 128      # TPU vreg lane width
SUB_BF16 = 16    # bf16 sublane tile (second-to-last dim granularity)


def _round_up(x, m):
    return (x + m - 1) // m * m


_VMEM_CAP_CACHE = []


def _vmem_capacity_bytes():
    """Generation-aware VMEM capacity (falls back to a conservative 64 MiB)."""
    if not _VMEM_CAP_CACHE:
        cap = 64 * 1024 * 1024
        try:
            info = pltpu.get_tpu_info()
            for name in ("vmem_capacity_bytes", "vmem_size_bytes", "vmem_bytes"):
                val = getattr(info, name, None)
                if val:
                    cap = int(val)
                    break
        except Exception:
            pass
        _VMEM_CAP_CACHE.append(cap)
    return _VMEM_CAP_CACHE[0]


# --------------------------------- kernel ------------------------------------

def _fused_residual_block_kernel(x_ref, w1_ref, g1_ref, b1_ref,
                                 w2_ref, g2_ref, b2_ref,
                                 o_ref, pad_ref, col_ref, *, interior_w):
    """out = relu(bn2(conv2(relu(bn1(conv1(x))))) + x), fully fused.

    x_ref:    (N, H, W, C)        bf16   (channels NOT padded)
    w1/w2:    (Kp, Cop)           bf16   tap-packed weights, Kp = pad(9*C)
    g*/b*:    (1, Cop)            f32
    o_ref:    (N, H, W, C)        bf16   narrow output (no padded channels)
    pad_ref:  (N, H+2, Wp, C)     bf16   halo scratch, reused for both stages
    col_ref:  (N, H, W, Kp)       bf16   tap-packed im2col operand (reused)
    """
    N, H, W, C = x_ref.shape
    Hp, Wp = pad_ref.shape[1], pad_ref.shape[2]
    Kp = col_ref.shape[-1]
    NHW = N * H * W
    inv_cnt = 1.0 / NHW
    IO = interior_w          # sublane-aligned W offset of the interior
    K = 9 * C                # useful contraction width (taps x channels)

    # ---- zero ONLY the halo strips that the conv taps read (no full fill) ----
    zero_row = jnp.zeros((N, 1, Wp, C), pad_ref.dtype)
    pad_ref[:, pl.ds(0, 1), :, :] = zero_row          # top halo row
    pad_ref[:, pl.ds(H + 1, 1), :, :] = zero_row      # bottom halo row
    zero_col = jnp.zeros((N, Hp, 1, C), pad_ref.dtype)
    pad_ref[:, :, pl.ds(IO - 1, 1), :] = zero_col     # left halo column
    pad_ref[:, :, pl.ds(IO + W, 1), :] = zero_col     # right halo column

    # zero the K-padding tail of the im2col operand once (shared by both convs)
    if K < Kp:
        col_ref[:, :, :, pl.ds(K, Kp - K)] = jnp.zeros(
            (N, H, W, Kp - K), col_ref.dtype)

    def conv3x3(w_ref):
        # Tap-packed im2col: lanes [t*C, (t+1)*C) of col hold tap t = kh*3+kw.
        # Windows are sliced straight from the halo Ref (bf16, no casts), then
        # ONE (NHW, Kp) @ (Kp, Cop) MXU matmul with f32 accumulation.
        for kh in range(3):
            for kw in range(3):
                t = kh * 3 + kw
                col_ref[:, :, :, pl.ds(t * C, C)] = \
                    pad_ref[:, pl.ds(kh, H), pl.ds(IO - 1 + kw, W), :]
        return jnp.dot(col_ref[...].reshape(NHW, Kp), w_ref[...],
                       preferred_element_type=jnp.float32)

    def batchnorm(z, g, b):
        # Training-mode BN over N*H*W, two-pass (centered) variance, all f32.
        mean = jnp.sum(z, axis=0, keepdims=True) * inv_cnt
        zc = z - mean
        var = jnp.sum(zc * zc, axis=0, keepdims=True) * inv_cnt
        return zc * jax.lax.rsqrt(var + BN_EPS) * g + b

    # ---- stage 1: relu(bn1(conv1(x))) ---------------------------------------
    # bf16 x written straight into the aligned interior (single pass, no cast).
    pad_ref[:, pl.ds(1, H), pl.ds(IO, W), :] = x_ref[...]
    y1 = jnp.maximum(batchnorm(conv3x3(w1_ref), g1_ref[...], b1_ref[...]), 0.0)

    # ---- stage-2 halo buffer: reuse pad_ref (halos are still zero) ----------
    pad_ref[:, pl.ds(1, H), pl.ds(IO, W), :] = \
        y1[:, :C].astype(pad_ref.dtype).reshape(N, H, W, C)

    # ---- stage 2: relu(bn2(conv2(y1)) + x) -----------------------------------
    z2 = batchnorm(conv3x3(w2_ref), g2_ref[...], b2_ref[...])
    # Identity residual: re-read the resident bf16 x_ref, upcast only here.
    res = x_ref[...].astype(jnp.float32).reshape(NHW, C)
    out = jnp.maximum(z2[:, :C] + res, 0.0)
    o_ref[...] = out.astype(o_ref.dtype).reshape(N, H, W, C)


# --------------------------------- wrapper ------------------------------------

@jax.jit
def residual_block_forward(x_nchw, w1, g1, b1, w2, g2, b2):
    """Matches ResidualBlock(C, C, stride=1, downsample=None).forward().

    x_nchw: (N, C, H, W) f32; w1/w2: (Cout, Cin, 3, 3) f32 (PyTorch OIHW);
    g*/b*: (C,) BatchNorm weight/bias.
    """
    N, C, H, W = x_nchw.shape
    Co = w1.shape[0]
    assert Co == C, "identity residual requires in_channels == out_channels"
    # TODO(synk): stride>1 / downsample branch not exercised (module defaults
    # are stride=1, downsample=None -> identity residual).

    Kp = _round_up(9 * C, LANES)     # tap-packed contraction dim (pad only K)
    Cop = _round_up(Co, LANES)       # lane-dense matmul output dim
    IO = SUB_BF16                    # aligned interior W offset in halo scratch
    Hp = H + 2
    Wp = IO + _round_up(W + 1, SUB_BF16)

    # NCHW -> NHWC, bf16, channels kept at their natural width.
    xh = jnp.transpose(x_nchw, (0, 2, 3, 1)).astype(jnp.bfloat16)

    def prep_w(w):
        # (Co, Ci, 3, 3) OIHW -> (9*Ci, Co); row index = (kh*3+kw)*Ci + ci,
        # matching the in-kernel im2col lane packing.  Zero-pad to (Kp, Cop).
        wf = jnp.transpose(w, (2, 3, 1, 0)).reshape(9 * C, Co)
        wf = jnp.pad(wf, ((0, Kp - 9 * C), (0, Cop - Co)))
        return wf.astype(jnp.bfloat16)

    def prep_gb(g, b):
        gp = jnp.pad(g.astype(jnp.float32), (0, Cop - Co), constant_values=1.0)
        bp = jnp.pad(b.astype(jnp.float32), (0, Cop - Co))
        return gp.reshape(1, Cop), bp.reshape(1, Cop)

    w1f, w2f = prep_w(w1), prep_w(w2)
    g1p, b1p = prep_gb(g1, b1)
    g2p, b2p = prep_gb(g2, b2)

    # ---- VMEM budget for the untiled, activation-resident kernel ------------
    NHW = N * H * W
    vmem_bytes = (NHW * C * 2                 # x (bf16)
                  + 2 * Kp * Cop * 2          # weights (bf16)
                  + 4 * Cop * 4               # gamma/beta (f32)
                  + NHW * C * 2               # output (bf16)
                  + N * Hp * Wp * C * 2       # halo scratch (bf16, reused)
                  + NHW * Kp * 2              # im2col scratch (bf16, reused)
                  + 4 * NHW * Cop * 4)        # f32 temporaries headroom
    cap = _vmem_capacity_bytes()              # 128 MiB-class on v5e/v6e, 64 MiB v7x
    vmem_limit = int(min(max(2 * vmem_bytes, 32 * 1024 * 1024), int(0.80 * cap)))
    if vmem_bytes > vmem_limit:
        # TODO(synk): tiled two-phase-BN grid (sum/sumsq over an 'arbitrary'
        # reduction axis, 'parallel' batch/spatial axes for v7x megacore,
        # BlockSpec double-buffering) for activations that exceed VMEM.
        raise ValueError("activation too large for the untiled VMEM-resident "
                         "kernel; the tiled two-phase-BN variant is required")

    # Advisory cost estimate with UNPADDED arithmetic (review note).
    flops = 2 * (2 * NHW * 9 * C * Co)        # two 3x3 convs
    bytes_accessed = (NHW * C * 2 + 2 * 9 * C * Co * 2 + 4 * Co * 4 + NHW * C * 2)

    kernel = functools.partial(_fused_residual_block_kernel, interior_w=IO)
    vmem = pl.BlockSpec(memory_space=pltpu.MemorySpace.VMEM)
    out = pl.pallas_call(
        kernel,
        out_shape=jax.ShapeDtypeStruct((N, H, W, C), jnp.bfloat16),
        in_specs=[vmem] * 7,
        out_specs=vmem,
        scratch_shapes=[pltpu.VMEM((N, Hp, Wp, C), jnp.bfloat16),
                        pltpu.VMEM((N, H, W, Kp), jnp.bfloat16)],
        compiler_params=pltpu.CompilerParams(vmem_limit_bytes=vmem_limit),
        cost_estimate=pl.CostEstimate(flops=flops, transcendentals=2 * Co,
                                      bytes_accessed=bytes_accessed),
    )(xh, w1f, g1p, b1p, w2f, g2p, b2p)

    # back to NCHW, f32 (matches the PyTorch module's dtype)
    return jnp.transpose(out, (0, 3, 1, 2)).astype(jnp.float32)


# ------------------------------ pure-JAX reference ----------------------------

def _reference_forward(x, w1, g1, b1, w2, g2, b2):
    def conv(a, w):
        return jax.lax.conv_general_dilated(
            a, w, window_strides=(1, 1), padding=((1, 1), (1, 1)),
            dimension_numbers=("NCHW", "OIHW", "NCHW"))

    def bn(a, g, b):
        mean = jnp.mean(a, axis=(0, 2, 3), keepdims=True)
        var = jnp.mean(jnp.square(a - mean), axis=(0, 2, 3), keepdims=True)
        return ((a - mean) * jax.lax.rsqrt(var + BN_EPS)
                * g.reshape(1, -1, 1, 1) + b.reshape(1, -1, 1, 1))

    out = jax.nn.relu(bn(conv(x, w1), g1, b1))
    out = bn(conv(out, w2), g2, b2)
    return jax.nn.relu(out + x)


# ----------------------------------- main --------------------------------------

if __name__ == "__main__":
    key = jax.random.PRNGKey(0)
    N, C, H, W = 2, 4, 16, 16
    k_x, k_w1, k_w2 = jax.random.split(key, 3)

    x = jax.random.normal(k_x, (N, C, H, W), jnp.float32)

    # deterministic parameter init (shapes from ResidualBlock.__init__)
    fan_in = C * 3 * 3
    w1 = jax.random.normal(k_w1, (C, C, 3, 3), jnp.float32) * (2.0 / fan_in) ** 0.5
    w2 = jax.random.normal(k_w2, (C, C, 3, 3), jnp.float32) * (2.0 / fan_in) ** 0.5
    g1 = jnp.ones((C,), jnp.float32)   # BatchNorm2d default init: gamma=1, beta=0
    b1 = jnp.zeros((C,), jnp.float32)
    g2 = jnp.ones((C,), jnp.float32)
    b2 = jnp.zeros((C,), jnp.float32)

    out = jax.block_until_ready(residual_block_forward(x, w1, g1, b1, w2, g2, b2))

    ref = _reference_forward(x, w1, g1, b1, w2, g2, b2)
    assert out.shape == (N, C, H, W)
    # bf16 MXU operands / bf16 output (vs f32 reference) -> mixed-precision tol.
    assert bool(jnp.allclose(out, ref, atol=1e-1, rtol=5e-2)), \
        f"max abs err = {float(jnp.max(jnp.abs(out - ref)))}"

    print("KERNEL_OK")
</pallas_src>

<mosaic_0001>
module attributes {stable_mosaic.version = 11 : i64} {
  func.func @_fused_residual_block_kernel(%arg0: memref<2x16x16x4xbf16, #tpu.memory_space<vmem>>, %arg1: memref<128x128xbf16, #tpu.memory_space<vmem>>, %arg2: memref<1x128xf32, #tpu.memory_space<vmem>>, %arg3: memref<1x128xf32, #tpu.memory_space<vmem>>, %arg4: memref<128x128xbf16, #tpu.memory_space<vmem>>, %arg5: memref<1x128xf32, #tpu.memory_space<vmem>>, %arg6: memref<1x128xf32, #tpu.memory_space<vmem>>, %arg7: memref<2x16x16x4xbf16, #tpu.memory_space<vmem>>, %arg8: memref<2x18x48x4xbf16, #tpu.memory_space<vmem>>, %arg9: memref<2x16x16x128xbf16, #tpu.memory_space<vmem>>) attributes {dimension_semantics = [], scalar_prefetch = 0 : i64, scratch_operands = 2 : i64, tpu.core_type = #tpu.core_type<tc>} {
    %cst = arith.constant 0.000000e+00 : bf16
    %0 = vector.broadcast %cst : bf16 to vector<2x1x48x4xbf16>
    %c0 = arith.constant 0 : index
    %c0_0 = arith.constant 0 : index
    %c0_1 = arith.constant 0 : index
    %c0_2 = arith.constant 0 : index
    %1 = vector.load %arg8[%c0, %c0_0, %c0_1, %c0_2] : memref<2x18x48x4xbf16, #tpu.memory_space<vmem>>, vector<2x1x48x4xbf16>
    tpu.vector_store %arg8[%c0, %c0_0, %c0_1, %c0_2], %0 {strides = array<i32>} : memref<2x18x48x4xbf16, #tpu.memory_space<vmem>>, vector<2x1x48x4xbf16>,
    %c0_3 = arith.constant 0 : index
    %c17 = arith.constant 17 : index
    %c0_4 = arith.constant 0 : index
    %c0_5 = arith.constant 0 : index
    %2 = vector.load %arg8[%c0_3, %c17, %c0_4, %c0_5] : memref<2x18x48x4xbf16, #tpu.memory_space<vmem>>, vector<2x1x48x4xbf16>
    tpu.vector_store %arg8[%c0_3, %c17, %c0_4, %c0_5], %0 {strides = array<i32>} : memref<2x18x48x4xbf16, #tpu.memory_space<vmem>>, vector<2x1x48x4xbf16>,
    %cst_6 = arith.constant 0.000000e+00 : bf16
    %3 = vector.broadcast %cst_6 : bf16 to vector<2x18x1x4xbf16>
    %c0_7 = arith.constant 0 : index
    %c0_8 = arith.constant 0 : index
    %c15 = arith.constant 15 : index
    %c0_9 = arith.constant 0 : index
    %4 = vector.load %arg8[%c0_7, %c0_8, %c15, %c0_9] : memref<2x18x48x4xbf16, #tpu.memory_space<vmem>>, vector<2x18x1x4xbf16>
    tpu.vector_store %arg8[%c0_7, %c0_8, %c15, %c0_9], %3 {strides = array<i32>} : memref<2x18x48x4xbf16, #tpu.memory_space<vmem>>, vector<2x18x1x4xbf16>,
    %c0_10 = arith.constant 0 : index
    %c0_11 = arith.constant 0 : index
    %c32 = arith.constant 32 : index
    %c0_12 = arith.constant 0 : index
    %5 = vector.load %arg8[%c0_10, %c0_11, %c32, %c0_12] : memref<2x18x48x4xbf16, #tpu.memory_space<vmem>>, vector<2x18x1x4xbf16>
    tpu.vector_store %arg8[%c0_10, %c0_11, %c32, %c0_12], %3 {strides = array<i32>} : memref<2x18x48x4xbf16, #tpu.memory_space<vmem>>, vector<2x18x1x4xbf16>,
    %cst_13 = arith.constant 0.000000e+00 : bf16
    %6 = vector.broadcast %cst_13 : bf16 to vector<2x16x16x92xbf16>
    %c0_14 = arith.constant 0 : index
    %c0_15 = arith.constant 0 : index
    %c0_16 = arith.constant 0 : index
    %c36 = arith.constant 36 : index
    %7 = vector.load %arg9[%c0_14, %c0_15, %c0_16, %c36] : memref<2x16x16x128xbf16, #tpu.memory_space<vmem>>, vector<2x16x16x92xbf16>
    tpu.vector_store %arg9[%c0_14, %c0_15, %c0_16, %c36], %6 {strides = array<i32>} : memref<2x16x16x128xbf16, #tpu.memory_space<vmem>>, vector<2x16x16x92xbf16>,
    %c0_17 = arith.constant 0 : index
    %c0_18 = arith.constant 0 : index
    %c0_19 = arith.constant 0 : index
    %c0_20 = arith.constant 0 : index
    %8 = vector.load %arg0[%c0_17, %c0_18, %c0_19, %c0_20] : memref<2x16x16x4xbf16, #tpu.memory_space<vmem>>, vector<2x16x16x4xbf16>
    %c0_21 = arith.constant 0 : index
    %c1 = arith.constant 1 : index
    %c16 = arith.constant 16 : index
    %c0_22 = arith.constant 0 : index
    %9 = vector.load %arg8[%c0_21, %c1, %c16, %c0_22] : memref<2x18x48x4xbf16, #tpu.memory_space<vmem>>, vector<2x16x16x4xbf16>
    tpu.vector_store %arg8[%c0_21, %c1, %c16, %c0_22], %8 {strides = array<i32>} : memref<2x18x48x4xbf16, #tpu.memory_space<vmem>>, vector<2x16x16x4xbf16>,
    %c0_23 = arith.constant 0 : index
    %c0_24 = arith.constant 0 : index
    %c15_25 = arith.constant 15 : index
    %c0_26 = arith.constant 0 : index
    %10 = vector.load %arg8[%c0_23, %c0_24, %c15_25, %c0_26] : memref<2x18x48x4xbf16, #tpu.memory_space<vmem>>, vector<2x16x16x4xbf16>
    %c0_27 = arith.constant 0 : index
    %c0_28 = arith.constant 0 : index
    %c0_29 = arith.constant 0 : index
    %c0_30 = arith.constant 0 : index
    %11 = vector.load %arg9[%c0_27, %c0_28, %c0_29, %c0_30] : memref<2x16x16x128xbf16, #tpu.memory_space<vmem>>, vector<2x16x16x4xbf16>
    tpu.vector_store %arg9[%c0_27, %c0_28, %c0_29, %c0_30], %10 {strides = array<i32>} : memref<2x16x16x128xbf16, #tpu.memory_space<vmem>>, vector<2x16x16x4xbf16>,
    %c0_31 = arith.constant 0 : index
    %c0_32 = arith.constant 0 : index
    %c16_33 = arith.constant 16 : index
    %c0_34 = arith.constant 0 : index
    %12 = vector.load %arg8[%c0_31, %c0_32, %c16_33, %c0_34] : memref<2x18x48x4xbf16, #tpu.memory_space<vmem>>, vector<2x16x16x4xbf16>
    %c0_35 = arith.constant 0 : index
    %c0_36 = arith.constant 0 : index
    %c0_37 = arith.constant 0 : index
    %c4 = arith.constant 4 : index
    %13 = vector.load %arg9[%c0_35, %c0_36, %c0_37, %c4] : memref<2x16x16x128xbf16, #tpu.memory_space<vmem>>, vector<2x16x16x4xbf16>
    tpu.vector_store %arg9[%c0_35, %c0_36, %c0_37, %c4], %12 {strides = array<i32>} : memref<2x16x16x128xbf16, #tpu.memory_space<vmem>>, vector<2x16x16x4xbf16>,
    %c0_38 = arith.constant 0 : index
    %c0_39 = arith.constant 0 : index
    %c17_40 = arith.constant 17 : index
    %c0_41 = arith.constant 0 : index
    %14 = vector.load %arg8[%c0_38, %c0_39, %c17_40, %c0_41] : memref<2x18x48x4xbf16, #tpu.memory_space<vmem>>, vector<2x16x16x4xbf16>
    %c0_42 = arith.constant 0 : index
    %c0_43 = arith.constant 0 : index
    %c0_44 = arith.constant 0 : index
    %c8 = arith.constant 8 : index
    %15 = vector.load %arg9[%c0_42, %c0_43, %c0_44, %c8] : memref<2x16x16x128xbf16, #tpu.memory_space<vmem>>, vector<2x16x16x4xbf16>
    tpu.vector_store %arg9[%c0_42, %c0_43, %c0_44, %c8], %14 {strides = array<i32>} : memref<2x16x16x128xbf16, #tpu.memory_space<vmem>>, vector<2x16x16x4xbf16>,
    %c0_45 = arith.constant 0 : index
    %c1_46 = arith.constant 1 : index
    %c15_47 = arith.constant 15 : index
    %c0_48 = arith.constant 0 : index
    %16 = vector.load %arg8[%c0_45, %c1_46, %c15_47, %c0_48] : memref<2x18x48x4xbf16, #tpu.memory_space<vmem>>, vector<2x16x16x4xbf16>
    %c0_49 = arith.constant 0 : index
    %c0_50 = arith.constant 0 : index
    %c0_51 = arith.constant 0 : index
    %c12 = arith.constant 12 : index
    %17 = vector.load %arg9[%c0_49, %c0_50, %c0_51, %c12] : memref<2x16x16x128xbf16, #tpu.memory_space<vmem>>, vector<2x16x16x4xbf16>
    tpu.vector_store %arg9[%c0_49, %c0_50, %c0_51, %c12], %16 {strides = array<i32>} : memref<2x16x16x128xbf16, #tpu.memory_space<vmem>>, vector<2x16x16x4xbf16>,
    %c0_52 = arith.constant 0 : index
    %c1_53 = arith.constant 1 : index
    %c16_54 = arith.constant 16 : index
    %c0_55 = arith.constant 0 : index
    %18 = vector.load %arg8[%c0_52, %c1_53, %c16_54, %c0_55] : memref<2x18x48x4xbf16, #tpu.memory_space<vmem>>, vector<2x16x16x4xbf16>
    %c0_56 = arith.constant 0 : index
    %c0_57 = arith.constant 0 : index
    %c0_58 = arith.constant 0 : index
    %c16_59 = arith.constant 16 : index
    %19 = vector.load %arg9[%c0_56, %c0_57, %c0_58, %c16_59] : memref<2x16x16x128xbf16, #tpu.memory_space<vmem>>, vector<2x16x16x4xbf16>
    tpu.vector_store %arg9[%c0_56, %c0_57, %c0_58, %c16_59], %18 {strides = array<i32>} : memref<2x16x16x128xbf16, #tpu.memory_space<vmem>>, vector<2x16x16x4xbf16>,
    %c0_60 = arith.constant 0 : index
    %c1_61 = arith.constant 1 : index
    %c17_62 = arith.constant 17 : index
    %c0_63 = arith.constant 0 : index
    %20 = vector.load %arg8[%c0_60, %c1_61, %c17_62, %c0_63] : memref<2x18x48x4xbf16, #tpu.memory_space<vmem>>, vector<2x16x16x4xbf16>
    %c0_64 = arith.constant 0 : index
    %c0_65 = arith.constant 0 : index
    %c0_66 = arith.constant 0 : index
    %c20 = arith.constant 20 : index
    %21 = vector.load %arg9[%c0_64, %c0_65, %c0_66, %c20] : memref<2x16x16x128xbf16, #tpu.memory_space<vmem>>, vector<2x16x16x4xbf16>
    tpu.vector_store %arg9[%c0_64, %c0_65, %c0_66, %c20], %20 {strides = array<i32>} : memref<2x16x16x128xbf16, #tpu.memory_space<vmem>>, vector<2x16x16x4xbf16>,
    %c0_67 = arith.constant 0 : index
    %c2 = arith.constant 2 : index
    %c15_68 = arith.constant 15 : index
    %c0_69 = arith.constant 0 : index
    %22 = vector.load %arg8[%c0_67, %c2, %c15_68, %c0_69] : memref<2x18x48x4xbf16, #tpu.memory_space<vmem>>, vector<2x16x16x4xbf16>
    %c0_70 = arith.constant 0 : index
    %c0_71 = arith.constant 0 : index
    %c0_72 = arith.constant 0 : index
    %c24 = arith.constant 24 : index
    %23 = vector.load %arg9[%c0_70, %c0_71, %c0_72, %c24] : memref<2x16x16x128xbf16, #tpu.memory_space<vmem>>, vector<2x16x16x4xbf16>
    tpu.vector_store %arg9[%c0_70, %c0_71, %c0_72, %c24], %22 {strides = array<i32>} : memref<2x16x16x128xbf16, #tpu.memory_space<vmem>>, vector<2x16x16x4xbf16>,
    %c0_73 = arith.constant 0 : index
    %c2_74 = arith.constant 2 : index
    %c16_75 = arith.constant 16 : index
    %c0_76 = arith.constant 0 : index
    %24 = vector.load %arg8[%c0_73, %c2_74, %c16_75, %c0_76] : memref<2x18x48x4xbf16, #tpu.memory_space<vmem>>, vector<2x16x16x4xbf16>
    %c0_77 = arith.constant 0 : index
    %c0_78 = arith.constant 0 : index
    %c0_79 = arith.constant 0 : index
    %c28 = arith.constant 28 : index
    %25 = vector.load %arg9[%c0_77, %c0_78, %c0_79, %c28] : memref<2x16x16x128xbf16, #tpu.memory_space<vmem>>, vector<2x16x16x4xbf16>
    tpu.vector_store %arg9[%c0_77, %c0_78, %c0_79, %c28], %24 {strides = array<i32>} : memref<2x16x16x128xbf16, #tpu.memory_space<vmem>>, vector<2x16x16x4xbf16>,
    %c0_80 = arith.constant 0 : index
    %c2_81 = arith.constant 2 : index
    %c17_82 = arith.constant 17 : index
    %c0_83 = arith.constant 0 : index
    %26 = vector.load %arg8[%c0_80, %c2_81, %c17_82, %c0_83] : memref<2x18x48x4xbf16, #tpu.memory_space<vmem>>, vector<2x16x16x4xbf16>
    %c0_84 = arith.constant 0 : index
    %c0_85 = arith.constant 0 : index
    %c0_86 = arith.constant 0 : index
    %c32_87 = arith.constant 32 : index
    %27 = vector.load %arg9[%c0_84, %c0_85, %c0_86, %c32_87] : memref<2x16x16x128xbf16, #tpu.memory_space<vmem>>, vector<2x16x16x4xbf16>
    tpu.vector_store %arg9[%c0_84, %c0_85, %c0_86, %c32_87], %26 {strides = array<i32>} : memref<2x16x16x128xbf16, #tpu.memory_space<vmem>>, vector<2x16x16x4xbf16>,
    %c0_88 = arith.constant 0 : index
    %c0_89 = arith.constant 0 : index
    %c0_90 = arith.constant 0 : index
    %c0_91 = arith.constant 0 : index
    %28 = vector.load %arg9[%c0_88, %c0_89, %c0_90, %c0_91] : memref<2x16x16x128xbf16, #tpu.memory_space<vmem>>, vector<2x16x16x128xbf16>
    %29 = vector.shape_cast %28 : vector<2x16x16x128xbf16> to vector<512x128xbf16>
    %c0_92 = arith.constant 0 : index
    %c0_93 = arith.constant 0 : index
    %30 = vector.load %arg1[%c0_92, %c0_93] : memref<128x128xbf16, #tpu.memory_space<vmem>>, vector<128x128xbf16>
    %cst_94 = arith.constant dense<0.000000e+00> : vector<512x128xf32>
    %31 = tpu.matmul %29, %30, %cst_94 {dimension_numbers = #tpu.dot_dimension_numbers<[1], [0], [0], [1], [0, 0, 1, 1], [], []>} : vector<512x128xbf16>, vector<128x128xbf16>, vector<512x128xf32> -> vector<512x128xf32>
    %c0_95 = arith.constant 0 : index
    %c0_96 = arith.constant 0 : index
    %32 = vector.load %arg2[%c0_95, %c0_96] : memref<1x128xf32, #tpu.memory_space<vmem>>, vector<1x128xf32>
    %c0_97 = arith.constant 0 : index
    %c0_98 = arith.constant 0 : index
    %33 = vector.load %arg3[%c0_97, %c0_98] : memref<1x128xf32, #tpu.memory_space<vmem>>, vector<1x128xf32>
    %cst_99 = arith.constant dense<0.000000e+00> : vector<128xf32>
    %34 = vector.multi_reduction <add>, %31, %cst_99 [0] : vector<512x128xf32> to vector<128xf32>
    %35 = vector.shape_cast %34 : vector<128xf32> to vector<1x128xf32>
    %cst_100 = arith.constant 0.001953125 : f32
    %36 = vector.broadcast %cst_100 : f32 to vector<1x128xf32>
    %37 = arith.mulf %35, %36 : vector<1x128xf32>
    %38 = vector.broadcast %37 : vector<1x128xf32> to vector<512x128xf32>
    %39 = arith.subf %31, %38 : vector<512x128xf32>
    %40 = arith.mulf %39, %39 : vector<512x128xf32>
    %cst_101 = arith.constant dense<0.000000e+00> : vector<128xf32>
    %41 = vector.multi_reduction <add>, %40, %cst_101 [0] : vector<512x128xf32> to vector<128xf32>
    %42 = vector.shape_cast %41 : vector<128xf32> to vector<1x128xf32>
    %cst_102 = arith.constant 0.001953125 : f32
    %43 = vector.broadcast %cst_102 : f32 to vector<1x128xf32>
    %44 = arith.mulf %42, %43 : vector<1x128xf32>
    %cst_103 = arith.constant 9.99999974E-6 : f32
    %45 = vector.broadcast %cst_103 : f32 to vector<1x128xf32>
    %46 = arith.addf %44, %45 : vector<1x128xf32>
    %47 = math.rsqrt %46 : vector<1x128xf32>
    %48 = vector.broadcast %47 : vector<1x128xf32> to vector<512x128xf32>
    %49 = arith.mulf %39, %48 : vector<512x128xf32>
    %50 = vector.broadcast %32 : vector<1x128xf32> to vector<512x128xf32>
    %51 = arith.mulf %49, %50 : vector<512x128xf32>
    %52 = vector.broadcast %33 : vector<1x128xf32> to vector<512x128xf32>
    %53 = arith.addf %51, %52 : vector<512x128xf32>
    %cst_104 = arith.constant 0.000000e+00 : f32
    %54 = vector.broadcast %cst_104 : f32 to vector<512x128xf32>
    %55 = arith.maximumf %53, %54 : vector<512x128xf32>
    %56 = vector.extract_strided_slice %55 {offsets = [0, 0], sizes = [512, 4], strides = [1, 1]} : vector<512x128xf32> to vector<512x4xf32>
    %57 = arith.truncf %56 : vector<512x4xf32> to vector<512x4xbf16>
    %58 = vector.shape_cast %57 : vector<512x4xbf16> to vector<2x16x16x4xbf16>
    %c0_105 = arith.constant 0 : index
    %c1_106 = arith.constant 1 : index
    %c16_107 = arith.constant 16 : index
    %c0_108 = arith.constant 0 : index
    %59 = vector.load %arg8[%c0_105, %c1_106, %c16_107, %c0_108] : memref<2x18x48x4xbf16, #tpu.memory_space<vmem>>, vector<2x16x16x4xbf16>
    tpu.vector_store %arg8[%c0_105, %c1_106, %c16_107, %c0_108], %58 {strides = array<i32>} : memref<2x18x48x4xbf16, #tpu.memory_space<vmem>>, vector<2x16x16x4xbf16>,
    %c0_109 = arith.constant 0 : index
    %c0_110 = arith.constant 0 : index
    %c15_111 = arith.constant 15 : index
    %c0_112 = arith.constant 0 : index
    %60 = vector.load %arg8[%c0_109, %c0_110, %c15_111, %c0_112] : memref<2x18x48x4xbf16, #tpu.memory_space<vmem>>, vector<2x16x16x4xbf16>
    %c0_113 = arith.constant 0 : index
    %c0_114 = arith.constant 0 : index
    %c0_115 = arith.constant 0 : index
    %c0_116 = arith.constant 0 : index
    %61 = vector.load %arg9[%c0_113, %c0_114, %c0_115, %c0_116] : memref<2x16x16x128xbf16, #tpu.memory_space<vmem>>, vector<2x16x16x4xbf16>
    tpu.vector_store %arg9[%c0_113, %c0_114, %c0_115, %c0_116], %60 {strides = array<i32>} : memref<2x16x16x128xbf16, #tpu.memory_space<vmem>>, vector<2x16x16x4xbf16>,
    %c0_117 = arith.constant 0 : index
    %c0_118 = arith.constant 0 : index
    %c16_119 = arith.constant 16 : index
    %c0_120 = arith.constant 0 : index
    %62 = vector.load %arg8[%c0_117, %c0_118, %c16_119, %c0_120] : memref<2x18x48x4xbf16, #tpu.memory_space<vmem>>, vector<2x16x16x4xbf16>
    %c0_121 = arith.constant 0 : index
    %c0_122 = arith.constant 0 : index
    %c0_123 = arith.constant 0 : index
    %c4_124 = arith.constant 4 : index
    %63 = vector.load %arg9[%c0_121, %c0_122, %c0_123, %c4_124] : memref<2x16x16x128xbf16, #tpu.memory_space<vmem>>, vector<2x16x16x4xbf16>
    tpu.vector_store %arg9[%c0_121, %c0_122, %c0_123, %c4_124], %62 {strides = array<i32>} : memref<2x16x16x128xbf16, #tpu.memory_space<vmem>>, vector<2x16x16x4xbf16>,
    %c0_125 = arith.constant 0 : index
    %c0_126 = arith.constant 0 : index
    %c17_127 = arith.constant 17 : index
    %c0_128 = arith.constant 0 : index
    %64 = vector.load %arg8[%c0_125, %c0_126, %c17_127, %c0_128] : memref<2x18x48x4xbf16, #tpu.memory_space<vmem>>, vector<2x16x16x4xbf16>
    %c0_129 = arith.constant 0 : index
    %c0_130 = arith.constant 0 : index
    %c0_131 = arith.constant 0 : index
    %c8_132 = arith.constant 8 : index
    %65 = vector.load %arg9[%c0_129, %c0_130, %c0_131, %c8_132] : memref<2x16x16x128xbf16, #tpu.memory_space<vmem>>, vector<2x16x16x4xbf16>
    tpu.vector_store %arg9[%c0_129, %c0_130, %c0_131, %c8_132], %64 {strides = array<i32>} : memref<2x16x16x128xbf16, #tpu.memory_space<vmem>>, vector<2x16x16x4xbf16>,
    %c0_133 = arith.constant 0 : index
    %c1_134 = arith.constant 1 : index
    %c15_135 = arith.constant 15 : index
    %c0_136 = arith.constant 0 : index
    %66 = vector.load %arg8[%c0_133, %c1_134, %c15_135, %c0_136] : memref<2x18x48x4xbf16, #tpu.memory_space<vmem>>, vector<2x16x16x4xbf16>
    %c0_137 = arith.constant 0 : index
    %c0_138 = arith.constant 0 : index
    %c0_139 = arith.constant 0 : index
    %c12_140 = arith.constant 12 : index
    %67 = vector.load %arg9[%c0_137, %c0_138, %c0_139, %c12_140] : memref<2x16x16x128xbf16, #tpu.memory_space<vmem>>, vector<2x16x16x4xbf16>
    tpu.vector_store %arg9[%c0_137, %c0_138, %c0_139, %c12_140], %66 {strides = array<i32>} : memref<2x16x16x128xbf16, #tpu.memory_space<vmem>>, vector<2x16x16x4xbf16>,
    %c0_141 = arith.constant 0 : index
    %c1_142 = arith.constant 1 : index
    %c16_143 = arith.constant 16 : index
    %c0_144 = arith.constant 0 : index
    %68 = vector.load %arg8[%c0_141, %c1_142, %c16_143, %c0_144] : memref<2x18x48x4xbf16, #tpu.memory_space<vmem>>, vector<2x16x16x4xbf16>
    %c0_145 = arith.constant 0 : index
    %c0_146 = arith.constant 0 : index
    %c0_147 = arith.constant 0 : index
    %c16_148 = arith.constant 16 : index
    %69 = vector.load %arg9[%c0_145, %c0_146, %c0_147, %c16_148] : memref<2x16x16x128xbf16, #tpu.memory_space<vmem>>, vector<2x16x16x4xbf16>
    tpu.vector_store %arg9[%c0_145, %c0_146, %c0_147, %c16_148], %68 {strides = array<i32>} : memref<2x16x16x128xbf16, #tpu.memory_space<vmem>>, vector<2x16x16x4xbf16>,
    %c0_149 = arith.constant 0 : index
    %c1_150 = arith.constant 1 : index
    %c17_151 = arith.constant 17 : index
    %c0_152 = arith.constant 0 : index
    %70 = vector.load %arg8[%c0_149, %c1_150, %c17_151, %c0_152] : memref<2x18x48x4xbf16, #tpu.memory_space<vmem>>, vector<2x16x16x4xbf16>
    %c0_153 = arith.constant 0 : index
    %c0_154 = arith.constant 0 : index
    %c0_155 = arith.constant 0 : index
    %c20_156 = arith.constant 20 : index
    %71 = vector.load %arg9[%c0_153, %c0_154, %c0_155, %c20_156] : memref<2x16x16x128xbf16, #tpu.memory_space<vmem>>, vector<2x16x16x4xbf16>
    tpu.vector_store %arg9[%c0_153, %c0_154, %c0_155, %c20_156], %70 {strides = array<i32>} : memref<2x16x16x128xbf16, #tpu.memory_space<vmem>>, vector<2x16x16x4xbf16>,
    %c0_157 = arith.constant 0 : index
    %c2_158 = arith.constant 2 : index
    %c15_159 = arith.constant 15 : index
    %c0_160 = arith.constant 0 : index
    %72 = vector.load %arg8[%c0_157, %c2_158, %c15_159, %c0_160] : memref<2x18x48x4xbf16, #tpu.memory_space<vmem>>, vector<2x16x16x4xbf16>
    %c0_161 = arith.constant 0 : index
    %c0_162 = arith.constant 0 : index
    %c0_163 = arith.constant 0 : index
    %c24_164 = arith.constant 24 : index
    %73 = vector.load %arg9[%c0_161, %c0_162, %c0_163, %c24_164] : memref<2x16x16x128xbf16, #tpu.memory_space<vmem>>, vector<2x16x16x4xbf16>
    tpu.vector_store %arg9[%c0_161, %c0_162, %c0_163, %c24_164], %72 {strides = array<i32>} : memref<2x16x16x128xbf16, #tpu.memory_space<vmem>>, vector<2x16x16x4xbf16>,
    %c0_165 = arith.constant 0 : index
    %c2_166 = arith.constant 2 : index
    %c16_167 = arith.constant 16 : index
    %c0_168 = arith.constant 0 : index
    %74 = vector.load %arg8[%c0_165, %c2_166, %c16_167, %c0_168] : memref<2x18x48x4xbf16, #tpu.memory_space<vmem>>, vector<2x16x16x4xbf16>
    %c0_169 = arith.constant 0 : index
    %c0_170 = arith.constant 0 : index
    %c0_171 = arith.constant 0 : index
    %c28_172 = arith.constant 28 : index
    %75 = vector.load %arg9[%c0_169, %c0_170, %c0_171, %c28_172] : memref<2x16x16x128xbf16, #tpu.memory_space<vmem>>, vector<2x16x16x4xbf16>
    tpu.vector_store %arg9[%c0_169, %c0_170, %c0_171, %c28_172], %74 {strides = array<i32>} : memref<2x16x16x128xbf16, #tpu.memory_space<vmem>>, vector<2x16x16x4xbf16>,
    %c0_173 = arith.constant 0 : index
    %c2_174 = arith.constant 2 : index
    %c17_175 = arith.constant 17 : index
    %c0_176 = arith.constant 0 : index
    %76 = vector.load %arg8[%c0_173, %c2_174, %c17_175, %c0_176] : memref<2x18x48x4xbf16, #tpu.memory_space<vmem>>, vector<2x16x16x4xbf16>
    %c0_177 = arith.constant 0 : index
    %c0_178 = arith.constant 0 : index
    %c0_179 = arith.constant 0 : index
    %c32_180 = arith.constant 32 : index
    %77 = vector.load %arg9[%c0_177, %c0_178, %c0_179, %c32_180] : memref<2x16x16x128xbf16, #tpu.memory_space<vmem>>, vector<2x16x16x4xbf16>
    tpu.vector_store %arg9[%c0_177, %c0_178, %c0_179, %c32_180], %76 {strides = array<i32>} : memref<2x16x16x128xbf16, #tpu.memory_space<vmem>>, vector<2x16x16x4xbf16>,
    %c0_181 = arith.constant 0 : index
    %c0_182 = arith.constant 0 : index
    %c0_183 = arith.constant 0 : index
    %c0_184 = arith.constant 0 : index
    %78 = vector.load %arg9[%c0_181, %c0_182, %c0_183, %c0_184] : memref<2x16x16x128xbf16, #tpu.memory_space<vmem>>, vector<2x16x16x128xbf16>
    %79 = vector.shape_cast %78 : vector<2x16x16x128xbf16> to vector<512x128xbf16>
    %c0_185 = arith.constant 0 : index
    %c0_186 = arith.constant 0 : index
    %80 = vector.load %arg4[%c0_185, %c0_186] : memref<128x128xbf16, #tpu.memory_space<vmem>>, vector<128x128xbf16>
    %cst_187 = arith.constant dense<0.000000e+00> : vector<512x128xf32>
    %81 = tpu.matmul %79, %80, %cst_187 {dimension_numbers = #tpu.dot_dimension_numbers<[1], [0], [0], [1], [0, 0, 1, 1], [], []>} : vector<512x128xbf16>, vector<128x128xbf16>, vector<512x128xf32> -> vector<512x128xf32>
    %c0_188 = arith.constant 0 : index
    %c0_189 = arith.constant 0 : index
    %82 = vector.load %arg5[%c0_188, %c0_189] : memref<1x128xf32, #tpu.memory_space<vmem>>, vector<1x128xf32>
    %c0_190 = arith.constant 0 : index
    %c0_191 = arith.constant 0 : index
    %83 = vector.load %arg6[%c0_190, %c0_191] : memref<1x128xf32, #tpu.memory_space<vmem>>, vector<1x128xf32>
    %cst_192 = arith.constant dense<0.000000e+00> : vector<128xf32>
    %84 = vector.multi_reduction <add>, %81, %cst_192 [0] : vector<512x128xf32> to vector<128xf32>
    %85 = vector.shape_cast %84 : vector<128xf32> to vector<1x128xf32>
    %cst_193 = arith.constant 0.001953125 : f32
    %86 = vector.broadcast %cst_193 : f32 to vector<1x128xf32>
    %87 = arith.mulf %85, %86 : vector<1x128xf32>
    %88 = vector.broadcast %87 : vector<1x128xf32> to vector<512x128xf32>
    %89 = arith.subf %81, %88 : vector<512x128xf32>
    %90 = arith.mulf %89, %89 : vector<512x128xf32>
    %cst_194 = arith.constant dense<0.000000e+00> : vector<128xf32>
    %91 = vector.multi_reduction <add>, %90, %cst_194 [0] : vector<512x128xf32> to vector<128xf32>
    %92 = vector.shape_cast %91 : vector<128xf32> to vector<1x128xf32>
    %cst_195 = arith.constant 0.001953125 : f32
    %93 = vector.broadcast %cst_195 : f32 to vector<1x128xf32>
    %94 = arith.mulf %92, %93 : vector<1x128xf32>
    %cst_196 = arith.constant 9.99999974E-6 : f32
    %95 = vector.broadcast %cst_196 : f32 to vector<1x128xf32>
    %96 = arith.addf %94, %95 : vector<1x128xf32>
    %97 = math.rsqrt %96 : vector<1x128xf32>
    %98 = vector.broadcast %97 : vector<1x128xf32> to vector<512x128xf32>
    %99 = arith.mulf %89, %98 : vector<512x128xf32>
    %100 = vector.broadcast %82 : vector<1x128xf32> to vector<512x128xf32>
    %101 = arith.mulf %99, %100 : vector<512x128xf32>
    %102 = vector.broadcast %83 : vector<1x128xf32> to vector<512x128xf32>
    %103 = arith.addf %101, %102 : vector<512x128xf32>
    %c0_197 = arith.constant 0 : index
    %c0_198 = arith.constant 0 : index
    %c0_199 = arith.constant 0 : index
    %c0_200 = arith.constant 0 : index
    %104 = vector.load %arg0[%c0_197, %c0_198, %c0_199, %c0_200] : memref<2x16x16x4xbf16, #tpu.memory_space<vmem>>, vector<2x16x16x4xbf16>
    %105 = arith.extf %104 : vector<2x16x16x4xbf16> to vector<2x16x16x4xf32>
    %106 = vector.shape_cast %105 : vector<2x16x16x4xf32> to vector<512x4xf32>
    %107 = vector.extract_strided_slice %103 {offsets = [0, 0], sizes = [512, 4], strides = [1, 1]} : vector<512x128xf32> to vector<512x4xf32>
    %108 = arith.addf %107, %106 : vector<512x4xf32>
    %cst_201 = arith.constant 0.000000e+00 : f32
    %109 = vector.broadcast %cst_201 : f32 to vector<512x4xf32>
    %110 = arith.maximumf %108, %109 : vector<512x4xf32>
    %111 = arith.truncf %110 : vector<512x4xf32> to vector<512x4xbf16>
    %112 = vector.shape_cast %111 : vector<512x4xbf16> to vector<2x16x16x4xbf16>
    %c0_202 = arith.constant 0 : index
    %c0_203 = arith.constant 0 : index
    %c0_204 = arith.constant 0 : index
    %c0_205 = arith.constant 0 : index
    %113 = vector.load %arg7[%c0_202, %c0_203, %c0_204, %c0_205] : memref<2x16x16x4xbf16, #tpu.memory_space<vmem>>, vector<2x16x16x4xbf16>
    tpu.vector_store %arg7[%c0_202, %c0_203, %c0_204, %c0_205], %112 {strides = array<i32>} : memref<2x16x16x4xbf16, #tpu.memory_space<vmem>>, vector<2x16x16x4xbf16>,
    return
  }
}

</mosaic_0001>

<llo_original>
// kernel: residual_block_forward.1
$region0: #{residual_block_forward.1}
  #allocation0 [shape = 'u32[]', space=smem, size = 0x4, offset = 0x4, fixed_abs, tag = 'smem constant byte address 0x4 - core index']
  #allocation1 [shape = 'u32[144,128]{1,0:T(1,128)}', space=vmem, size = 0x12000, scoped, tag = 'internal scratch']
  #allocation2 [shape = 'bf16[2,18,48,4]{3,2,1,0:T(16,128)(2,1)}', space=vmem, size = 0x6c000, scoped, tag = 'scratch operand']
  #allocation3 [shape = 'bf16[2,16,16,128]{3,2,1,0:T(16,128)(2,1)}', space=vmem, size = 0x20000, scoped, tag = 'scratch operand']
  %s0 = inlined_call_operand.vmem [shape: bf16[2,16,16,4], index: 0, kind: input, shape index: {}]
  %s1 = inlined_call_operand.vmem [shape: bf16[128,128], index: 1, kind: input, shape index: {}]
  %s2 = inlined_call_operand.vmem [shape: f32[1,128], index: 2, kind: input, shape index: {}]
  %s3 = inlined_call_operand.vmem [shape: f32[1,128], index: 3, kind: input, shape index: {}]
  %s4 = inlined_call_operand.vmem [shape: bf16[128,128], index: 4, kind: input, shape index: {}]
  %s5 = inlined_call_operand.vmem [shape: f32[1,128], index: 5, kind: input, shape index: {}]
  %s6 = inlined_call_operand.vmem [shape: f32[1,128], index: 6, kind: input, shape index: {}]
  %s7 = inlined_call_operand.vmem [shape: bf16[2,16,16,4], index: 7, kind: output, shape index: {}]
  %s8 = sld [smem:[#allocation0]]
  $region38: #{residual_block_forward.1} parent=0
    _
  %s10 = ssub.s32 1, %s8
  %s11 = scalar_select 0, %s10, %s8
  // Predicated region
  $region2: #{residual_block_forward.1} parent=0 // pred_check
    _
  $region3: #{residual_block_forward.1} parent=0 // pred_check_branch
    %13 = sbr.rel (0) target = $region5
  $region4: #{residual_block_forward.1} parent=0 // pred_region
    _
  $region5: #{residual_block_forward.1} parent=0 // pred_fallthru
    _
  // Predicated region
  $region6: #{residual_block_forward.1} parent=0 // pred_check
    _
  $region7: #{residual_block_forward.1} parent=0 // pred_check_branch
    %15 = sbr.rel (0) target = $region9
  $region8: #{residual_block_forward.1} parent=0 // pred_region
    _
  $region9: #{residual_block_forward.1} parent=0 // pred_fallthru
    _
  // Predicated region
  $region10: #{residual_block_forward.1} parent=0 // pred_check
    _
  $region11: #{residual_block_forward.1} parent=0 // pred_check_branch
    %17 = sbr.rel (0) target = $region13
  $region12: #{residual_block_forward.1} parent=0 // pred_region
    _
  $region13: #{residual_block_forward.1} parent=0 // pred_fallthru
    _
  // Predicated region
  $region14: #{residual_block_forward.1} parent=0 // pred_check
    _
  $region15: #{residual_block_forward.1} parent=0 // pred_check_branch
    %19 = sbr.rel (0) target = $region17
  $region16: #{residual_block_forward.1} parent=0 // pred_region
    _
  $region17: #{residual_block_forward.1} parent=0 // pred_fallthru
    _
  // Predicated region
  $region18: #{residual_block_forward.1} parent=0 // pred_check
    _
  $region19: #{residual_block_forward.1} parent=0 // pred_check_branch
    %21 = sbr.rel (0) target = $region21
  $region20: #{residual_block_forward.1} parent=0 // pred_region
    _
  $region21: #{residual_block_forward.1} parent=0 // pred_fallthru
    _
  // Predicated region
  $region22: #{residual_block_forward.1} parent=0 // pred_check
    _
  $region23: #{residual_block_forward.1} parent=0 // pred_check_branch
    %23 = sbr.rel (0) target = $region25
  $region24: #{residual_block_forward.1} parent=0 // pred_region
    _
  $region25: #{residual_block_forward.1} parent=0 // pred_fallthru
    _
  // Predicated region
  $region26: #{residual_block_forward.1} parent=0 // pred_check
    _
  $region27: #{residual_block_forward.1} parent=0 // pred_check_branch
    %25 = sbr.rel (0) target = $region29
  $region28: #{residual_block_forward.1} parent=0 // pred_region
    _
  $region29: #{residual_block_forward.1} parent=0 // pred_fallthru
    _
  %vm27 = vcmask 31744
  %28 = vst.msk [vmem:[#allocation2] sm:$0xff] %vm27, 0
  %29 = vst.msk [vmem:[#allocation2 + $0x8] sm:$0xff] %vm27, 0
  %30 = vst.msk [vmem:[#allocation2 + $0x10] sm:$0xff] %vm27, 0
  %31 = vst.msk [vmem:[#allocation2 + $0x1b0] sm:$0xff] %vm27, 0
  %32 = vst.msk [vmem:[#allocation2 + $0x1b8] sm:$0xff] %vm27, 0
  %33 = vst.msk [vmem:[#allocation2 + $0x1c0] sm:$0xff] %vm27, 0
  %s34 = scalar_lea.vmem [#allocation2], 408
  %35 = vst.msk [vmem:[%s34] sm:$0xff] %vm27, 0
  %36 = vst.msk [vmem:[%s34 + $0x8] sm:$0xff] %vm27, 0
  %37 = vst.msk [vmem:[%s34 + $0x10] sm:$0xff] %vm27, 0
  %38 = vst.msk [vmem:[%s34 + $0x1b0] sm:$0xff] %vm27, 0
  %39 = vst.msk [vmem:[%s34 + $0x1b8] sm:$0xff] %vm27, 0
  %40 = vst.msk [vmem:[%s34 + $0x1c0] sm:$0xff] %vm27, 0
  %vm41 = vcmask 31751
  %vm42 = vsmask.f32 7966
  %vm43 = vmand %vm41, %vm42
  %v44 = vld [vmem:[#allocation2] sm:$0x80]
  %v45 = vsel %vm43, 0, %v44
  %46 = vst [vmem:[#allocation2] sm:$0x80] %v45
  %v47 = vld [vmem:[#allocation2 + $0x18] sm:$0x80]
  %v48 = vsel %vm43, 0, %v47
  %49 = vst [vmem:[#allocation2 + $0x18] sm:$0x80] %v48
  %v50 = vld [vmem:[#allocation2 + $0x30] sm:$0x80]
  %v51 = vsel %vm43, 0, %v50
  %52 = vst [vmem:[#allocation2 + $0x30] sm:$0x80] %v51
  %v53 = vld [vmem:[#allocation2 + $0x48] sm:$0x80]
  %v54 = vsel %vm43, 0, %v53
  %55 = vst [vmem:[#allocation2 + $0x48] sm:$0x80] %v54
  %v56 = vld [vmem:[#allocation2 + $0x60] sm:$0x80]
  %v57 = vsel %vm43, 0, %v56
  %58 = vst [vmem:[#allocation2 + $0x60] sm:$0x80] %v57
  %v59 = vld [vmem:[#allocation2 + $0x78] sm:$0x80]
  %v60 = vsel %vm43, 0, %v59
  %61 = vst [vmem:[#allocation2 + $0x78] sm:$0x80] %v60
  %v62 = vld [vmem:[#allocation2 + $0x90] sm:$0x80]
  %v63 = vsel %vm43, 0, %v62
  %64 = vst [vmem:[#allocation2 + $0x90] sm:$0x80] %v63
  %v65 = vld [vmem:[#allocation2 + $0xa8] sm:$0x80]
  %v66 = vsel %vm43, 0, %v65
  %67 = vst [vmem:[#allocation2 + $0xa8] sm:$0x80] %v66
  %v68 = vld [vmem:[#allocation2 + $0xc0] sm:$0x80]
  %v69 = vsel %vm43, 0, %v68
  %70 = vst [vmem:[#allocation2 + $0xc0] sm:$0x80] %v69
  %v71 = vld [vmem:[#allocation2 + $0xd8] sm:$0x80]
  %v72 = vsel %vm43, 0, %v71
  %73 = vst [vmem:[#allocation2 + $0xd8] sm:$0x80] %v72
  %v74 = vld [vmem:[#allocation2 + $0xf0] sm:$0x80]
  %v75 = vsel %vm43, 0, %v74
  %76 = vst [vmem:[#allocation2 + $0xf0] sm:$0x80] %v75
  %v77 = vld [vmem:[#allocation2 + $0x108] sm:$0x80]
  %v78 = vsel %vm43, 0, %v77
  %79 = vst [vmem:[#allocation2 + $0x108] sm:$0x80] %v78
  %v80 = vld [vmem:[#allocation2 + $0x120] sm:$0x80]
  %v81 = vsel %vm43, 0, %v80
  %82 = vst [vmem:[#allocation2 + $0x120] sm:$0x80] %v81
  %v83 = vld [vmem:[#allocation2 + $0x138] sm:$0x80]
  %v84 = vsel %vm43, 0, %v83
  %85 = vst [vmem:[#allocation2 + $0x138] sm:$0x80] %v84
  %v86 = vld [vmem:[#allocation2 + $0x150] sm:$0x80]
  %v87 = vsel %vm43, 0, %v86
  %88 = vst [vmem:[#allocation2 + $0x150] sm:$0x80] %v87
  %v89 = vld [vmem:[#allocation2 + $0x168] sm:$0x80]
  %v90 = vsel %vm43, 0, %v89
  %91 = vst [vmem:[#allocation2 + $0x168] sm:$0x80] %v90
  %v92 = vld [vmem:[#allocation2 + $0x180] sm:$0x80]
  %v93 = vsel %vm43, 0, %v92
  %94 = vst [vmem:[#allocation2 + $0x180] sm:$0x80] %v93
  %v95 = vld [vmem:[#allocation2 + $0x198] sm:$0x80]
  %v96 = vsel %vm43, 0, %v95
  %97 = vst [vmem:[#allocation2 + $0x198] sm:$0x80] %v96
  %v98 = vld [vmem:[#allocation2 + $0x1b0] sm:$0x80]
  %v99 = vsel %vm43, 0, %v98
  %100 = vst [vmem:[#allocation2 + $0x1b0] sm:$0x80] %v99
  %v101 = vld [vmem:[#allocation2 + $0x1c8] sm:$0x80]
  %v102 = vsel %vm43, 0, %v101
  %103 = vst [vmem:[#allocation2 + $0x1c8] sm:$0x80] %v102
  %v104 = vld [vmem:[#allocation2 + $0x1e0] sm:$0x80]
  %v105 = vsel %vm43, 0, %v104
  %106 = vst [vmem:[#allocation2 + $0x1e0] sm:$0x80] %v105
  %v107 = vld [vmem:[#allocation2 + $0x1f8] sm:$0x80]
  %v108 = vsel %vm43, 0, %v107
  %109 = vst [vmem:[#allocation2 + $0x1f8] sm:$0x80] %v108
  %v110 = vld [vmem:[#allocation2 + $0x210] sm:$0x80]
  %v111 = vsel %vm43, 0, %v110
  %112 = vst [vmem:[#allocation2 + $0x210] sm:$0x80] %v111
  %v113 = vld [vmem:[#allocation2 + $0x228] sm:$0x80]
  %v114 = vsel %vm43, 0, %v113
  %115 = vst [vmem:[#allocation2 + $0x228] sm:$0x80] %v114
  %v116 = vld [vmem:[#allocation2 + $0x240] sm:$0x80]
  %v117 = vsel %vm43, 0, %v116
  %118 = vst [vmem:[#allocation2 + $0x240] sm:$0x80] %v117
  %v119 = vld [vmem:[#allocation2 + $0x258] sm:$0x80]
  %v120 = vsel %vm43, 0, %v119
  %121 = vst [vmem:[#allocation2 + $0x258] sm:$0x80] %v120
  %v122 = vld [vmem:[#allocation2 + $0x270] sm:$0x80]
  %v123 = vsel %vm43, 0, %v122
  %124 = vst [vmem:[#allocation2 + $0x270] sm:$0x80] %v123
  %v125 = vld [vmem:[#allocation2 + $0x288] sm:$0x80]
  %v126 = vsel %vm43, 0, %v125
  %127 = vst [vmem:[#allocation2 + $0x288] sm:$0x80] %v126
  %v128 = vld [vmem:[#allocation2 + $0x2a0] sm:$0x80]
  %v129 = vsel %vm43, 0, %v128
  %130 = vst [vmem:[#allocation2 + $0x2a0] sm:$0x80] %v129
  %v131 = vld [vmem:[#allocation2 + $0x2b8] sm:$0x80]
  %v132 = vsel %vm43, 0, %v131
  %133 = vst [vmem:[#allocation2 + $0x2b8] sm:$0x80] %v132
  %v134 = vld [vmem:[#allocation2 + $0x2d0] sm:$0x80]
  %v135 = vsel %vm43, 0, %v134
  %136 = vst [vmem:[#allocation2 + $0x2d0] sm:$0x80] %v135
  %v137 = vld [vmem:[#allocation2 + $0x2e8] sm:$0x80]
  %v138 = vsel %vm43, 0, %v137
  %139 = vst [vmem:[#allocation2 + $0x2e8] sm:$0x80] %v138
  %v140 = vld [vmem:[#allocation2 + $0x300] sm:$0x80]
  %v141 = vsel %vm43, 0, %v140
  %142 = vst [vmem:[#allocation2 + $0x300] sm:$0x80] %v141
  %v143 = vld [vmem:[#allocation2 + $0x318] sm:$0x80]
  %v144 = vsel %vm43, 0, %v143
  %145 = vst [vmem:[#allocation2 + $0x318] sm:$0x80] %v144
  %v146 = vld [vmem:[#allocation2 + $0x330] sm:$0x80]
  %v147 = vsel %vm43, 0, %v146
  %148 = vst [vmem:[#allocation2 + $0x330] sm:$0x80] %v147
  %v149 = vld [vmem:[#allocation2 + $0x348] sm:$0x80]
  %v150 = vsel %vm43, 0, %v149
  %151 = vst [vmem:[#allocation2 + $0x348] sm:$0x80] %v150
  %vm152 = vcmask 24576
  %vm153 = vsmask.f32 256
  %vm154 = vmand %vm152, %vm153
  %v155 = vld [vmem:[#allocation2 + $0x10] sm:$0x1]
  %v156 = vsel %vm154, 0, %v155
  %157 = vst [vmem:[#allocation2 + $0x10] sm:$0x1] %v156
  %v158 = vld [vmem:[#allocation2 + $0x28] sm:$0x1]
  %v159 = vsel %vm154, 0, %v158
  %160 = vst [vmem:[#allocation2 + $0x28] sm:$0x1] %v159
  %v161 = vld [vmem:[#allocation2 + $0x40] sm:$0x1]
  %v162 = vsel %vm154, 0, %v161
  %163 = vst [vmem:[#allocation2 + $0x40] sm:$0x1] %v162
  %v164 = vld [vmem:[#allocation2 + $0x58] sm:$0x1]
  %v165 = vsel %vm154, 0, %v164
  %166 = vst [vmem:[#allocation2 + $0x58] sm:$0x1] %v165
  %v167 = vld [vmem:[#allocation2 + $0x70] sm:$0x1]
  %v168 = vsel %vm154, 0, %v167
  %169 = vst [vmem:[#allocation2 + $0x70] sm:$0x1] %v168
  %v170 = vld [vmem:[#allocation2 + $0x88] sm:$0x1]
  %v171 = vsel %vm154, 0, %v170
  %172 = vst [vmem:[#allocation2 + $0x88] sm:$0x1] %v171
  %v173 = vld [vmem:[#allocation2 + $0xa0] sm:$0x1]
  %v174 = vsel %vm154, 0, %v173
  %175 = vst [vmem:[#allocation2 + $0xa0] sm:$0x1] %v174
  %v176 = vld [vmem:[#allocation2 + $0xb8] sm:$0x1]
  %v177 = vsel %vm154, 0, %v176
  %178 = vst [vmem:[#allocation2 + $0xb8] sm:$0x1] %v177
  %v179 = vld [vmem:[#allocation2 + $0xd0] sm:$0x1]
  %v180 = vsel %vm154, 0, %v179
  %181 = vst [vmem:[#allocation2 + $0xd0] sm:$0x1] %v180
  %v182 = vld [vmem:[#allocation2 + $0xe8] sm:$0x1]
  %v183 = vsel %vm154, 0, %v182
  %184 = vst [vmem:[#allocation2 + $0xe8] sm:$0x1] %v183
  %v185 = vld [vmem:[#allocation2 + $0x100] sm:$0x1]
  %v186 = vsel %vm154, 0, %v185
  %187 = vst [vmem:[#allocation2 + $0x100] sm:$0x1] %v186
  %v188 = vld [vmem:[#allocation2 + $0x118] sm:$0x1]
  %v189 = vsel %vm154, 0, %v188
  %190 = vst [vmem:[#allocation2 + $0x118] sm:$0x1] %v189
  %v191 = vld [vmem:[#allocation2 + $0x130] sm:$0x1]
  %v192 = vsel %vm154, 0, %v191
  %193 = vst [vmem:[#allocation2 + $0x130] sm:$0x1] %v192
  %v194 = vld [vmem:[#allocation2 + $0x148] sm:$0x1]
  %v195 = vsel %vm154, 0, %v194
  %196 = vst [vmem:[#allocation2 + $0x148] sm:$0x1] %v195
  %v197 = vld [vmem:[#allocation2 + $0x160] sm:$0x1]
  %v198 = vsel %vm154, 0, %v197
  %199 = vst [vmem:[#allocation2 + $0x160] sm:$0x1] %v198
  %v200 = vld [vmem:[#allocation2 + $0x178] sm:$0x1]
  %v201 = vsel %vm154, 0, %v200
  %202 = vst [vmem:[#allocation2 + $0x178] sm:$0x1] %v201
  %v203 = vld [vmem:[#allocation2 + $0x190] sm:$0x1]
  %v204 = vsel %vm154, 0, %v203
  %205 = vst [vmem:[#allocation2 + $0x190] sm:$0x1] %v204
  %v206 = vld [vmem:[#allocation2 + $0x1a8] sm:$0x1]
  %v207 = vsel %vm154, 0, %v206
  %208 = vst [vmem:[#allocation2 + $0x1a8] sm:$0x1] %v207
  %v209 = vld [vmem:[#allocation2 + $0x1c0] sm:$0x1]
  %v210 = vsel %vm154, 0, %v209
  %211 = vst [vmem:[#allocation2 + $0x1c0] sm:$0x1] %v210
  %v212 = vld [vmem:[#allocation2 + $0x1d8] sm:$0x1]
  %v213 = vsel %vm154, 0, %v212
  %214 = vst [vmem:[#allocation2 + $0x1d8] sm:$0x1] %v213
  %v215 = vld [vmem:[#allocation2 + $0x1f0] sm:$0x1]
  %v216 = vsel %vm154, 0, %v215
  %217 = vst [vmem:[#allocation2 + $0x1f0] sm:$0x1] %v216
  %v218 = vld [vmem:[#allocation2 + $0x208] sm:$0x1]
  %v219 = vsel %vm154, 0, %v218
  %220 = vst [vmem:[#allocation2 + $0x208] sm:$0x1] %v219
  %v221 = vld [vmem:[#allocation2 + $0x220] sm:$0x1]
  %v222 = vsel %vm154, 0, %v221
  %223 = vst [vmem:[#allocation2 + $0x220] sm:$0x1] %v222
  %v224 = vld [vmem:[#allocation2 + $0x238] sm:$0x1]
  %v225 = vsel %vm154, 0, %v224
  %226 = vst [vmem:[#allocation2 + $0x238] sm:$0x1] %v225
  %v227 = vld [vmem:[#allocation2 + $0x250] sm:$0x1]
  %v228 = vsel %vm154, 0, %v227
  %229 = vst [vmem:[#allocation2 + $0x250] sm:$0x1] %v228
  %v230 = vld [vmem:[#allocation2 + $0x268] sm:$0x1]
  %v231 = vsel %vm154, 0, %v230
  %232 = vst [vmem:[#allocation2 + $0x268] sm:$0x1] %v231
  %v233 = vld [vmem:[#allocation2 + $0x280] sm:$0x1]
  %v234 = vsel %vm154, 0, %v233
  %235 = vst [vmem:[#allocation2 + $0x280] sm:$0x1] %v234
  %v236 = vld [vmem:[#allocation2 + $0x298] sm:$0x1]
  %v237 = vsel %vm154, 0, %v236
  %238 = vst [vmem:[#allocation2 + $0x298] sm:$0x1] %v237
  %v239 = vld [vmem:[#allocation2 + $0x2b0] sm:$0x1]
  %v240 = vsel %vm154, 0, %v239
  %241 = vst [vmem:[#allocation2 + $0x2b0] sm:$0x1] %v240
  %v242 = vld [vmem:[#allocation2 + $0x2c8] sm:$0x1]
  %v243 = vsel %vm154, 0, %v242
  %244 = vst [vmem:[#allocation2 + $0x2c8] sm:$0x1] %v243
  %v245 = vld [vmem:[#allocation2 + $0x2e0] sm:$0x1]
  %v246 = vsel %vm154, 0, %v245
  %247 = vst [vmem:[#allocation2 + $0x2e0] sm:$0x1] %v246
  %v248 = vld [vmem:[#allocation2 + $0x2f8] sm:$0x1]
  %v249 = vsel %vm154, 0, %v248
  %250 = vst [vmem:[#allocation2 + $0x2f8] sm:$0x1] %v249
  %v251 = vld [vmem:[#allocation2 + $0x310] sm:$0x1]
  %v252 = vsel %vm154, 0, %v251
  %253 = vst [vmem:[#allocation2 + $0x310] sm:$0x1] %v252
  %v254 = vld [vmem:[#allocation2 + $0x328] sm:$0x1]
  %v255 = vsel %vm154, 0, %v254
  %256 = vst [vmem:[#allocation2 + $0x328] sm:$0x1] %v255
  %v257 = vld [vmem:[#allocation2 + $0x340] sm:$0x1]
  %v258 = vsel %vm154, 0, %v257
  %259 = vst [vmem:[#allocation2 + $0x340] sm:$0x1] %v258
  %v260 = vld [vmem:[#allocation2 + $0x358] sm:$0x1]
  %v261 = vsel %vm154, 0, %v260
  %262 = vst [vmem:[#allocation2 + $0x358] sm:$0x1] %v261
  %vm263 = vcmask 1047840
  %264 = vst.msk [vmem:[#allocation3] sm:$0xff] %vm263, 0
  %265 = vst.msk [vmem:[#allocation3 + $0x8] sm:$0xff] %vm263, 0
  %266 = vst.msk [vmem:[#allocation3 + $0x10] sm:$0xff] %vm263, 0
  %267 = vst.msk [vmem:[#allocation3 + $0x18] sm:$0xff] %vm263, 0
  %268 = vst.msk [vmem:[#allocation3 + $0x20] sm:$0xff] %vm263, 0
  %269 = vst.msk [vmem:[#allocation3 + $0x28] sm:$0xff] %vm263, 0
  %270 = vst.msk [vmem:[#allocation3 + $0x30] sm:$0xff] %vm263, 0
  %271 = vst.msk [vmem:[#allocation3 + $0x38] sm:$0xff] %vm263, 0
  %272 = vst.msk [vmem:[#allocation3 + $0x40] sm:$0xff] %vm263, 0
  %273 = vst.msk [vmem:[#allocation3 + $0x48] sm:$0xff] %vm263, 0
  %274 = vst.msk [vmem:[#allocation3 + $0x50] sm:$0xff] %vm263, 0
  %275 = vst.msk [vmem:[#allocation3 + $0x58] sm:$0xff] %vm263, 0
  %276 = vst.msk [vmem:[#allocation3 + $0x60] sm:$0xff] %vm263, 0
  %277 = vst.msk [vmem:[#allocation3 + $0x68] sm:$0xff] %vm263, 0
  %278 = vst.msk [vmem:[#allocation3 + $0x70] sm:$0xff] %vm263, 0
  %279 = vst.msk [vmem:[#allocation3 + $0x78] sm:$0xff] %vm263, 0
  %280 = vst.msk [vmem:[#allocation3 + $0x80] sm:$0xff] %vm263, 0
  %281 = vst.msk [vmem:[#allocation3 + $0x88] sm:$0xff] %vm263, 0
  %282 = vst.msk [vmem:[#allocation3 + $0x90] sm:$0xff] %vm263, 0
  %283 = vst.msk [vmem:[#allocation3 + $0x98] sm:$0xff] %vm263, 0
  %284 = vst.msk [vmem:[#allocation3 + $0xa0] sm:$0xff] %vm263, 0
  %285 = vst.msk [vmem:[#allocation3 + $0xa8] sm:$0xff] %vm263, 0
  %286 = vst.msk [vmem:[#allocation3 + $0xb0] sm:$0xff] %vm263, 0
  %287 = vst.msk [vmem:[#allocation3 + $0xb8] sm:$0xff] %vm263, 0
  %288 = vst.msk [vmem:[#allocation3 + $0xc0] sm:$0xff] %vm263, 0
  %289 = vst.msk [vmem:[#allocation3 + $0xc8] sm:$0xff] %vm263, 0
  %290 = vst.msk [vmem:[#allocation3 + $0xd0] sm:$0xff] %vm263, 0
  %291 = vst.msk [vmem:[#allocation3 + $0xd8] sm:$0xff] %vm263, 0
  %292 = vst.msk [vmem:[#allocation3 + $0xe0] sm:$0xff] %vm263, 0
  %293 = vst.msk [vmem:[#allocation3 + $0xe8] sm:$0xff] %vm263, 0
  %294 = vst.msk [vmem:[#allocation3 + $0xf0] sm:$0xff] %vm263, 0
  %295 = vst.msk [vmem:[#allocation3 + $0xf8] sm:$0xff] %vm263, 0
  %v296 = vld [vmem:[%s0] sm:$0xf]
  %v297 = vld [vmem:[%s0 + $0x4] sm:$0xf]
  %v298 = vld [vmem:[%s0 + $0x8] sm:$0xf]
  %v299 = vld [vmem:[%s0 + $0xc] sm:$0xf]
  %v300 = vld [vmem:[%s0 + $0x10] sm:$0xf]
  %v301 = vld [vmem:[%s0 + $0x14] sm:$0xf]
  %v302 = vld [vmem:[%s0 + $0x18] sm:$0xf]
  %v303 = vld [vmem:[%s0 + $0x1c] sm:$0xf]
  %v304 = vld [vmem:[%s0 + $0x20] sm:$0xf]
  %v305 = vld [vmem:[%s0 + $0x24] sm:$0xf]
  %v306 = vld [vmem:[%s0 + $0x28] sm:$0xf]
  %v307 = vld [vmem:[%s0 + $0x2c] sm:$0xf]
  %v308 = vld [vmem:[%s0 + $0x30] sm:$0xf]
  %v309 = vld [vmem:[%s0 + $0x34] sm:$0xf]
  %v310 = vld [vmem:[%s0 + $0x38] sm:$0xf]
  %v311 = vld [vmem:[%s0 + $0x3c] sm:$0xf]
  %v312 = vld [vmem:[%s0 + $0x40] sm:$0xf]
  %v313 = vld [vmem:[%s0 + $0x44] sm:$0xf]
  %v314 = vld [vmem:[%s0 + $0x48] sm:$0xf]
  %v315 = vld [vmem:[%s0 + $0x4c] sm:$0xf]
  %v316 = vld [vmem:[%s0 + $0x50] sm:$0xf]
  %v317 = vld [vmem:[%s0 + $0x54] sm:$0xf]
  %v318 = vld [vmem:[%s0 + $0x58] sm:$0xf]
  %v319 = vld [vmem:[%s0 + $0x5c] sm:$0xf]
  %v320 = vld [vmem:[%s0 + $0x60] sm:$0xf]
  %v321 = vld [vmem:[%s0 + $0x64] sm:$0xf]
  %v322 = vld [vmem:[%s0 + $0x68] sm:$0xf]
  %v323 = vld [vmem:[%s0 + $0x6c] sm:$0xf]
  %v324 = vld [vmem:[%s0 + $0x70] sm:$0xf]
  %v325 = vld [vmem:[%s0 + $0x74] sm:$0xf]
  %v326 = vld [vmem:[%s0 + $0x78] sm:$0xf]
  %v327 = vld [vmem:[%s0 + $0x7c] sm:$0xf]
  %v328 = vld [vmem:[%s0 + $0x80] sm:$0xf]
  %v329 = vld [vmem:[%s0 + $0x84] sm:$0xf]
  %v330 = vld [vmem:[%s0 + $0x88] sm:$0xf]
  %v331 = vld [vmem:[%s0 + $0x8c] sm:$0xf]
  %v332 = vld [vmem:[%s0 + $0x90] sm:$0xf]
  %v333 = vld [vmem:[%s0 + $0x94] sm:$0xf]
  %v334 = vld [vmem:[%s0 + $0x98] sm:$0xf]
  %v335 = vld [vmem:[%s0 + $0x9c] sm:$0xf]
  %v336 = vld [vmem:[%s0 + $0xa0] sm:$0xf]
  %v337 = vld [vmem:[%s0 + $0xa4] sm:$0xf]
  %v338 = vld [vmem:[%s0 + $0xa8] sm:$0xf]
  %v339 = vld [vmem:[%s0 + $0xac] sm:$0xf]
  %v340 = vld [vmem:[%s0 + $0xb0] sm:$0xf]
  %v341 = vld [vmem:[%s0 + $0xb4] sm:$0xf]
  %v342 = vld [vmem:[%s0 + $0xb8] sm:$0xf]
  %v343 = vld [vmem:[%s0 + $0xbc] sm:$0xf]
  %v344 = vld [vmem:[%s0 + $0xc0] sm:$0xf]
  %v345 = vld [vmem:[%s0 + $0xc4] sm:$0xf]
  %v346 = vld [vmem:[%s0 + $0xc8] sm:$0xf]
  %v347 = vld [vmem:[%s0 + $0xcc] sm:$0xf]
  %v348 = vld [vmem:[%s0 + $0xd0] sm:$0xf]
  %v349 = vld [vmem:[%s0 + $0xd4] sm:$0xf]
  %v350 = vld [vmem:[%s0 + $0xd8] sm:$0xf]
  %v351 = vld [vmem:[%s0 + $0xdc] sm:$0xf]
  %v352 = vld [vmem:[%s0 + $0xe0] sm:$0xf]
  %v353 = vld [vmem:[%s0 + $0xe4] sm:$0xf]
  %v354 = vld [vmem:[%s0 + $0xe8] sm:$0xf]
  %v355 = vld [vmem:[%s0 + $0xec] sm:$0xf]
  %v356 = vld [vmem:[%s0 + $0xf0] sm:$0xf]
  %v357 = vld [vmem:[%s0 + $0xf4] sm:$0xf]
  %v358 = vld [vmem:[%s0 + $0xf8] sm:$0xf]
  %v359 = vld [vmem:[%s0 + $0xfc] sm:$0xf]
  %v424 = vunpack.c.l.b16 %v296
  %v425 = vunpack.c.l.b16 %v297
  %v426 = vunpack.c.l.b16 %v298
  %v427 = vunpack.c.l.b16 %v299
  %v428 = vunpack.c.l.b16 %v300
  %v429 = vunpack.c.l.b16 %v301
  %v430 = vunpack.c.l.b16 %v302
  %v431 = vunpack.c.l.b16 %v303
  %v432 = vunpack.c.l.b16 %v304
  %v433 = vunpack.c.l.b16 %v305
  %v434 = vunpack.c.l.b16 %v306
  %v435 = vunpack.c.l.b16 %v307
  %v436 = vunpack.c.l.b16 %v308
  %v437 = vunpack.c.l.b16 %v309
  %v438 = vunpack.c.l.b16 %v310
  %v439 = vunpack.c.l.b16 %v311
  %v440 = vunpack.c.l.b16 %v312
  %v441 = vunpack.c.l.b16 %v313
  %v442 = vunpack.c.l.b16 %v314
  %v443 = vunpack.c.l.b16 %v315
  %v444 = vunpack.c.l.b16 %v316
  %v445 = vunpack.c.l.b16 %v317
  %v446 = vunpack.c.l.b16 %v318
  %v447 = vunpack.c.l.b16 %v319
  %v448 = vunpack.c.l.b16 %v320
  %v449 = vunpack.c.l.b16 %v321
  %v450 = vunpack.c.l.b16 %v322
  %v451 = vunpack.c.l.b16 %v323
  %v452 = vunpack.c.l.b16 %v324
  %v453 = vunpack.c.l.b16 %v325
  %v454 = vunpack.c.l.b16 %v326
  %v455 = vunpack.c.l.b16 %v327
  %v456 = vunpack.c.l.b16 %v328
  %v457 = vunpack.c.l.b16 %v329
  %v458 = vunpack.c.l.b16 %v330
  %v459 = vunpack.c.l.b16 %v331
  %v460 = vunpack.c.l.b16 %v332
  %v461 = vunpack.c.l.b16 %v333
  %v462 = vunpack.c.l.b16 %v334
  %v463 = vunpack.c.l.b16 %v335
  %v464 = vunpack.c.l.b16 %v336
  %v465 = vunpack.c.l.b16 %v337
  %v466 = vunpack.c.l.b16 %v338
  %v467 = vunpack.c.l.b16 %v339
  %v468 = vunpack.c.l.b16 %v340
  %v469 = vunpack.c.l.b16 %v341
  %v470 = vunpack.c.l.b16 %v342
  %v471 = vunpack.c.l.b16 %v343
  %v472 = vunpack.c.l.b16 %v344
  %v473 = vunpack.c.l.b16 %v345
  %v474 = vunpack.c.l.b16 %v346
  %v475 = vunpack.c.l.b16 %v347
  %v476 = vunpack.c.l.b16 %v348
  %v477 = vunpack.c.l.b16 %v349
  %v478 = vunpack.c.l.b16 %v350
  %v479 = vunpack.c.l.b16 %v351
  %v480 = vunpack.c.l.b16 %v352
  %v481 = vunpack.c.l.b16 %v353
  %v482 = vunpack.c.l.b16 %v354
  %v483 = vunpack.c.l.b16 %v355
  %v484 = vunpack.c.l.b16 %v356
  %v485 = vunpack.c.l.b16 %v357
  %v486 = vunpack.c.l.b16 %v358
  %v487 = vunpack.c.l.b16 %v359
  %v488 = vpack.c.b16 %v425, %v424
  %v489 = vpack.c.b16 %v427, %v426
  %v490 = vpack.c.b16 %v429, %v428
  %v491 = vpack.c.b16 %v431, %v430
  %v492 = vpack.c.b16 %v433, %v432
  %v493 = vpack.c.b16 %v435, %v434
  %v494 = vpack.c.b16 %v437, %v436
  %v495 = vpack.c.b16 %v439, %v438
  %v496 = vpack.c.b16 %v441, %v440
  %v497 = vpack.c.b16 %v443, %v442
  %v498 = vpack.c.b16 %v445, %v444
  %v499 = vpack.c.b16 %v447, %v446
  %v500 = vpack.c.b16 %v449, %v448
  %v501 = vpack.c.b16 %v451, %v450
  %v502 = vpack.c.b16 %v453, %v452
  %v503 = vpack.c.b16 %v455, %v454
  %v504 = vpack.c.b16 %v457, %v456
  %v505 = vpack.c.b16 %v459, %v458
  %v506 = vpack.c.b16 %v461, %v460
  %v507 = vpack.c.b16 %v463, %v462
  %v508 = vpack.c.b16 %v465, %v464
  %v509 = vpack.c.b16 %v467, %v466
  %v510 = vpack.c.b16 %v469, %v468
  %v511 = vpack.c.b16 %v471, %v470
  %v512 = vpack.c.b16 %v473, %v472
  %v513 = vpack.c.b16 %v475, %v474
  %v514 = vpack.c.b16 %v477, %v476
  %v515 = vpack.c.b16 %v479, %v478
  %v516 = vpack.c.b16 %v481, %v480
  %v517 = vpack.c.b16 %v483, %v482
  %v518 = vpack.c.b16 %v485, %v484
  %v519 = vpack.c.b16 %v487, %v486
  %s552 = scalar_lea.vmem [#allocation2], 24
  %553 = vst.msk [vmem:[%s552 + $0x8] sm:$0xff] %vm27, %v488
  %554 = vst.msk [vmem:[%s552 + $0x20] sm:$0xff] %vm27, %v489
  %555 = vst.msk [vmem:[%s552 + $0x38] sm:$0xff] %vm27, %v490
  %556 = vst.msk [vmem:[%s552 + $0x50] sm:$0xff] %vm27, %v491
  %557 = vst.msk [vmem:[%s552 + $0x68] sm:$0xff] %vm27, %v492
  %558 = vst.msk [vmem:[%s552 + $0x80] sm:$0xff] %vm27, %v493
  %559 = vst.msk [vmem:[%s552 + $0x98] sm:$0xff] %vm27, %v494
  %560 = vst.msk [vmem:[%s552 + $0xb0] sm:$0xff] %vm27, %v495
  %561 = vst.msk [vmem:[%s552 + $0xc8] sm:$0xff] %vm27, %v496
  %562 = vst.msk [vmem:[%s552 + $0xe0] sm:$0xff] %vm27, %v497
  %563 = vst.msk [vmem:[%s552 + $0xf8] sm:$0xff] %vm27, %v498
  %564 = vst.msk [vmem:[%s552 + $0x110] sm:$0xff] %vm27, %v499
  %565 = vst.msk [vmem:[%s552 + $0x128] sm:$0xff] %vm27, %v500
  %566 = vst.msk [vmem:[%s552 + $0x140] sm:$0xff] %vm27, %v501
  %567 = vst.msk [vmem:[%s552 + $0x158] sm:$0xff] %vm27, %v502
  %568 = vst.msk [vmem:[%s552 + $0x170] sm:$0xff] %vm27, %v503
  %569 = vst.msk [vmem:[%s552 + $0x1b8] sm:$0xff] %vm27, %v504
  %570 = vst.msk [vmem:[%s552 + $0x1d0] sm:$0xff] %vm27, %v505
  %571 = vst.msk [vmem:[%s552 + $0x1e8] sm:$0xff] %vm27, %v506
  %572 = vst.msk [vmem:[%s552 + $0x200] sm:$0xff] %vm27, %v507
  %573 = vst.msk [vmem:[%s552 + $0x218] sm:$0xff] %vm27, %v508
  %574 = vst.msk [vmem:[%s552 + $0x230] sm:$0xff] %vm27, %v509
  %575 = vst.msk [vmem:[%s552 + $0x248] sm:$0xff] %vm27, %v510
  %576 = vst.msk [vmem:[%s552 + $0x260] sm:$0xff] %vm27, %v511
  %577 = vst.msk [vmem:[%s552 + $0x278] sm:$0xff] %vm27, %v512
  %578 = vst.msk [vmem:[%s552 + $0x290] sm:$0xff] %vm27, %v513
  %579 = vst.msk [vmem:[%s552 + $0x2a8] sm:$0xff] %vm27, %v514
  %580 = vst.msk [vmem:[%s552 + $0x2c0] sm:$0xff] %vm27, %v515
  %581 = vst.msk [vmem:[%s552 + $0x2d8] sm:$0xff] %vm27, %v516
  %582 = vst.msk [vmem:[%s552 + $0x2f0] sm:$0xff] %vm27, %v517
  %583 = vst.msk [vmem:[%s552 + $0x308] sm:$0xff] %vm27, %v518
  %584 = vst.msk [vmem:[%s552 + $0x320] sm:$0xff] %vm27, %v519
  %v585 = vld [vmem:[#allocation2] sm:$0x80]
  %v586 = vld [vmem:[#allocation2 + $0x8] sm:$0xff]
  %v587 = vld [vmem:[#allocation2 + $0x18] sm:$0x80]
  %v588 = vld [vmem:[#allocation2 + $0x20] sm:$0xff]
  %v589 = vld [vmem:[#allocation2 + $0x30] sm:$0x80]
  %v590 = vld [vmem:[#allocation2 + $0x38] sm:$0xff]
  %v591 = vld [vmem:[#allocation2 + $0x48] sm:$0x80]
  %v592 = vld [vmem:[#allocation2 + $0x50] sm:$0xff]
  %v593 = vld [vmem:[#allocation2 + $0x60] sm:$0x80]
  %v594 = vld [vmem:[#allocation2 + $0x68] sm:$0xff]
  %v595 = vld [vmem:[#allocation2 + $0x78] sm:$0x80]
  %v596 = vld [vmem:[#allocation2 + $0x80] sm:$0xff]
  %v597 = vld [vmem:[#allocation2 + $0x90] sm:$0x80]
  %v598 = vld [vmem:[#allocation2 + $0x98] sm:$0xff]
  %v599 = vld [vmem:[#allocation2 + $0xa8] sm:$0x80]
  %v600 = vld [vmem:[#allocation2 + $0xb0] sm:$0xff]
  %v601 = vld [vmem:[#allocation2 + $0xc0] sm:$0x80]
  %v602 = vld [vmem:[#allocation2 + $0xc8] sm:$0xff]
  %v603 = vld [vmem:[#allocation2 + $0xd8] sm:$0x80]
  %v604 = vld [vmem:[#allocation2 + $0xe0] sm:$0xff]
  %v605 = vld [vmem:[#allocation2 + $0xf0] sm:$0x80]
  %v606 = vld [vmem:[#allocation2 + $0xf8] sm:$0xff]
  %v607 = vld [vmem:[#allocation2 + $0x108] sm:$0x80]
  %v608 = vld [vmem:[#allocation2 + $0x110] sm:$0xff]
  %v609 = vld [vmem:[#allocation2 + $0x120] sm:$0x80]
  %v610 = vld [vmem:[#allocation2 + $0x128] sm:$0xff]
  %v611 = vld [vmem:[#allocation2 + $0x138] sm:$0x80]
  %v612 = vld [vmem:[#allocation2 + $0x140] sm:$0xff]
  %v613 = vld [vmem:[#allocation2 + $0x150] sm:$0x80]
  %v614 = vld [vmem:[#allocation2 + $0x158] sm:$0xff]
  %v615 = vld [vmem:[#allocation2 + $0x168] sm:$0x80]
  %v616 = vld [vmem:[#allocation2 + $0x170] sm:$0xff]
  %v617 = vld [vmem:[#allocation2 + $0x1b0] sm:$0x80]
  %v618 = vld [vmem:[#allocation2 + $0x1b8] sm:$0xff]
  %v619 = vld [vmem:[#allocation2 + $0x1c8] sm:$0x80]
  %v620 = vld [vmem:[#allocation2 + $0x1d0] sm:$0xff]
  %v621 = vld [vmem:[#allocation2 + $0x1e0] sm:$0x80]
  %v622 = vld [vmem:[#allocation2 + $0x1e8] sm:$0xff]
  %v623 = vld [vmem:[#allocation2 + $0x1f8] sm:$0x80]
  %v624 = vld [vmem:[#allocation2 + $0x200] sm:$0xff]
  %v625 = vld [vmem:[#allocation2 + $0x210] sm:$0x80]
  %v626 = vld [vmem:[#allocation2 + $0x218] sm:$0xff]
  %v627 = vld [vmem:[#allocation2 + $0x228] sm:$0x80]
  %v628 = vld [vmem:[#allocation2 + $0x230] sm:$0xff]
  %v629 = vld [vmem:[#allocation2 + $0x240] sm:$0x80]
  %v630 = vld [vmem:[#allocation2 + $0x248] sm:$0xff]
  %v631 = vld [vmem:[#allocation2 + $0x258] sm:$0x80]
  %v632 = vld [vmem:[#allocation2 + $0x260] sm:$0xff]
  %v633 = vld [vmem:[#allocation2 + $0x270] sm:$0x80]
  %v634 = vld [vmem:[#allocation2 + $0x278] sm:$0xff]
  %v635 = vld [vmem:[#allocation2 + $0x288] sm:$0x80]
  %v636 = vld [vmem:[#allocation2 + $0x290] sm:$0xff]
  %v637 = vld [vmem:[#allocation2 + $0x2a0] sm:$0x80]
  %v638 = vld [vmem:[#allocation2 + $0x2a8] sm:$0xff]
  %v639 = vld [vmem:[#allocation2 + $0x2b8] sm:$0x80]
  %v640 = vld [vmem:[#allocation2 + $0x2c0] sm:$0xff]
  %v641 = vld [vmem:[#allocation2 + $0x2d0] sm:$0x80]
  %v642 = vld [vmem:[#allocation2 + $0x2d8] sm:$0xff]
  %v643 = vld [vmem:[#allocation2 + $0x2e8] sm:$0x80]
  %v644 = vld [vmem:[#allocation2 + $0x2f0] sm:$0xff]
  %v645 = vld [vmem:[#allocation2 + $0x300] sm:$0x80]
  %v646 = vld [vmem:[#allocation2 + $0x308] sm:$0xff]
  %v647 = vld [vmem:[#allocation2 + $0x318] sm:$0x80]
  %v648 = vld [vmem:[#allocation2 + $0x320] sm:$0xff]
  %v650 = vshrl.u32 %v585, 16
  %v652 = vrot.slane %v650, 7
  %v654 = vshrl.u32 %v586, 16
  %v656 = vrot.slane %v654, 7
  %v657 = vshll.u32 %v586, 16
  %v659 = vor.u32 %v656, %v657
  %v660 = vsel %vm153, %v652, %v659
  %v662 = vshrl.u32 %v587, 16
  %v664 = vrot.slane %v662, 7
  %v666 = vshrl.u32 %v588, 16
  %v668 = vrot.slane %v666, 7
  %v669 = vshll.u32 %v588, 16
  %v671 = vor.u32 %v668, %v669
  %v672 = vsel %vm153, %v664, %v671
  %v674 = vshrl.u32 %v589, 16
  %v676 = vrot.slane %v674, 7
  %v678 = vshrl.u32 %v590, 16
  %v680 = vrot.slane %v678, 7
  %v681 = vshll.u32 %v590, 16
  %v683 = vor.u32 %v680, %v681
  %v684 = vsel %vm153, %v676, %v683
  %v686 = vshrl.u32 %v591, 16
  %v688 = vrot.slane %v686, 7
  %v690 = vshrl.u32 %v592, 16
  %v692 = vrot.slane %v690, 7
  %v693 = vshll.u32 %v592, 16
  %v695 = vor.u32 %v692, %v693
  %v696 = vsel %vm153, %v688, %v695
  %v698 = vshrl.u32 %v593, 16
  %v700 = vrot.slane %v698, 7
  %v702 = vshrl.u32 %v594, 16
  %v704 = vrot.slane %v702, 7
  %v705 = vshll.u32 %v594, 16
  %v707 = vor.u32 %v704, %v705
  %v708 = vsel %vm153, %v700, %v707
  %v710 = vshrl.u32 %v595, 16
  %v712 = vrot.slane %v710, 7
  %v714 = vshrl.u32 %v596, 16
  %v716 = vrot.slane %v714, 7
  %v717 = vshll.u32 %v596, 16
  %v719 = vor.u32 %v716, %v717
  %v720 = vsel %vm153, %v712, %v719
  %v722 = vshrl.u32 %v597, 16
  %v724 = vrot.slane %v722, 7
  %v726 = vshrl.u32 %v598, 16
  %v728 = vrot.slane %v726, 7
  %v729 = vshll.u32 %v598, 16
  %v731 = vor.u32 %v728, %v729
  %v732 = vsel %vm153, %v724, %v731
  %v734 = vshrl.u32 %v599, 16
  %v736 = vrot.slane %v734, 7
  %v738 = vshrl.u32 %v600, 16
  %v740 = vrot.slane %v738, 7
  %v741 = vshll.u32 %v600, 16
  %v743 = vor.u32 %v740, %v741
  %v744 = vsel %vm153, %v736, %v743
  %v746 = vshrl.u32 %v601, 16
  %v748 = vrot.slane %v746, 7
  %v750 = vshrl.u32 %v602, 16
  %v752 = vrot.slane %v750, 7
  %v753 = vshll.u32 %v602, 16
  %v755 = vor.u32 %v752, %v753
  %v756 = vsel %vm153, %v748, %v755
  %v758 = vshrl.u32 %v603, 16
  %v760 = vrot.slane %v758, 7
  %v762 = vshrl.u32 %v604, 16
  %v764 = vrot.slane %v762, 7
  %v765 = vshll.u32 %v604, 16
  %v767 = vor.u32 %v764, %v765
  %v768 = vsel %vm153, %v760, %v767
  %v770 = vshrl.u32 %v605, 16
  %v772 = vrot.slane %v770, 7
  %v774 = vshrl.u32 %v606, 16
  %v776 = vrot.slane %v774, 7
  %v777 = vshll.u32 %v606, 16
  %v779 = vor.u32 %v776, %v777
  %v780 = vsel %vm153, %v772, %v779
  %v782 = vshrl.u32 %v607, 16
  %v784 = vrot.slane %v782, 7
  %v786 = vshrl.u32 %v608, 16
  %v788 = vrot.slane %v786, 7
  %v789 = vshll.u32 %v608, 16
  %v791 = vor.u32 %v788, %v789
  %v792 = vsel %vm153, %v784, %v791
  %v794 = vshrl.u32 %v609, 16
  %v796 = vrot.slane %v794, 7
  %v798 = vshrl.u32 %v610, 16
  %v800 = vrot.slane %v798, 7
  %v801 = vshll.u32 %v610, 16
  %v803 = vor.u32 %v800, %v801
  %v804 = vsel %vm153, %v796, %v803
  %v806 = vshrl.u32 %v611, 16
  %v808 = vrot.slane %v806, 7
  %v810 = vshrl.u32 %v612, 16
  %v812 = vrot.slane %v810, 7
  %v813 = vshll.u32 %v612, 16
  %v815 = vor.u32 %v812, %v813
  %v816 = vsel %vm153, %v808, %v815
  %v818 = vshrl.u32 %v613, 16
  %v820 = vrot.slane %v818, 7
  %v822 = vshrl.u32 %v614, 16
  %v824 = vrot.slane %v822, 7
  %v825 = vshll.u32 %v614, 16
  %v827 = vor.u32 %v824, %v825
  %v828 = vsel %vm153, %v820, %v827
  %v830 = vshrl.u32 %v615, 16
  %v832 = vrot.slane %v830, 7
  %v834 = vshrl.u32 %v616, 16
  %v836 = vrot.slane %v834, 7
  %v837 = vshll.u32 %v616, 16
  %v839 = vor.u32 %v836, %v837
  %v840 = vsel %vm153, %v832, %v839
  %v842 = vshrl.u32 %v617, 16
  %v844 = vrot.slane %v842, 7
  %v846 = vshrl.u32 %v618, 16
  %v848 = vrot.slane %v846, 7
  %v849 = vshll.u32 %v618, 16
  %v851 = vor.u32 %v848, %v849
  %v852 = vsel %vm153, %v844, %v851
  %v854 = vshrl.u32 %v619, 16
  %v856 = vrot.slane %v854, 7
  %v858 = vshrl.u32 %v620, 16
  %v860 = vrot.slane %v858, 7
  %v861 = vshll.u32 %v620, 16
  %v863 = vor.u32 %v860, %v861
  %v864 = vsel %vm153, %v856, %v863
  %v866 = vshrl.u32 %v621, 16
  %v868 = vrot.slane %v866, 7
  %v870 = vshrl.u32 %v622, 16
  %v872 = vrot.slane %v870, 7
  %v873 = vshll.u32 %v622, 16
  %v875 = vor.u32 %v872, %v873
  %v876 = vsel %vm153, %v868, %v875
  %v878 = vshrl.u32 %v623, 16
  %v880 = vrot.slane %v878, 7
  %v882 = vshrl.u32 %v624, 16
  %v884 = vrot.slane %v882, 7
  %v885 = vshll.u32 %v624, 16
  %v887 = vor.u32 %v884, %v885
  %v888 = vsel %vm153, %v880, %v887
  %v890 = vshrl.u32 %v625, 16
  %v892 = vrot.slane %v890, 7
  %v894 = vshrl.u32 %v626, 16
  %v896 = vrot.slane %v894, 7
  %v897 = vshll.u32 %v626, 16
  %v899 = vor.u32 %v896, %v897
  %v900 = vsel %vm153, %v892, %v899
  %v902 = vshrl.u32 %v627, 16
  %v904 = vrot.slane %v902, 7
  %v906 = vshrl.u32 %v628, 16
  %v908 = vrot.slane %v906, 7
  %v909 = vshll.u32 %v628, 16
  %v911 = vor.u32 %v908, %v909
  %v912 = vsel %vm153, %v904, %v911
  %v914 = vshrl.u32 %v629, 16
  %v916 = vrot.slane %v914, 7
  %v918 = vshrl.u32 %v630, 16
  %v920 = vrot.slane %v918, 7
  %v921 = vshll.u32 %v630, 16
  %v923 = vor.u32 %v920, %v921
  %v924 = vsel %vm153, %v916, %v923
  %v926 = vshrl.u32 %v631, 16
  %v928 = vrot.slane %v926, 7
  %v930 = vshrl.u32 %v632, 16
  %v932 = vrot.slane %v930, 7
  %v933 = vshll.u32 %v632, 16
  %v935 = vor.u32 %v932, %v933
  %v936 = vsel %vm153, %v928, %v935
  %v938 = vshrl.u32 %v633, 16
  %v940 = vrot.slane %v938, 7
  %v942 = vshrl.u32 %v634, 16
  %v944 = vrot.slane %v942, 7
  %v945 = vshll.u32 %v634, 16
  %v947 = vor.u32 %v944, %v945
  %v948 = vsel %vm153, %v940, %v947
  %v950 = vshrl.u32 %v635, 16
  %v952 = vrot.slane %v950, 7
  %v954 = vshrl.u32 %v636, 16
  %v956 = vrot.slane %v954, 7
  %v957 = vshll.u32 %v636, 16
  %v959 = vor.u32 %v956, %v957
  %v960 = vsel %vm153, %v952, %v959
  %v962 = vshrl.u32 %v637, 16
  %v964 = vrot.slane %v962, 7
  %v966 = vshrl.u32 %v638, 16
  %v968 = vrot.slane %v966, 7
  %v969 = vshll.u32 %v638, 16
  %v971 = vor.u32 %v968, %v969
  %v972 = vsel %vm153, %v964, %v971
  %v974 = vshrl.u32 %v639, 16
  %v976 = vrot.slane %v974, 7
  %v978 = vshrl.u32 %v640, 16
  %v980 = vrot.slane %v978, 7
  %v981 = vshll.u32 %v640, 16
  %v983 = vor.u32 %v980, %v981
  %v984 = vsel %vm153, %v976, %v983
  %v986 = vshrl.u32 %v641, 16
  %v988 = vrot.slane %v986, 7
  %v990 = vshrl.u32 %v642, 16
  %v992 = vrot.slane %v990, 7
  %v993 = vshll.u32 %v642, 16
  %v995 = vor.u32 %v992, %v993
  %v996 = vsel %vm153, %v988, %v995
  %v998 = vshrl.u32 %v643, 16
  %v1000 = vrot.slane %v998, 7
  %v1002 = vshrl.u32 %v644, 16
  %v1004 = vrot.slane %v1002, 7
  %v1005 = vshll.u32 %v644, 16
  %v1007 = vor.u32 %v1004, %v1005
  %v1008 = vsel %vm153, %v1000, %v1007
  %v1010 = vshrl.u32 %v645, 16
  %v1012 = vrot.slane %v1010, 7
  %v1014 = vshrl.u32 %v646, 16
  %v1016 = vrot.slane %v1014, 7
  %v1017 = vshll.u32 %v646, 16
  %v1019 = vor.u32 %v1016, %v1017
  %v1020 = vsel %vm153, %v1012, %v1019
  %v1022 = vshrl.u32 %v647, 16
  %v1024 = vrot.slane %v1022, 7
  %v1026 = vshrl.u32 %v648, 16
  %v1028 = vrot.slane %v1026, 7
  %v1029 = vshll.u32 %v648, 16
  %v1031 = vor.u32 %v1028, %v1029
  %v1032 = vsel %vm153, %v1024, %v1031
  %1065 = vst.msk [vmem:[#allocation3] sm:$0xff] %vm27, %v660
  %1066 = vst.msk [vmem:[#allocation3 + $0x8] sm:$0xff] %vm27, %v672
  %1067 = vst.msk [vmem:[#allocation3 + $0x10] sm:$0xff] %vm27, %v684
  %1068 = vst.msk [vmem:[#allocation3 + $0x18] sm:$0xff] %vm27, %v696
  %1069 = vst.msk [vmem:[#allocation3 + $0x20] sm:$0xff] %vm27, %v708
  %1070 = vst.msk [vmem:[#allocation3 + $0x28] sm:$0xff] %vm27, %v720
  %1071 = vst.msk [vmem:[#allocation3 + $0x30] sm:$0xff] %vm27, %v732
  %1072 = vst.msk [vmem:[#allocation3 + $0x38] sm:$0xff] %vm27, %v744
  %1073 = vst.msk [vmem:[#allocation3 + $0x40] sm:$0xff] %vm27, %v756
  %1074 = vst.msk [vmem:[#allocation3 + $0x48] sm:$0xff] %vm27, %v768
  %1075 = vst.msk [vmem:[#allocation3 + $0x50] sm:$0xff] %vm27, %v780
  %1076 = vst.msk [vmem:[#allocation3 + $0x58] sm:$0xff] %vm27, %v792
  %1077 = vst.msk [vmem:[#allocation3 + $0x60] sm:$0xff] %vm27, %v804
  %1078 = vst.msk [vmem:[#allocation3 + $0x68] sm:$0xff] %vm27, %v816
  %1079 = vst.msk [vmem:[#allocation3 + $0x70] sm:$0xff] %vm27, %v828
  %1080 = vst.msk [vmem:[#allocation3 + $0x78] sm:$0xff] %vm27, %v840
  %1081 = vst.msk [vmem:[#allocation3 + $0x80] sm:$0xff] %vm27, %v852
  %1082 = vst.msk [vmem:[#allocation3 + $0x88] sm:$0xff] %vm27, %v864
  %1083 = vst.msk [vmem:[#allocation3 + $0x90] sm:$0xff] %vm27, %v876
  %1084 = vst.msk [vmem:[#allocation3 + $0x98] sm:$0xff] %vm27, %v888
  %1085 = vst.msk [vmem:[#allocation3 + $0xa0] sm:$0xff] %vm27, %v900
  %1086 = vst.msk [vmem:[#allocation3 + $0xa8] sm:$0xff] %vm27, %v912
  %1087 = vst.msk [vmem:[#allocation3 + $0xb0] sm:$0xff] %vm27, %v924
  %1088 = vst.msk [vmem:[#allocation3 + $0xb8] sm:$0xff] %vm27, %v936
  %1089 = vst.msk [vmem:[#allocation3 + $0xc0] sm:$0xff] %vm27, %v948
  %1090 = vst.msk [vmem:[#allocation3 + $0xc8] sm:$0xff] %vm27, %v960
  %1091 = vst.msk [vmem:[#allocation3 + $0xd0] sm:$0xff] %vm27, %v972
  %1092 = vst.msk [vmem:[#allocation3 + $0xd8] sm:$0xff] %vm27, %v984
  %1093 = vst.msk [vmem:[#allocation3 + $0xe0] sm:$0xff] %vm27, %v996
  %1094 = vst.msk [vmem:[#allocation3 + $0xe8] sm:$0xff] %vm27, %v1008
  %1095 = vst.msk [vmem:[#allocation3 + $0xf0] sm:$0xff] %vm27, %v1020
  %1096 = vst.msk [vmem:[#allocation3 + $0xf8] sm:$0xff] %vm27, %v1032
  %v1097 = vld [vmem:[#allocation2 + $0x8] sm:$0xff]
  %v1098 = vld [vmem:[#allocation2 + $0x20] sm:$0xff]
  %v1099 = vld [vmem:[#allocation2 + $0x38] sm:$0xff]
  %v1100 = vld [vmem:[#allocation2 + $0x50] sm:$0xff]
  %v1101 = vld [vmem:[#allocation2 + $0x68] sm:$0xff]
  %v1102 = vld [vmem:[#allocation2 + $0x80] sm:$0xff]
  %v1103 = vld [vmem:[#allocation2 + $0x98] sm:$0xff]
  %v1104 = vld [vmem:[#allocation2 + $0xb0] sm:$0xff]
  %v1105 = vld [vmem:[#allocation2 + $0xc8] sm:$0xff]
  %v1106 = vld [vmem:[#allocation2 + $0xe0] sm:$0xff]
  %v1107 = vld [vmem:[#allocation2 + $0xf8] sm:$0xff]
  %v1108 = vld [vmem:[#allocation2 + $0x110] sm:$0xff]
  %v1109 = vld [vmem:[#allocation2 + $0x128] sm:$0xff]
  %v1110 = vld [vmem:[#allocation2 + $0x140] sm:$0xff]
  %v1111 = vld [vmem:[#allocation2 + $0x158] sm:$0xff]
  %v1112 = vld [vmem:[#allocation2 + $0x170] sm:$0xff]
  %v1113 = vld [vmem:[#allocation2 + $0x1b8] sm:$0xff]
  %v1114 = vld [vmem:[#allocation2 + $0x1d0] sm:$0xff]
  %v1115 = vld [vmem:[#allocation2 + $0x1e8] sm:$0xff]
  %v1116 = vld [vmem:[#allocation2 + $0x200] sm:$0xff]
  %v1117 = vld [vmem:[#allocation2 + $0x218] sm:$0xff]
  %v1118 = vld [vmem:[#allocation2 + $0x230] sm:$0xff]
  %v1119 = vld [vmem:[#allocation2 + $0x248] sm:$0xff]
  %v1120 = vld [vmem:[#allocation2 + $0x260] sm:$0xff]
  %v1121 = vld [vmem:[#allocation2 + $0x278] sm:$0xff]
  %v1122 = vld [vmem:[#allocation2 + $0x290] sm:$0xff]
  %v1123 = vld [vmem:[#allocation2 + $0x2a8] sm:$0xff]
  %v1124 = vld [vmem:[#allocation2 + $0x2c0] sm:$0xff]
  %v1125 = vld [vmem:[#allocation2 + $0x2d8] sm:$0xff]
  %v1126 = vld [vmem:[#allocation2 + $0x2f0] sm:$0xff]
  %v1127 = vld [vmem:[#allocation2 + $0x308] sm:$0xff]
  %v1128 = vld [vmem:[#allocation2 + $0x320] sm:$0xff]
  %1161 = vrot.lane.b32.xlu0 %v1097, 4
  %v1162 = vpop.permute.xlu0 %1161
  %1163 = vrot.lane.b32.xlu0 %v1098, 4
  %v1164 = vpop.permute.xlu0 %1163
  %1165 = vrot.lane.b32.xlu0 %v1099, 4
  %v1166 = vpop.permute.xlu0 %1165
  %1167 = vrot.lane.b32.xlu0 %v1100, 4
  %v1168 = vpop.permute.xlu0 %1167
  %1169 = vrot.lane.b32.xlu0 %v1101, 4
  %v1170 = vpop.permute.xlu0 %1169
  %1171 = vrot.lane.b32.xlu0 %v1102, 4
  %v1172 = vpop.permute.xlu0 %1171
  %1173 = vrot.lane.b32.xlu0 %v1103, 4
  %v1174 = vpop.permute.xlu0 %1173
  %1175 = vrot.lane.b32.xlu0 %v1104, 4
  %v1176 = vpop.permute.xlu0 %1175
  %1177 = vrot.lane.b32.xlu0 %v1105, 4
  %v1178 = vpop.permute.xlu0 %1177
  %1179 = vrot.lane.b32.xlu0 %v1106, 4
  %v1180 = vpop.permute.xlu0 %1179
  %1181 = vrot.lane.b32.xlu0 %v1107, 4
  %v1182 = vpop.permute.xlu0 %1181
  %1183 = vrot.lane.b32.xlu0 %v1108, 4
  %v1184 = vpop.permute.xlu0 %1183
  %1185 = vrot.lane.b32.xlu0 %v1109, 4
  %v1186 = vpop.permute.xlu0 %1185
  %1187 = vrot.lane.b32.xlu0 %v1110, 4
  %v1188 = vpop.permute.xlu0 %1187
  %1189 = vrot.lane.b32.xlu0 %v1111, 4
  %v1190 = vpop.permute.xlu0 %1189
  %1191 = vrot.lane.b32.xlu0 %v1112, 4
  %v1192 = vpop.permute.xlu0 %1191
  %1193 = vrot.lane.b32.xlu0 %v1113, 4
  %v1194 = vpop.permute.xlu0 %1193
  %1195 = vrot.lane.b32.xlu0 %v1114, 4
  %v1196 = vpop.permute.xlu0 %1195
  %1197 = vrot.lane.b32.xlu0 %v1115, 4
  %v1198 = vpop.permute.xlu0 %1197
  %1199 = vrot.lane.b32.xlu0 %v1116, 4
  %v1200 = vpop.permute.xlu0 %1199
  %1201 = vrot.lane.b32.xlu0 %v1117, 4
  %v1202 = vpop.permute.xlu0 %1201
  %1203 = vrot.lane.b32.xlu0 %v1118, 4
  %v1204 = vpop.permute.xlu0 %1203
  %1205 = vrot.lane.b32.xlu0 %v1119, 4
  %v1206 = vpop.permute.xlu0 %1205
  %1207 = vrot.lane.b32.xlu0 %v1120, 4
  %v1208 = vpop.permute.xlu0 %1207
  %1209 = vrot.lane.b32.xlu0 %v1121, 4
  %v1210 = vpop.permute.xlu0 %1209
  %1211 = vrot.lane.b32.xlu0 %v1122, 4
  %v1212 = vpop.permute.xlu0 %1211
  %1213 = vrot.lane.b32.xlu0 %v1123, 4
  %v1214 = vpop.permute.xlu0 %1213
  %1215 = vrot.lane.b32.xlu0 %v1124, 4
  %v1216 = vpop.permute.xlu0 %1215
  %1217 = vrot.lane.b32.xlu0 %v1125, 4
  %v1218 = vpop.permute.xlu0 %1217
  %1219 = vrot.lane.b32.xlu0 %v1126, 4
  %v1220 = vpop.permute.xlu0 %1219
  %1221 = vrot.lane.b32.xlu0 %v1127, 4
  %v1222 = vpop.permute.xlu0 %1221
  %1223 = vrot.lane.b32.xlu0 %v1128, 4
  %v1224 = vpop.permute.xlu0 %1223
  %vm1257 = vcmask 64544
  %1258 = vst.msk [vmem:[#allocation3] sm:$0xff] %vm1257, %v1162
  %1259 = vst.msk [vmem:[#allocation3 + $0x8] sm:$0xff] %vm1257, %v1164
  %1260 = vst.msk [vmem:[#allocation3 + $0x10] sm:$0xff] %vm1257, %v1166
  %1261 = vst.msk [vmem:[#allocation3 + $0x18] sm:$0xff] %vm1257, %v1168
  %1262 = vst.msk [vmem:[#allocation3 + $0x20] sm:$0xff] %vm1257, %v1170
  %1263 = vst.msk [vmem:[#allocation3 + $0x28] sm:$0xff] %vm1257, %v1172
  %1264 = vst.msk [vmem:[#allocation3 + $0x30] sm:$0xff] %vm1257, %v1174
  %1265 = vst.msk [vmem:[#allocation3 + $0x38] sm:$0xff] %vm1257, %v1176
  %1266 = vst.msk [vmem:[#allocation3 + $0x40] sm:$0xff] %vm1257, %v1178
  %1267 = vst.msk [vmem:[#allocation3 + $0x48] sm:$0xff] %vm1257, %v1180
  %1268 = vst.msk [vmem:[#allocation3 + $0x50] sm:$0xff] %vm1257, %v1182
  %1269 = vst.msk [vmem:[#allocation3 + $0x58] sm:$0xff] %vm1257, %v1184
  %1270 = vst.msk [vmem:[#allocation3 + $0x60] sm:$0xff] %vm1257, %v1186
  %1271 = vst.msk [vmem:[#allocation3 + $0x68] sm:$0xff] %vm1257, %v1188
  %1272 = vst.msk [vmem:[#allocation3 + $0x70] sm:$0xff] %vm1257, %v1190
  %1273 = vst.msk [vmem:[#allocation3 + $0x78] sm:$0xff] %vm1257, %v1192
  %1274 = vst.msk [vmem:[#allocation3 + $0x80] sm:$0xff] %vm1257, %v1194
  %1275 = vst.msk [vmem:[#allocation3 + $0x88] sm:$0xff] %vm1257, %v1196
  %1276 = vst.msk [vmem:[#allocation3 + $0x90] sm:$0xff] %vm1257, %v1198
  %1277 = vst.msk [vmem:[#allocation3 + $0x98] sm:$0xff] %vm1257, %v1200
  %1278 = vst.msk [vmem:[#allocation3 + $0xa0] sm:$0xff] %vm1257, %v1202
  %1279 = vst.msk [vmem:[#allocation3 + $0xa8] sm:$0xff] %vm1257, %v1204
  %1280 = vst.msk [vmem:[#allocation3 + $0xb0] sm:$0xff] %vm1257, %v1206
  %1281 = vst.msk [vmem:[#allocation3 + $0xb8] sm:$0xff] %vm1257, %v1208
  %1282 = vst.msk [vmem:[#allocation3 + $0xc0] sm:$0xff] %vm1257, %v1210
  %1283 = vst.msk [vmem:[#allocation3 + $0xc8] sm:$0xff] %vm1257, %v1212
  %1284 = vst.msk [vmem:[#allocation3 + $0xd0] sm:$0xff] %vm1257, %v1214
  %1285 = vst.msk [vmem:[#allocation3 + $0xd8] sm:$0xff] %vm1257, %v1216
  %1286 = vst.msk [vmem:[#allocation3 + $0xe0] sm:$0xff] %vm1257, %v1218
  %1287 = vst.msk [vmem:[#allocation3 + $0xe8] sm:$0xff] %vm1257, %v1220
  %1288 = vst.msk [vmem:[#allocation3 + $0xf0] sm:$0xff] %vm1257, %v1222
  %1289 = vst.msk [vmem:[#allocation3 + $0xf8] sm:$0xff] %vm1257, %v1224
  %v1290 = vld [vmem:[#allocation2 + $0x8] sm:$0xff]
  %v1291 = vld [vmem:[#allocation2 + $0x10] sm:$0x1]
  %v1292 = vld [vmem:[#allocation2 + $0x20] sm:$0xff]
  %v1293 = vld [vmem:[#allocation2 + $0x28] sm:$0x1]
  %v1294 = vld [vmem:[#allocation2 + $0x38] sm:$0xff]
  %v1295 = vld [vmem:[#allocation2 + $0x40] sm:$0x1]
  %v1296 = vld [vmem:[#allocation2 + $0x50] sm:$0xff]
  %v1297 = vld [vmem:[#allocation2 + $0x58] sm:$0x1]
  %v1298 = vld [vmem:[#allocation2 + $0x68] sm:$0xff]
  %v1299 = vld [vmem:[#allocation2 + $0x70] sm:$0x1]
  %v1300 = vld [vmem:[#allocation2 + $0x80] sm:$0xff]
  %v1301 = vld [vmem:[#allocation2 + $0x88] sm:$0x1]
  %v1302 = vld [vmem:[#allocation2 + $0x98] sm:$0xff]
  %v1303 = vld [vmem:[#allocation2 + $0xa0] sm:$0x1]
  %v1304 = vld [vmem:[#allocation2 + $0xb0] sm:$0xff]
  %v1305 = vld [vmem:[#allocation2 + $0xb8] sm:$0x1]
  %v1306 = vld [vmem:[#allocation2 + $0xc8] sm:$0xff]
  %v1307 = vld [vmem:[#allocation2 + $0xd0] sm:$0x1]
  %v1308 = vld [vmem:[#allocation2 + $0xe0] sm:$0xff]
  %v1309 = vld [vmem:[#allocation2 + $0xe8] sm:$0x1]
  %v1310 = vld [vmem:[#allocation2 + $0xf8] sm:$0xff]
  %v1311 = vld [vmem:[#allocation2 + $0x100] sm:$0x1]
  %v1312 = vld [vmem:[#allocation2 + $0x110] sm:$0xff]
  %v1313 = vld [vmem:[#allocation2 + $0x118] sm:$0x1]
  %v1314 = vld [vmem:[#allocation2 + $0x128] sm:$0xff]
  %v1315 = vld [vmem:[#allocation2 + $0x130] sm:$0x1]
  %v1316 = vld [vmem:[#allocation2 + $0x140] sm:$0xff]
  %v1317 = vld [vmem:[#allocation2 + $0x148] sm:$0x1]
  %v1318 = vld [vmem:[#allocation2 + $0x158] sm:$0xff]
  %v1319 = vld [vmem:[#allocation2 + $0x160] sm:$0x1]
  %v1320 = vld [vmem:[#allocation2 + $0x170] sm:$0xff]
  %v1321 = vld [vmem:[#allocation2 + $0x178] sm:$0x1]
  %v1322 = vld [vmem:[#allocation2 + $0x1b8] sm:$0xff]
  %v1323 = vld [vmem:[#allocation2 + $0x1c0] sm:$0x1]
  %v1324 = vld [vmem:[#allocation2 + $0x1d0] sm:$0xff]
  %v1325 = vld [vmem:[#allocation2 + $0x1d8] sm:$0x1]
  %v1326 = vld [vmem:[#allocation2 + $0x1e8] sm:$0xff]
  %v1327 = vld [vmem:[#allocation2 + $0x1f0] sm:$0x1]
  %v1328 = vld [vmem:[#allocation2 + $0x200] sm:$0xff]
  %v1329 = vld [vmem:[#allocation2 + $0x208] sm:$0x1]
  %v1330 = vld [vmem:[#allocation2 + $0x218] sm:$0xff]
  %v1331 = vld [vmem:[#allocation2 + $0x220] sm:$0x1]
  %v1332 = vld [vmem:[#allocation2 + $0x230] sm:$0xff]
  %v1333 = vld [vmem:[#allocation2 + $0x238] sm:$0x1]
  %v1334 = vld [vmem:[#allocation2 + $0x248] sm:$0xff]
  %v1335 = vld [vmem:[#allocation2 + $0x250] sm:$0x1]
  %v1336 = vld [vmem:[#allocation2 + $0x260] sm:$0xff]
  %v1337 = vld [vmem:[#allocation2 + $0x268] sm:$0x1]
  %v1338 = vld [vmem:[#allocation2 + $0x278] sm:$0xff]
  %v1339 = vld [vmem:[#allocation2 + $0x280] sm:$0x1]
  %v1340 = vld [vmem:[#allocation2 + $0x290] sm:$0xff]
  %v1341 = vld [vmem:[#allocation2 + $0x298] sm:$0x1]
  %v1342 = vld [vmem:[#allocation2 + $0x2a8] sm:$0xff]
  %v1343 = vld [vmem:[#allocation2 + $0x2b0] sm:$0x1]
  %v1344 = vld [vmem:[#allocation2 + $0x2c0] sm:$0xff]
  %v1345 = vld [vmem:[#allocation2 + $0x2c8] sm:$0x1]
  %v1346 = vld [vmem:[#allocation2 + $0x2d8] sm:$0xff]
  %v1347 = vld [vmem:[#allocation2 + $0x2e0] sm:$0x1]
  %v1348 = vld [vmem:[#allocation2 + $0x2f0] sm:$0xff]
  %v1349 = vld [vmem:[#allocation2 + $0x2f8] sm:$0x1]
  %v1350 = vld [vmem:[#allocation2 + $0x308] sm:$0xff]
  %v1351 = vld [vmem:[#allocation2 + $0x310] sm:$0x1]
  %v1352 = vld [vmem:[#allocation2 + $0x320] sm:$0xff]
  %v1353 = vld [vmem:[#allocation2 + $0x328] sm:$0x1]
  %vm1354 = vsmask.f32 7424
  %v1356 = vshrl.u32 %v1290, 16
  %v1358 = vshll.u32 %v1290, 16
  %v1360 = vrot.slane %v1358, 1
  %v1361 = vor.u32 %v1356, %v1360
  %v1363 = vshll.u32 %v1291, 16
  %v1365 = vrot.slane %v1363, 1
  %v1366 = vsel %vm1354, %v1361, %v1365
  %v1368 = vshrl.u32 %v1292, 16
  %v1370 = vshll.u32 %v1292, 16
  %v1372 = vrot.slane %v1370, 1
  %v1373 = vor.u32 %v1368, %v1372
  %v1375 = vshll.u32 %v1293, 16
  %v1377 = vrot.slane %v1375, 1
  %v1378 = vsel %vm1354, %v1373, %v1377
  %v1380 = vshrl.u32 %v1294, 16
  %v1382 = vshll.u32 %v1294, 16
  %v1384 = vrot.slane %v1382, 1
  %v1385 = vor.u32 %v1380, %v1384
  %v1387 = vshll.u32 %v1295, 16
  %v1389 = vrot.slane %v1387, 1
  %v1390 = vsel %vm1354, %v1385, %v1389
  %v1392 = vshrl.u32 %v1296, 16
  %v1394 = vshll.u32 %v1296, 16
  %v1396 = vrot.slane %v1394, 1
  %v1397 = vor.u32 %v1392, %v1396
  %v1399 = vshll.u32 %v1297, 16
  %v1401 = vrot.slane %v1399, 1
  %v1402 = vsel %vm1354, %v1397, %v1401
  %v1404 = vshrl.u32 %v1298, 16
  %v1406 = vshll.u32 %v1298, 16
  %v1408 = vrot.slane %v1406, 1
  %v1409 = vor.u32 %v1404, %v1408
  %v1411 = vshll.u32 %v1299, 16
  %v1413 = vrot.slane %v1411, 1
  %v1414 = vsel %vm1354, %v1409, %v1413
  %v1416 = vshrl.u32 %v1300, 16
  %v1418 = vshll.u32 %v1300, 16
  %v1420 = vrot.slane %v1418, 1
  %v1421 = vor.u32 %v1416, %v1420
  %v1423 = vshll.u32 %v1301, 16
  %v1425 = vrot.slane %v1423, 1
  %v1426 = vsel %vm1354, %v1421, %v1425
  %v1428 = vshrl.u32 %v1302, 16
  %v1430 = vshll.u32 %v1302, 16
  %v1432 = vrot.slane %v1430, 1
  %v1433 = vor.u32 %v1428, %v1432
  %v1435 = vshll.u32 %v1303, 16
  %v1437 = vrot.slane %v1435, 1
  %v1438 = vsel %vm1354, %v1433, %v1437
  %v1440 = vshrl.u32 %v1304, 16
  %v1442 = vshll.u32 %v1304, 16
  %v1444 = vrot.slane %v1442, 1
  %v1445 = vor.u32 %v1440, %v1444
  %v1447 = vshll.u32 %v1305, 16
  %v1449 = vrot.slane %v1447, 1
  %v1450 = vsel %vm1354, %v1445, %v1449
  %v1452 = vshrl.u32 %v1306, 16
  %v1454 = vshll.u32 %v1306, 16
  %v1456 = vrot.slane %v1454, 1
  %v1457 = vor.u32 %v1452, %v1456
  %v1459 = vshll.u32 %v1307, 16
  %v1461 = vrot.slane %v1459, 1
  %v1462 = vsel %vm1354, %v1457, %v1461
  %v1464 = vshrl.u32 %v1308, 16
  %v1466 = vshll.u32 %v1308, 16
  %v1468 = vrot.slane %v1466, 1
  %v1469 = vor.u32 %v1464, %v1468
  %v1471 = vshll.u32 %v1309, 16
  %v1473 = vrot.slane %v1471, 1
  %v1474 = vsel %vm1354, %v1469, %v1473
  %v1476 = vshrl.u32 %v1310, 16
  %v1478 = vshll.u32 %v1310, 16
  %v1480 = vrot.slane %v1478, 1
  %v1481 = vor.u32 %v1476, %v1480
  %v1483 = vshll.u32 %v1311, 16
  %v1485 = vrot.slane %v1483, 1
  %v1486 = vsel %vm1354, %v1481, %v1485
  %v1488 = vshrl.u32 %v1312, 16
  %v1490 = vshll.u32 %v1312, 16
  %v1492 = vrot.slane %v1490, 1
  %v1493 = vor.u32 %v1488, %v1492
  %v1495 = vshll.u32 %v1313, 16
  %v1497 = vrot.slane %v1495, 1
  %v1498 = vsel %vm1354, %v1493, %v1497
  %v1500 = vshrl.u32 %v1314, 16
  %v1502 = vshll.u32 %v1314, 16
  %v1504 = vrot.slane %v1502, 1
  %v1505 = vor.u32 %v1500, %v1504
  %v1507 = vshll.u32 %v1315, 16
  %v1509 = vrot.slane %v1507, 1
  %v1510 = vsel %vm1354, %v1505, %v1509
  %v1512 = vshrl.u32 %v1316, 16
  %v1514 = vshll.u32 %v1316, 16
  %v1516 = vrot.slane %v1514, 1
  %v1517 = vor.u32 %v1512, %v1516
  %v1519 = vshll.u32 %v1317, 16
  %v1521 = vrot.slane %v1519, 1
  %v1522 = vsel %vm1354, %v1517, %v1521
  %v1524 = vshrl.u32 %v1318, 16
  %v1526 = vshll.u32 %v1318, 16
  %v1528 = vrot.slane %v1526, 1
  %v1529 = vor.u32 %v1524, %v1528
  %v1531 = vshll.u32 %v1319, 16
  %v1533 = vrot.slane %v1531, 1
  %v1534 = vsel %vm1354, %v1529, %v1533
  %v1536 = vshrl.u32 %v1320, 16
  %v1538 = vshll.u32 %v1320, 16
  %v1540 = vrot.slane %v1538, 1
  %v1541 = vor.u32 %v1536, %v1540
  %v1543 = vshll.u32 %v1321, 16
  %v1545 = vrot.slane %v1543, 1
  %v1546 = vsel %vm1354, %v1541, %v1545
  %v1548 = vshrl.u32 %v1322, 16
  %v1550 = vshll.u32 %v1322, 16
  %v1552 = vrot.slane %v1550, 1
  %v1553 = vor.u32 %v1548, %v1552
  %v1555 = vshll.u32 %v1323, 16
  %v1557 = vrot.slane %v1555, 1
  %v1558 = vsel %vm1354, %v1553, %v1557
  %v1560 = vshrl.u32 %v1324, 16
  %v1562 = vshll.u32 %v1324, 16
  %v1564 = vrot.slane %v1562, 1
  %v1565 = vor.u32 %v1560, %v1564
  %v1567 = vshll.u32 %v1325, 16
  %v1569 = vrot.slane %v1567, 1
  %v1570 = vsel %vm1354, %v1565, %v1569
  %v1572 = vshrl.u32 %v1326, 16
  %v1574 = vshll.u32 %v1326, 16
  %v1576 = vrot.slane %v1574, 1
  %v1577 = vor.u32 %v1572, %v1576
  %v1579 = vshll.u32 %v1327, 16
  %v1581 = vrot.slane %v1579, 1
  %v1582 = vsel %vm1354, %v1577, %v1581
  %v1584 = vshrl.u32 %v1328, 16
  %v1586 = vshll.u32 %v1328, 16
  %v1588 = vrot.slane %v1586, 1
  %v1589 = vor.u32 %v1584, %v1588
  %v1591 = vshll.u32 %v1329, 16
  %v1593 = vrot.slane %v1591, 1
  %v1594 = vsel %vm1354, %v1589, %v1593
  %v1596 = vshrl.u32 %v1330, 16
  %v1598 = vshll.u32 %v1330, 16
  %v1600 = vrot.slane %v1598, 1
  %v1601 = vor.u32 %v1596, %v1600
  %v1603 = vshll.u32 %v1331, 16
  %v1605 = vrot.slane %v1603, 1
  %v1606 = vsel %vm1354, %v1601, %v1605
  %v1608 = vshrl.u32 %v1332, 16
  %v1610 = vshll.u32 %v1332, 16
  %v1612 = vrot.slane %v1610, 1
  %v1613 = vor.u32 %v1608, %v1612
  %v1615 = vshll.u32 %v1333, 16
  %v1617 = vrot.slane %v1615, 1
  %v1618 = vsel %vm1354, %v1613, %v1617
  %v1620 = vshrl.u32 %v1334, 16
  %v1622 = vshll.u32 %v1334, 16
  %v1624 = vrot.slane %v1622, 1
  %v1625 = vor.u32 %v1620, %v1624
  %v1627 = vshll.u32 %v1335, 16
  %v1629 = vrot.slane %v1627, 1
  %v1630 = vsel %vm1354, %v1625, %v1629
  %v1632 = vshrl.u32 %v1336, 16
  %v1634 = vshll.u32 %v1336, 16
  %v1636 = vrot.slane %v1634, 1
  %v1637 = vor.u32 %v1632, %v1636
  %v1639 = vshll.u32 %v1337, 16
  %v1641 = vrot.slane %v1639, 1
  %v1642 = vsel %vm1354, %v1637, %v1641
  %v1644 = vshrl.u32 %v1338, 16
  %v1646 = vshll.u32 %v1338, 16
  %v1648 = vrot.slane %v1646, 1
  %v1649 = vor.u32 %v1644, %v1648
  %v1651 = vshll.u32 %v1339, 16
  %v1653 = vrot.slane %v1651, 1
  %v1654 = vsel %vm1354, %v1649, %v1653
  %v1656 = vshrl.u32 %v1340, 16
  %v1658 = vshll.u32 %v1340, 16
  %v1660 = vrot.slane %v1658, 1
  %v1661 = vor.u32 %v1656, %v1660
  %v1663 = vshll.u32 %v1341, 16
  %v1665 = vrot.slane %v1663, 1
  %v1666 = vsel %vm1354, %v1661, %v1665
  %v1668 = vshrl.u32 %v1342, 16
  %v1670 = vshll.u32 %v1342, 16
  %v1672 = vrot.slane %v1670, 1
  %v1673 = vor.u32 %v1668, %v1672
  %v1675 = vshll.u32 %v1343, 16
  %v1677 = vrot.slane %v1675, 1
  %v1678 = vsel %vm1354, %v1673, %v1677
  %v1680 = vshrl.u32 %v1344, 16
  %v1682 = vshll.u32 %v1344, 16
  %v1684 = vrot.slane %v1682, 1
  %v1685 = vor.u32 %v1680, %v1684
  %v1687 = vshll.u32 %v1345, 16
  %v1689 = vrot.slane %v1687, 1
  %v1690 = vsel %vm1354, %v1685, %v1689
  %v1692 = vshrl.u32 %v1346, 16
  %v1694 = vshll.u32 %v1346, 16
  %v1696 = vrot.slane %v1694, 1
  %v1697 = vor.u32 %v1692, %v1696
  %v1699 = vshll.u32 %v1347, 16
  %v1701 = vrot.slane %v1699, 1
  %v1702 = vsel %vm1354, %v1697, %v1701
  %v1704 = vshrl.u32 %v1348, 16
  %v1706 = vshll.u32 %v1348, 16
  %v1708 = vrot.slane %v1706, 1
  %v1709 = vor.u32 %v1704, %v1708
  %v1711 = vshll.u32 %v1349, 16
  %v1713 = vrot.slane %v1711, 1
  %v1714 = vsel %vm1354, %v1709, %v1713
  %v1716 = vshrl.u32 %v1350, 16
  %v1718 = vshll.u32 %v1350, 16
  %v1720 = vrot.slane %v1718, 1
  %v1721 = vor.u32 %v1716, %v1720
  %v1723 = vshll.u32 %v1351, 16
  %v1725 = vrot.slane %v1723, 1
  %v1726 = vsel %vm1354, %v1721, %v1725
  %v1728 = vshrl.u32 %v1352, 16
  %v1730 = vshll.u32 %v1352, 16
  %v1732 = vrot.slane %v1730, 1
  %v1733 = vor.u32 %v1728, %v1732
  %v1735 = vshll.u32 %v1353, 16
  %v1737 = vrot.slane %v1735, 1
  %v1738 = vsel %vm1354, %v1733, %v1737
  %1739 = vrot.lane.b32.xlu0 %v1366, 8
  %v1740 = vpop.permute.xlu0 %1739
  %1741 = vrot.lane.b32.xlu0 %v1378, 8
  %v1742 = vpop.permute.xlu0 %1741
  %1743 = vrot.lane.b32.xlu0 %v1390, 8
  %v1744 = vpop.permute.xlu0 %1743
  %1745 = vrot.lane.b32.xlu0 %v1402, 8
  %v1746 = vpop.permute.xlu0 %1745
  %1747 = vrot.lane.b32.xlu0 %v1414, 8
  %v1748 = vpop.permute.xlu0 %1747
  %1749 = vrot.lane.b32.xlu0 %v1426, 8
  %v1750 = vpop.permute.xlu0 %1749
  %1751 = vrot.lane.b32.xlu0 %v1438, 8
  %v1752 = vpop.permute.xlu0 %1751
  %1753 = vrot.lane.b32.xlu0 %v1450, 8
  %v1754 = vpop.permute.xlu0 %1753
  %1755 = vrot.lane.b32.xlu0 %v1462, 8
  %v1756 = vpop.permute.xlu0 %1755
  %1757 = vrot.lane.b32.xlu0 %v1474, 8
  %v1758 = vpop.permute.xlu0 %1757
  %1759 = vrot.lane.b32.xlu0 %v1486, 8
  %v1760 = vpop.permute.xlu0 %1759
  %1761 = vrot.lane.b32.xlu0 %v1498, 8
  %v1762 = vpop.permute.xlu0 %1761
  %1763 = vrot.lane.b32.xlu0 %v1510, 8
  %v1764 = vpop.permute.xlu0 %1763
  %1765 = vrot.lane.b32.xlu0 %v1522, 8
  %v1766 = vpop.permute.xlu0 %1765
  %1767 = vrot.lane.b32.xlu0 %v1534, 8
  %v1768 = vpop.permute.xlu0 %1767
  %1769 = vrot.lane.b32.xlu0 %v1546, 8
  %v1770 = vpop.permute.xlu0 %1769
  %1771 = vrot.lane.b32.xlu0 %v1558, 8
  %v1772 = vpop.permute.xlu0 %1771
  %1773 = vrot.lane.b32.xlu0 %v1570, 8
  %v1774 = vpop.permute.xlu0 %1773
  %1775 = vrot.lane.b32.xlu0 %v1582, 8
  %v1776 = vpop.permute.xlu0 %1775
  %1777 = vrot.lane.b32.xlu0 %v1594, 8
  %v1778 = vpop.permute.xlu0 %1777
  %1779 = vrot.lane.b32.xlu0 %v1606, 8
  %v1780 = vpop.permute.xlu0 %1779
  %1781 = vrot.lane.b32.xlu0 %v1618, 8
  %v1782 = vpop.permute.xlu0 %1781
  %1783 = vrot.lane.b32.xlu0 %v1630, 8
  %v1784 = vpop.permute.xlu0 %1783
  %1785 = vrot.lane.b32.xlu0 %v1642, 8
  %v1786 = vpop.permute.xlu0 %1785
  %1787 = vrot.lane.b32.xlu0 %v1654, 8
  %v1788 = vpop.permute.xlu0 %1787
  %1789 = vrot.lane.b32.xlu0 %v1666, 8
  %v1790 = vpop.permute.xlu0 %1789
  %1791 = vrot.lane.b32.xlu0 %v1678, 8
  %v1792 = vpop.permute.xlu0 %1791
  %1793 = vrot.lane.b32.xlu0 %v1690, 8
  %v1794 = vpop.permute.xlu0 %1793
  %1795 = vrot.lane.b32.xlu0 %v1702, 8
  %v1796 = vpop.permute.xlu0 %1795
  %1797 = vrot.lane.b32.xlu0 %v1714, 8
  %v1798 = vpop.permute.xlu0 %1797
  %1799 = vrot.lane.b32.xlu0 %v1726, 8
  %v1800 = vpop.permute.xlu0 %1799
  %1801 = vrot.lane.b32.xlu0 %v1738, 8
  %v1802 = vpop.permute.xlu0 %1801
  %vm1835 = vcmask 97344
  %1836 = vst.msk [vmem:[#allocation3] sm:$0xff] %vm1835, %v1740
  %1837 = vst.msk [vmem:[#allocation3 + $0x8] sm:$0xff] %vm1835, %v1742
  %1838 = vst.msk [vmem:[#allocation3 + $0x10] sm:$0xff] %vm1835, %v1744
  %1839 = vst.msk [vmem:[#allocation3 + $0x18] sm:$0xff] %vm1835, %v1746
  %1840 = vst.msk [vmem:[#allocation3 + $0x20] sm:$0xff] %vm1835, %v1748
  %1841 = vst.msk [vmem:[#allocation3 + $0x28] sm:$0xff] %vm1835, %v1750
  %1842 = vst.msk [vmem:[#allocation3 + $0x30] sm:$0xff] %vm1835, %v1752
  %1843 = vst.msk [vmem:[#allocation3 + $0x38] sm:$0xff] %vm1835, %v1754
  %1844 = vst.msk [vmem:[#allocation3 + $0x40] sm:$0xff] %vm1835, %v1756
  %1845 = vst.msk [vmem:[#allocation3 + $0x48] sm:$0xff] %vm1835, %v1758
  %1846 = vst.msk [vmem:[#allocation3 + $0x50] sm:$0xff] %vm1835, %v1760
  %1847 = vst.msk [vmem:[#allocation3 + $0x58] sm:$0xff] %vm1835, %v1762
  %1848 = vst.msk [vmem:[#allocation3 + $0x60] sm:$0xff] %vm1835, %v1764
  %1849 = vst.msk [vmem:[#allocation3 + $0x68] sm:$0xff] %vm1835, %v1766
  %1850 = vst.msk [vmem:[#allocation3 + $0x70] sm:$0xff] %vm1835, %v1768
  %1851 = vst.msk [vmem:[#allocation3 + $0x78] sm:$0xff] %vm1835, %v1770
  %1852 = vst.msk [vmem:[#allocation3 + $0x80] sm:$0xff] %vm1835, %v1772
  %1853 = vst.msk [vmem:[#allocation3 + $0x88] sm:$0xff] %vm1835, %v1774
  %1854 = vst.msk [vmem:[#allocation3 + $0x90] sm:$0xff] %vm1835, %v1776
  %1855 = vst.msk [vmem:[#allocation3 + $0x98] sm:$0xff] %vm1835, %v1778
  %1856 = vst.msk [vmem:[#allocation3 + $0xa0] sm:$0xff] %vm1835, %v1780
  %1857 = vst.msk [vmem:[#allocation3 + $0xa8] sm:$0xff] %vm1835, %v1782
  %1858 = vst.msk [vmem:[#allocation3 + $0xb0] sm:$0xff] %vm1835, %v1784
  %1859 = vst.msk [vmem:[#allocation3 + $0xb8] sm:$0xff] %vm1835, %v1786
  %1860 = vst.msk [vmem:[#allocation3 + $0xc0] sm:$0xff] %vm1835, %v1788
  %1861 = vst.msk [vmem:[#allocation3 + $0xc8] sm:$0xff] %vm1835, %v1790
  %1862 = vst.msk [vmem:[#allocation3 + $0xd0] sm:$0xff] %vm1835, %v1792
  %1863 = vst.msk [vmem:[#allocation3 + $0xd8] sm:$0xff] %vm1835, %v1794
  %1864 = vst.msk [vmem:[#allocation3 + $0xe0] sm:$0xff] %vm1835, %v1796
  %1865 = vst.msk [vmem:[#allocation3 + $0xe8] sm:$0xff] %vm1835, %v1798
  %1866 = vst.msk [vmem:[#allocation3 + $0xf0] sm:$0xff] %vm1835, %v1800
  %1867 = vst.msk [vmem:[#allocation3 + $0xf8] sm:$0xff] %vm1835, %v1802
  %v1868 = vld [vmem:[%s552] sm:$0x80]
  %v1869 = vld [vmem:[%s552 + $0x8] sm:$0xff]
  %v1870 = vld [vmem:[%s552 + $0x18] sm:$0x80]
  %v1871 = vld [vmem:[%s552 + $0x20] sm:$0xff]
  %v1872 = vld [vmem:[%s552 + $0x30] sm:$0x80]
  %v1873 = vld [vmem:[%s552 + $0x38] sm:$0xff]
  %v1874 = vld [vmem:[%s552 + $0x48] sm:$0x80]
  %v1875 = vld [vmem:[%s552 + $0x50] sm:$0xff]
  %v1876 = vld [vmem:[%s552 + $0x60] sm:$0x80]
  %v1877 = vld [vmem:[%s552 + $0x68] sm:$0xff]
  %v1878 = vld [vmem:[%s552 + $0x78] sm:$0x80]
  %v1879 = vld [vmem:[%s552 + $0x80] sm:$0xff]
  %v1880 = vld [vmem:[%s552 + $0x90] sm:$0x80]
  %v1881 = vld [vmem:[%s552 + $0x98] sm:$0xff]
  %v1882 = vld [vmem:[%s552 + $0xa8] sm:$0x80]
  %v1883 = vld [vmem:[%s552 + $0xb0] sm:$0xff]
  %v1884 = vld [vmem:[%s552 + $0xc0] sm:$0x80]
  %v1885 = vld [vmem:[%s552 + $0xc8] sm:$0xff]
  %v1886 = vld [vmem:[%s552 + $0xd8] sm:$0x80]
  %v1887 = vld [vmem:[%s552 + $0xe0] sm:$0xff]
  %v1888 = vld [vmem:[%s552 + $0xf0] sm:$0x80]
  %v1889 = vld [vmem:[%s552 + $0xf8] sm:$0xff]
  %v1890 = vld [vmem:[%s552 + $0x108] sm:$0x80]
  %v1891 = vld [vmem:[%s552 + $0x110] sm:$0xff]
  %v1892 = vld [vmem:[%s552 + $0x120] sm:$0x80]
  %v1893 = vld [vmem:[%s552 + $0x128] sm:$0xff]
  %v1894 = vld [vmem:[%s552 + $0x138] sm:$0x80]
  %v1895 = vld [vmem:[%s552 + $0x140] sm:$0xff]
  %v1896 = vld [vmem:[%s552 + $0x150] sm:$0x80]
  %v1897 = vld [vmem:[%s552 + $0x158] sm:$0xff]
  %v1898 = vld [vmem:[%s552 + $0x168] sm:$0x80]
  %v1899 = vld [vmem:[%s552 + $0x170] sm:$0xff]
  %v1900 = vld [vmem:[%s552 + $0x1b0] sm:$0x80]
  %v1901 = vld [vmem:[%s552 + $0x1b8] sm:$0xff]
  %v1902 = vld [vmem:[%s552 + $0x1c8] sm:$0x80]
  %v1903 = vld [vmem:[%s552 + $0x1d0] sm:$0xff]
  %v1904 = vld [vmem:[%s552 + $0x1e0] sm:$0x80]
  %v1905 = vld [vmem:[%s552 + $0x1e8] sm:$0xff]
  %v1906 = vld [vmem:[%s552 + $0x1f8] sm:$0x80]
  %v1907 = vld [vmem:[%s552 + $0x200] sm:$0xff]
  %v1908 = vld [vmem:[%s552 + $0x210] sm:$0x80]
  %v1909 = vld [vmem:[%s552 + $0x218] sm:$0xff]
  %v1910 = vld [vmem:[%s552 + $0x228] sm:$0x80]
  %v1911 = vld [vmem:[%s552 + $0x230] sm:$0xff]
  %v1912 = vld [vmem:[%s552 + $0x240] sm:$0x80]
  %v1913 = vld [vmem:[%s552 + $0x248] sm:$0xff]
  %v1914 = vld [vmem:[%s552 + $0x258] sm:$0x80]
  %v1915 = vld [vmem:[%s552 + $0x260] sm:$0xff]
  %v1916 = vld [vmem:[%s552 + $0x270] sm:$0x80]
  %v1917 = vld [vmem:[%s552 + $0x278] sm:$0xff]
  %v1918 = vld [vmem:[%s552 + $0x288] sm:$0x80]
  %v1919 = vld [vmem:[%s552 + $0x290] sm:$0xff]
  %v1920 = vld [vmem:[%s552 + $0x2a0] sm:$0x80]
  %v1921 = vld [vmem:[%s552 + $0x2a8] sm:$0xff]
  %v1922 = vld [vmem:[%s552 + $0x2b8] sm:$0x80]
  %v1923 = vld [vmem:[%s552 + $0x2c0] sm:$0xff]
  %v1924 = vld [vmem:[%s552 + $0x2d0] sm:$0x80]
  %v1925 = vld [vmem:[%s552 + $0x2d8] sm:$0xff]
  %v1926 = vld [vmem:[%s552 + $0x2e8] sm:$0x80]
  %v1927 = vld [vmem:[%s552 + $0x2f0] sm:$0xff]
  %v1928 = vld [vmem:[%s552 + $0x300] sm:$0x80]
  %v1929 = vld [vmem:[%s552 + $0x308] sm:$0xff]
  %v1930 = vld [vmem:[%s552 + $0x318] sm:$0x80]
  %v1931 = vld [vmem:[%s552 + $0x320] sm:$0xff]
  %v1933 = vshrl.u32 %v1868, 16
  %v1935 = vrot.slane %v1933, 7
  %v1937 = vshrl.u32 %v1869, 16
  %v1939 = vrot.slane %v1937, 7
  %v1940 = vshll.u32 %v1869, 16
  %v1942 = vor.u32 %v1939, %v1940
  %v1943 = vsel %vm153, %v1935, %v1942
  %v1945 = vshrl.u32 %v1870, 16
  %v1947 = vrot.slane %v1945, 7
  %v1949 = vshrl.u32 %v1871, 16
  %v1951 = vrot.slane %v1949, 7
  %v1952 = vshll.u32 %v1871, 16
  %v1954 = vor.u32 %v1951, %v1952
  %v1955 = vsel %vm153, %v1947, %v1954
  %v1957 = vshrl.u32 %v1872, 16
  %v1959 = vrot.slane %v1957, 7
  %v1961 = vshrl.u32 %v1873, 16
  %v1963 = vrot.slane %v1961, 7
  %v1964 = vshll.u32 %v1873, 16
  %v1966 = vor.u32 %v1963, %v1964
  %v1967 = vsel %vm153, %v1959, %v1966
  %v1969 = vshrl.u32 %v1874, 16
  %v1971 = vrot.slane %v1969, 7
  %v1973 = vshrl.u32 %v1875, 16
  %v1975 = vrot.slane %v1973, 7
  %v1976 = vshll.u32 %v1875, 16
  %v1978 = vor.u32 %v1975, %v1976
  %v1979 = vsel %vm153, %v1971, %v1978
  %v1981 = vshrl.u32 %v1876, 16
  %v1983 = vrot.slane %v1981, 7
  %v1985 = vshrl.u32 %v1877, 16
  %v1987 = vrot.slane %v1985, 7
  %v1988 = vshll.u32 %v1877, 16
  %v1990 = vor.u32 %v1987, %v1988
  %v1991 = vsel %vm153, %v1983, %v1990
  %v1993 = vshrl.u32 %v1878, 16
  %v1995 = vrot.slane %v1993, 7
  %v1997 = vshrl.u32 %v1879, 16
  %v1999 = vrot.slane %v1997, 7
  %v2000 = vshll.u32 %v1879, 16
  %v2002 = vor.u32 %v1999, %v2000
  %v2003 = vsel %vm153, %v1995, %v2002
  %v2005 = vshrl.u32 %v1880, 16
  %v2007 = vrot.slane %v2005, 7
  %v2009 = vshrl.u32 %v1881, 16
  %v2011 = vrot.slane %v2009, 7
  %v2012 = vshll.u32 %v1881, 16
  %v2014 = vor.u32 %v2011, %v2012
  %v2015 = vsel %vm153, %v2007, %v2014
  %v2017 = vshrl.u32 %v1882, 16
  %v2019 = vrot.slane %v2017, 7
  %v2021 = vshrl.u32 %v1883, 16
  %v2023 = vrot.slane %v2021, 7
  %v2024 = vshll.u32 %v1883, 16
  %v2026 = vor.u32 %v2023, %v2024
  %v2027 = vsel %vm153, %v2019, %v2026
  %v2029 = vshrl.u32 %v1884, 16
  %v2031 = vrot.slane %v2029, 7
  %v2033 = vshrl.u32 %v1885, 16
  %v2035 = vrot.slane %v2033, 7
  %v2036 = vshll.u32 %v1885, 16
  %v2038 = vor.u32 %v2035, %v2036
  %v2039 = vsel %vm153, %v2031, %v2038
  %v2041 = vshrl.u32 %v1886, 16
  %v2043 = vrot.slane %v2041, 7
  %v2045 = vshrl.u32 %v1887, 16
  %v2047 = vrot.slane %v2045, 7
  %v2048 = vshll.u32 %v1887, 16
  %v2050 = vor.u32 %v2047, %v2048
  %v2051 = vsel %vm153, %v2043, %v2050
  %v2053 = vshrl.u32 %v1888, 16
  %v2055 = vrot.slane %v2053, 7
  %v2057 = vshrl.u32 %v1889, 16
  %v2059 = vrot.slane %v2057, 7
  %v2060 = vshll.u32 %v1889, 16
  %v2062 = vor.u32 %v2059, %v2060
  %v2063 = vsel %vm153, %v2055, %v2062
  %v2065 = vshrl.u32 %v1890, 16
  %v2067 = vrot.slane %v2065, 7
  %v2069 = vshrl.u32 %v1891, 16
  %v2071 = vrot.slane %v2069, 7
  %v2072 = vshll.u32 %v1891, 16
  %v2074 = vor.u32 %v2071, %v2072
  %v2075 = vsel %vm153, %v2067, %v2074
  %v2077 = vshrl.u32 %v1892, 16
  %v2079 = vrot.slane %v2077, 7
  %v2081 = vshrl.u32 %v1893, 16
  %v2083 = vrot.slane %v2081, 7
  %v2084 = vshll.u32 %v1893, 16
  %v2086 = vor.u32 %v2083, %v2084
  %v2087 = vsel %vm153, %v2079, %v2086
  %v2089 = vshrl.u32 %v1894, 16
  %v2091 = vrot.slane %v2089, 7
  %v2093 = vshrl.u32 %v1895, 16
  %v2095 = vrot.slane %v2093, 7
  %v2096 = vshll.u32 %v1895, 16
  %v2098 = vor.u32 %v2095, %v2096
  %v2099 = vsel %vm153, %v2091, %v2098
  %v2101 = vshrl.u32 %v1896, 16
  %v2103 = vrot.slane %v2101, 7
  %v2105 = vshrl.u32 %v1897, 16
  %v2107 = vrot.slane %v2105, 7
  %v2108 = vshll.u32 %v1897, 16
  %v2110 = vor.u32 %v2107, %v2108
  %v2111 = vsel %vm153, %v2103, %v2110
  %v2113 = vshrl.u32 %v1898, 16
  %v2115 = vrot.slane %v2113, 7
  %v2117 = vshrl.u32 %v1899, 16
  %v2119 = vrot.slane %v2117, 7
  %v2120 = vshll.u32 %v1899, 16
  %v2122 = vor.u32 %v2119, %v2120
  %v2123 = vsel %vm153, %v2115, %v2122
  %v2125 = vshrl.u32 %v1900, 16
  %v2127 = vrot.slane %v2125, 7
  %v2129 = vshrl.u32 %v1901, 16
  %v2131 = vrot.slane %v2129, 7
  %v2132 = vshll.u32 %v1901, 16
  %v2134 = vor.u32 %v2131, %v2132
  %v2135 = vsel %vm153, %v2127, %v2134
  %v2137 = vshrl.u32 %v1902, 16
  %v2139 = vrot.slane %v2137, 7
  %v2141 = vshrl.u32 %v1903, 16
  %v2143 = vrot.slane %v2141, 7
  %v2144 = vshll.u32 %v1903, 16
  %v2146 = vor.u32 %v2143, %v2144
  %v2147 = vsel %vm153, %v2139, %v2146
  %v2149 = vshrl.u32 %v1904, 16
  %v2151 = vrot.slane %v2149, 7
  %v2153 = vshrl.u32 %v1905, 16
  %v2155 = vrot.slane %v2153, 7
  %v2156 = vshll.u32 %v1905, 16
  %v2158 = vor.u32 %v2155, %v2156
  %v2159 = vsel %vm153, %v2151, %v2158
  %v2161 = vshrl.u32 %v1906, 16
  %v2163 = vrot.slane %v2161, 7
  %v2165 = vshrl.u32 %v1907, 16
  %v2167 = vrot.slane %v2165, 7
  %v2168 = vshll.u32 %v1907, 16
  %v2170 = vor.u32 %v2167, %v2168
  %v2171 = vsel %vm153, %v2163, %v2170
  %v2173 = vshrl.u32 %v1908, 16
  %v2175 = vrot.slane %v2173, 7
  %v2177 = vshrl.u32 %v1909, 16
  %v2179 = vrot.slane %v2177, 7
  %v2180 = vshll.u32 %v1909, 16
  %v2182 = vor.u32 %v2179, %v2180
  %v2183 = vsel %vm153, %v2175, %v2182
  %v2185 = vshrl.u32 %v1910, 16
  %v2187 = vrot.slane %v2185, 7
  %v2189 = vshrl.u32 %v1911, 16
  %v2191 = vrot.slane %v2189, 7
  %v2192 = vshll.u32 %v1911, 16
  %v2194 = vor.u32 %v2191, %v2192
  %v2195 = vsel %vm153, %v2187, %v2194
  %v2197 = vshrl.u32 %v1912, 16
  %v2199 = vrot.slane %v2197, 7
  %v2201 = vshrl.u32 %v1913, 16
  %v2203 = vrot.slane %v2201, 7
  %v2204 = vshll.u32 %v1913, 16
  %v2206 = vor.u32 %v2203, %v2204
  %v2207 = vsel %vm153, %v2199, %v2206
  %v2209 = vshrl.u32 %v1914, 16
  %v2211 = vrot.slane %v2209, 7
  %v2213 = vshrl.u32 %v1915, 16
  %v2215 = vrot.slane %v2213, 7
  %v2216 = vshll.u32 %v1915, 16
  %v2218 = vor.u32 %v2215, %v2216
  %v2219 = vsel %vm153, %v2211, %v2218
  %v2221 = vshrl.u32 %v1916, 16
  %v2223 = vrot.slane %v2221, 7
  %v2225 = vshrl.u32 %v1917, 16
  %v2227 = vrot.slane %v2225, 7
  %v2228 = vshll.u32 %v1917, 16
  %v2230 = vor.u32 %v2227, %v2228
  %v2231 = vsel %vm153, %v2223, %v2230
  %v2233 = vshrl.u32 %v1918, 16
  %v2235 = vrot.slane %v2233, 7
  %v2237 = vshrl.u32 %v1919, 16
  %v2239 = vrot.slane %v2237, 7
  %v2240 = vshll.u32 %v1919, 16
  %v2242 = vor.u32 %v2239, %v2240
  %v2243 = vsel %vm153, %v2235, %v2242
  %v2245 = vshrl.u32 %v1920, 16
  %v2247 = vrot.slane %v2245, 7
  %v2249 = vshrl.u32 %v1921, 16
  %v2251 = vrot.slane %v2249, 7
  %v2252 = vshll.u32 %v1921, 16
  %v2254 = vor.u32 %v2251, %v2252
  %v2255 = vsel %vm153, %v2247, %v2254
  %v2257 = vshrl.u32 %v1922, 16
  %v2259 = vrot.slane %v2257, 7
  %v2261 = vshrl.u32 %v1923, 16
  %v2263 = vrot.slane %v2261, 7
  %v2264 = vshll.u32 %v1923, 16
  %v2266 = vor.u32 %v2263, %v2264
  %v2267 = vsel %vm153, %v2259, %v2266
  %v2269 = vshrl.u32 %v1924, 16
  %v2271 = vrot.slane %v2269, 7
  %v2273 = vshrl.u32 %v1925, 16
  %v2275 = vrot.slane %v2273, 7
  %v2276 = vshll.u32 %v1925, 16
  %v2278 = vor.u32 %v2275, %v2276
  %v2279 = vsel %vm153, %v2271, %v2278
  %v2281 = vshrl.u32 %v1926, 16
  %v2283 = vrot.slane %v2281, 7
  %v2285 = vshrl.u32 %v1927, 16
  %v2287 = vrot.slane %v2285, 7
  %v2288 = vshll.u32 %v1927, 16
  %v2290 = vor.u32 %v2287, %v2288
  %v2291 = vsel %vm153, %v2283, %v2290
  %v2293 = vshrl.u32 %v1928, 16
  %v2295 = vrot.slane %v2293, 7
  %v2297 = vshrl.u32 %v1929, 16
  %v2299 = vrot.slane %v2297, 7
  %v2300 = vshll.u32 %v1929, 16
  %v2302 = vor.u32 %v2299, %v2300
  %v2303 = vsel %vm153, %v2295, %v2302
  %v2305 = vshrl.u32 %v1930, 16
  %v2307 = vrot.slane %v2305, 7
  %v2309 = vshrl.u32 %v1931, 16
  %v2311 = vrot.slane %v2309, 7
  %v2312 = vshll.u32 %v1931, 16
  %v2314 = vor.u32 %v2311, %v2312
  %v2315 = vsel %vm153, %v2307, %v2314
  %2316 = vrot.lane.b32.xlu0 %v1943, 12
  %v2317 = vpop.permute.xlu0 %2316
  %2318 = vrot.lane.b32.xlu0 %v1955, 12
  %v2319 = vpop.permute.xlu0 %2318
  %2320 = vrot.lane.b32.xlu0 %v1967, 12
  %v2321 = vpop.permute.xlu0 %2320
  %2322 = vrot.lane.b32.xlu0 %v1979, 12
  %v2323 = vpop.permute.xlu0 %2322
  %2324 = vrot.lane.b32.xlu0 %v1991, 12
  %v2325 = vpop.permute.xlu0 %2324
  %2326 = vrot.lane.b32.xlu0 %v2003, 12
  %v2327 = vpop.permute.xlu0 %2326
  %2328 = vrot.lane.b32.xlu0 %v2015, 12
  %v2329 = vpop.permute.xlu0 %2328
  %2330 = vrot.lane.b32.xlu0 %v2027, 12
  %v2331 = vpop.permute.xlu0 %2330
  %2332 = vrot.lane.b32.xlu0 %v2039, 12
  %v2333 = vpop.permute.xlu0 %2332
  %2334 = vrot.lane.b32.xlu0 %v2051, 12
  %v2335 = vpop.permute.xlu0 %2334
  %2336 = vrot.lane.b32.xlu0 %v2063, 12
  %v2337 = vpop.permute.xlu0 %2336
  %2338 = vrot.lane.b32.xlu0 %v2075, 12
  %v2339 = vpop.permute.xlu0 %2338
  %2340 = vrot.lane.b32.xlu0 %v2087, 12
  %v2341 = vpop.permute.xlu0 %2340
  %2342 = vrot.lane.b32.xlu0 %v2099, 12
  %v2343 = vpop.permute.xlu0 %2342
  %2344 = vrot.lane.b32.xlu0 %v2111, 12
  %v2345 = vpop.permute.xlu0 %2344
  %2346 = vrot.lane.b32.xlu0 %v2123, 12
  %v2347 = vpop.permute.xlu0 %2346
  %2348 = vrot.lane.b32.xlu0 %v2135, 12
  %v2349 = vpop.permute.xlu0 %2348
  %2350 = vrot.lane.b32.xlu0 %v2147, 12
  %v2351 = vpop.permute.xlu0 %2350
  %2352 = vrot.lane.b32.xlu0 %v2159, 12
  %v2353 = vpop.permute.xlu0 %2352
  %2354 = vrot.lane.b32.xlu0 %v2171, 12
  %v2355 = vpop.permute.xlu0 %2354
  %2356 = vrot.lane.b32.xlu0 %v2183, 12
  %v2357 = vpop.permute.xlu0 %2356
  %2358 = vrot.lane.b32.xlu0 %v2195, 12
  %v2359 = vpop.permute.xlu0 %2358
  %2360 = vrot.lane.b32.xlu0 %v2207, 12
  %v2361 = vpop.permute.xlu0 %2360
  %2362 = vrot.lane.b32.xlu0 %v2219, 12
  %v2363 = vpop.permute.xlu0 %2362
  %2364 = vrot.lane.b32.xlu0 %v2231, 12
  %v2365 = vpop.permute.xlu0 %2364
  %2366 = vrot.lane.b32.xlu0 %v2243, 12
  %v2367 = vpop.permute.xlu0 %2366
  %2368 = vrot.lane.b32.xlu0 %v2255, 12
  %v2369 = vpop.permute.xlu0 %2368
  %2370 = vrot.lane.b32.xlu0 %v2267, 12
  %v2371 = vpop.permute.xlu0 %2370
  %2372 = vrot.lane.b32.xlu0 %v2279, 12
  %v2373 = vpop.permute.xlu0 %2372
  %2374 = vrot.lane.b32.xlu0 %v2291, 12
  %v2375 = vpop.permute.xlu0 %2374
  %2376 = vrot.lane.b32.xlu0 %v2303, 12
  %v2377 = vpop.permute.xlu0 %2376
  %2378 = vrot.lane.b32.xlu0 %v2315, 12
  %v2379 = vpop.permute.xlu0 %2378
  %vm2412 = vcmask 130144
  %2413 = vst.msk [vmem:[#allocation3] sm:$0xff] %vm2412, %v2317
  %2414 = vst.msk [vmem:[#allocation3 + $0x8] sm:$0xff] %vm2412, %v2319
  %2415 = vst.msk [vmem:[#allocation3 + $0x10] sm:$0xff] %vm2412, %v2321
  %2416 = vst.msk [vmem:[#allocation3 + $0x18] sm:$0xff] %vm2412, %v2323
  %2417 = vst.msk [vmem:[#allocation3 + $0x20] sm:$0xff] %vm2412, %v2325
  %2418 = vst.msk [vmem:[#allocation3 + $0x28] sm:$0xff] %vm2412, %v2327
  %2419 = vst.msk [vmem:[#allocation3 + $0x30] sm:$0xff] %vm2412, %v2329
  %2420 = vst.msk [vmem:[#allocation3 + $0x38] sm:$0xff] %vm2412, %v2331
  %2421 = vst.msk [vmem:[#allocation3 + $0x40] sm:$0xff] %vm2412, %v2333
  %2422 = vst.msk [vmem:[#allocation3 + $0x48] sm:$0xff] %vm2412, %v2335
  %2423 = vst.msk [vmem:[#allocation3 + $0x50] sm:$0xff] %vm2412, %v2337
  %2424 = vst.msk [vmem:[#allocation3 + $0x58] sm:$0xff] %vm2412, %v2339
  %2425 = vst.msk [vmem:[#allocation3 + $0x60] sm:$0xff] %vm2412, %v2341
  %2426 = vst.msk [vmem:[#allocation3 + $0x68] sm:$0xff] %vm2412, %v2343
  %2427 = vst.msk [vmem:[#allocation3 + $0x70] sm:$0xff] %vm2412, %v2345
  %2428 = vst.msk [vmem:[#allocation3 + $0x78] sm:$0xff] %vm2412, %v2347
  %2429 = vst.msk [vmem:[#allocation3 + $0x80] sm:$0xff] %vm2412, %v2349
  %2430 = vst.msk [vmem:[#allocation3 + $0x88] sm:$0xff] %vm2412, %v2351
  %2431 = vst.msk [vmem:[#allocation3 + $0x90] sm:$0xff] %vm2412, %v2353
  %2432 = vst.msk [vmem:[#allocation3 + $0x98] sm:$0xff] %vm2412, %v2355
  %2433 = vst.msk [vmem:[#allocation3 + $0xa0] sm:$0xff] %vm2412, %v2357
  %2434 = vst.msk [vmem:[#allocation3 + $0xa8] sm:$0xff] %vm2412, %v2359
  %2435 = vst.msk [vmem:[#allocation3 + $0xb0] sm:$0xff] %vm2412, %v2361
  %2436 = vst.msk [vmem:[#allocation3 + $0xb8] sm:$0xff] %vm2412, %v2363
  %2437 = vst.msk [vmem:[#allocation3 + $0xc0] sm:$0xff] %vm2412, %v2365
  %2438 = vst.msk [vmem:[#allocation3 + $0xc8] sm:$0xff] %vm2412, %v2367
  %2439 = vst.msk [vmem:[#allocation3 + $0xd0] sm:$0xff] %vm2412, %v2369
  %2440 = vst.msk [vmem:[#allocation3 + $0xd8] sm:$0xff] %vm2412, %v2371
  %2441 = vst.msk [vmem:[#allocation3 + $0xe0] sm:$0xff] %vm2412, %v2373
  %2442 = vst.msk [vmem:[#allocation3 + $0xe8] sm:$0xff] %vm2412, %v2375
  %2443 = vst.msk [vmem:[#allocation3 + $0xf0] sm:$0xff] %vm2412, %v2377
  %2444 = vst.msk [vmem:[#allocation3 + $0xf8] sm:$0xff] %vm2412, %v2379
  %v2445 = vld [vmem:[%s552 + $0x8] sm:$0xff]
  %v2446 = vld [vmem:[%s552 + $0x20] sm:$0xff]
  %v2447 = vld [vmem:[%s552 + $0x38] sm:$0xff]
  %v2448 = vld [vmem:[%s552 + $0x50] sm:$0xff]
  %v2449 = vld [vmem:[%s552 + $0x68] sm:$0xff]
  %v2450 = vld [vmem:[%s552 + $0x80] sm:$0xff]
  %v2451 = vld [vmem:[%s552 + $0x98] sm:$0xff]
  %v2452 = vld [vmem:[%s552 + $0xb0] sm:$0xff]
  %v2453 = vld [vmem:[%s552 + $0xc8] sm:$0xff]
  %v2454 = vld [vmem:[%s552 + $0xe0] sm:$0xff]
  %v2455 = vld [vmem:[%s552 + $0xf8] sm:$0xff]
  %v2456 = vld [vmem:[%s552 + $0x110] sm:$0xff]
  %v2457 = vld [vmem:[%s552 + $0x128] sm:$0xff]
  %v2458 = vld [vmem:[%s552 + $0x140] sm:$0xff]
  %v2459 = vld [vmem:[%s552 + $0x158] sm:$0xff]
  %v2460 = vld [vmem:[%s552 + $0x170] sm:$0xff]
  %v2461 = vld [vmem:[%s552 + $0x1b8] sm:$0xff]
  %v2462 = vld [vmem:[%s552 + $0x1d0] sm:$0xff]
  %v2463 = vld [vmem:[%s552 + $0x1e8] sm:$0xff]
  %v2464 = vld [vmem:[%s552 + $0x200] sm:$0xff]
  %v2465 = vld [vmem:[%s552 + $0x218] sm:$0xff]
  %v2466 = vld [vmem:[%s552 + $0x230] sm:$0xff]
  %v2467 = vld [vmem:[%s552 + $0x248] sm:$0xff]
  %v2468 = vld [vmem:[%s552 + $0x260] sm:$0xff]
  %v2469 = vld [vmem:[%s552 + $0x278] sm:$0xff]
  %v2470 = vld [vmem:[%s552 + $0x290] sm:$0xff]
  %v2471 = vld [vmem:[%s552 + $0x2a8] sm:$0xff]
  %v2472 = vld [vmem:[%s552 + $0x2c0] sm:$0xff]
  %v2473 = vld [vmem:[%s552 + $0x2d8] sm:$0xff]
  %v2474 = vld [vmem:[%s552 + $0x2f0] sm:$0xff]
  %v2475 = vld [vmem:[%s552 + $0x308] sm:$0xff]
  %v2476 = vld [vmem:[%s552 + $0x320] sm:$0xff]
  %2509 = vrot.lane.b32.xlu0 %v2445, 16
  %v2510 = vpop.permute.xlu0 %2509
  %2511 = vrot.lane.b32.xlu0 %v2446, 16
  %v2512 = vpop.permute.xlu0 %2511
  %2513 = vrot.lane.b32.xlu0 %v2447, 16
  %v2514 = vpop.permute.xlu0 %2513
  %2515 = vrot.lane.b32.xlu0 %v2448, 16
  %v2516 = vpop.permute.xlu0 %2515
  %2517 = vrot.lane.b32.xlu0 %v2449, 16
  %v2518 = vpop.permute.xlu0 %2517
  %2519 = vrot.lane.b32.xlu0 %v2450, 16
  %v2520 = vpop.permute.xlu0 %2519
  %2521 = vrot.lane.b32.xlu0 %v2451, 16
  %v2522 = vpop.permute.xlu0 %2521
  %2523 = vrot.lane.b32.xlu0 %v2452, 16
  %v2524 = vpop.permute.xlu0 %2523
  %2525 = vrot.lane.b32.xlu0 %v2453, 16
  %v2526 = vpop.permute.xlu0 %2525
  %2527 = vrot.lane.b32.xlu0 %v2454, 16
  %v2528 = vpop.permute.xlu0 %2527
  %2529 = vrot.lane.b32.xlu0 %v2455, 16
  %v2530 = vpop.permute.xlu0 %2529
  %2531 = vrot.lane.b32.xlu0 %v2456, 16
  %v2532 = vpop.permute.xlu0 %2531
  %2533 = vrot.lane.b32.xlu0 %v2457, 16
  %v2534 = vpop.permute.xlu0 %2533
  %2535 = vrot.lane.b32.xlu0 %v2458, 16
  %v2536 = vpop.permute.xlu0 %2535
  %2537 = vrot.lane.b32.xlu0 %v2459, 16
  %v2538 = vpop.permute.xlu0 %2537
  %2539 = vrot.lane.b32.xlu0 %v2460, 16
  %v2540 = vpop.permute.xlu0 %2539
  %2541 = vrot.lane.b32.xlu0 %v2461, 16
  %v2542 = vpop.permute.xlu0 %2541
  %2543 = vrot.lane.b32.xlu0 %v2462, 16
  %v2544 = vpop.permute.xlu0 %2543
  %2545 = vrot.lane.b32.xlu0 %v2463, 16
  %v2546 = vpop.permute.xlu0 %2545
  %2547 = vrot.lane.b32.xlu0 %v2464, 16
  %v2548 = vpop.permute.xlu0 %2547
  %2549 = vrot.lane.b32.xlu0 %v2465, 16
  %v2550 = vpop.permute.xlu0 %2549
  %2551 = vrot.lane.b32.xlu0 %v2466, 16
  %v2552 = vpop.permute.xlu0 %2551
  %2553 = vrot.lane.b32.xlu0 %v2467, 16
  %v2554 = vpop.permute.xlu0 %2553
  %2555 = vrot.lane.b32.xlu0 %v2468, 16
  %v2556 = vpop.permute.xlu0 %2555
  %2557 = vrot.lane.b32.xlu0 %v2469, 16
  %v2558 = vpop.permute.xlu0 %2557
  %2559 = vrot.lane.b32.xlu0 %v2470, 16
  %v2560 = vpop.permute.xlu0 %2559
  %2561 = vrot.lane.b32.xlu0 %v2471, 16
  %v2562 = vpop.permute.xlu0 %2561
  %2563 = vrot.lane.b32.xlu0 %v2472, 16
  %v2564 = vpop.permute.xlu0 %2563
  %2565 = vrot.lane.b32.xlu0 %v2473, 16
  %v2566 = vpop.permute.xlu0 %2565
  %2567 = vrot.lane.b32.xlu0 %v2474, 16
  %v2568 = vpop.permute.xlu0 %2567
  %2569 = vrot.lane.b32.xlu0 %v2475, 16
  %v2570 = vpop.permute.xlu0 %2569
  %2571 = vrot.lane.b32.xlu0 %v2476, 16
  %v2572 = vpop.permute.xlu0 %2571
  %vm2605 = vcmask 162944
  %2606 = vst.msk [vmem:[#allocation3] sm:$0xff] %vm2605, %v2510
  %2607 = vst.msk [vmem:[#allocation3 + $0x8] sm:$0xff] %vm2605, %v2512
  %2608 = vst.msk [vmem:[#allocation3 + $0x10] sm:$0xff] %vm2605, %v2514
  %2609 = vst.msk [vmem:[#allocation3 + $0x18] sm:$0xff] %vm2605, %v2516
  %2610 = vst.msk [vmem:[#allocation3 + $0x20] sm:$0xff] %vm2605, %v2518
  %2611 = vst.msk [vmem:[#allocation3 + $0x28] sm:$0xff] %vm2605, %v2520
  %2612 = vst.msk [vmem:[#allocation3 + $0x30] sm:$0xff] %vm2605, %v2522
  %2613 = vst.msk [vmem:[#allocation3 + $0x38] sm:$0xff] %vm2605, %v2524
  %2614 = vst.msk [vmem:[#allocation3 + $0x40] sm:$0xff] %vm2605, %v2526
  %2615 = vst.msk [vmem:[#allocation3 + $0x48] sm:$0xff] %vm2605, %v2528
  %2616 = vst.msk [vmem:[#allocation3 + $0x50] sm:$0xff] %vm2605, %v2530
  %2617 = vst.msk [vmem:[#allocation3 + $0x58] sm:$0xff] %vm2605, %v2532
  %2618 = vst.msk [vmem:[#allocation3 + $0x60] sm:$0xff] %vm2605, %v2534
  %2619 = vst.msk [vmem:[#allocation3 + $0x68] sm:$0xff] %vm2605, %v2536
  %2620 = vst.msk [vmem:[#allocation3 + $0x70] sm:$0xff] %vm2605, %v2538
  %2621 = vst.msk [vmem:[#allocation3 + $0x78] sm:$0xff] %vm2605, %v2540
  %2622 = vst.msk [vmem:[#allocation3 + $0x80] sm:$0xff] %vm2605, %v2542
  %2623 = vst.msk [vmem:[#allocation3 + $0x88] sm:$0xff] %vm2605, %v2544
  %2624 = vst.msk [vmem:[#allocation3 + $0x90] sm:$0xff] %vm2605, %v2546
  %2625 = vst.msk [vmem:[#allocation3 + $0x98] sm:$0xff] %vm2605, %v2548
  %2626 = vst.msk [vmem:[#allocation3 + $0xa0] sm:$0xff] %vm2605, %v2550
  %2627 = vst.msk [vmem:[#allocation3 + $0xa8] sm:$0xff] %vm2605, %v2552
  %2628 = vst.msk [vmem:[#allocation3 + $0xb0] sm:$0xff] %vm2605, %v2554
  %2629 = vst.msk [vmem:[#allocation3 + $0xb8] sm:$0xff] %vm2605, %v2556
  %2630 = vst.msk [vmem:[#allocation3 + $0xc0] sm:$0xff] %vm2605, %v2558
  %2631 = vst.msk [vmem:[#allocation3 + $0xc8] sm:$0xff] %vm2605, %v2560
  %2632 = vst.msk [vmem:[#allocation3 + $0xd0] sm:$0xff] %vm2605, %v2562
  %2633 = vst.msk [vmem:[#allocation3 + $0xd8] sm:$0xff] %vm2605, %v2564
  %2634 = vst.msk [vmem:[#allocation3 + $0xe0] sm:$0xff] %vm2605, %v2566
  %2635 = vst.msk [vmem:[#allocation3 + $0xe8] sm:$0xff] %vm2605, %v2568
  %2636 = vst.msk [vmem:[#allocation3 + $0xf0] sm:$0xff] %vm2605, %v2570
  %2637 = vst.msk [vmem:[#allocation3 + $0xf8] sm:$0xff] %vm2605, %v2572
  %v2638 = vld [vmem:[%s552 + $0x8] sm:$0xff]
  %v2639 = vld [vmem:[%s552 + $0x10] sm:$0x1]
  %v2640 = vld [vmem:[%s552 + $0x20] sm:$0xff]
  %v2641 = vld [vmem:[%s552 + $0x28] sm:$0x1]
  %v2642 = vld [vmem:[%s552 + $0x38] sm:$0xff]
  %v2643 = vld [vmem:[%s552 + $0x40] sm:$0x1]
  %v2644 = vld [vmem:[%s552 + $0x50] sm:$0xff]
  %v2645 = vld [vmem:[%s552 + $0x58] sm:$0x1]
  %v2646 = vld [vmem:[%s552 + $0x68] sm:$0xff]
  %v2647 = vld [vmem:[%s552 + $0x70] sm:$0x1]
  %v2648 = vld [vmem:[%s552 + $0x80] sm:$0xff]
  %v2649 = vld [vmem:[%s552 + $0x88] sm:$0x1]
  %v2650 = vld [vmem:[%s552 + $0x98] sm:$0xff]
  %v2651 = vld [vmem:[%s552 + $0xa0] sm:$0x1]
  %v2652 = vld [vmem:[%s552 + $0xb0] sm:$0xff]
  %v2653 = vld [vmem:[%s552 + $0xb8] sm:$0x1]
  %v2654 = vld [vmem:[%s552 + $0xc8] sm:$0xff]
  %v2655 = vld [vmem:[%s552 + $0xd0] sm:$0x1]
  %v2656 = vld [vmem:[%s552 + $0xe0] sm:$0xff]
  %v2657 = vld [vmem:[%s552 + $0xe8] sm:$0x1]
  %v2658 = vld [vmem:[%s552 + $0xf8] sm:$0xff]
  %v2659 = vld [vmem:[%s552 + $0x100] sm:$0x1]
  %v2660 = vld [vmem:[%s552 + $0x110] sm:$0xff]
  %v2661 = vld [vmem:[%s552 + $0x118] sm:$0x1]
  %v2662 = vld [vmem:[%s552 + $0x128] sm:$0xff]
  %v2663 = vld [vmem:[%s552 + $0x130] sm:$0x1]
  %v2664 = vld [vmem:[%s552 + $0x140] sm:$0xff]
  %v2665 = vld [vmem:[%s552 + $0x148] sm:$0x1]
  %v2666 = vld [vmem:[%s552 + $0x158] sm:$0xff]
  %v2667 = vld [vmem:[%s552 + $0x160] sm:$0x1]
  %v2668 = vld [vmem:[%s552 + $0x170] sm:$0xff]
  %v2669 = vld [vmem:[%s552 + $0x178] sm:$0x1]
  %v2670 = vld [vmem:[%s552 + $0x1b8] sm:$0xff]
  %v2671 = vld [vmem:[%s552 + $0x1c0] sm:$0x1]
  %v2672 = vld [vmem:[%s552 + $0x1d0] sm:$0xff]
  %v2673 = vld [vmem:[%s552 + $0x1d8] sm:$0x1]
  %v2674 = vld [vmem:[%s552 + $0x1e8] sm:$0xff]
  %v2675 = vld [vmem:[%s552 + $0x1f0] sm:$0x1]
  %v2676 = vld [vmem:[%s552 + $0x200] sm:$0xff]
  %v2677 = vld [vmem:[%s552 + $0x208] sm:$0x1]
  %v2678 = vld [vmem:[%s552 + $0x218] sm:$0xff]
  %v2679 = vld [vmem:[%s552 + $0x220] sm:$0x1]
  %v2680 = vld [vmem:[%s552 + $0x230] sm:$0xff]
  %v2681 = vld [vmem:[%s552 + $0x238] sm:$0x1]
  %v2682 = vld [vmem:[%s552 + $0x248] sm:$0xff]
  %v2683 = vld [vmem:[%s552 + $0x250] sm:$0x1]
  %v2684 = vld [vmem:[%s552 + $0x260] sm:$0xff]
  %v2685 = vld [vmem:[%s552 + $0x268] sm:$0x1]
  %v2686 = vld [vmem:[%s552 + $0x278] sm:$0xff]
  %v2687 = vld [vmem:[%s552 + $0x280] sm:$0x1]
  %v2688 = vld [vmem:[%s552 + $0x290] sm:$0xff]
  %v2689 = vld [vmem:[%s552 + $0x298] sm:$0x1]
  %v2690 = vld [vmem:[%s552 + $0x2a8] sm:$0xff]
  %v2691 = vld [vmem:[%s552 + $0x2b0] sm:$0x1]
  %v2692 = vld [vmem:[%s552 + $0x2c0] sm:$0xff]
  %v2693 = vld [vmem:[%s552 + $0x2c8] sm:$0x1]
  %v2694 = vld [vmem:[%s552 + $0x2d8] sm:$0xff]
  %v2695 = vld [vmem:[%s552 + $0x2e0] sm:$0x1]
  %v2696 = vld [vmem:[%s552 + $0x2f0] sm:$0xff]
  %v2697 = vld [vmem:[%s552 + $0x2f8] sm:$0x1]
  %v2698 = vld [vmem:[%s552 + $0x308] sm:$0xff]
  %v2699 = vld [vmem:[%s552 + $0x310] sm:$0x1]
  %v2700 = vld [vmem:[%s552 + $0x320] sm:$0xff]
  %v2701 = vld [vmem:[%s552 + $0x328] sm:$0x1]
  %v2703 = vshrl.u32 %v2638, 16
  %v2705 = vshll.u32 %v2638, 16
  %v2707 = vrot.slane %v2705, 1
  %v2708 = vor.u32 %v2703, %v2707
  %v2710 = vshll.u32 %v2639, 16
  %v2712 = vrot.slane %v2710, 1
  %v2713 = vsel %vm1354, %v2708, %v2712
  %v2715 = vshrl.u32 %v2640, 16
  %v2717 = vshll.u32 %v2640, 16
  %v2719 = vrot.slane %v2717, 1
  %v2720 = vor.u32 %v2715, %v2719
  %v2722 = vshll.u32 %v2641, 16
  %v2724 = vrot.slane %v2722, 1
  %v2725 = vsel %vm1354, %v2720, %v2724
  %v2727 = vshrl.u32 %v2642, 16
  %v2729 = vshll.u32 %v2642, 16
  %v2731 = vrot.slane %v2729, 1
  %v2732 = vor.u32 %v2727, %v2731
  %v2734 = vshll.u32 %v2643, 16
  %v2736 = vrot.slane %v2734, 1
  %v2737 = vsel %vm1354, %v2732, %v2736
  %v2739 = vshrl.u32 %v2644, 16
  %v2741 = vshll.u32 %v2644, 16
  %v2743 = vrot.slane %v2741, 1
  %v2744 = vor.u32 %v2739, %v2743
  %v2746 = vshll.u32 %v2645, 16
  %v2748 = vrot.slane %v2746, 1
  %v2749 = vsel %vm1354, %v2744, %v2748
  %v2751 = vshrl.u32 %v2646, 16
  %v2753 = vshll.u32 %v2646, 16
  %v2755 = vrot.slane %v2753, 1
  %v2756 = vor.u32 %v2751, %v2755
  %v2758 = vshll.u32 %v2647, 16
  %v2760 = vrot.slane %v2758, 1
  %v2761 = vsel %vm1354, %v2756, %v2760
  %v2763 = vshrl.u32 %v2648, 16
  %v2765 = vshll.u32 %v2648, 16
  %v2767 = vrot.slane %v2765, 1
  %v2768 = vor.u32 %v2763, %v2767
  %v2770 = vshll.u32 %v2649, 16
  %v2772 = vrot.slane %v2770, 1
  %v2773 = vsel %vm1354, %v2768, %v2772
  %v2775 = vshrl.u32 %v2650, 16
  %v2777 = vshll.u32 %v2650, 16
  %v2779 = vrot.slane %v2777, 1
  %v2780 = vor.u32 %v2775, %v2779
  %v2782 = vshll.u32 %v2651, 16
  %v2784 = vrot.slane %v2782, 1
  %v2785 = vsel %vm1354, %v2780, %v2784
  %v2787 = vshrl.u32 %v2652, 16
  %v2789 = vshll.u32 %v2652, 16
  %v2791 = vrot.slane %v2789, 1
  %v2792 = vor.u32 %v2787, %v2791
  %v2794 = vshll.u32 %v2653, 16
  %v2796 = vrot.slane %v2794, 1
  %v2797 = vsel %vm1354, %v2792, %v2796
  %v2799 = vshrl.u32 %v2654, 16
  %v2801 = vshll.u32 %v2654, 16
  %v2803 = vrot.slane %v2801, 1
  %v2804 = vor.u32 %v2799, %v2803
  %v2806 = vshll.u32 %v2655, 16
  %v2808 = vrot.slane %v2806, 1
  %v2809 = vsel %vm1354, %v2804, %v2808
  %v2811 = vshrl.u32 %v2656, 16
  %v2813 = vshll.u32 %v2656, 16
  %v2815 = vrot.slane %v2813, 1
  %v2816 = vor.u32 %v2811, %v2815
  %v2818 = vshll.u32 %v2657, 16
  %v2820 = vrot.slane %v2818, 1
  %v2821 = vsel %vm1354, %v2816, %v2820
  %v2823 = vshrl.u32 %v2658, 16
  %v2825 = vshll.u32 %v2658, 16
  %v2827 = vrot.slane %v2825, 1
  %v2828 = vor.u32 %v2823, %v2827
  %v2830 = vshll.u32 %v2659, 16
  %v2832 = vrot.slane %v2830, 1
  %v2833 = vsel %vm1354, %v2828, %v2832
  %v2835 = vshrl.u32 %v2660, 16
  %v2837 = vshll.u32 %v2660, 16
  %v2839 = vrot.slane %v2837, 1
  %v2840 = vor.u32 %v2835, %v2839
  %v2842 = vshll.u32 %v2661, 16
  %v2844 = vrot.slane %v2842, 1
  %v2845 = vsel %vm1354, %v2840, %v2844
  %v2847 = vshrl.u32 %v2662, 16
  %v2849 = vshll.u32 %v2662, 16
  %v2851 = vrot.slane %v2849, 1
  %v2852 = vor.u32 %v2847, %v2851
  %v2854 = vshll.u32 %v2663, 16
  %v2856 = vrot.slane %v2854, 1
  %v2857 = vsel %vm1354, %v2852, %v2856
  %v2859 = vshrl.u32 %v2664, 16
  %v2861 = vshll.u32 %v2664, 16
  %v2863 = vrot.slane %v2861, 1
  %v2864 = vor.u32 %v2859, %v2863
  %v2866 = vshll.u32 %v2665, 16
  %v2868 = vrot.slane %v2866, 1
  %v2869 = vsel %vm1354, %v2864, %v2868
  %v2871 = vshrl.u32 %v2666, 16
  %v2873 = vshll.u32 %v2666, 16
  %v2875 = vrot.slane %v2873, 1
  %v2876 = vor.u32 %v2871, %v2875
  %v2878 = vshll.u32 %v2667, 16
  %v2880 = vrot.slane %v2878, 1
  %v2881 = vsel %vm1354, %v2876, %v2880
  %v2883 = vshrl.u32 %v2668, 16
  %v2885 = vshll.u32 %v2668, 16
  %v2887 = vrot.slane %v2885, 1
  %v2888 = vor.u32 %v2883, %v2887
  %v2890 = vshll.u32 %v2669, 16
  %v2892 = vrot.slane %v2890, 1
  %v2893 = vsel %vm1354, %v2888, %v2892
  %v2895 = vshrl.u32 %v2670, 16
  %v2897 = vshll.u32 %v2670, 16
  %v2899 = vrot.slane %v2897, 1
  %v2900 = vor.u32 %v2895, %v2899
  %v2902 = vshll.u32 %v2671, 16
  %v2904 = vrot.slane %v2902, 1
  %v2905 = vsel %vm1354, %v2900, %v2904
  %v2907 = vshrl.u32 %v2672, 16
  %v2909 = vshll.u32 %v2672, 16
  %v2911 = vrot.slane %v2909, 1
  %v2912 = vor.u32 %v2907, %v2911
  %v2914 = vshll.u32 %v2673, 16
  %v2916 = vrot.slane %v2914, 1
  %v2917 = vsel %vm1354, %v2912, %v2916
  %v2919 = vshrl.u32 %v2674, 16
  %v2921 = vshll.u32 %v2674, 16
  %v2923 = vrot.slane %v2921, 1
  %v2924 = vor.u32 %v2919, %v2923
  %v2926 = vshll.u32 %v2675, 16
  %v2928 = vrot.slane %v2926, 1
  %v2929 = vsel %vm1354, %v2924, %v2928
  %v2931 = vshrl.u32 %v2676, 16
  %v2933 = vshll.u32 %v2676, 16
  %v2935 = vrot.slane %v2933, 1
  %v2936 = vor.u32 %v2931, %v2935
  %v2938 = vshll.u32 %v2677, 16
  %v2940 = vrot.slane %v2938, 1
  %v2941 = vsel %vm1354, %v2936, %v2940
  %v2943 = vshrl.u32 %v2678, 16
  %v2945 = vshll.u32 %v2678, 16
  %v2947 = vrot.slane %v2945, 1
  %v2948 = vor.u32 %v2943, %v2947
  %v2950 = vshll.u32 %v2679, 16
  %v2952 = vrot.slane %v2950, 1
  %v2953 = vsel %vm1354, %v2948, %v2952
  %v2955 = vshrl.u32 %v2680, 16
  %v2957 = vshll.u32 %v2680, 16
  %v2959 = vrot.slane %v2957, 1
  %v2960 = vor.u32 %v2955, %v2959
  %v2962 = vshll.u32 %v2681, 16
  %v2964 = vrot.slane %v2962, 1
  %v2965 = vsel %vm1354, %v2960, %v2964
  %v2967 = vshrl.u32 %v2682, 16
  %v2969 = vshll.u32 %v2682, 16
  %v2971 = vrot.slane %v2969, 1
  %v2972 = vor.u32 %v2967, %v2971
  %v2974 = vshll.u32 %v2683, 16
  %v2976 = vrot.slane %v2974, 1
  %v2977 = vsel %vm1354, %v2972, %v2976
  %v2979 = vshrl.u32 %v2684, 16
  %v2981 = vshll.u32 %v2684, 16
  %v2983 = vrot.slane %v2981, 1
  %v2984 = vor.u32 %v2979, %v2983
  %v2986 = vshll.u32 %v2685, 16
  %v2988 = vrot.slane %v2986, 1
  %v2989 = vsel %vm1354, %v2984, %v2988
  %v2991 = vshrl.u32 %v2686, 16
  %v2993 = vshll.u32 %v2686, 16
  %v2995 = vrot.slane %v2993, 1
  %v2996 = vor.u32 %v2991, %v2995
  %v2998 = vshll.u32 %v2687, 16
  %v3000 = vrot.slane %v2998, 1
  %v3001 = vsel %vm1354, %v2996, %v3000
  %v3003 = vshrl.u32 %v2688, 16
  %v3005 = vshll.u32 %v2688, 16
  %v3007 = vrot.slane %v3005, 1
  %v3008 = vor.u32 %v3003, %v3007
  %v3010 = vshll.u32 %v2689, 16
  %v3012 = vrot.slane %v3010, 1
  %v3013 = vsel %vm1354, %v3008, %v3012
  %v3015 = vshrl.u32 %v2690, 16
  %v3017 = vshll.u32 %v2690, 16
  %v3019 = vrot.slane %v3017, 1
  %v3020 = vor.u32 %v3015, %v3019
  %v3022 = vshll.u32 %v2691, 16
  %v3024 = vrot.slane %v3022, 1
  %v3025 = vsel %vm1354, %v3020, %v3024
  %v3027 = vshrl.u32 %v2692, 16
  %v3029 = vshll.u32 %v2692, 16
  %v3031 = vrot.slane %v3029, 1
  %v3032 = vor.u32 %v3027, %v3031
  %v3034 = vshll.u32 %v2693, 16
  %v3036 = vrot.slane %v3034, 1
  %v3037 = vsel %vm1354, %v3032, %v3036
  %v3039 = vshrl.u32 %v2694, 16
  %v3041 = vshll.u32 %v2694, 16
  %v3043 = vrot.slane %v3041, 1
  %v3044 = vor.u32 %v3039, %v3043
  %v3046 = vshll.u32 %v2695, 16
  %v3048 = vrot.slane %v3046, 1
  %v3049 = vsel %vm1354, %v3044, %v3048
  %v3051 = vshrl.u32 %v2696, 16
  %v3053 = vshll.u32 %v2696, 16
  %v3055 = vrot.slane %v3053, 1
  %v3056 = vor.u32 %v3051, %v3055
  %v3058 = vshll.u32 %v2697, 16
  %v3060 = vrot.slane %v3058, 1
  %v3061 = vsel %vm1354, %v3056, %v3060
  %v3063 = vshrl.u32 %v2698, 16
  %v3065 = vshll.u32 %v2698, 16
  %v3067 = vrot.slane %v3065, 1
  %v3068 = vor.u32 %v3063, %v3067
  %v3070 = vshll.u32 %v2699, 16
  %v3072 = vrot.slane %v3070, 1
  %v3073 = vsel %vm1354, %v3068, %v3072
  %v3075 = vshrl.u32 %v2700, 16
  %v3077 = vshll.u32 %v2700, 16
  %v3079 = vrot.slane %v3077, 1
  %v3080 = vor.u32 %v3075, %v3079
  %v3082 = vshll.u32 %v2701, 16
  %v3084 = vrot.slane %v3082, 1
  %v3085 = vsel %vm1354, %v3080, %v3084
  %3086 = vrot.lane.b32.xlu0 %v2713, 20
  %v3087 = vpop.permute.xlu0 %3086
  %3088 = vrot.lane.b32.xlu0 %v2725, 20
  %v3089 = vpop.permute.xlu0 %3088
  %3090 = vrot.lane.b32.xlu0 %v2737, 20
  %v3091 = vpop.permute.xlu0 %3090
  %3092 = vrot.lane.b32.xlu0 %v2749, 20
  %v3093 = vpop.permute.xlu0 %3092
  %3094 = vrot.lane.b32.xlu0 %v2761, 20
  %v3095 = vpop.permute.xlu0 %3094
  %3096 = vrot.lane.b32.xlu0 %v2773, 20
  %v3097 = vpop.permute.xlu0 %3096
  %3098 = vrot.lane.b32.xlu0 %v2785, 20
  %v3099 = vpop.permute.xlu0 %3098
  %3100 = vrot.lane.b32.xlu0 %v2797, 20
  %v3101 = vpop.permute.xlu0 %3100
  %3102 = vrot.lane.b32.xlu0 %v2809, 20
  %v3103 = vpop.permute.xlu0 %3102
  %3104 = vrot.lane.b32.xlu0 %v2821, 20
  %v3105 = vpop.permute.xlu0 %3104
  %3106 = vrot.lane.b32.xlu0 %v2833, 20
  %v3107 = vpop.permute.xlu0 %3106
  %3108 = vrot.lane.b32.xlu0 %v2845, 20
  %v3109 = vpop.permute.xlu0 %3108
  %3110 = vrot.lane.b32.xlu0 %v2857, 20
  %v3111 = vpop.permute.xlu0 %3110
  %3112 = vrot.lane.b32.xlu0 %v2869, 20
  %v3113 = vpop.permute.xlu0 %3112
  %3114 = vrot.lane.b32.xlu0 %v2881, 20
  %v3115 = vpop.permute.xlu0 %3114
  %3116 = vrot.lane.b32.xlu0 %v2893, 20
  %v3117 = vpop.permute.xlu0 %3116
  %3118 = vrot.lane.b32.xlu0 %v2905, 20
  %v3119 = vpop.permute.xlu0 %3118
  %3120 = vrot.lane.b32.xlu0 %v2917, 20
  %v3121 = vpop.permute.xlu0 %3120
  %3122 = vrot.lane.b32.xlu0 %v2929, 20
  %v3123 = vpop.permute.xlu0 %3122
  %3124 = vrot.lane.b32.xlu0 %v2941, 20
  %v3125 = vpop.permute.xlu0 %3124
  %3126 = vrot.lane.b32.xlu0 %v2953, 20
  %v3127 = vpop.permute.xlu0 %3126
  %3128 = vrot.lane.b32.xlu0 %v2965, 20
  %v3129 = vpop.permute.xlu0 %3128
  %3130 = vrot.lane.b32.xlu0 %v2977, 20
  %v3131 = vpop.permute.xlu0 %3130
  %3132 = vrot.lane.b32.xlu0 %v2989, 20
  %v3133 = vpop.permute.xlu0 %3132
  %3134 = vrot.lane.b32.xlu0 %v3001, 20
  %v3135 = vpop.permute.xlu0 %3134
  %3136 = vrot.lane.b32.xlu0 %v3013, 20
  %v3137 = vpop.permute.xlu0 %3136
  %3138 = vrot.lane.b32.xlu0 %v3025, 20
  %v3139 = vpop.permute.xlu0 %3138
  %3140 = vrot.lane.b32.xlu0 %v3037, 20
  %v3141 = vpop.permute.xlu0 %3140
  %3142 = vrot.lane.b32.xlu0 %v3049, 20
  %v3143 = vpop.permute.xlu0 %3142
  %3144 = vrot.lane.b32.xlu0 %v3061, 20
  %v3145 = vpop.permute.xlu0 %3144
  %3146 = vrot.lane.b32.xlu0 %v3073, 20
  %v3147 = vpop.permute.xlu0 %3146
  %3148 = vrot.lane.b32.xlu0 %v3085, 20
  %v3149 = vpop.permute.xlu0 %3148
  %vm3182 = vcmask 195744
  %3183 = vst.msk [vmem:[#allocation3] sm:$0xff] %vm3182, %v3087
  %3184 = vst.msk [vmem:[#allocation3 + $0x8] sm:$0xff] %vm3182, %v3089
  %3185 = vst.msk [vmem:[#allocation3 + $0x10] sm:$0xff] %vm3182, %v3091
  %3186 = vst.msk [vmem:[#allocation3 + $0x18] sm:$0xff] %vm3182, %v3093
  %3187 = vst.msk [vmem:[#allocation3 + $0x20] sm:$0xff] %vm3182, %v3095
  %3188 = vst.msk [vmem:[#allocation3 + $0x28] sm:$0xff] %vm3182, %v3097
  %3189 = vst.msk [vmem:[#allocation3 + $0x30] sm:$0xff] %vm3182, %v3099
  %3190 = vst.msk [vmem:[#allocation3 + $0x38] sm:$0xff] %vm3182, %v3101
  %3191 = vst.msk [vmem:[#allocation3 + $0x40] sm:$0xff] %vm3182, %v3103
  %3192 = vst.msk [vmem:[#allocation3 + $0x48] sm:$0xff] %vm3182, %v3105
  %3193 = vst.msk [vmem:[#allocation3 + $0x50] sm:$0xff] %vm3182, %v3107
  %3194 = vst.msk [vmem:[#allocation3 + $0x58] sm:$0xff] %vm3182, %v3109
  %3195 = vst.msk [vmem:[#allocation3 + $0x60] sm:$0xff] %vm3182, %v3111
  %3196 = vst.msk [vmem:[#allocation3 + $0x68] sm:$0xff] %vm3182, %v3113
  %3197 = vst.msk [vmem:[#allocation3 + $0x70] sm:$0xff] %vm3182, %v3115
  %3198 = vst.msk [vmem:[#allocation3 + $0x78] sm:$0xff] %vm3182, %v3117
  %3199 = vst.msk [vmem:[#allocation3 + $0x80] sm:$0xff] %vm3182, %v3119
  %3200 = vst.msk [vmem:[#allocation3 + $0x88] sm:$0xff] %vm3182, %v3121
  %3201 = vst.msk [vmem:[#allocation3 + $0x90] sm:$0xff] %vm3182, %v3123
  %3202 = vst.msk [vmem:[#allocation3 + $0x98] sm:$0xff] %vm3182, %v3125
  %3203 = vst.msk [vmem:[#allocation3 + $0xa0] sm:$0xff] %vm3182, %v3127
  %3204 = vst.msk [vmem:[#allocation3 + $0xa8] sm:$0xff] %vm3182, %v3129
  %3205 = vst.msk [vmem:[#allocation3 + $0xb0] sm:$0xff] %vm3182, %v3131
  %3206 = vst.msk [vmem:[#allocation3 + $0xb8] sm:$0xff] %vm3182, %v3133
  %3207 = vst.msk [vmem:[#allocation3 + $0xc0] sm:$0xff] %vm3182, %v3135
  %3208 = vst.msk [vmem:[#allocation3 + $0xc8] sm:$0xff] %vm3182, %v3137
  %3209 = vst.msk [vmem:[#allocation3 + $0xd0] sm:$0xff] %vm3182, %v3139
  %3210 = vst.msk [vmem:[#allocation3 + $0xd8] sm:$0xff] %vm3182, %v3141
  %3211 = vst.msk [vmem:[#allocation3 + $0xe0] sm:$0xff] %vm3182, %v3143
  %3212 = vst.msk [vmem:[#allocation3 + $0xe8] sm:$0xff] %vm3182, %v3145
  %3213 = vst.msk [vmem:[#allocation3 + $0xf0] sm:$0xff] %vm3182, %v3147
  %3214 = vst.msk [vmem:[#allocation3 + $0xf8] sm:$0xff] %vm3182, %v3149
  %s3215 = scalar_lea.vmem [#allocation2], 48
  %v3216 = vld [vmem:[%s3215] sm:$0x80]
  %v3217 = vld [vmem:[%s3215 + $0x8] sm:$0xff]
  %v3218 = vld [vmem:[%s3215 + $0x18] sm:$0x80]
  %v3219 = vld [vmem:[%s3215 + $0x20] sm:$0xff]
  %v3220 = vld [vmem:[%s3215 + $0x30] sm:$0x80]
  %v3221 = vld [vmem:[%s3215 + $0x38] sm:$0xff]
  %v3222 = vld [vmem:[%s3215 + $0x48] sm:$0x80]
  %v3223 = vld [vmem:[%s3215 + $0x50] sm:$0xff]
  %v3224 = vld [vmem:[%s3215 + $0x60] sm:$0x80]
  %v3225 = vld [vmem:[%s3215 + $0x68] sm:$0xff]
  %v3226 = vld [vmem:[%s3215 + $0x78] sm:$0x80]
  %v3227 = vld [vmem:[%s3215 + $0x80] sm:$0xff]
  %v3228 = vld [vmem:[%s3215 + $0x90] sm:$0x80]
  %v3229 = vld [vmem:[%s3215 + $0x98] sm:$0xff]
  %v3230 = vld [vmem:[%s3215 + $0xa8] sm:$0x80]
  %v3231 = vld [vmem:[%s3215 + $0xb0] sm:$0xff]
  %v3232 = vld [vmem:[%s3215 + $0xc0] sm:$0x80]
  %v3233 = vld [vmem:[%s3215 + $0xc8] sm:$0xff]
  %v3234 = vld [vmem:[%s3215 + $0xd8] sm:$0x80]
  %v3235 = vld [vmem:[%s3215 + $0xe0] sm:$0xff]
  %v3236 = vld [vmem:[%s3215 + $0xf0] sm:$0x80]
  %v3237 = vld [vmem:[%s3215 + $0xf8] sm:$0xff]
  %v3238 = vld [vmem:[%s3215 + $0x108] sm:$0x80]
  %v3239 = vld [vmem:[%s3215 + $0x110] sm:$0xff]
  %v3240 = vld [vmem:[%s3215 + $0x120] sm:$0x80]
  %v3241 = vld [vmem:[%s3215 + $0x128] sm:$0xff]
  %v3242 = vld [vmem:[%s3215 + $0x138] sm:$0x80]
  %v3243 = vld [vmem:[%s3215 + $0x140] sm:$0xff]
  %v3244 = vld [vmem:[%s3215 + $0x150] sm:$0x80]
  %v3245 = vld [vmem:[%s3215 + $0x158] sm:$0xff]
  %v3246 = vld [vmem:[%s3215 + $0x168] sm:$0x80]
  %v3247 = vld [vmem:[%s3215 + $0x170] sm:$0xff]
  %v3248 = vld [vmem:[%s3215 + $0x1b0] sm:$0x80]
  %v3249 = vld [vmem:[%s3215 + $0x1b8] sm:$0xff]
  %v3250 = vld [vmem:[%s3215 + $0x1c8] sm:$0x80]
  %v3251 = vld [vmem:[%s3215 + $0x1d0] sm:$0xff]
  %v3252 = vld [vmem:[%s3215 + $0x1e0] sm:$0x80]
  %v3253 = vld [vmem:[%s3215 + $0x1e8] sm:$0xff]
  %v3254 = vld [vmem:[%s3215 + $0x1f8] sm:$0x80]
  %v3255 = vld [vmem:[%s3215 + $0x200] sm:$0xff]
  %v3256 = vld [vmem:[%s3215 + $0x210] sm:$0x80]
  %v3257 = vld [vmem:[%s3215 + $0x218] sm:$0xff]
  %v3258 = vld [vmem:[%s3215 + $0x228] sm:$0x80]
  %v3259 = vld [vmem:[%s3215 + $0x230] sm:$0xff]
  %v3260 = vld [vmem:[%s3215 + $0x240] sm:$0x80]
  %v3261 = vld [vmem:[%s3215 + $0x248] sm:$0xff]
  %v3262 = vld [vmem:[%s3215 + $0x258] sm:$0x80]
  %v3263 = vld [vmem:[%s3215 + $0x260] sm:$0xff]
  %v3264 = vld [vmem:[%s3215 + $0x270] sm:$0x80]
  %v3265 = vld [vmem:[%s3215 + $0x278] sm:$0xff]
  %v3266 = vld [vmem:[%s3215 + $0x288] sm:$0x80]
  %v3267 = vld [vmem:[%s3215 + $0x290] sm:$0xff]
  %v3268 = vld [vmem:[%s3215 + $0x2a0] sm:$0x80]
  %v3269 = vld [vmem:[%s3215 + $0x2a8] sm:$0xff]
  %v3270 = vld [vmem:[%s3215 + $0x2b8] sm:$0x80]
  %v3271 = vld [vmem:[%s3215 + $0x2c0] sm:$0xff]
  %v3272 = vld [vmem:[%s3215 + $0x2d0] sm:$0x80]
  %v3273 = vld [vmem:[%s3215 + $0x2d8] sm:$0xff]
  %v3274 = vld [vmem:[%s3215 + $0x2e8] sm:$0x80]
  %v3275 = vld [vmem:[%s3215 + $0x2f0] sm:$0xff]
  %v3276 = vld [vmem:[%s3215 + $0x300] sm:$0x80]
  %v3277 = vld [vmem:[%s3215 + $0x308] sm:$0xff]
  %v3278 = vld [vmem:[%s3215 + $0x318] sm:$0x80]
  %v3279 = vld [vmem:[%s3215 + $0x320] sm:$0xff]
  %v3281 = vshrl.u32 %v3216, 16
  %v3283 = vrot.slane %v3281, 7
  %v3285 = vshrl.u32 %v3217, 16
  %v3287 = vrot.slane %v3285, 7
  %v3288 = vshll.u32 %v3217, 16
  %v3290 = vor.u32 %v3287, %v3288
  %v3291 = vsel %vm153, %v3283, %v3290
  %v3293 = vshrl.u32 %v3218, 16
  %v3295 = vrot.slane %v3293, 7
  %v3297 = vshrl.u32 %v3219, 16
  %v3299 = vrot.slane %v3297, 7
  %v3300 = vshll.u32 %v3219, 16
  %v3302 = vor.u32 %v3299, %v3300
  %v3303 = vsel %vm153, %v3295, %v3302
  %v3305 = vshrl.u32 %v3220, 16
  %v3307 = vrot.slane %v3305, 7
  %v3309 = vshrl.u32 %v3221, 16
  %v3311 = vrot.slane %v3309, 7
  %v3312 = vshll.u32 %v3221, 16
  %v3314 = vor.u32 %v3311, %v3312
  %v3315 = vsel %vm153, %v3307, %v3314
  %v3317 = vshrl.u32 %v3222, 16
  %v3319 = vrot.slane %v3317, 7
  %v3321 = vshrl.u32 %v3223, 16
  %v3323 = vrot.slane %v3321, 7
  %v3324 = vshll.u32 %v3223, 16
  %v3326 = vor.u32 %v3323, %v3324
  %v3327 = vsel %vm153, %v3319, %v3326
  %v3329 = vshrl.u32 %v3224, 16
  %v3331 = vrot.slane %v3329, 7
  %v3333 = vshrl.u32 %v3225, 16
  %v3335 = vrot.slane %v3333, 7
  %v3336 = vshll.u32 %v3225, 16
  %v3338 = vor.u32 %v3335, %v3336
  %v3339 = vsel %vm153, %v3331, %v3338
  %v3341 = vshrl.u32 %v3226, 16
  %v3343 = vrot.slane %v3341, 7
  %v3345 = vshrl.u32 %v3227, 16
  %v3347 = vrot.slane %v3345, 7
  %v3348 = vshll.u32 %v3227, 16
  %v3350 = vor.u32 %v3347, %v3348
  %v3351 = vsel %vm153, %v3343, %v3350
  %v3353 = vshrl.u32 %v3228, 16
  %v3355 = vrot.slane %v3353, 7
  %v3357 = vshrl.u32 %v3229, 16
  %v3359 = vrot.slane %v3357, 7
  %v3360 = vshll.u32 %v3229, 16
  %v3362 = vor.u32 %v3359, %v3360
  %v3363 = vsel %vm153, %v3355, %v3362
  %v3365 = vshrl.u32 %v3230, 16
  %v3367 = vrot.slane %v3365, 7
  %v3369 = vshrl.u32 %v3231, 16
  %v3371 = vrot.slane %v3369, 7
  %v3372 = vshll.u32 %v3231, 16
  %v3374 = vor.u32 %v3371, %v3372
  %v3375 = vsel %vm153, %v3367, %v3374
  %v3377 = vshrl.u32 %v3232, 16
  %v3379 = vrot.slane %v3377, 7
  %v3381 = vshrl.u32 %v3233, 16
  %v3383 = vrot.slane %v3381, 7
  %v3384 = vshll.u32 %v3233, 16
  %v3386 = vor.u32 %v3383, %v3384
  %v3387 = vsel %vm153, %v3379, %v3386
  %v3389 = vshrl.u32 %v3234, 16
  %v3391 = vrot.slane %v3389, 7
  %v3393 = vshrl.u32 %v3235, 16
  %v3395 = vrot.slane %v3393, 7
  %v3396 = vshll.u32 %v3235, 16
  %v3398 = vor.u32 %v3395, %v3396
  %v3399 = vsel %vm153, %v3391, %v3398
  %v3401 = vshrl.u32 %v3236, 16
  %v3403 = vrot.slane %v3401, 7
  %v3405 = vshrl.u32 %v3237, 16
  %v3407 = vrot.slane %v3405, 7
  %v3408 = vshll.u32 %v3237, 16
  %v3410 = vor.u32 %v3407, %v3408
  %v3411 = vsel %vm153, %v3403, %v3410
  %v3413 = vshrl.u32 %v3238, 16
  %v3415 = vrot.slane %v3413, 7
  %v3417 = vshrl.u32 %v3239, 16
  %v3419 = vrot.slane %v3417, 7
  %v3420 = vshll.u32 %v3239, 16
  %v3422 = vor.u32 %v3419, %v3420
  %v3423 = vsel %vm153, %v3415, %v3422
  %v3425 = vshrl.u32 %v3240, 16
  %v3427 = vrot.slane %v3425, 7
  %v3429 = vshrl.u32 %v3241, 16
  %v3431 = vrot.slane %v3429, 7
  %v3432 = vshll.u32 %v3241, 16
  %v3434 = vor.u32 %v3431, %v3432
  %v3435 = vsel %vm153, %v3427, %v3434
  %v3437 = vshrl.u32 %v3242, 16
  %v3439 = vrot.slane %v3437, 7
  %v3441 = vshrl.u32 %v3243, 16
  %v3443 = vrot.slane %v3441, 7
  %v3444 = vshll.u32 %v3243, 16
  %v3446 = vor.u32 %v3443, %v3444
  %v3447 = vsel %vm153, %v3439, %v3446
  %v3449 = vshrl.u32 %v3244, 16
  %v3451 = vrot.slane %v3449, 7
  %v3453 = vshrl.u32 %v3245, 16
  %v3455 = vrot.slane %v3453, 7
  %v3456 = vshll.u32 %v3245, 16
  %v3458 = vor.u32 %v3455, %v3456
  %v3459 = vsel %vm153, %v3451, %v3458
  %v3461 = vshrl.u32 %v3246, 16
  %v3463 = vrot.slane %v3461, 7
  %v3465 = vshrl.u32 %v3247, 16
  %v3467 = vrot.slane %v3465, 7
  %v3468 = vshll.u32 %v3247, 16
  %v3470 = vor.u32 %v3467, %v3468
  %v3471 = vsel %vm153, %v3463, %v3470
  %v3473 = vshrl.u32 %v3248, 16
  %v3475 = vrot.slane %v3473, 7
  %v3477 = vshrl.u32 %v3249, 16
  %v3479 = vrot.slane %v3477, 7
  %v3480 = vshll.u32 %v3249, 16
  %v3482 = vor.u32 %v3479, %v3480
  %v3483 = vsel %vm153, %v3475, %v3482
  %v3485 = vshrl.u32 %v3250, 16
  %v3487 = vrot.slane %v3485, 7
  %v3489 = vshrl.u32 %v3251, 16
  %v3491 = vrot.slane %v3489, 7
  %v3492 = vshll.u32 %v3251, 16
  %v3494 = vor.u32 %v3491, %v3492
  %v3495 = vsel %vm153, %v3487, %v3494
  %v3497 = vshrl.u32 %v3252, 16
  %v3499 = vrot.slane %v3497, 7
  %v3501 = vshrl.u32 %v3253, 16
  %v3503 = vrot.slane %v3501, 7
  %v3504 = vshll.u32 %v3253, 16
  %v3506 = vor.u32 %v3503, %v3504
  %v3507 = vsel %vm153, %v3499, %v3506
  %v3509 = vshrl.u32 %v3254, 16
  %v3511 = vrot.slane %v3509, 7
  %v3513 = vshrl.u32 %v3255, 16
  %v3515 = vrot.slane %v3513, 7
  %v3516 = vshll.u32 %v3255, 16
  %v3518 = vor.u32 %v3515, %v3516
  %v3519 = vsel %vm153, %v3511, %v3518
  %v3521 = vshrl.u32 %v3256, 16
  %v3523 = vrot.slane %v3521, 7
  %v3525 = vshrl.u32 %v3257, 16
  %v3527 = vrot.slane %v3525, 7
  %v3528 = vshll.u32 %v3257, 16
  %v3530 = vor.u32 %v3527, %v3528
  %v3531 = vsel %vm153, %v3523, %v3530
  %v3533 = vshrl.u32 %v3258, 16
  %v3535 = vrot.slane %v3533, 7
  %v3537 = vshrl.u32 %v3259, 16
  %v3539 = vrot.slane %v3537, 7
  %v3540 = vshll.u32 %v3259, 16
  %v3542 = vor.u32 %v3539, %v3540
  %v3543 = vsel %vm153, %v3535, %v3542
  %v3545 = vshrl.u32 %v3260, 16
  %v3547 = vrot.slane %v3545, 7
  %v3549 = vshrl.u32 %v3261, 16
  %v3551 = vrot.slane %v3549, 7
  %v3552 = vshll.u32 %v3261, 16
  %v3554 = vor.u32 %v3551, %v3552
  %v3555 = vsel %vm153, %v3547, %v3554
  %v3557 = vshrl.u32 %v3262, 16
  %v3559 = vrot.slane %v3557, 7
  %v3561 = vshrl.u32 %v3263, 16
  %v3563 = vrot.slane %v3561, 7
  %v3564 = vshll.u32 %v3263, 16
  %v3566 = vor.u32 %v3563, %v3564
  %v3567 = vsel %vm153, %v3559, %v3566
  %v3569 = vshrl.u32 %v3264, 16
  %v3571 = vrot.slane %v3569, 7
  %v3573 = vshrl.u32 %v3265, 16
  %v3575 = vrot.slane %v3573, 7
  %v3576 = vshll.u32 %v3265, 16
  %v3578 = vor.u32 %v3575, %v3576
  %v3579 = vsel %vm153, %v3571, %v3578
  %v3581 = vshrl.u32 %v3266, 16
  %v3583 = vrot.slane %v3581, 7
  %v3585 = vshrl.u32 %v3267, 16
  %v3587 = vrot.slane %v3585, 7
  %v3588 = vshll.u32 %v3267, 16
  %v3590 = vor.u32 %v3587, %v3588
  %v3591 = vsel %vm153, %v3583, %v3590
  %v3593 = vshrl.u32 %v3268, 16
  %v3595 = vrot.slane %v3593, 7
  %v3597 = vshrl.u32 %v3269, 16
  %v3599 = vrot.slane %v3597, 7
  %v3600 = vshll.u32 %v3269, 16
  %v3602 = vor.u32 %v3599, %v3600
  %v3603 = vsel %vm153, %v3595, %v3602
  %v3605 = vshrl.u32 %v3270, 16
  %v3607 = vrot.slane %v3605, 7
  %v3609 = vshrl.u32 %v3271, 16
  %v3611 = vrot.slane %v3609, 7
  %v3612 = vshll.u32 %v3271, 16
  %v3614 = vor.u32 %v3611, %v3612
  %v3615 = vsel %vm153, %v3607, %v3614
  %v3617 = vshrl.u32 %v3272, 16
  %v3619 = vrot.slane %v3617, 7
  %v3621 = vshrl.u32 %v3273, 16
  %v3623 = vrot.slane %v3621, 7
  %v3624 = vshll.u32 %v3273, 16
  %v3626 = vor.u32 %v3623, %v3624
  %v3627 = vsel %vm153, %v3619, %v3626
  %v3629 = vshrl.u32 %v3274, 16
  %v3631 = vrot.slane %v3629, 7
  %v3633 = vshrl.u32 %v3275, 16
  %v3635 = vrot.slane %v3633, 7
  %v3636 = vshll.u32 %v3275, 16
  %v3638 = vor.u32 %v3635, %v3636
  %v3639 = vsel %vm153, %v3631, %v3638
  %v3641 = vshrl.u32 %v3276, 16
  %v3643 = vrot.slane %v3641, 7
  %v3645 = vshrl.u32 %v3277, 16
  %v3647 = vrot.slane %v3645, 7
  %v3648 = vshll.u32 %v3277, 16
  %v3650 = vor.u32 %v3647, %v3648
  %v3651 = vsel %vm153, %v3643, %v3650
  %v3653 = vshrl.u32 %v3278, 16
  %v3655 = vrot.slane %v3653, 7
  %v3657 = vshrl.u32 %v3279, 16
  %v3659 = vrot.slane %v3657, 7
  %v3660 = vshll.u32 %v3279, 16
  %v3662 = vor.u32 %v3659, %v3660
  %v3663 = vsel %vm153, %v3655, %v3662
  %3664 = vrot.lane.b32.xlu0 %v3291, 24
  %v3665 = vpop.permute.xlu0 %3664
  %3666 = vrot.lane.b32.xlu0 %v3303, 24
  %v3667 = vpop.permute.xlu0 %3666
  %3668 = vrot.lane.b32.xlu0 %v3315, 24
  %v3669 = vpop.permute.xlu0 %3668
  %3670 = vrot.lane.b32.xlu0 %v3327, 24
  %v3671 = vpop.permute.xlu0 %3670
  %3672 = vrot.lane.b32.xlu0 %v3339, 24
  %v3673 = vpop.permute.xlu0 %3672
  %3674 = vrot.lane.b32.xlu0 %v3351, 24
  %v3675 = vpop.permute.xlu0 %3674
  %3676 = vrot.lane.b32.xlu0 %v3363, 24
  %v3677 = vpop.permute.xlu0 %3676
  %3678 = vrot.lane.b32.xlu0 %v3375, 24
  %v3679 = vpop.permute.xlu0 %3678
  %3680 = vrot.lane.b32.xlu0 %v3387, 24
  %v3681 = vpop.permute.xlu0 %3680
  %3682 = vrot.lane.b32.xlu0 %v3399, 24
  %v3683 = vpop.permute.xlu0 %3682
  %3684 = vrot.lane.b32.xlu0 %v3411, 24
  %v3685 = vpop.permute.xlu0 %3684
  %3686 = vrot.lane.b32.xlu0 %v3423, 24
  %v3687 = vpop.permute.xlu0 %3686
  %3688 = vrot.lane.b32.xlu0 %v3435, 24
  %v3689 = vpop.permute.xlu0 %3688
  %3690 = vrot.lane.b32.xlu0 %v3447, 24
  %v3691 = vpop.permute.xlu0 %3690
  %3692 = vrot.lane.b32.xlu0 %v3459, 24
  %v3693 = vpop.permute.xlu0 %3692
  %3694 = vrot.lane.b32.xlu0 %v3471, 24
  %v3695 = vpop.permute.xlu0 %3694
  %3696 = vrot.lane.b32.xlu0 %v3483, 24
  %v3697 = vpop.permute.xlu0 %3696
  %3698 = vrot.lane.b32.xlu0 %v3495, 24
  %v3699 = vpop.permute.xlu0 %3698
  %3700 = vrot.lane.b32.xlu0 %v3507, 24
  %v3701 = vpop.permute.xlu0 %3700
  %3702 = vrot.lane.b32.xlu0 %v3519, 24
  %v3703 = vpop.permute.xlu0 %3702
  %3704 = vrot.lane.b32.xlu0 %v3531, 24
  %v3705 = vpop.permute.xlu0 %3704
  %3706 = vrot.lane.b32.xlu0 %v3543, 24
  %v3707 = vpop.permute.xlu0 %3706
  %3708 = vrot.lane.b32.xlu0 %v3555, 24
  %v3709 = vpop.permute.xlu0 %3708
  %3710 = vrot.lane.b32.xlu0 %v3567, 24
  %v3711 = vpop.permute.xlu0 %3710
  %3712 = vrot.lane.b32.xlu0 %v3579, 24
  %v3713 = vpop.permute.xlu0 %3712
  %3714 = vrot.lane.b32.xlu0 %v3591, 24
  %v3715 = vpop.permute.xlu0 %3714
  %3716 = vrot.lane.b32.xlu0 %v3603, 24
  %v3717 = vpop.permute.xlu0 %3716
  %3718 = vrot.lane.b32.xlu0 %v3615, 24
  %v3719 = vpop.permute.xlu0 %3718
  %3720 = vrot.lane.b32.xlu0 %v3627, 24
  %v3721 = vpop.permute.xlu0 %3720
  %3722 = vrot.lane.b32.xlu0 %v3639, 24
  %v3723 = vpop.permute.xlu0 %3722
  %3724 = vrot.lane.b32.xlu0 %v3651, 24
  %v3725 = vpop.permute.xlu0 %3724
  %3726 = vrot.lane.b32.xlu0 %v3663, 24
  %v3727 = vpop.permute.xlu0 %3726
  %vm3760 = vcmask 228544
  %3761 = vst.msk [vmem:[#allocation3] sm:$0xff] %vm3760, %v3665
  %3762 = vst.msk [vmem:[#allocation3 + $0x8] sm:$0xff] %vm3760, %v3667
  %3763 = vst.msk [vmem:[#allocation3 + $0x10] sm:$0xff] %vm3760, %v3669
  %3764 = vst.msk [vmem:[#allocation3 + $0x18] sm:$0xff] %vm3760, %v3671
  %3765 = vst.msk [vmem:[#allocation3 + $0x20] sm:$0xff] %vm3760, %v3673
  %3766 = vst.msk [vmem:[#allocation3 + $0x28] sm:$0xff] %vm3760, %v3675
  %3767 = vst.msk [vmem:[#allocation3 + $0x30] sm:$0xff] %vm3760, %v3677
  %3768 = vst.msk [vmem:[#allocation3 + $0x38] sm:$0xff] %vm3760, %v3679
  %3769 = vst.msk [vmem:[#allocation3 + $0x40] sm:$0xff] %vm3760, %v3681
  %3770 = vst.msk [vmem:[#allocation3 + $0x48] sm:$0xff] %vm3760, %v3683
  %3771 = vst.msk [vmem:[#allocation3 + $0x50] sm:$0xff] %vm3760, %v3685
  %3772 = vst.msk [vmem:[#allocation3 + $0x58] sm:$0xff] %vm3760, %v3687
  %3773 = vst.msk [vmem:[#allocation3 + $0x60] sm:$0xff] %vm3760, %v3689
  %3774 = vst.msk [vmem:[#allocation3 + $0x68] sm:$0xff] %vm3760, %v3691
  %3775 = vst.msk [vmem:[#allocation3 + $0x70] sm:$0xff] %vm3760, %v3693
  %3776 = vst.msk [vmem:[#allocation3 + $0x78] sm:$0xff] %vm3760, %v3695
  %3777 = vst.msk [vmem:[#allocation3 + $0x80] sm:$0xff] %vm3760, %v3697
  %3778 = vst.msk [vmem:[#allocation3 + $0x88] sm:$0xff] %vm3760, %v3699
  %3779 = vst.msk [vmem:[#allocation3 + $0x90] sm:$0xff] %vm3760, %v3701
  %3780 = vst.msk [vmem:[#allocation3 + $0x98] sm:$0xff] %vm3760, %v3703
  %3781 = vst.msk [vmem:[#allocation3 + $0xa0] sm:$0xff] %vm3760, %v3705
  %3782 = vst.msk [vmem:[#allocation3 + $0xa8] sm:$0xff] %vm3760, %v3707
  %3783 = vst.msk [vmem:[#allocation3 + $0xb0] sm:$0xff] %vm3760, %v3709
  %3784 = vst.msk [vmem:[#allocation3 + $0xb8] sm:$0xff] %vm3760, %v3711
  %3785 = vst.msk [vmem:[#allocation3 + $0xc0] sm:$0xff] %vm3760, %v3713
  %3786 = vst.msk [vmem:[#allocation3 + $0xc8] sm:$0xff] %vm3760, %v3715
  %3787 = vst.msk [vmem:[#allocation3 + $0xd0] sm:$0xff] %vm3760, %v3717
  %3788 = vst.msk [vmem:[#allocation3 + $0xd8] sm:$0xff] %vm3760, %v3719
  %3789 = vst.msk [vmem:[#allocation3 + $0xe0] sm:$0xff] %vm3760, %v3721
  %3790 = vst.msk [vmem:[#allocation3 + $0xe8] sm:$0xff] %vm3760, %v3723
  %3791 = vst.msk [vmem:[#allocation3 + $0xf0] sm:$0xff] %vm3760, %v3725
  %3792 = vst.msk [vmem:[#allocation3 + $0xf8] sm:$0xff] %vm3760, %v3727
  %v3793 = vld [vmem:[%s3215 + $0x8] sm:$0xff]
  %v3794 = vld [vmem:[%s3215 + $0x20] sm:$0xff]
  %v3795 = vld [vmem:[%s3215 + $0x38] sm:$0xff]
  %v3796 = vld [vmem:[%s3215 + $0x50] sm:$0xff]
  %v3797 = vld [vmem:[%s3215 + $0x68] sm:$0xff]
  %v3798 = vld [vmem:[%s3215 + $0x80] sm:$0xff]
  %v3799 = vld [vmem:[%s3215 + $0x98] sm:$0xff]
  %v3800 = vld [vmem:[%s3215 + $0xb0] sm:$0xff]
  %v3801 = vld [vmem:[%s3215 + $0xc8] sm:$0xff]
  %v3802 = vld [vmem:[%s3215 + $0xe0] sm:$0xff]
  %v3803 = vld [vmem:[%s3215 + $0xf8] sm:$0xff]
  %v3804 = vld [vmem:[%s3215 + $0x110] sm:$0xff]
  %v3805 = vld [vmem:[%s3215 + $0x128] sm:$0xff]
  %v3806 = vld [vmem:[%s3215 + $0x140] sm:$0xff]
  %v3807 = vld [vmem:[%s3215 + $0x158] sm:$0xff]
  %v3808 = vld [vmem:[%s3215 + $0x170] sm:$0xff]
  %v3809 = vld [vmem:[%s3215 + $0x1b8] sm:$0xff]
  %v3810 = vld [vmem:[%s3215 + $0x1d0] sm:$0xff]
  %v3811 = vld [vmem:[%s3215 + $0x1e8] sm:$0xff]
  %v3812 = vld [vmem:[%s3215 + $0x200] sm:$0xff]
  %v3813 = vld [vmem:[%s3215 + $0x218] sm:$0xff]
  %v3814 = vld [vmem:[%s3215 + $0x230] sm:$0xff]
  %v3815 = vld [vmem:[%s3215 + $0x248] sm:$0xff]
  %v3816 = vld [vmem:[%s3215 + $0x260] sm:$0xff]
  %v3817 = vld [vmem:[%s3215 + $0x278] sm:$0xff]
  %v3818 = vld [vmem:[%s3215 + $0x290] sm:$0xff]
  %v3819 = vld [vmem:[%s3215 + $0x2a8] sm:$0xff]
  %v3820 = vld [vmem:[%s3215 + $0x2c0] sm:$0xff]
  %v3821 = vld [vmem:[%s3215 + $0x2d8] sm:$0xff]
  %v3822 = vld [vmem:[%s3215 + $0x2f0] sm:$0xff]
  %v3823 = vld [vmem:[%s3215 + $0x308] sm:$0xff]
  %v3824 = vld [vmem:[%s3215 + $0x320] sm:$0xff]
  %3857 = vrot.lane.b32.xlu0 %v3793, 28
  %v3858 = vpop.permute.xlu0 %3857
  %3859 = vrot.lane.b32.xlu0 %v3794, 28
  %v3860 = vpop.permute.xlu0 %3859
  %3861 = vrot.lane.b32.xlu0 %v3795, 28
  %v3862 = vpop.permute.xlu0 %3861
  %3863 = vrot.lane.b32.xlu0 %v3796, 28
  %v3864 = vpop.permute.xlu0 %3863
  %3865 = vrot.lane.b32.xlu0 %v3797, 28
  %v3866 = vpop.permute.xlu0 %3865
  %3867 = vrot.lane.b32.xlu0 %v3798, 28
  %v3868 = vpop.permute.xlu0 %3867
  %3869 = vrot.lane.b32.xlu0 %v3799, 28
  %v3870 = vpop.permute.xlu0 %3869
  %3871 = vrot.lane.b32.xlu0 %v3800, 28
  %v3872 = vpop.permute.xlu0 %3871
  %3873 = vrot.lane.b32.xlu0 %v3801, 28
  %v3874 = vpop.permute.xlu0 %3873
  %3875 = vrot.lane.b32.xlu0 %v3802, 28
  %v3876 = vpop.permute.xlu0 %3875
  %3877 = vrot.lane.b32.xlu0 %v3803, 28
  %v3878 = vpop.permute.xlu0 %3877
  %3879 = vrot.lane.b32.xlu0 %v3804, 28
  %v3880 = vpop.permute.xlu0 %3879
  %3881 = vrot.lane.b32.xlu0 %v3805, 28
  %v3882 = vpop.permute.xlu0 %3881
  %3883 = vrot.lane.b32.xlu0 %v3806, 28
  %v3884 = vpop.permute.xlu0 %3883
  %3885 = vrot.lane.b32.xlu0 %v3807, 28
  %v3886 = vpop.permute.xlu0 %3885
  %3887 = vrot.lane.b32.xlu0 %v3808, 28
  %v3888 = vpop.permute.xlu0 %3887
  %3889 = vrot.lane.b32.xlu0 %v3809, 28
  %v3890 = vpop.permute.xlu0 %3889
  %3891 = vrot.lane.b32.xlu0 %v3810, 28
  %v3892 = vpop.permute.xlu0 %3891
  %3893 = vrot.lane.b32.xlu0 %v3811, 28
  %v3894 = vpop.permute.xlu0 %3893
  %3895 = vrot.lane.b32.xlu0 %v3812, 28
  %v3896 = vpop.permute.xlu0 %3895
  %3897 = vrot.lane.b32.xlu0 %v3813, 28
  %v3898 = vpop.permute.xlu0 %3897
  %3899 = vrot.lane.b32.xlu0 %v3814, 28
  %v3900 = vpop.permute.xlu0 %3899
  %3901 = vrot.lane.b32.xlu0 %v3815, 28
  %v3902 = vpop.permute.xlu0 %3901
  %3903 = vrot.lane.b32.xlu0 %v3816, 28
  %v3904 = vpop.permute.xlu0 %3903
  %3905 = vrot.lane.b32.xlu0 %v3817, 28
  %v3906 = vpop.permute.xlu0 %3905
  %3907 = vrot.lane.b32.xlu0 %v3818, 28
  %v3908 = vpop.permute.xlu0 %3907
  %3909 = vrot.lane.b32.xlu0 %v3819, 28
  %v3910 = vpop.permute.xlu0 %3909
  %3911 = vrot.lane.b32.xlu0 %v3820, 28
  %v3912 = vpop.permute.xlu0 %3911
  %3913 = vrot.lane.b32.xlu0 %v3821, 28
  %v3914 = vpop.permute.xlu0 %3913
  %3915 = vrot.lane.b32.xlu0 %v3822, 28
  %v3916 = vpop.permute.xlu0 %3915
  %3917 = vrot.lane.b32.xlu0 %v3823, 28
  %v3918 = vpop.permute.xlu0 %3917
  %3919 = vrot.lane.b32.xlu0 %v3824, 28
  %v3920 = vpop.permute.xlu0 %3919
  %vm3953 = vcmask 261344
  %3954 = vst.msk [vmem:[#allocation3] sm:$0xff] %vm3953, %v3858
  %3955 = vst.msk [vmem:[#allocation3 + $0x8] sm:$0xff] %vm3953, %v3860
  %3956 = vst.msk [vmem:[#allocation3 + $0x10] sm:$0xff] %vm3953, %v3862
  %3957 = vst.msk [vmem:[#allocation3 + $0x18] sm:$0xff] %vm3953, %v3864
  %3958 = vst.msk [vmem:[#allocation3 + $0x20] sm:$0xff] %vm3953, %v3866
  %3959 = vst.msk [vmem:[#allocation3 + $0x28] sm:$0xff] %vm3953, %v3868
  %3960 = vst.msk [vmem:[#allocation3 + $0x30] sm:$0xff] %vm3953, %v3870
  %3961 = vst.msk [vmem:[#allocation3 + $0x38] sm:$0xff] %vm3953, %v3872
  %3962 = vst.msk [vmem:[#allocation3 + $0x40] sm:$0xff] %vm3953, %v3874
  %3963 = vst.msk [vmem:[#allocation3 + $0x48] sm:$0xff] %vm3953, %v3876
  %3964 = vst.msk [vmem:[#allocation3 + $0x50] sm:$0xff] %vm3953, %v3878
  %3965 = vst.msk [vmem:[#allocation3 + $0x58] sm:$0xff] %vm3953, %v3880
  %3966 = vst.msk [vmem:[#allocation3 + $0x60] sm:$0xff] %vm3953, %v3882
  %3967 = vst.msk [vmem:[#allocation3 + $0x68] sm:$0xff] %vm3953, %v3884
  %3968 = vst.msk [vmem:[#allocation3 + $0x70] sm:$0xff] %vm3953, %v3886
  %3969 = vst.msk [vmem:[#allocation3 + $0x78] sm:$0xff] %vm3953, %v3888
  %3970 = vst.msk [vmem:[#allocation3 + $0x80] sm:$0xff] %vm3953, %v3890
  %3971 = vst.msk [vmem:[#allocation3 + $0x88] sm:$0xff] %vm3953, %v3892
  %3972 = vst.msk [vmem:[#allocation3 + $0x90] sm:$0xff] %vm3953, %v3894
  %3973 = vst.msk [vmem:[#allocation3 + $0x98] sm:$0xff] %vm3953, %v3896
  %3974 = vst.msk [vmem:[#allocation3 + $0xa0] sm:$0xff] %vm3953, %v3898
  %3975 = vst.msk [vmem:[#allocation3 + $0xa8] sm:$0xff] %vm3953, %v3900
  %3976 = vst.msk [vmem:[#allocation3 + $0xb0] sm:$0xff] %vm3953, %v3902
  %3977 = vst.msk [vmem:[#allocation3 + $0xb8] sm:$0xff] %vm3953, %v3904
  %3978 = vst.msk [vmem:[#allocation3 + $0xc0] sm:$0xff] %vm3953, %v3906
  %3979 = vst.msk [vmem:[#allocation3 + $0xc8] sm:$0xff] %vm3953, %v3908
  %3980 = vst.msk [vmem:[#allocation3 + $0xd0] sm:$0xff] %vm3953, %v3910
  %3981 = vst.msk [vmem:[#allocation3 + $0xd8] sm:$0xff] %vm3953, %v3912
  %3982 = vst.msk [vmem:[#allocation3 + $0xe0] sm:$0xff] %vm3953, %v3914
  %3983 = vst.msk [vmem:[#allocation3 + $0xe8] sm:$0xff] %vm3953, %v3916
  %3984 = vst.msk [vmem:[#allocation3 + $0xf0] sm:$0xff] %vm3953, %v3918
  %3985 = vst.msk [vmem:[#allocation3 + $0xf8] sm:$0xff] %vm3953, %v3920
  %v3986 = vld [vmem:[%s3215 + $0x8] sm:$0xff]
  %v3987 = vld [vmem:[%s3215 + $0x10] sm:$0x1]
  %v3988 = vld [vmem:[%s3215 + $0x20] sm:$0xff]
  %v3989 = vld [vmem:[%s3215 + $0x28] sm:$0x1]
  %v3990 = vld [vmem:[%s3215 + $0x38] sm:$0xff]
  %v3991 = vld [vmem:[%s3215 + $0x40] sm:$0x1]
  %v3992 = vld [vmem:[%s3215 + $0x50] sm:$0xff]
  %v3993 = vld [vmem:[%s3215 + $0x58] sm:$0x1]
  %v3994 = vld [vmem:[%s3215 + $0x68] sm:$0xff]
  %v3995 = vld [vmem:[%s3215 + $0x70] sm:$0x1]
  %v3996 = vld [vmem:[%s3215 + $0x80] sm:$0xff]
  %v3997 = vld [vmem:[%s3215 + $0x88] sm:$0x1]
  %v3998 = vld [vmem:[%s3215 + $0x98] sm:$0xff]
  %v3999 = vld [vmem:[%s3215 + $0xa0] sm:$0x1]
  %v4000 = vld [vmem:[%s3215 + $0xb0] sm:$0xff]
  %v4001 = vld [vmem:[%s3215 + $0xb8] sm:$0x1]
  %v4002 = vld [vmem:[%s3215 + $0xc8] sm:$0xff]
  %v4003 = vld [vmem:[%s3215 + $0xd0] sm:$0x1]
  %v4004 = vld [vmem:[%s3215 + $0xe0] sm:$0xff]
  %v4005 = vld [vmem:[%s3215 + $0xe8] sm:$0x1]
  %v4006 = vld [vmem:[%s3215 + $0xf8] sm:$0xff]
  %v4007 = vld [vmem:[%s3215 + $0x100] sm:$0x1]
  %v4008 = vld [vmem:[%s3215 + $0x110] sm:$0xff]
  %v4009 = vld [vmem:[%s3215 + $0x118] sm:$0x1]
  %v4010 = vld [vmem:[%s3215 + $0x128] sm:$0xff]
  %v4011 = vld [vmem:[%s3215 + $0x130] sm:$0x1]
  %v4012 = vld [vmem:[%s3215 + $0x140] sm:$0xff]
  %v4013 = vld [vmem:[%s3215 + $0x148] sm:$0x1]
  %v4014 = vld [vmem:[%s3215 + $0x158] sm:$0xff]
  %v4015 = vld [vmem:[%s3215 + $0x160] sm:$0x1]
  %v4016 = vld [vmem:[%s3215 + $0x170] sm:$0xff]
  %v4017 = vld [vmem:[%s3215 + $0x178] sm:$0x1]
  %v4018 = vld [vmem:[%s3215 + $0x1b8] sm:$0xff]
  %v4019 = vld [vmem:[%s3215 + $0x1c0] sm:$0x1]
  %v4020 = vld [vmem:[%s3215 + $0x1d0] sm:$0xff]
  %v4021 = vld [vmem:[%s3215 + $0x1d8] sm:$0x1]
  %v4022 = vld [vmem:[%s3215 + $0x1e8] sm:$0xff]
  %v4023 = vld [vmem:[%s3215 + $0x1f0] sm:$0x1]
  %v4024 = vld [vmem:[%s3215 + $0x200] sm:$0xff]
  %v4025 = vld [vmem:[%s3215 + $0x208] sm:$0x1]
  %v4026 = vld [vmem:[%s3215 + $0x218] sm:$0xff]
  %v4027 = vld [vmem:[%s3215 + $0x220] sm:$0x1]
  %v4028 = vld [vmem:[%s3215 + $0x230] sm:$0xff]
  %v4029 = vld [vmem:[%s3215 + $0x238] sm:$0x1]
  %v4030 = vld [vmem:[%s3215 + $0x248] sm:$0xff]
  %v4031 = vld [vmem:[%s3215 + $0x250] sm:$0x1]
  %v4032 = vld [vmem:[%s3215 + $0x260] sm:$0xff]
  %v4033 = vld [vmem:[%s3215 + $0x268] sm:$0x1]
  %v4034 = vld [vmem:[%s3215 + $0x278] sm:$0xff]
  %v4035 = vld [vmem:[%s3215 + $0x280] sm:$0x1]
  %v4036 = vld [vmem:[%s3215 + $0x290] sm:$0xff]
  %v4037 = vld [vmem:[%s3215 + $0x298] sm:$0x1]
  %v4038 = vld [vmem:[%s3215 + $0x2a8] sm:$0xff]
  %v4039 = vld [vmem:[%s3215 + $0x2b0] sm:$0x1]
  %v4040 = vld [vmem:[%s3215 + $0x2c0] sm:$0xff]
  %v4041 = vld [vmem:[%s3215 + $0x2c8] sm:$0x1]
  %v4042 = vld [vmem:[%s3215 + $0x2d8] sm:$0xff]
  %v4043 = vld [vmem:[%s3215 + $0x2e0] sm:$0x1]
  %v4044 = vld [vmem:[%s3215 + $0x2f0] sm:$0xff]
  %v4045 = vld [vmem:[%s3215 + $0x2f8] sm:$0x1]
  %v4046 = vld [vmem:[%s3215 + $0x308] sm:$0xff]
  %v4047 = vld [vmem:[%s3215 + $0x310] sm:$0x1]
  %v4048 = vld [vmem:[%s3215 + $0x320] sm:$0xff]
  %v4049 = vld [vmem:[%s3215 + $0x328] sm:$0x1]
  %v4051 = vshrl.u32 %v3986, 16
  %v4053 = vshll.u32 %v3986, 16
  %v4055 = vrot.slane %v4053, 1
  %v4056 = vor.u32 %v4051, %v4055
  %v4058 = vshll.u32 %v3987, 16
  %v4060 = vrot.slane %v4058, 1
  %v4061 = vsel %vm1354, %v4056, %v4060
  %v4063 = vshrl.u32 %v3988, 16
  %v4065 = vshll.u32 %v3988, 16
  %v4067 = vrot.slane %v4065, 1
  %v4068 = vor.u32 %v4063, %v4067
  %v4070 = vshll.u32 %v3989, 16
  %v4072 = vrot.slane %v4070, 1
  %v4073 = vsel %vm1354, %v4068, %v4072
  %v4075 = vshrl.u32 %v3990, 16
  %v4077 = vshll.u32 %v3990, 16
  %v4079 = vrot.slane %v4077, 1
  %v4080 = vor.u32 %v4075, %v4079
  %v4082 = vshll.u32 %v3991, 16
  %v4084 = vrot.slane %v4082, 1
  %v4085 = vsel %vm1354, %v4080, %v4084
  %v4087 = vshrl.u32 %v3992, 16
  %v4089 = vshll.u32 %v3992, 16
  %v4091 = vrot.slane %v4089, 1
  %v4092 = vor.u32 %v4087, %v4091
  %v4094 = vshll.u32 %v3993, 16
  %v4096 = vrot.slane %v4094, 1
  %v4097 = vsel %vm1354, %v4092, %v4096
  %v4099 = vshrl.u32 %v3994, 16
  %v4101 = vshll.u32 %v3994, 16
  %v4103 = vrot.slane %v4101, 1
  %v4104 = vor.u32 %v4099, %v4103
  %v4106 = vshll.u32 %v3995, 16
  %v4108 = vrot.slane %v4106, 1
  %v4109 = vsel %vm1354, %v4104, %v4108
  %v4111 = vshrl.u32 %v3996, 16
  %v4113 = vshll.u32 %v3996, 16
  %v4115 = vrot.slane %v4113, 1
  %v4116 = vor.u32 %v4111, %v4115
  %v4118 = vshll.u32 %v3997, 16
  %v4120 = vrot.slane %v4118, 1
  %v4121 = vsel %vm1354, %v4116, %v4120
  %v4123 = vshrl.u32 %v3998, 16
  %v4125 = vshll.u32 %v3998, 16
  %v4127 = vrot.slane %v4125, 1
  %v4128 = vor.u32 %v4123, %v4127
  %v4130 = vshll.u32 %v3999, 16
  %v4132 = vrot.slane %v4130, 1
  %v4133 = vsel %vm1354, %v4128, %v4132
  %v4135 = vshrl.u32 %v4000, 16
  %v4137 = vshll.u32 %v4000, 16
  %v4139 = vrot.slane %v4137, 1
  %v4140 = vor.u32 %v4135, %v4139
  %v4142 = vshll.u32 %v4001, 16
  %v4144 = vrot.slane %v4142, 1
  %v4145 = vsel %vm1354, %v4140, %v4144
  %v4147 = vshrl.u32 %v4002, 16
  %v4149 = vshll.u32 %v4002, 16
  %v4151 = vrot.slane %v4149, 1
  %v4152 = vor.u32 %v4147, %v4151
  %v4154 = vshll.u32 %v4003, 16
  %v4156 = vrot.slane %v4154, 1
  %v4157 = vsel %vm1354, %v4152, %v4156
  %v4159 = vshrl.u32 %v4004, 16
  %v4161 = vshll.u32 %v4004, 16
  %v4163 = vrot.slane %v4161, 1
  %v4164 = vor.u32 %v4159, %v4163
  %v4166 = vshll.u32 %v4005, 16
  %v4168 = vrot.slane %v4166, 1
  %v4169 = vsel %vm1354, %v4164, %v4168
  %v4171 = vshrl.u32 %v4006, 16
  %v4173 = vshll.u32 %v4006, 16
  %v4175 = vrot.slane %v4173, 1
  %v4176 = vor.u32 %v4171, %v4175
  %v4178 = vshll.u32 %v4007, 16
  %v4180 = vrot.slane %v4178, 1
  %v4181 = vsel %vm1354, %v4176, %v4180
  %v4183 = vshrl.u32 %v4008, 16
  %v4185 = vshll.u32 %v4008, 16
  %v4187 = vrot.slane %v4185, 1
  %v4188 = vor.u32 %v4183, %v4187
  %v4190 = vshll.u32 %v4009, 16
  %v4192 = vrot.slane %v4190, 1
  %v4193 = vsel %vm1354, %v4188, %v4192
  %v4195 = vshrl.u32 %v4010, 16
  %v4197 = vshll.u32 %v4010, 16
  %v4199 = vrot.slane %v4197, 1
  %v4200 = vor.u32 %v4195, %v4199
  %v4202 = vshll.u32 %v4011, 16
  %v4204 = vrot.slane %v4202, 1
  %v4205 = vsel %vm1354, %v4200, %v4204
  %v4207 = vshrl.u32 %v4012, 16
  %v4209 = vshll.u32 %v4012, 16
  %v4211 = vrot.slane %v4209, 1
  %v4212 = vor.u32 %v4207, %v4211
  %v4214 = vshll.u32 %v4013, 16
  %v4216 = vrot.slane %v4214, 1
  %v4217 = vsel %vm1354, %v4212, %v4216
  %v4219 = vshrl.u32 %v4014, 16
  %v4221 = vshll.u32 %v4014, 16
  %v4223 = vrot.slane %v4221, 1
  %v4224 = vor.u32 %v4219, %v4223
  %v4226 = vshll.u32 %v4015, 16
  %v4228 = vrot.slane %v4226, 1
  %v4229 = vsel %vm1354, %v4224, %v4228
  %v4231 = vshrl.u32 %v4016, 16
  %v4233 = vshll.u32 %v4016, 16
  %v4235 = vrot.slane %v4233, 1
  %v4236 = vor.u32 %v4231, %v4235
  %v4238 = vshll.u32 %v4017, 16
  %v4240 = vrot.slane %v4238, 1
  %v4241 = vsel %vm1354, %v4236, %v4240
  %v4243 = vshrl.u32 %v4018, 16
  %v4245 = vshll.u32 %v4018, 16
  %v4247 = vrot.slane %v4245, 1
  %v4248 = vor.u32 %v4243, %v4247
  %v4250 = vshll.u32 %v4019, 16
  %v4252 = vrot.slane %v4250, 1
  %v4253 = vsel %vm1354, %v4248, %v4252
  %v4255 = vshrl.u32 %v4020, 16
  %v4257 = vshll.u32 %v4020, 16
  %v4259 = vrot.slane %v4257, 1
  %v4260 = vor.u32 %v4255, %v4259
  %v4262 = vshll.u32 %v4021, 16
  %v4264 = vrot.slane %v4262, 1
  %v4265 = vsel %vm1354, %v4260, %v4264
  %v4267 = vshrl.u32 %v4022, 16
  %v4269 = vshll.u32 %v4022, 16
  %v4271 = vrot.slane %v4269, 1
  %v4272 = vor.u32 %v4267, %v4271
  %v4274 = vshll.u32 %v4023, 16
  %v4276 = vrot.slane %v4274, 1
  %v4277 = vsel %vm1354, %v4272, %v4276
  %v4279 = vshrl.u32 %v4024, 16
  %v4281 = vshll.u32 %v4024, 16
  %v4283 = vrot.slane %v4281, 1
  %v4284 = vor.u32 %v4279, %v4283
  %v4286 = vshll.u32 %v4025, 16
  %v4288 = vrot.slane %v4286, 1
  %v4289 = vsel %vm1354, %v4284, %v4288
  %v4291 = vshrl.u32 %v4026, 16
  %v4293 = vshll.u32 %v4026, 16
  %v4295 = vrot.slane %v4293, 1
  %v4296 = vor.u32 %v4291, %v4295
  %v4298 = vshll.u32 %v4027, 16
  %v4300 = vrot.slane %v4298, 1
  %v4301 = vsel %vm1354, %v4296, %v4300
  %v4303 = vshrl.u32 %v4028, 16
  %v4305 = vshll.u32 %v4028, 16
  %v4307 = vrot.slane %v4305, 1
  %v4308 = vor.u32 %v4303, %v4307
  %v4310 = vshll.u32 %v4029, 16
  %v4312 = vrot.slane %v4310, 1
  %v4313 = vsel %vm1354, %v4308, %v4312
  %v4315 = vshrl.u32 %v4030, 16
  %v4317 = vshll.u32 %v4030, 16
  %v4319 = vrot.slane %v4317, 1
  %v4320 = vor.u32 %v4315, %v4319
  %v4322 = vshll.u32 %v4031, 16
  %v4324 = vrot.slane %v4322, 1
  %v4325 = vsel %vm1354, %v4320, %v4324
  %v4327 = vshrl.u32 %v4032, 16
  %v4329 = vshll.u32 %v4032, 16
  %v4331 = vrot.slane %v4329, 1
  %v4332 = vor.u32 %v4327, %v4331
  %v4334 = vshll.u32 %v4033, 16
  %v4336 = vrot.slane %v4334, 1
  %v4337 = vsel %vm1354, %v4332, %v4336
  %v4339 = vshrl.u32 %v4034, 16
  %v4341 = vshll.u32 %v4034, 16
  %v4343 = vrot.slane %v4341, 1
  %v4344 = vor.u32 %v4339, %v4343
  %v4346 = vshll.u32 %v4035, 16
  %v4348 = vrot.slane %v4346, 1
  %v4349 = vsel %vm1354, %v4344, %v4348
  %v4351 = vshrl.u32 %v4036, 16
  %v4353 = vshll.u32 %v4036, 16
  %v4355 = vrot.slane %v4353, 1
  %v4356 = vor.u32 %v4351, %v4355
  %v4358 = vshll.u32 %v4037, 16
  %v4360 = vrot.slane %v4358, 1
  %v4361 = vsel %vm1354, %v4356, %v4360
  %v4363 = vshrl.u32 %v4038, 16
  %v4365 = vshll.u32 %v4038, 16
  %v4367 = vrot.slane %v4365, 1
  %v4368 = vor.u32 %v4363, %v4367
  %v4370 = vshll.u32 %v4039, 16
  %v4372 = vrot.slane %v4370, 1
  %v4373 = vsel %vm1354, %v4368, %v4372
  %v4375 = vshrl.u32 %v4040, 16
  %v4377 = vshll.u32 %v4040, 16
  %v4379 = vrot.slane %v4377, 1
  %v4380 = vor.u32 %v4375, %v4379
  %v4382 = vshll.u32 %v4041, 16
  %v4384 = vrot.slane %v4382, 1
  %v4385 = vsel %vm1354, %v4380, %v4384
  %v4387 = vshrl.u32 %v4042, 16
  %v4389 = vshll.u32 %v4042, 16
  %v4391 = vrot.slane %v4389, 1
  %v4392 = vor.u32 %v4387, %v4391
  %v4394 = vshll.u32 %v4043, 16
  %v4396 = vrot.slane %v4394, 1
  %v4397 = vsel %vm1354, %v4392, %v4396
  %v4399 = vshrl.u32 %v4044, 16
  %v4401 = vshll.u32 %v4044, 16
  %v4403 = vrot.slane %v4401, 1
  %v4404 = vor.u32 %v4399, %v4403
  %v4406 = vshll.u32 %v4045, 16
  %v4408 = vrot.slane %v4406, 1
  %v4409 = vsel %vm1354, %v4404, %v4408
  %v4411 = vshrl.u32 %v4046, 16
  %v4413 = vshll.u32 %v4046, 16
  %v4415 = vrot.slane %v4413, 1
  %v4416 = vor.u32 %v4411, %v4415
  %v4418 = vshll.u32 %v4047, 16
  %v4420 = vrot.slane %v4418, 1
  %v4421 = vsel %vm1354, %v4416, %v4420
  %v4423 = vshrl.u32 %v4048, 16
  %v4425 = vshll.u32 %v4048, 16
  %v4427 = vrot.slane %v4425, 1
  %v4428 = vor.u32 %v4423, %v4427
  %v4430 = vshll.u32 %v4049, 16
  %v4432 = vrot.slane %v4430, 1
  %v4433 = vsel %vm1354, %v4428, %v4432
  %4434 = vrot.lane.b32.xlu0 %v4061, 32
  %v4435 = vpop.permute.xlu0 %4434
  %4436 = vrot.lane.b32.xlu0 %v4073, 32
  %v4437 = vpop.permute.xlu0 %4436
  %4438 = vrot.lane.b32.xlu0 %v4085, 32
  %v4439 = vpop.permute.xlu0 %4438
  %4440 = vrot.lane.b32.xlu0 %v4097, 32
  %v4441 = vpop.permute.xlu0 %4440
  %4442 = vrot.lane.b32.xlu0 %v4109, 32
  %v4443 = vpop.permute.xlu0 %4442
  %4444 = vrot.lane.b32.xlu0 %v4121, 32
  %v4445 = vpop.permute.xlu0 %4444
  %4446 = vrot.lane.b32.xlu0 %v4133, 32
  %v4447 = vpop.permute.xlu0 %4446
  %4448 = vrot.lane.b32.xlu0 %v4145, 32
  %v4449 = vpop.permute.xlu0 %4448
  %4450 = vrot.lane.b32.xlu0 %v4157, 32
  %v4451 = vpop.permute.xlu0 %4450
  %4452 = vrot.lane.b32.xlu0 %v4169, 32
  %v4453 = vpop.permute.xlu0 %4452
  %4454 = vrot.lane.b32.xlu0 %v4181, 32
  %v4455 = vpop.permute.xlu0 %4454
  %4456 = vrot.lane.b32.xlu0 %v4193, 32
  %v4457 = vpop.permute.xlu0 %4456
  %4458 = vrot.lane.b32.xlu0 %v4205, 32
  %v4459 = vpop.permute.xlu0 %4458
  %4460 = vrot.lane.b32.xlu0 %v4217, 32
  %v4461 = vpop.permute.xlu0 %4460
  %4462 = vrot.lane.b32.xlu0 %v4229, 32
  %v4463 = vpop.permute.xlu0 %4462
  %4464 = vrot.lane.b32.xlu0 %v4241, 32
  %v4465 = vpop.permute.xlu0 %4464
  %4466 = vrot.lane.b32.xlu0 %v4253, 32
  %v4467 = vpop.permute.xlu0 %4466
  %4468 = vrot.lane.b32.xlu0 %v4265, 32
  %v4469 = vpop.permute.xlu0 %4468
  %4470 = vrot.lane.b32.xlu0 %v4277, 32
  %v4471 = vpop.permute.xlu0 %4470
  %4472 = vrot.lane.b32.xlu0 %v4289, 32
  %v4473 = vpop.permute.xlu0 %4472
  %4474 = vrot.lane.b32.xlu0 %v4301, 32
  %v4475 = vpop.permute.xlu0 %4474
  %4476 = vrot.lane.b32.xlu0 %v4313, 32
  %v4477 = vpop.permute.xlu0 %4476
  %4478 = vrot.lane.b32.xlu0 %v4325, 32
  %v4479 = vpop.permute.xlu0 %4478
  %4480 = vrot.lane.b32.xlu0 %v4337, 32
  %v4481 = vpop.permute.xlu0 %4480
  %4482 = vrot.lane.b32.xlu0 %v4349, 32
  %v4483 = vpop.permute.xlu0 %4482
  %4484 = vrot.lane.b32.xlu0 %v4361, 32
  %v4485 = vpop.permute.xlu0 %4484
  %4486 = vrot.lane.b32.xlu0 %v4373, 32
  %v4487 = vpop.permute.xlu0 %4486
  %4488 = vrot.lane.b32.xlu0 %v4385, 32
  %v4489 = vpop.permute.xlu0 %4488
  %4490 = vrot.lane.b32.xlu0 %v4397, 32
  %v4491 = vpop.permute.xlu0 %4490
  %4492 = vrot.lane.b32.xlu0 %v4409, 32
  %v4493 = vpop.permute.xlu0 %4492
  %4494 = vrot.lane.b32.xlu0 %v4421, 32
  %v4495 = vpop.permute.xlu0 %4494
  %4496 = vrot.lane.b32.xlu0 %v4433, 32
  %v4497 = vpop.permute.xlu0 %4496
  %vm4530 = vcmask 294144
  %4531 = vst.msk [vmem:[#allocation3] sm:$0xff] %vm4530, %v4435
  %4532 = vst.msk [vmem:[#allocation3 + $0x8] sm:$0xff] %vm4530, %v4437
  %4533 = vst.msk [vmem:[#allocation3 + $0x10] sm:$0xff] %vm4530, %v4439
  %4534 = vst.msk [vmem:[#allocation3 + $0x18] sm:$0xff] %vm4530, %v4441
  %4535 = vst.msk [vmem:[#allocation3 + $0x20] sm:$0xff] %vm4530, %v4443
  %4536 = vst.msk [vmem:[#allocation3 + $0x28] sm:$0xff] %vm4530, %v4445
  %4537 = vst.msk [vmem:[#allocation3 + $0x30] sm:$0xff] %vm4530, %v4447
  %4538 = vst.msk [vmem:[#allocation3 + $0x38] sm:$0xff] %vm4530, %v4449
  %4539 = vst.msk [vmem:[#allocation3 + $0x40] sm:$0xff] %vm4530, %v4451
  %4540 = vst.msk [vmem:[#allocation3 + $0x48] sm:$0xff] %vm4530, %v4453
  %4541 = vst.msk [vmem:[#allocation3 + $0x50] sm:$0xff] %vm4530, %v4455
  %4542 = vst.msk [vmem:[#allocation3 + $0x58] sm:$0xff] %vm4530, %v4457
  %4543 = vst.msk [vmem:[#allocation3 + $0x60] sm:$0xff] %vm4530, %v4459
  %4544 = vst.msk [vmem:[#allocation3 + $0x68] sm:$0xff] %vm4530, %v4461
  %4545 = vst.msk [vmem:[#allocation3 + $0x70] sm:$0xff] %vm4530, %v4463
  %4546 = vst.msk [vmem:[#allocation3 + $0x78] sm:$0xff] %vm4530, %v4465
  %4547 = vst.msk [vmem:[#allocation3 + $0x80] sm:$0xff] %vm4530, %v4467
  %4548 = vst.msk [vmem:[#allocation3 + $0x88] sm:$0xff] %vm4530, %v4469
  %4549 = vst.msk [vmem:[#allocation3 + $0x90] sm:$0xff] %vm4530, %v4471
  %4550 = vst.msk [vmem:[#allocation3 + $0x98] sm:$0xff] %vm4530, %v4473
  %4551 = vst.msk [vmem:[#allocation3 + $0xa0] sm:$0xff] %vm4530, %v4475
  %4552 = vst.msk [vmem:[#allocation3 + $0xa8] sm:$0xff] %vm4530, %v4477
  %4553 = vst.msk [vmem:[#allocation3 + $0xb0] sm:$0xff] %vm4530, %v4479
  %4554 = vst.msk [vmem:[#allocation3 + $0xb8] sm:$0xff] %vm4530, %v4481
  %4555 = vst.msk [vmem:[#allocation3 + $0xc0] sm:$0xff] %vm4530, %v4483
  %4556 = vst.msk [vmem:[#allocation3 + $0xc8] sm:$0xff] %vm4530, %v4485
  %4557 = vst.msk [vmem:[#allocation3 + $0xd0] sm:$0xff] %vm4530, %v4487
  %4558 = vst.msk [vmem:[#allocation3 + $0xd8] sm:$0xff] %vm4530, %v4489
  %4559 = vst.msk [vmem:[#allocation3 + $0xe0] sm:$0xff] %vm4530, %v4491
  %4560 = vst.msk [vmem:[#allocation3 + $0xe8] sm:$0xff] %vm4530, %v4493
  %4561 = vst.msk [vmem:[#allocation3 + $0xf0] sm:$0xff] %vm4530, %v4495
  %4562 = vst.msk [vmem:[#allocation3 + $0xf8] sm:$0xff] %vm4530, %v4497
  %v4563 = vld [vmem:[#allocation3] sm:$0xff]
  %v4564 = vld [vmem:[#allocation3 + $0x8] sm:$0xff]
  %v4565 = vld [vmem:[#allocation3 + $0x10] sm:$0xff]
  %v4566 = vld [vmem:[#allocation3 + $0x18] sm:$0xff]
  %v4567 = vld [vmem:[#allocation3 + $0x20] sm:$0xff]
  %v4568 = vld [vmem:[#allocation3 + $0x28] sm:$0xff]
  %v4569 = vld [vmem:[#allocation3 + $0x30] sm:$0xff]
  %v4570 = vld [vmem:[#allocation3 + $0x38] sm:$0xff]
  %v4571 = vld [vmem:[#allocation3 + $0x40] sm:$0xff]
  %v4572 = vld [vmem:[#allocation3 + $0x48] sm:$0xff]
  %v4573 = vld [vmem:[#allocation3 + $0x50] sm:$0xff]
  %v4574 = vld [vmem:[#allocation3 + $0x58] sm:$0xff]
  %v4575 = vld [vmem:[#allocation3 + $0x60] sm:$0xff]
  %v4576 = vld [vmem:[#allocation3 + $0x68] sm:$0xff]
  %v4577 = vld [vmem:[#allocation3 + $0x70] sm:$0xff]
  %v4578 = vld [vmem:[#allocation3 + $0x78] sm:$0xff]
  %v4579 = vld [vmem:[#allocation3 + $0x80] sm:$0xff]
  %v4580 = vld [vmem:[#allocation3 + $0x88] sm:$0xff]
  %v4581 = vld [vmem:[#allocation3 + $0x90] sm:$0xff]
  %v4582 = vld [vmem:[#allocation3 + $0x98] sm:$0xff]
  %v4583 = vld [vmem:[#allocation3 + $0xa0] sm:$0xff]
  %v4584 = vld [vmem:[#allocation3 + $0xa8] sm:$0xff]
  %v4585 = vld [vmem:[#allocation3 + $0xb0] sm:$0xff]
  %v4586 = vld [vmem:[#allocation3 + $0xb8] sm:$0xff]
  %v4587 = vld [vmem:[#allocation3 + $0xc0] sm:$0xff]
  %v4588 = vld [vmem:[#allocation3 + $0xc8] sm:$0xff]
  %v4589 = vld [vmem:[#allocation3 + $0xd0] sm:$0xff]
  %v4590 = vld [vmem:[#allocation3 + $0xd8] sm:$0xff]
  %v4591 = vld [vmem:[#allocation3 + $0xe0] sm:$0xff]
  %v4592 = vld [vmem:[#allocation3 + $0xe8] sm:$0xff]
  %v4593 = vld [vmem:[#allocation3 + $0xf0] sm:$0xff]
  %v4594 = vld [vmem:[#allocation3 + $0xf8] sm:$0xff]
  %v4595 = vld [vmem:[%s1] sm:$0xf]
  %v4596 = vld [vmem:[%s1 + $0x4] sm:$0xf]
  %v4597 = vld [vmem:[%s1 + $0x8] sm:$0xf]
  %v4598 = vld [vmem:[%s1 + $0xc] sm:$0xf]
  %v4599 = vld [vmem:[%s1 + $0x10] sm:$0xf]
  %v4600 = vld [vmem:[%s1 + $0x14] sm:$0xf]
  %v4601 = vld [vmem:[%s1 + $0x18] sm:$0xf]
  %v4602 = vld [vmem:[%s1 + $0x1c] sm:$0xf]
  %v4603 = vld [vmem:[%s1 + $0x20] sm:$0xf]
  %v4604 = vld [vmem:[%s1 + $0x24] sm:$0xf]
  %v4605 = vld [vmem:[%s1 + $0x28] sm:$0xf]
  %v4606 = vld [vmem:[%s1 + $0x2c] sm:$0xf]
  %v4607 = vld [vmem:[%s1 + $0x30] sm:$0xf]
  %v4608 = vld [vmem:[%s1 + $0x34] sm:$0xf]
  %v4609 = vld [vmem:[%s1 + $0x38] sm:$0xf]
  %v4610 = vld [vmem:[%s1 + $0x3c] sm:$0xf]
  %v4627 = vunpack.c.l.b16 %v4595
  %v4628 = vunpack.c.l.b16 %v4596
  %v4629 = vunpack.c.l.b16 %v4597
  %v4630 = vunpack.c.l.b16 %v4598
  %v4631 = vunpack.c.l.b16 %v4599
  %v4632 = vunpack.c.l.b16 %v4600
  %v4633 = vunpack.c.l.b16 %v4601
  %v4634 = vunpack.c.l.b16 %v4602
  %v4635 = vunpack.c.l.b16 %v4603
  %v4636 = vunpack.c.l.b16 %v4604
  %v4637 = vunpack.c.l.b16 %v4605
  %v4638 = vunpack.c.l.b16 %v4606
  %v4639 = vunpack.c.l.b16 %v4607
  %v4640 = vunpack.c.l.b16 %v4608
  %v4641 = vunpack.c.l.b16 %v4609
  %v4642 = vunpack.c.l.b16 %v4610
  %v4643 = vpack.c.b16 %v4628, %v4627
  %v4644 = vpack.c.b16 %v4630, %v4629
  %v4645 = vpack.c.b16 %v4632, %v4631
  %v4646 = vpack.c.b16 %v4634, %v4633
  %v4647 = vpack.c.b16 %v4636, %v4635
  %v4648 = vpack.c.b16 %v4638, %v4637
  %v4649 = vpack.c.b16 %v4640, %v4639
  %v4650 = vpack.c.b16 %v4642, %v4641
  %4659 = vmatprep.subr.bf16.mxu0 0
  %4660 = vmatpush1.bf16.msra.mxu0 %v4643
  %4661 = vmatprep.subr.bf16.mxu0 0
  %4662 = vmatpush1.bf16.msra.mxu0 %v4644
  %4663 = vmatprep.subr.bf16.mxu0 0
  %4664 = vmatpush1.bf16.msra.mxu0 %v4645
  %4665 = vmatprep.subr.bf16.mxu0 0
  %4666 = vmatpush1.bf16.msra.mxu0 %v4646
  %4667 = vmatprep.subr.bf16.mxu0 0
  %4668 = vmatpush1.bf16.msra.mxu0 %v4647
  %4669 = vmatprep.subr.bf16.mxu0 0
  %4670 = vmatpush1.bf16.msra.mxu0 %v4648
  %4671 = vmatprep.subr.bf16.mxu0 0
  %4672 = vmatpush1.bf16.msra.mxu0 %v4649
  %4673 = vmatprep.subr.bf16.mxu0 0
  %4674 = vmatpush1.bf16.msra.mxu0 %v4650
  %4675 = vmatprep.subr.bf16.mxu0 0
  %4676 = vmatpush1.bf16.msra.mxu0 0
  %4677 = vmatprep.subr.bf16.mxu0 0
  %4678 = vmatpush1.bf16.msra.mxu0 0
  %4679 = vmatprep.subr.bf16.mxu0 0
  %4680 = vmatpush1.bf16.msra.mxu0 0
  %4681 = vmatprep.subr.bf16.mxu0 0
  %4682 = vmatpush1.bf16.msra.mxu0 0
  %4683 = vmatprep.subr.bf16.mxu0 0
  %4684 = vmatpush1.bf16.msra.mxu0 0
  %4685 = vmatprep.subr.bf16.mxu0 0
  %4686 = vmatpush1.bf16.msra.mxu0 0
  %4687 = vmatprep.subr.bf16.mxu0 0
  %4688 = vmatpush1.bf16.msra.mxu0 0
  %4689 = vmatprep.subr.bf16.mxu0 0
  %4690 = vmatpush1.bf16.msra.mxu0 0
  %4691 = vmatprep.mubr.bf16.mxu0 0
  %4692 = vmatmul.mubr.bf16.gmra.mrb[0].mxu0 %v4563
  %v4693 = vpop.f32.mrb[0].mxu0
  %v4694 = vadd.f32 0.0, %v4693
  %v4695 = vpop.f32.mrb[0].mxu0
  %v4696 = vpop.f32.mrb[0].mxu0
  %v4697 = vadd.f32 0.0, %v4696
  %v4698 = vpop.f32.mrb[0].mxu0
  %4699 = vmatprep.mubr.bf16.mxu0 0
  %4700 = vmatmul.mubr.bf16.gmra.mrb[0].mxu0 %v4564
  %v4701 = vpop.f32.mrb[0].mxu0
  %v4702 = vadd.f32 0.0, %v4701
  %v4703 = vpop.f32.mrb[0].mxu0
  %v4704 = vpop.f32.mrb[0].mxu0
  %v4705 = vadd.f32 0.0, %v4704
  %v4706 = vpop.f32.mrb[0].mxu0
  %4707 = vmatprep.mubr.bf16.mxu0 0
  %4708 = vmatmul.mubr.bf16.gmra.mrb[0].mxu0 %v4565
  %v4709 = vpop.f32.mrb[0].mxu0
  %v4710 = vadd.f32 0.0, %v4709
  %v4711 = vpop.f32.mrb[0].mxu0
  %v4712 = vpop.f32.mrb[0].mxu0
  %v4713 = vadd.f32 0.0, %v4712
  %v4714 = vpop.f32.mrb[0].mxu0
  %4715 = vmatprep.mubr.bf16.mxu0 0
  %4716 = vmatmul.mubr.bf16.gmra.mrb[0].mxu0 %v4566
  %v4717 = vpop.f32.mrb[0].mxu0
  %v4718 = vadd.f32 0.0, %v4717
  %v4719 = vpop.f32.mrb[0].mxu0
  %v4720 = vpop.f32.mrb[0].mxu0
  %v4721 = vadd.f32 0.0, %v4720
  %v4722 = vpop.f32.mrb[0].mxu0
  %4723 = vmatprep.mubr.bf16.mxu0 0
  %4724 = vmatmul.mubr.bf16.gmra.mrb[0].mxu0 %v4567
  %v4725 = vpop.f32.mrb[0].mxu0
  %v4726 = vadd.f32 0.0, %v4725
  %v4727 = vpop.f32.mrb[0].mxu0
  %v4728 = vpop.f32.mrb[0].mxu0
  %v4729 = vadd.f32 0.0, %v4728
  %v4730 = vpop.f32.mrb[0].mxu0
  %4731 = vmatprep.mubr.bf16.mxu0 0
  %4732 = vmatmul.mubr.bf16.gmra.mrb[0].mxu0 %v4568
  %v4733 = vpop.f32.mrb[0].mxu0
  %v4734 = vadd.f32 0.0, %v4733
  %v4735 = vpop.f32.mrb[0].mxu0
  %v4736 = vpop.f32.mrb[0].mxu0
  %v4737 = vadd.f32 0.0, %v4736
  %v4738 = vpop.f32.mrb[0].mxu0
  %4739 = vmatprep.mubr.bf16.mxu0 0
  %4740 = vmatmul.mubr.bf16.gmra.mrb[0].mxu0 %v4569
  %v4741 = vpop.f32.mrb[0].mxu0
  %v4742 = vadd.f32 0.0, %v4741
  %v4743 = vpop.f32.mrb[0].mxu0
  %v4744 = vpop.f32.mrb[0].mxu0
  %v4745 = vadd.f32 0.0, %v4744
  %v4746 = vpop.f32.mrb[0].mxu0
  %4747 = vmatprep.mubr.bf16.mxu0 0
  %4748 = vmatmul.mubr.bf16.gmra.mrb[0].mxu0 %v4570
  %v4749 = vpop.f32.mrb[0].mxu0
  %v4750 = vadd.f32 0.0, %v4749
  %v4751 = vpop.f32.mrb[0].mxu0
  %v4752 = vpop.f32.mrb[0].mxu0
  %v4753 = vadd.f32 0.0, %v4752
  %v4754 = vpop.f32.mrb[0].mxu0
  %4755 = vmatprep.mubr.bf16.mxu0 0
  %4756 = vmatmul.mubr.bf16.gmra.mrb[0].mxu0 %v4571
  %v4757 = vpop.f32.mrb[0].mxu0
  %v4758 = vadd.f32 0.0, %v4757
  %v4759 = vpop.f32.mrb[0].mxu0
  %v4760 = vpop.f32.mrb[0].mxu0
  %v4761 = vadd.f32 0.0, %v4760
  %v4762 = vpop.f32.mrb[0].mxu0
  %4763 = vmatprep.mubr.bf16.mxu0 0
  %4764 = vmatmul.mubr.bf16.gmra.mrb[0].mxu0 %v4572
  %v4765 = vpop.f32.mrb[0].mxu0
  %v4766 = vadd.f32 0.0, %v4765
  %v4767 = vpop.f32.mrb[0].mxu0
  %v4768 = vpop.f32.mrb[0].mxu0
  %v4769 = vadd.f32 0.0, %v4768
  %v4770 = vpop.f32.mrb[0].mxu0
  %4771 = vmatprep.mubr.bf16.mxu0 0
  %4772 = vmatmul.mubr.bf16.gmra.mrb[0].mxu0 %v4573
  %v4773 = vpop.f32.mrb[0].mxu0
  %v4774 = vadd.f32 0.0, %v4773
  %v4775 = vpop.f32.mrb[0].mxu0
  %v4776 = vpop.f32.mrb[0].mxu0
  %v4777 = vadd.f32 0.0, %v4776
  %v4778 = vpop.f32.mrb[0].mxu0
  %4779 = vmatprep.mubr.bf16.mxu0 0
  %4780 = vmatmul.mubr.bf16.gmra.mrb[0].mxu0 %v4574
  %v4781 = vpop.f32.mrb[0].mxu0
  %v4782 = vadd.f32 0.0, %v4781
  %v4783 = vpop.f32.mrb[0].mxu0
  %v4784 = vpop.f32.mrb[0].mxu0
  %v4785 = vadd.f32 0.0, %v4784
  %v4786 = vpop.f32.mrb[0].mxu0
  %4787 = vmatprep.mubr.bf16.mxu0 0
  %4788 = vmatmul.mubr.bf16.gmra.mrb[0].mxu0 %v4575
  %v4789 = vpop.f32.mrb[0].mxu0
  %v4790 = vadd.f32 0.0, %v4789
  %v4791 = vpop.f32.mrb[0].mxu0
  %v4792 = vpop.f32.mrb[0].mxu0
  %v4793 = vadd.f32 0.0, %v4792
  %v4794 = vpop.f32.mrb[0].mxu0
  %4795 = vmatprep.mubr.bf16.mxu0 0
  %4796 = vmatmul.mubr.bf16.gmra.mrb[0].mxu0 %v4576
  %v4797 = vpop.f32.mrb[0].mxu0
  %v4798 = vadd.f32 0.0, %v4797
  %v4799 = vpop.f32.mrb[0].mxu0
  %v4800 = vpop.f32.mrb[0].mxu0
  %v4801 = vadd.f32 0.0, %v4800
  %v4802 = vpop.f32.mrb[0].mxu0
  %4803 = vmatprep.mubr.bf16.mxu0 0
  %4804 = vmatmul.mubr.bf16.gmra.mrb[0].mxu0 %v4577
  %v4805 = vpop.f32.mrb[0].mxu0
  %v4806 = vadd.f32 0.0, %v4805
  %v4807 = vpop.f32.mrb[0].mxu0
  %v4808 = vpop.f32.mrb[0].mxu0
  %v4809 = vadd.f32 0.0, %v4808
  %v4810 = vpop.f32.mrb[0].mxu0
  %4811 = vmatprep.mubr.bf16.mxu0 0
  %4812 = vmatmul.mubr.bf16.gmra.mrb[0].mxu0 %v4578
  %v4813 = vpop.f32.mrb[0].mxu0
  %v4814 = vadd.f32 0.0, %v4813
  %v4815 = vpop.f32.mrb[0].mxu0
  %v4816 = vpop.f32.mrb[0].mxu0
  %v4817 = vadd.f32 0.0, %v4816
  %v4818 = vpop.f32.mrb[0].mxu0
  %4819 = vmatprep.mubr.bf16.mxu0 0
  %4820 = vmatmul.mubr.bf16.gmra.mrb[0].mxu0 %v4579
  %v4821 = vpop.f32.mrb[0].mxu0
  %v4822 = vadd.f32 0.0, %v4821
  %v4823 = vpop.f32.mrb[0].mxu0
  %v4824 = vpop.f32.mrb[0].mxu0
  %v4825 = vadd.f32 0.0, %v4824
  %v4826 = vpop.f32.mrb[0].mxu0
  %4827 = vmatprep.mubr.bf16.mxu0 0
  %4828 = vmatmul.mubr.bf16.gmra.mrb[0].mxu0 %v4580
  %v4829 = vpop.f32.mrb[0].mxu0
  %v4830 = vadd.f32 0.0, %v4829
  %v4831 = vpop.f32.mrb[0].mxu0
  %v4832 = vpop.f32.mrb[0].mxu0
  %v4833 = vadd.f32 0.0, %v4832
  %v4834 = vpop.f32.mrb[0].mxu0
  %4835 = vmatprep.mubr.bf16.mxu0 0
  %4836 = vmatmul.mubr.bf16.gmra.mrb[0].mxu0 %v4581
  %v4837 = vpop.f32.mrb[0].mxu0
  %v4838 = vadd.f32 0.0, %v4837
  %v4839 = vpop.f32.mrb[0].mxu0
  %v4840 = vpop.f32.mrb[0].mxu0
  %v4841 = vadd.f32 0.0, %v4840
  %v4842 = vpop.f32.mrb[0].mxu0
  %4843 = vmatprep.mubr.bf16.mxu0 0
  %4844 = vmatmul.mubr.bf16.gmra.mrb[0].mxu0 %v4582
  %v4845 = vpop.f32.mrb[0].mxu0
  %v4846 = vadd.f32 0.0, %v4845
  %v4847 = vpop.f32.mrb[0].mxu0
  %v4848 = vpop.f32.mrb[0].mxu0
  %v4849 = vadd.f32 0.0, %v4848
  %v4850 = vpop.f32.mrb[0].mxu0
  %4851 = vmatprep.mubr.bf16.mxu0 0
  %4852 = vmatmul.mubr.bf16.gmra.mrb[0].mxu0 %v4583
  %v4853 = vpop.f32.mrb[0].mxu0
  %v4854 = vadd.f32 0.0, %v4853
  %v4855 = vpop.f32.mrb[0].mxu0
  %v4856 = vpop.f32.mrb[0].mxu0
  %v4857 = vadd.f32 0.0, %v4856
  %v4858 = vpop.f32.mrb[0].mxu0
  %4859 = vmatprep.mubr.bf16.mxu0 0
  %4860 = vmatmul.mubr.bf16.gmra.mrb[0].mxu0 %v4584
  %v4861 = vpop.f32.mrb[0].mxu0
  %v4862 = vadd.f32 0.0, %v4861
  %v4863 = vpop.f32.mrb[0].mxu0
  %v4864 = vpop.f32.mrb[0].mxu0
  %v4865 = vadd.f32 0.0, %v4864
  %v4866 = vpop.f32.mrb[0].mxu0
  %4867 = vmatprep.mubr.bf16.mxu0 0
  %4868 = vmatmul.mubr.bf16.gmra.mrb[0].mxu0 %v4585
  %v4869 = vpop.f32.mrb[0].mxu0
  %v4870 = vadd.f32 0.0, %v4869
  %v4871 = vpop.f32.mrb[0].mxu0
  %v4872 = vpop.f32.mrb[0].mxu0
  %v4873 = vadd.f32 0.0, %v4872
  %v4874 = vpop.f32.mrb[0].mxu0
  %4875 = vmatprep.mubr.bf16.mxu0 0
  %4876 = vmatmul.mubr.bf16.gmra.mrb[0].mxu0 %v4586
  %v4877 = vpop.f32.mrb[0].mxu0
  %v4878 = vadd.f32 0.0, %v4877
  %v4879 = vpop.f32.mrb[0].mxu0
  %v4880 = vpop.f32.mrb[0].mxu0
  %v4881 = vadd.f32 0.0, %v4880
  %v4882 = vpop.f32.mrb[0].mxu0
  %4883 = vmatprep.mubr.bf16.mxu0 0
  %4884 = vmatmul.mubr.bf16.gmra.mrb[0].mxu0 %v4587
  %v4885 = vpop.f32.mrb[0].mxu0
  %v4886 = vadd.f32 0.0, %v4885
  %v4887 = vpop.f32.mrb[0].mxu0
  %v4888 = vpop.f32.mrb[0].mxu0
  %v4889 = vadd.f32 0.0, %v4888
  %v4890 = vpop.f32.mrb[0].mxu0
  %4891 = vmatprep.mubr.bf16.mxu0 0
  %4892 = vmatmul.mubr.bf16.gmra.mrb[0].mxu0 %v4588
  %v4893 = vpop.f32.mrb[0].mxu0
  %v4894 = vadd.f32 0.0, %v4893
  %v4895 = vpop.f32.mrb[0].mxu0
  %v4896 = vpop.f32.mrb[0].mxu0
  %v4897 = vadd.f32 0.0, %v4896
  %v4898 = vpop.f32.mrb[0].mxu0
  %4899 = vmatprep.mubr.bf16.mxu0 0
  %4900 = vmatmul.mubr.bf16.gmra.mrb[0].mxu0 %v4589
  %v4901 = vpop.f32.mrb[0].mxu0
  %v4902 = vadd.f32 0.0, %v4901
  %v4903 = vpop.f32.mrb[0].mxu0
  %v4904 = vpop.f32.mrb[0].mxu0
  %v4905 = vadd.f32 0.0, %v4904
  %v4906 = vpop.f32.mrb[0].mxu0
  %4907 = vmatprep.mubr.bf16.mxu0 0
  %4908 = vmatmul.mubr.bf16.gmra.mrb[0].mxu0 %v4590
  %v4909 = vpop.f32.mrb[0].mxu0
  %v4910 = vadd.f32 0.0, %v4909
  %v4911 = vpop.f32.mrb[0].mxu0
  %v4912 = vpop.f32.mrb[0].mxu0
  %v4913 = vadd.f32 0.0, %v4912
  %v4914 = vpop.f32.mrb[0].mxu0
  %4915 = vmatprep.mubr.bf16.mxu0 0
  %4916 = vmatmul.mubr.bf16.gmra.mrb[0].mxu0 %v4591
  %v4917 = vpop.f32.mrb[0].mxu0
  %v4918 = vadd.f32 0.0, %v4917
  %v4919 = vpop.f32.mrb[0].mxu0
  %v4920 = vpop.f32.mrb[0].mxu0
  %v4921 = vadd.f32 0.0, %v4920
  %v4922 = vpop.f32.mrb[0].mxu0
  %4923 = vmatprep.mubr.bf16.mxu0 0
  %4924 = vmatmul.mubr.bf16.gmra.mrb[0].mxu0 %v4592
  %v4925 = vpop.f32.mrb[0].mxu0
  %v4926 = vadd.f32 0.0, %v4925
  %v4927 = vpop.f32.mrb[0].mxu0
  %v4928 = vpop.f32.mrb[0].mxu0
  %v4929 = vadd.f32 0.0, %v4928
  %v4930 = vpop.f32.mrb[0].mxu0
  %4931 = vmatprep.mubr.bf16.mxu0 0
  %4932 = vmatmul.mubr.bf16.gmra.mrb[0].mxu0 %v4593
  %v4933 = vpop.f32.mrb[0].mxu0
  %v4934 = vadd.f32 0.0, %v4933
  %v4935 = vpop.f32.mrb[0].mxu0
  %v4936 = vpop.f32.mrb[0].mxu0
  %v4937 = vadd.f32 0.0, %v4936
  %v4938 = vpop.f32.mrb[0].mxu0
  %4939 = vmatprep.mubr.bf16.mxu0 0
  %4940 = vmatmul.mubr.bf16.gmra.mrb[0].mxu0 %v4594
  %v4941 = vpop.f32.mrb[0].mxu0
  %v4942 = vadd.f32 0.0, %v4941
  %v4943 = vpop.f32.mrb[0].mxu0
  %v4944 = vpop.f32.mrb[0].mxu0
  %v4945 = vadd.f32 0.0, %v4944
  %v4946 = vpop.f32.mrb[0].mxu0
  %4947 = vdwg.mxu0
  %v4948 = vld [vmem:[%s2] sm:$0x1]
  %v4949 = vld [vmem:[%s3] sm:$0x1]
  %v4950 = vadd.f32 %v4694, %v4697
  %v4951 = vadd.f32 %v4950, %v4702
  %v4952 = vadd.f32 %v4951, %v4705
  %v4953 = vadd.f32 %v4952, %v4710
  %v4954 = vadd.f32 %v4953, %v4713
  %v4955 = vadd.f32 %v4954, %v4718
  %v4956 = vadd.f32 %v4955, %v4721
  %v4957 = vadd.f32 %v4956, %v4726
  %v4958 = vadd.f32 %v4957, %v4729
  %v4959 = vadd.f32 %v4958, %v4734
  %v4960 = vadd.f32 %v4959, %v4737
  %v4961 = vadd.f32 %v4960, %v4742
  %v4962 = vadd.f32 %v4961, %v4745
  %v4963 = vadd.f32 %v4962, %v4750
  %v4964 = vadd.f32 %v4963, %v4753
  %v4965 = vadd.f32 %v4964, %v4758
  %v4966 = vadd.f32 %v4965, %v4761
  %v4967 = vadd.f32 %v4966, %v4766
  %v4968 = vadd.f32 %v4967, %v4769
  %v4969 = vadd.f32 %v4968, %v4774
  %v4970 = vadd.f32 %v4969, %v4777
  %v4971 = vadd.f32 %v4970, %v4782
  %v4972 = vadd.f32 %v4971, %v4785
  %v4973 = vadd.f32 %v4972, %v4790
  %v4974 = vadd.f32 %v4973, %v4793
  %v4975 = vadd.f32 %v4974, %v4798
  %v4976 = vadd.f32 %v4975, %v4801
  %v4977 = vadd.f32 %v4976, %v4806
  %v4978 = vadd.f32 %v4977, %v4809
  %v4979 = vadd.f32 %v4978, %v4814
  %v4980 = vadd.f32 %v4979, %v4817
  %v4981 = vadd.f32 %v4980, %v4822
  %v4982 = vadd.f32 %v4981, %v4825
  %v4983 = vadd.f32 %v4982, %v4830
  %v4984 = vadd.f32 %v4983, %v4833
  %v4985 = vadd.f32 %v4984, %v4838
  %v4986 = vadd.f32 %v4985, %v4841
  %v4987 = vadd.f32 %v4986, %v4846
  %v4988 = vadd.f32 %v4987, %v4849
  %v4989 = vadd.f32 %v4988, %v4854
  %v4990 = vadd.f32 %v4989, %v4857
  %v4991 = vadd.f32 %v4990, %v4862
  %v4992 = vadd.f32 %v4991, %v4865
  %v4993 = vadd.f32 %v4992, %v4870
  %v4994 = vadd.f32 %v4993, %v4873
  %v4995 = vadd.f32 %v4994, %v4878
  %v4996 = vadd.f32 %v4995, %v4881
  %v4997 = vadd.f32 %v4996, %v4886
  %v4998 = vadd.f32 %v4997, %v4889
  %v4999 = vadd.f32 %v4998, %v4894
  %v5000 = vadd.f32 %v4999, %v4897
  %v5001 = vadd.f32 %v5000, %v4902
  %v5002 = vadd.f32 %v5001, %v4905
  %v5003 = vadd.f32 %v5002, %v4910
  %v5004 = vadd.f32 %v5003, %v4913
  %v5005 = vadd.f32 %v5004, %v4918
  %v5006 = vadd.f32 %v5005, %v4921
  %v5007 = vadd.f32 %v5006, %v4926
  %v5008 = vadd.f32 %v5007, %v4929
  %v5009 = vadd.f32 %v5008, %v4934
  %v5010 = vadd.f32 %v5009, %v4937
  %v5011 = vadd.f32 %v5010, %v4942
  %v5012 = vadd.f32 %v5011, %v4945
  %v5013 = vrot.slane %v5012, 4
  %v5014 = vadd.f32 %v5012, %v5013
  %v5015 = vrot.slane %v5014, 2
  %v5016 = vadd.f32 %v5014, %v5015
  %v5017 = vrot.slane %v5016, 1
  %v5018 = vadd.f32 %v5016, %v5017
  %v5019 = vmul.f32 %v5018, 0.001953125
  %v5020 = vsub.f32 %v4694, %v5019
  %v5021 = vsub.f32 %v4697, %v5019
  %v5022 = vsub.f32 %v4702, %v5019
  %v5023 = vsub.f32 %v4705, %v5019
  %v5024 = vsub.f32 %v4710, %v5019
  %v5025 = vsub.f32 %v4713, %v5019
  %v5026 = vsub.f32 %v4718, %v5019
  %v5027 = vsub.f32 %v4721, %v5019
  %v5028 = vsub.f32 %v4726, %v5019
  %v5029 = vsub.f32 %v4729, %v5019
  %v5030 = vsub.f32 %v4734, %v5019
  %v5031 = vsub.f32 %v4737, %v5019
  %v5032 = vsub.f32 %v4742, %v5019
  %v5033 = vsub.f32 %v4745, %v5019
  %v5034 = vsub.f32 %v4750, %v5019
  %v5035 = vsub.f32 %v4753, %v5019
  %v5036 = vsub.f32 %v4758, %v5019
  %v5037 = vsub.f32 %v4761, %v5019
  %v5038 = vsub.f32 %v4766, %v5019
  %v5039 = vsub.f32 %v4769, %v5019
  %v5040 = vsub.f32 %v4774, %v5019
  %v5041 = vsub.f32 %v4777, %v5019
  %v5042 = vsub.f32 %v4782, %v5019
  %v5043 = vsub.f32 %v4785, %v5019
  %v5044 = vsub.f32 %v4790, %v5019
  %v5045 = vsub.f32 %v4793, %v5019
  %v5046 = vsub.f32 %v4798, %v5019
  %v5047 = vsub.f32 %v4801, %v5019
  %v5048 = vsub.f32 %v4806, %v5019
  %v5049 = vsub.f32 %v4809, %v5019
  %v5050 = vsub.f32 %v4814, %v5019
  %v5051 = vsub.f32 %v4817, %v5019
  %v5052 = vsub.f32 %v4822, %v5019
  %v5053 = vsub.f32 %v4825, %v5019
  %v5054 = vsub.f32 %v4830, %v5019
  %v5055 = vsub.f32 %v4833, %v5019
  %v5056 = vsub.f32 %v4838, %v5019
  %v5057 = vsub.f32 %v4841, %v5019
  %v5058 = vsub.f32 %v4846, %v5019
  %v5059 = vsub.f32 %v4849, %v5019
  %v5060 = vsub.f32 %v4854, %v5019
  %v5061 = vsub.f32 %v4857, %v5019
  %v5062 = vsub.f32 %v4862, %v5019
  %v5063 = vsub.f32 %v4865, %v5019
  %v5064 = vsub.f32 %v4870, %v5019
  %v5065 = vsub.f32 %v4873, %v5019
  %v5066 = vsub.f32 %v4878, %v5019
  %v5067 = vsub.f32 %v4881, %v5019
  %v5068 = vsub.f32 %v4886, %v5019
  %v5069 = vsub.f32 %v4889, %v5019
  %v5070 = vsub.f32 %v4894, %v5019
  %v5071 = vsub.f32 %v4897, %v5019
  %v5072 = vsub.f32 %v4902, %v5019
  %v5073 = vsub.f32 %v4905, %v5019
  %v5074 = vsub.f32 %v4910, %v5019
  %v5075 = vsub.f32 %v4913, %v5019
  %v5076 = vsub.f32 %v4918, %v5019
  %v5077 = vsub.f32 %v4921, %v5019
  %v5078 = vsub.f32 %v4926, %v5019
  %v5079 = vsub.f32 %v4929, %v5019
  %v5080 = vsub.f32 %v4934, %v5019
  %v5081 = vsub.f32 %v4937, %v5019
  %v5082 = vsub.f32 %v4942, %v5019
  %v5083 = vsub.f32 %v4945, %v5019
  %v5084 = vmul.f32 %v5020, %v5020
  %v5085 = vmul.f32 %v5021, %v5021
  %v5086 = vmul.f32 %v5022, %v5022
  %v5087 = vmul.f32 %v5023, %v5023
  %v5088 = vmul.f32 %v5024, %v5024
  %v5089 = vmul.f32 %v5025, %v5025
  %v5090 = vmul.f32 %v5026, %v5026
  %v5091 = vmul.f32 %v5027, %v5027
  %v5092 = vmul.f32 %v5028, %v5028
  %v5093 = vmul.f32 %v5029, %v5029
  %v5094 = vmul.f32 %v5030, %v5030
  %v5095 = vmul.f32 %v5031, %v5031
  %v5096 = vmul.f32 %v5032, %v5032
  %v5097 = vmul.f32 %v5033, %v5033
  %v5098 = vmul.f32 %v5034, %v5034
  %v5099 = vmul.f32 %v5035, %v5035
  %v5100 = vmul.f32 %v5036, %v5036
  %v5101 = vmul.f32 %v5037, %v5037
  %v5102 = vmul.f32 %v5038, %v5038
  %v5103 = vmul.f32 %v5039, %v5039
  %v5104 = vmul.f32 %v5040, %v5040
  %v5105 = vmul.f32 %v5041, %v5041
  %v5106 = vmul.f32 %v5042, %v5042
  %v5107 = vmul.f32 %v5043, %v5043
  %v5108 = vmul.f32 %v5044, %v5044
  %v5109 = vmul.f32 %v5045, %v5045
  %v5110 = vmul.f32 %v5046, %v5046
  %v5111 = vmul.f32 %v5047, %v5047
  %v5112 = vmul.f32 %v5048, %v5048
  %v5113 = vmul.f32 %v5049, %v5049
  %v5114 = vmul.f32 %v5050, %v5050
  %v5115 = vmul.f32 %v5051, %v5051
  %v5116 = vmul.f32 %v5052, %v5052
  %v5117 = vmul.f32 %v5053, %v5053
  %v5118 = vmul.f32 %v5054, %v5054
  %v5119 = vmul.f32 %v5055, %v5055
  %v5120 = vmul.f32 %v5056, %v5056
  %v5121 = vmul.f32 %v5057, %v5057
  %v5122 = vmul.f32 %v5058, %v5058
  %v5123 = vmul.f32 %v5059, %v5059
  %v5124 = vmul.f32 %v5060, %v5060
  %v5125 = vmul.f32 %v5061, %v5061
  %v5126 = vmul.f32 %v5062, %v5062
  %v5127 = vmul.f32 %v5063, %v5063
  %v5128 = vmul.f32 %v5064, %v5064
  %v5129 = vmul.f32 %v5065, %v5065
  %v5130 = vmul.f32 %v5066, %v5066
  %v5131 = vmul.f32 %v5067, %v5067
  %v5132 = vmul.f32 %v5068, %v5068
  %v5133 = vmul.f32 %v5069, %v5069
  %v5134 = vmul.f32 %v5070, %v5070
  %v5135 = vmul.f32 %v5071, %v5071
  %v5136 = vmul.f32 %v5072, %v5072
  %v5137 = vmul.f32 %v5073, %v5073
  %v5138 = vmul.f32 %v5074, %v5074
  %v5139 = vmul.f32 %v5075, %v5075
  %v5140 = vmul.f32 %v5076, %v5076
  %v5141 = vmul.f32 %v5077, %v5077
  %v5142 = vmul.f32 %v5078, %v5078
  %v5143 = vmul.f32 %v5079, %v5079
  %v5144 = vmul.f32 %v5080, %v5080
  %v5145 = vmul.f32 %v5081, %v5081
  %v5146 = vmul.f32 %v5082, %v5082
  %v5147 = vmul.f32 %v5083, %v5083
  %v5148 = vadd.f32 %v5084, %v5085
  %v5149 = vadd.f32 %v5148, %v5086
  %v5150 = vadd.f32 %v5149, %v5087
  %v5151 = vadd.f32 %v5150, %v5088
  %v5152 = vadd.f32 %v5151, %v5089
  %v5153 = vadd.f32 %v5152, %v5090
  %v5154 = vadd.f32 %v5153, %v5091
  %v5155 = vadd.f32 %v5154, %v5092
  %v5156 = vadd.f32 %v5155, %v5093
  %v5157 = vadd.f32 %v5156, %v5094
  %v5158 = vadd.f32 %v5157, %v5095
  %v5159 = vadd.f32 %v5158, %v5096
  %v5160 = vadd.f32 %v5159, %v5097
  %v5161 = vadd.f32 %v5160, %v5098
  %v5162 = vadd.f32 %v5161, %v5099
  %v5163 = vadd.f32 %v5162, %v5100
  %v5164 = vadd.f32 %v5163, %v5101
  %v5165 = vadd.f32 %v5164, %v5102
  %v5166 = vadd.f32 %v5165, %v5103
  %v5167 = vadd.f32 %v5166, %v5104
  %v5168 = vadd.f32 %v5167, %v5105
  %v5169 = vadd.f32 %v5168, %v5106
  %v5170 = vadd.f32 %v5169, %v5107
  %v5171 = vadd.f32 %v5170, %v5108
  %v5172 = vadd.f32 %v5171, %v5109
  %v5173 = vadd.f32 %v5172, %v5110
  %v5174 = vadd.f32 %v5173, %v5111
  %v5175 = vadd.f32 %v5174, %v5112
  %v5176 = vadd.f32 %v5175, %v5113
  %v5177 = vadd.f32 %v5176, %v5114
  %v5178 = vadd.f32 %v5177, %v5115
  %v5179 = vadd.f32 %v5178, %v5116
  %v5180 = vadd.f32 %v5179, %v5117
  %v5181 = vadd.f32 %v5180, %v5118
  %v5182 = vadd.f32 %v5181, %v5119
  %v5183 = vadd.f32 %v5182, %v5120
  %v5184 = vadd.f32 %v5183, %v5121
  %v5185 = vadd.f32 %v5184, %v5122
  %v5186 = vadd.f32 %v5185, %v5123
  %v5187 = vadd.f32 %v5186, %v5124
  %v5188 = vadd.f32 %v5187, %v5125
  %v5189 = vadd.f32 %v5188, %v5126
  %v5190 = vadd.f32 %v5189, %v5127
  %v5191 = vadd.f32 %v5190, %v5128
  %v5192 = vadd.f32 %v5191, %v5129
  %v5193 = vadd.f32 %v5192, %v5130
  %v5194 = vadd.f32 %v5193, %v5131
  %v5195 = vadd.f32 %v5194, %v5132
  %v5196 = vadd.f32 %v5195, %v5133
  %v5197 = vadd.f32 %v5196, %v5134
  %v5198 = vadd.f32 %v5197, %v5135
  %v5199 = vadd.f32 %v5198, %v5136
  %v5200 = vadd.f32 %v5199, %v5137
  %v5201 = vadd.f32 %v5200, %v5138
  %v5202 = vadd.f32 %v5201, %v5139
  %v5203 = vadd.f32 %v5202, %v5140
  %v5204 = vadd.f32 %v5203, %v5141
  %v5205 = vadd.f32 %v5204, %v5142
  %v5206 = vadd.f32 %v5205, %v5143
  %v5207 = vadd.f32 %v5206, %v5144
  %v5208 = vadd.f32 %v5207, %v5145
  %v5209 = vadd.f32 %v5208, %v5146
  %v5210 = vadd.f32 %v5209, %v5147
  %v5211 = vrot.slane %v5210, 4
  %v5212 = vadd.f32 %v5210, %v5211
  %v5213 = vrot.slane %v5212, 2
  %v5214 = vadd.f32 %v5212, %v5213
  %v5215 = vrot.slane %v5214, 1
  %v5216 = vadd.f32 %v5214, %v5215
  %v5217 = vmul.f32 %v5216, 0.001953125
  %v5218 = vadd.f32 %v5217, 1e-05
  %v5219 = vrsqrt.pop %v5218
  %v5220 = vmul.f32 %v5020, %v5219
  %v5221 = vmul.f32 %v5021, %v5219
  %v5222 = vmul.f32 %v5022, %v5219
  %v5223 = vmul.f32 %v5023, %v5219
  %v5224 = vmul.f32 %v5024, %v5219
  %v5225 = vmul.f32 %v5025, %v5219
  %v5226 = vmul.f32 %v5026, %v5219
  %v5227 = vmul.f32 %v5027, %v5219
  %v5228 = vmul.f32 %v5028, %v5219
  %v5229 = vmul.f32 %v5029, %v5219
  %v5230 = vmul.f32 %v5030, %v5219
  %v5231 = vmul.f32 %v5031, %v5219
  %v5232 = vmul.f32 %v5032, %v5219
  %v5233 = vmul.f32 %v5033, %v5219
  %v5234 = vmul.f32 %v5034, %v5219
  %v5235 = vmul.f32 %v5035, %v5219
  %v5236 = vmul.f32 %v5036, %v5219
  %v5237 = vmul.f32 %v5037, %v5219
  %v5238 = vmul.f32 %v5038, %v5219
  %v5239 = vmul.f32 %v5039, %v5219
  %v5240 = vmul.f32 %v5040, %v5219
  %v5241 = vmul.f32 %v5041, %v5219
  %v5242 = vmul.f32 %v5042, %v5219
  %v5243 = vmul.f32 %v5043, %v5219
  %v5244 = vmul.f32 %v5044, %v5219
  %v5245 = vmul.f32 %v5045, %v5219
  %v5246 = vmul.f32 %v5046, %v5219
  %v5247 = vmul.f32 %v5047, %v5219
  %v5248 = vmul.f32 %v5048, %v5219
  %v5249 = vmul.f32 %v5049, %v5219
  %v5250 = vmul.f32 %v5050, %v5219
  %v5251 = vmul.f32 %v5051, %v5219
  %v5252 = vmul.f32 %v5052, %v5219
  %v5253 = vmul.f32 %v5053, %v5219
  %v5254 = vmul.f32 %v5054, %v5219
  %v5255 = vmul.f32 %v5055, %v5219
  %v5256 = vmul.f32 %v5056, %v5219
  %v5257 = vmul.f32 %v5057, %v5219
  %v5258 = vmul.f32 %v5058, %v5219
  %v5259 = vmul.f32 %v5059, %v5219
  %v5260 = vmul.f32 %v5060, %v5219
  %v5261 = vmul.f32 %v5061, %v5219
  %v5262 = vmul.f32 %v5062, %v5219
  %v5263 = vmul.f32 %v5063, %v5219
  %v5264 = vmul.f32 %v5064, %v5219
  %v5265 = vmul.f32 %v5065, %v5219
  %v5266 = vmul.f32 %v5066, %v5219
  %v5267 = vmul.f32 %v5067, %v5219
  %v5268 = vmul.f32 %v5068, %v5219
  %v5269 = vmul.f32 %v5069, %v5219
  %v5270 = vmul.f32 %v5070, %v5219
  %v5271 = vmul.f32 %v5071, %v5219
  %v5272 = vmul.f32 %v5072, %v5219
  %v5273 = vmul.f32 %v5073, %v5219
  %v5274 = vmul.f32 %v5074, %v5219
  %v5275 = vmul.f32 %v5075, %v5219
  %v5276 = vmul.f32 %v5076, %v5219
  %v5277 = vmul.f32 %v5077, %v5219
  %v5278 = vmul.f32 %v5078, %v5219
  %v5279 = vmul.f32 %v5079, %v5219
  %v5280 = vmul.f32 %v5080, %v5219
  %v5281 = vmul.f32 %v5081, %v5219
  %v5282 = vmul.f32 %v5082, %v5219
  %v5283 = vmul.f32 %v5083, %v5219
  %v5285 = vlaneseq
  %v5286 = vshrl.u32 %v5285, 7
  %v5287 = vsub.s32 0, %v5286
  %v5288 = vrot.slane %v4948, %v5287
  %v5290 = vmul.f32 %v5220, %v5288
  %v5291 = vmul.f32 %v5221, %v5288
  %v5292 = vmul.f32 %v5222, %v5288
  %v5293 = vmul.f32 %v5223, %v5288
  %v5294 = vmul.f32 %v5224, %v5288
  %v5295 = vmul.f32 %v5225, %v5288
  %v5296 = vmul.f32 %v5226, %v5288
  %v5297 = vmul.f32 %v5227, %v5288
  %v5298 = vmul.f32 %v5228, %v5288
  %v5299 = vmul.f32 %v5229, %v5288
  %v5300 = vmul.f32 %v5230, %v5288
  %v5301 = vmul.f32 %v5231, %v5288
  %v5302 = vmul.f32 %v5232, %v5288
  %v5303 = vmul.f32 %v5233, %v5288
  %v5304 = vmul.f32 %v5234, %v5288
  %v5305 = vmul.f32 %v5235, %v5288
  %v5306 = vmul.f32 %v5236, %v5288
  %v5307 = vmul.f32 %v5237, %v5288
  %v5308 = vmul.f32 %v5238, %v5288
  %v5309 = vmul.f32 %v5239, %v5288
  %v5310 = vmul.f32 %v5240, %v5288
  %v5311 = vmul.f32 %v5241, %v5288
  %v5312 = vmul.f32 %v5242, %v5288
  %v5313 = vmul.f32 %v5243, %v5288
  %v5314 = vmul.f32 %v5244, %v5288
  %v5315 = vmul.f32 %v5245, %v5288
  %v5316 = vmul.f32 %v5246, %v5288
  %v5317 = vmul.f32 %v5247, %v5288
  %v5318 = vmul.f32 %v5248, %v5288
  %v5319 = vmul.f32 %v5249, %v5288
  %v5320 = vmul.f32 %v5250, %v5288
  %v5321 = vmul.f32 %v5251, %v5288
  %v5322 = vmul.f32 %v5252, %v5288
  %v5323 = vmul.f32 %v5253, %v5288
  %v5324 = vmul.f32 %v5254, %v5288
  %v5325 = vmul.f32 %v5255, %v5288
  %v5326 = vmul.f32 %v5256, %v5288
  %v5327 = vmul.f32 %v5257, %v5288
  %v5328 = vmul.f32 %v5258, %v5288
  %v5329 = vmul.f32 %v5259, %v5288
  %v5330 = vmul.f32 %v5260, %v5288
  %v5331 = vmul.f32 %v5261, %v5288
  %v5332 = vmul.f32 %v5262, %v5288
  %v5333 = vmul.f32 %v5263, %v5288
  %v5334 = vmul.f32 %v5264, %v5288
  %v5335 = vmul.f32 %v5265, %v5288
  %v5336 = vmul.f32 %v5266, %v5288
  %v5337 = vmul.f32 %v5267, %v5288
  %v5338 = vmul.f32 %v5268, %v5288
  %v5339 = vmul.f32 %v5269, %v5288
  %v5340 = vmul.f32 %v5270, %v5288
  %v5341 = vmul.f32 %v5271, %v5288
  %v5342 = vmul.f32 %v5272, %v5288
  %v5343 = vmul.f32 %v5273, %v5288
  %v5344 = vmul.f32 %v5274, %v5288
  %v5345 = vmul.f32 %v5275, %v5288
  %v5346 = vmul.f32 %v5276, %v5288
  %v5347 = vmul.f32 %v5277, %v5288
  %v5348 = vmul.f32 %v5278, %v5288
  %v5349 = vmul.f32 %v5279, %v5288
  %v5350 = vmul.f32 %v5280, %v5288
  %v5351 = vmul.f32 %v5281, %v5288
  %v5352 = vmul.f32 %v5282, %v5288
  %v5353 = vmul.f32 %v5283, %v5288
  %v5355 = vlaneseq
  %v5356 = vshrl.u32 %v5355, 7
  %v5357 = vsub.s32 0, %v5356
  %v5358 = vrot.slane %v4949, %v5357
  %v5360 = vadd.f32 %v5290, %v5358
  %v5361 = vadd.f32 %v5291, %v5358
  %v5362 = vadd.f32 %v5292, %v5358
  %v5363 = vadd.f32 %v5293, %v5358
  %v5364 = vadd.f32 %v5294, %v5358
  %v5365 = vadd.f32 %v5295, %v5358
  %v5366 = vadd.f32 %v5296, %v5358
  %v5367 = vadd.f32 %v5297, %v5358
  %v5368 = vadd.f32 %v5298, %v5358
  %v5369 = vadd.f32 %v5299, %v5358
  %v5370 = vadd.f32 %v5300, %v5358
  %v5371 = vadd.f32 %v5301, %v5358
  %v5372 = vadd.f32 %v5302, %v5358
  %v5373 = vadd.f32 %v5303, %v5358
  %v5374 = vadd.f32 %v5304, %v5358
  %v5375 = vadd.f32 %v5305, %v5358
  %v5376 = vadd.f32 %v5306, %v5358
  %v5377 = vadd.f32 %v5307, %v5358
  %v5378 = vadd.f32 %v5308, %v5358
  %v5379 = vadd.f32 %v5309, %v5358
  %v5380 = vadd.f32 %v5310, %v5358
  %v5381 = vadd.f32 %v5311, %v5358
  %v5382 = vadd.f32 %v5312, %v5358
  %v5383 = vadd.f32 %v5313, %v5358
  %v5384 = vadd.f32 %v5314, %v5358
  %v5385 = vadd.f32 %v5315, %v5358
  %v5386 = vadd.f32 %v5316, %v5358
  %v5387 = vadd.f32 %v5317, %v5358
  %v5388 = vadd.f32 %v5318, %v5358
  %v5389 = vadd.f32 %v5319, %v5358
  %v5390 = vadd.f32 %v5320, %v5358
  %v5391 = vadd.f32 %v5321, %v5358
  %v5392 = vadd.f32 %v5322, %v5358
  %v5393 = vadd.f32 %v5323, %v5358
  %v5394 = vadd.f32 %v5324, %v5358
  %v5395 = vadd.f32 %v5325, %v5358
  %v5396 = vadd.f32 %v5326, %v5358
  %v5397 = vadd.f32 %v5327, %v5358
  %v5398 = vadd.f32 %v5328, %v5358
  %v5399 = vadd.f32 %v5329, %v5358
  %v5400 = vadd.f32 %v5330, %v5358
  %v5401 = vadd.f32 %v5331, %v5358
  %v5402 = vadd.f32 %v5332, %v5358
  %v5403 = vadd.f32 %v5333, %v5358
  %v5404 = vadd.f32 %v5334, %v5358
  %v5405 = vadd.f32 %v5335, %v5358
  %v5406 = vadd.f32 %v5336, %v5358
  %v5407 = vadd.f32 %v5337, %v5358
  %v5408 = vadd.f32 %v5338, %v5358
  %v5409 = vadd.f32 %v5339, %v5358
  %v5410 = vadd.f32 %v5340, %v5358
  %v5411 = vadd.f32 %v5341, %v5358
  %v5412 = vadd.f32 %v5342, %v5358
  %v5413 = vadd.f32 %v5343, %v5358
  %v5414 = vadd.f32 %v5344, %v5358
  %v5415 = vadd.f32 %v5345, %v5358
  %v5416 = vadd.f32 %v5346, %v5358
  %v5417 = vadd.f32 %v5347, %v5358
  %v5418 = vadd.f32 %v5348, %v5358
  %v5419 = vadd.f32 %v5349, %v5358
  %v5420 = vadd.f32 %v5350, %v5358
  %v5421 = vadd.f32 %v5351, %v5358
  %v5422 = vadd.f32 %v5352, %v5358
  %v5423 = vadd.f32 %v5353, %v5358
  %v5424 = vmax.f32 %v5360, 0.0
  %v5425 = vmax.f32 %v5361, 0.0
  %v5426 = vmax.f32 %v5362, 0.0
  %v5427 = vmax.f32 %v5363, 0.0
  %v5428 = vmax.f32 %v5364, 0.0
  %v5429 = vmax.f32 %v5365, 0.0
  %v5430 = vmax.f32 %v5366, 0.0
  %v5431 = vmax.f32 %v5367, 0.0
  %v5432 = vmax.f32 %v5368, 0.0
  %v5433 = vmax.f32 %v5369, 0.0
  %v5434 = vmax.f32 %v5370, 0.0
  %v5435 = vmax.f32 %v5371, 0.0
  %v5436 = vmax.f32 %v5372, 0.0
  %v5437 = vmax.f32 %v5373, 0.0
  %v5438 = vmax.f32 %v5374, 0.0
  %v5439 = vmax.f32 %v5375, 0.0
  %v5440 = vmax.f32 %v5376, 0.0
  %v5441 = vmax.f32 %v5377, 0.0
  %v5442 = vmax.f32 %v5378, 0.0
  %v5443 = vmax.f32 %v5379, 0.0
  %v5444 = vmax.f32 %v5380, 0.0
  %v5445 = vmax.f32 %v5381, 0.0
  %v5446 = vmax.f32 %v5382, 0.0
  %v5447 = vmax.f32 %v5383, 0.0
  %v5448 = vmax.f32 %v5384, 0.0
  %v5449 = vmax.f32 %v5385, 0.0
  %v5450 = vmax.f32 %v5386, 0.0
  %v5451 = vmax.f32 %v5387, 0.0
  %v5452 = vmax.f32 %v5388, 0.0
  %v5453 = vmax.f32 %v5389, 0.0
  %v5454 = vmax.f32 %v5390, 0.0
  %v5455 = vmax.f32 %v5391, 0.0
  %v5456 = vmax.f32 %v5392, 0.0
  %v5457 = vmax.f32 %v5393, 0.0
  %v5458 = vmax.f32 %v5394, 0.0
  %v5459 = vmax.f32 %v5395, 0.0
  %v5460 = vmax.f32 %v5396, 0.0
  %v5461 = vmax.f32 %v5397, 0.0
  %v5462 = vmax.f32 %v5398, 0.0
  %v5463 = vmax.f32 %v5399, 0.0
  %v5464 = vmax.f32 %v5400, 0.0
  %v5465 = vmax.f32 %v5401, 0.0
  %v5466 = vmax.f32 %v5402, 0.0
  %v5467 = vmax.f32 %v5403, 0.0
  %v5468 = vmax.f32 %v5404, 0.0
  %v5469 = vmax.f32 %v5405, 0.0
  %v5470 = vmax.f32 %v5406, 0.0
  %v5471 = vmax.f32 %v5407, 0.0
  %v5472 = vmax.f32 %v5408, 0.0
  %v5473 = vmax.f32 %v5409, 0.0
  %v5474 = vmax.f32 %v5410, 0.0
  %v5475 = vmax.f32 %v5411, 0.0
  %v5476 = vmax.f32 %v5412, 0.0
  %v5477 = vmax.f32 %v5413, 0.0
  %v5478 = vmax.f32 %v5414, 0.0
  %v5479 = vmax.f32 %v5415, 0.0
  %v5480 = vmax.f32 %v5416, 0.0
  %v5481 = vmax.f32 %v5417, 0.0
  %v5482 = vmax.f32 %v5418, 0.0
  %v5483 = vmax.f32 %v5419, 0.0
  %v5484 = vmax.f32 %v5420, 0.0
  %v5485 = vmax.f32 %v5421, 0.0
  %v5486 = vmax.f32 %v5422, 0.0
  %v5487 = vmax.f32 %v5423, 0.0
  %v5488 = vpack.c.bf16 %v5425, %v5424
  %v5489 = vpack.c.bf16 %v5427, %v5426
  %v5490 = vpack.c.bf16 %v5429, %v5428
  %v5491 = vpack.c.bf16 %v5431, %v5430
  %v5492 = vpack.c.bf16 %v5433, %v5432
  %v5493 = vpack.c.bf16 %v5435, %v5434
  %v5494 = vpack.c.bf16 %v5437, %v5436
  %v5495 = vpack.c.bf16 %v5439, %v5438
  %v5496 = vpack.c.bf16 %v5441, %v5440
  %v5497 = vpack.c.bf16 %v5443, %v5442
  %v5498 = vpack.c.bf16 %v5445, %v5444
  %v5499 = vpack.c.bf16 %v5447, %v5446
  %v5500 = vpack.c.bf16 %v5449, %v5448
  %v5501 = vpack.c.bf16 %v5451, %v5450
  %v5502 = vpack.c.bf16 %v5453, %v5452
  %v5503 = vpack.c.bf16 %v5455, %v5454
  %v5504 = vpack.c.bf16 %v5457, %v5456
  %v5505 = vpack.c.bf16 %v5459, %v5458
  %v5506 = vpack.c.bf16 %v5461, %v5460
  %v5507 = vpack.c.bf16 %v5463, %v5462
  %v5508 = vpack.c.bf16 %v5465, %v5464
  %v5509 = vpack.c.bf16 %v5467, %v5466
  %v5510 = vpack.c.bf16 %v5469, %v5468
  %v5511 = vpack.c.bf16 %v5471, %v5470
  %v5512 = vpack.c.bf16 %v5473, %v5472
  %v5513 = vpack.c.bf16 %v5475, %v5474
  %v5514 = vpack.c.bf16 %v5477, %v5476
  %v5515 = vpack.c.bf16 %v5479, %v5478
  %v5516 = vpack.c.bf16 %v5481, %v5480
  %v5517 = vpack.c.bf16 %v5483, %v5482
  %v5518 = vpack.c.bf16 %v5485, %v5484
  %v5519 = vpack.c.bf16 %v5487, %v5486
  %5520 = vst.msk [vmem:[%s552 + $0x8] sm:$0xff] %vm27, %v5488
  %5521 = vst.msk [vmem:[%s552 + $0x20] sm:$0xff] %vm27, %v5489
  %5522 = vst.msk [vmem:[%s552 + $0x38] sm:$0xff] %vm27, %v5490
  %5523 = vst.msk [vmem:[%s552 + $0x50] sm:$0xff] %vm27, %v5491
  %5524 = vst.msk [vmem:[%s552 + $0x68] sm:$0xff] %vm27, %v5492
  %5525 = vst.msk [vmem:[%s552 + $0x80] sm:$0xff] %vm27, %v5493
  %5526 = vst.msk [vmem:[%s552 + $0x98] sm:$0xff] %vm27, %v5494
  %5527 = vst.msk [vmem:[%s552 + $0xb0] sm:$0xff] %vm27, %v5495
  %5528 = vst.msk [vmem:[%s552 + $0xc8] sm:$0xff] %vm27, %v5496
  %5529 = vst.msk [vmem:[%s552 + $0xe0] sm:$0xff] %vm27, %v5497
  %5530 = vst.msk [vmem:[%s552 + $0xf8] sm:$0xff] %vm27, %v5498
  %5531 = vst.msk [vmem:[%s552 + $0x110] sm:$0xff] %vm27, %v5499
  %5532 = vst.msk [vmem:[%s552 + $0x128] sm:$0xff] %vm27, %v5500
  %5533 = vst.msk [vmem:[%s552 + $0x140] sm:$0xff] %vm27, %v5501
  %5534 = vst.msk [vmem:[%s552 + $0x158] sm:$0xff] %vm27, %v5502
  %5535 = vst.msk [vmem:[%s552 + $0x170] sm:$0xff] %vm27, %v5503
  %5536 = vst.msk [vmem:[%s552 + $0x1b8] sm:$0xff] %vm27, %v5504
  %5537 = vst.msk [vmem:[%s552 + $0x1d0] sm:$0xff] %vm27, %v5505
  %5538 = vst.msk [vmem:[%s552 + $0x1e8] sm:$0xff] %vm27, %v5506
  %5539 = vst.msk [vmem:[%s552 + $0x200] sm:$0xff] %vm27, %v5507
  %5540 = vst.msk [vmem:[%s552 + $0x218] sm:$0xff] %vm27, %v5508
  %5541 = vst.msk [vmem:[%s552 + $0x230] sm:$0xff] %vm27, %v5509
  %5542 = vst.msk [vmem:[%s552 + $0x248] sm:$0xff] %vm27, %v5510
  %5543 = vst.msk [vmem:[%s552 + $0x260] sm:$0xff] %vm27, %v5511
  %5544 = vst.msk [vmem:[%s552 + $0x278] sm:$0xff] %vm27, %v5512
  %5545 = vst.msk [vmem:[%s552 + $0x290] sm:$0xff] %vm27, %v5513
  %5546 = vst.msk [vmem:[%s552 + $0x2a8] sm:$0xff] %vm27, %v5514
  %5547 = vst.msk [vmem:[%s552 + $0x2c0] sm:$0xff] %vm27, %v5515
  %5548 = vst.msk [vmem:[%s552 + $0x2d8] sm:$0xff] %vm27, %v5516
  %5549 = vst.msk [vmem:[%s552 + $0x2f0] sm:$0xff] %vm27, %v5517
  %5550 = vst.msk [vmem:[%s552 + $0x308] sm:$0xff] %vm27, %v5518
  %5551 = vst.msk [vmem:[%s552 + $0x320] sm:$0xff] %vm27, %v5519
  %v5552 = vld [vmem:[#allocation2] sm:$0x80]
  %v5553 = vld [vmem:[#allocation2 + $0x8] sm:$0xff]
  %v5554 = vld [vmem:[#allocation2 + $0x18] sm:$0x80]
  %v5555 = vld [vmem:[#allocation2 + $0x20] sm:$0xff]
  %v5556 = vld [vmem:[#allocation2 + $0x30] sm:$0x80]
  %v5557 = vld [vmem:[#allocation2 + $0x38] sm:$0xff]
  %v5558 = vld [vmem:[#allocation2 + $0x48] sm:$0x80]
  %v5559 = vld [vmem:[#allocation2 + $0x50] sm:$0xff]
  %v5560 = vld [vmem:[#allocation2 + $0x60] sm:$0x80]
  %v5561 = vld [vmem:[#allocation2 + $0x68] sm:$0xff]
  %v5562 = vld [vmem:[#allocation2 + $0x78] sm:$0x80]
  %v5563 = vld [vmem:[#allocation2 + $0x80] sm:$0xff]
  %v5564 = vld [vmem:[#allocation2 + $0x90] sm:$0x80]
  %v5565 = vld [vmem:[#allocation2 + $0x98] sm:$0xff]
  %v5566 = vld [vmem:[#allocation2 + $0xa8] sm:$0x80]
  %v5567 = vld [vmem:[#allocation2 + $0xb0] sm:$0xff]
  %v5568 = vld [vmem:[#allocation2 + $0xc0] sm:$0x80]
  %v5569 = vld [vmem:[#allocation2 + $0xc8] sm:$0xff]
  %v5570 = vld [vmem:[#allocation2 + $0xd8] sm:$0x80]
  %v5571 = vld [vmem:[#allocation2 + $0xe0] sm:$0xff]
  %v5572 = vld [vmem:[#allocation2 + $0xf0] sm:$0x80]
  %v5573 = vld [vmem:[#allocation2 + $0xf8] sm:$0xff]
  %v5574 = vld [vmem:[#allocation2 + $0x108] sm:$0x80]
  %v5575 = vld [vmem:[#allocation2 + $0x110] sm:$0xff]
  %v5576 = vld [vmem:[#allocation2 + $0x120] sm:$0x80]
  %v5577 = vld [vmem:[#allocation2 + $0x128] sm:$0xff]
  %v5578 = vld [vmem:[#allocation2 + $0x138] sm:$0x80]
  %v5579 = vld [vmem:[#allocation2 + $0x140] sm:$0xff]
  %v5580 = vld [vmem:[#allocation2 + $0x150] sm:$0x80]
  %v5581 = vld [vmem:[#allocation2 + $0x158] sm:$0xff]
  %v5582 = vld [vmem:[#allocation2 + $0x168] sm:$0x80]
  %v5583 = vld [vmem:[#allocation2 + $0x170] sm:$0xff]
  %v5584 = vld [vmem:[#allocation2 + $0x1b0] sm:$0x80]
  %v5585 = vld [vmem:[#allocation2 + $0x1b8] sm:$0xff]
  %v5586 = vld [vmem:[#allocation2 + $0x1c8] sm:$0x80]
  %v5587 = vld [vmem:[#allocation2 + $0x1d0] sm:$0xff]
  %v5588 = vld [vmem:[#allocation2 + $0x1e0] sm:$0x80]
  %v5589 = vld [vmem:[#allocation2 + $0x1e8] sm:$0xff]
  %v5590 = vld [vmem:[#allocation2 + $0x1f8] sm:$0x80]
  %v5591 = vld [vmem:[#allocation2 + $0x200] sm:$0xff]
  %v5592 = vld [vmem:[#allocation2 + $0x210] sm:$0x80]
  %v5593 = vld [vmem:[#allocation2 + $0x218] sm:$0xff]
  %v5594 = vld [vmem:[#allocation2 + $0x228] sm:$0x80]
  %v5595 = vld [vmem:[#allocation2 + $0x230] sm:$0xff]
  %v5596 = vld [vmem:[#allocation2 + $0x240] sm:$0x80]
  %v5597 = vld [vmem:[#allocation2 + $0x248] sm:$0xff]
  %v5598 = vld [vmem:[#allocation2 + $0x258] sm:$0x80]
  %v5599 = vld [vmem:[#allocation2 + $0x260] sm:$0xff]
  %v5600 = vld [vmem:[#allocation2 + $0x270] sm:$0x80]
  %v5601 = vld [vmem:[#allocation2 + $0x278] sm:$0xff]
  %v5602 = vld [vmem:[#allocation2 + $0x288] sm:$0x80]
  %v5603 = vld [vmem:[#allocation2 + $0x290] sm:$0xff]
  %v5604 = vld [vmem:[#allocation2 + $0x2a0] sm:$0x80]
  %v5605 = vld [vmem:[#allocation2 + $0x2a8] sm:$0xff]
  %v5606 = vld [vmem:[#allocation2 + $0x2b8] sm:$0x80]
  %v5607 = vld [vmem:[#allocation2 + $0x2c0] sm:$0xff]
  %v5608 = vld [vmem:[#allocation2 + $0x2d0] sm:$0x80]
  %v5609 = vld [vmem:[#allocation2 + $0x2d8] sm:$0xff]
  %v5610 = vld [vmem:[#allocation2 + $0x2e8] sm:$0x80]
  %v5611 = vld [vmem:[#allocation2 + $0x2f0] sm:$0xff]
  %v5612 = vld [vmem:[#allocation2 + $0x300] sm:$0x80]
  %v5613 = vld [vmem:[#allocation2 + $0x308] sm:$0xff]
  %v5614 = vld [vmem:[#allocation2 + $0x318] sm:$0x80]
  %v5615 = vld [vmem:[#allocation2 + $0x320] sm:$0xff]
  %v5617 = vshrl.u32 %v5552, 16
  %v5619 = vrot.slane %v5617, 7
  %v5621 = vshrl.u32 %v5553, 16
  %v5623 = vrot.slane %v5621, 7
  %v5624 = vshll.u32 %v5553, 16
  %v5626 = vor.u32 %v5623, %v5624
  %v5627 = vsel %vm153, %v5619, %v5626
  %v5629 = vshrl.u32 %v5554, 16
  %v5631 = vrot.slane %v5629, 7
  %v5633 = vshrl.u32 %v5555, 16
  %v5635 = vrot.slane %v5633, 7
  %v5636 = vshll.u32 %v5555, 16
  %v5638 = vor.u32 %v5635, %v5636
  %v5639 = vsel %vm153, %v5631, %v5638
  %v5641 = vshrl.u32 %v5556, 16
  %v5643 = vrot.slane %v5641, 7
  %v5645 = vshrl.u32 %v5557, 16
  %v5647 = vrot.slane %v5645, 7
  %v5648 = vshll.u32 %v5557, 16
  %v5650 = vor.u32 %v5647, %v5648
  %v5651 = vsel %vm153, %v5643, %v5650
  %v5653 = vshrl.u32 %v5558, 16
  %v5655 = vrot.slane %v5653, 7
  %v5657 = vshrl.u32 %v5559, 16
  %v5659 = vrot.slane %v5657, 7
  %v5660 = vshll.u32 %v5559, 16
  %v5662 = vor.u32 %v5659, %v5660
  %v5663 = vsel %vm153, %v5655, %v5662
  %v5665 = vshrl.u32 %v5560, 16
  %v5667 = vrot.slane %v5665, 7
  %v5669 = vshrl.u32 %v5561, 16
  %v5671 = vrot.slane %v5669, 7
  %v5672 = vshll.u32 %v5561, 16
  %v5674 = vor.u32 %v5671, %v5672
  %v5675 = vsel %vm153, %v5667, %v5674
  %v5677 = vshrl.u32 %v5562, 16
  %v5679 = vrot.slane %v5677, 7
  %v5681 = vshrl.u32 %v5563, 16
  %v5683 = vrot.slane %v5681, 7
  %v5684 = vshll.u32 %v5563, 16
  %v5686 = vor.u32 %v5683, %v5684
  %v5687 = vsel %vm153, %v5679, %v5686
  %v5689 = vshrl.u32 %v5564, 16
  %v5691 = vrot.slane %v5689, 7
  %v5693 = vshrl.u32 %v5565, 16
  %v5695 = vrot.slane %v5693, 7
  %v5696 = vshll.u32 %v5565, 16
  %v5698 = vor.u32 %v5695, %v5696
  %v5699 = vsel %vm153, %v5691, %v5698
  %v5701 = vshrl.u32 %v5566, 16
  %v5703 = vrot.slane %v5701, 7
  %v5705 = vshrl.u32 %v5567, 16
  %v5707 = vrot.slane %v5705, 7
  %v5708 = vshll.u32 %v5567, 16
  %v5710 = vor.u32 %v5707, %v5708
  %v5711 = vsel %vm153, %v5703, %v5710
  %v5713 = vshrl.u32 %v5568, 16
  %v5715 = vrot.slane %v5713, 7
  %v5717 = vshrl.u32 %v5569, 16
  %v5719 = vrot.slane %v5717, 7
  %v5720 = vshll.u32 %v5569, 16
  %v5722 = vor.u32 %v5719, %v5720
  %v5723 = vsel %vm153, %v5715, %v5722
  %v5725 = vshrl.u32 %v5570, 16
  %v5727 = vrot.slane %v5725, 7
  %v5729 = vshrl.u32 %v5571, 16
  %v5731 = vrot.slane %v5729, 7
  %v5732 = vshll.u32 %v5571, 16
  %v5734 = vor.u32 %v5731, %v5732
  %v5735 = vsel %vm153, %v5727, %v5734
  %v5737 = vshrl.u32 %v5572, 16
  %v5739 = vrot.slane %v5737, 7
  %v5741 = vshrl.u32 %v5573, 16
  %v5743 = vrot.slane %v5741, 7
  %v5744 = vshll.u32 %v5573, 16
  %v5746 = vor.u32 %v5743, %v5744
  %v5747 = vsel %vm153, %v5739, %v5746
  %v5749 = vshrl.u32 %v5574, 16
  %v5751 = vrot.slane %v5749, 7
  %v5753 = vshrl.u32 %v5575, 16
  %v5755 = vrot.slane %v5753, 7
  %v5756 = vshll.u32 %v5575, 16
  %v5758 = vor.u32 %v5755, %v5756
  %v5759 = vsel %vm153, %v5751, %v5758
  %v5761 = vshrl.u32 %v5576, 16
  %v5763 = vrot.slane %v5761, 7
  %v5765 = vshrl.u32 %v5577, 16
  %v5767 = vrot.slane %v5765, 7
  %v5768 = vshll.u32 %v5577, 16
  %v5770 = vor.u32 %v5767, %v5768
  %v5771 = vsel %vm153, %v5763, %v5770
  %v5773 = vshrl.u32 %v5578, 16
  %v5775 = vrot.slane %v5773, 7
  %v5777 = vshrl.u32 %v5579, 16
  %v5779 = vrot.slane %v5777, 7
  %v5780 = vshll.u32 %v5579, 16
  %v5782 = vor.u32 %v5779, %v5780
  %v5783 = vsel %vm153, %v5775, %v5782
  %v5785 = vshrl.u32 %v5580, 16
  %v5787 = vrot.slane %v5785, 7
  %v5789 = vshrl.u32 %v5581, 16
  %v5791 = vrot.slane %v5789, 7
  %v5792 = vshll.u32 %v5581, 16
  %v5794 = vor.u32 %v5791, %v5792
  %v5795 = vsel %vm153, %v5787, %v5794
  %v5797 = vshrl.u32 %v5582, 16
  %v5799 = vrot.slane %v5797, 7
  %v5801 = vshrl.u32 %v5583, 16
  %v5803 = vrot.slane %v5801, 7
  %v5804 = vshll.u32 %v5583, 16
  %v5806 = vor.u32 %v5803, %v5804
  %v5807 = vsel %vm153, %v5799, %v5806
  %v5809 = vshrl.u32 %v5584, 16
  %v5811 = vrot.slane %v5809, 7
  %v5813 = vshrl.u32 %v5585, 16
  %v5815 = vrot.slane %v5813, 7
  %v5816 = vshll.u32 %v5585, 16
  %v5818 = vor.u32 %v5815, %v5816
  %v5819 = vsel %vm153, %v5811, %v5818
  %v5821 = vshrl.u32 %v5586, 16
  %v5823 = vrot.slane %v5821, 7
  %v5825 = vshrl.u32 %v5587, 16
  %v5827 = vrot.slane %v5825, 7
  %v5828 = vshll.u32 %v5587, 16
  %v5830 = vor.u32 %v5827, %v5828
  %v5831 = vsel %vm153, %v5823, %v5830
  %v5833 = vshrl.u32 %v5588, 16
  %v5835 = vrot.slane %v5833, 7
  %v5837 = vshrl.u32 %v5589, 16
  %v5839 = vrot.slane %v5837, 7
  %v5840 = vshll.u32 %v5589, 16
  %v5842 = vor.u32 %v5839, %v5840
  %v5843 = vsel %vm153, %v5835, %v5842
  %v5845 = vshrl.u32 %v5590, 16
  %v5847 = vrot.slane %v5845, 7
  %v5849 = vshrl.u32 %v5591, 16
  %v5851 = vrot.slane %v5849, 7
  %v5852 = vshll.u32 %v5591, 16
  %v5854 = vor.u32 %v5851, %v5852
  %v5855 = vsel %vm153, %v5847, %v5854
  %v5857 = vshrl.u32 %v5592, 16
  %v5859 = vrot.slane %v5857, 7
  %v5861 = vshrl.u32 %v5593, 16
  %v5863 = vrot.slane %v5861, 7
  %v5864 = vshll.u32 %v5593, 16
  %v5866 = vor.u32 %v5863, %v5864
  %v5867 = vsel %vm153, %v5859, %v5866
  %v5869 = vshrl.u32 %v5594, 16
  %v5871 = vrot.slane %v5869, 7
  %v5873 = vshrl.u32 %v5595, 16
  %v5875 = vrot.slane %v5873, 7
  %v5876 = vshll.u32 %v5595, 16
  %v5878 = vor.u32 %v5875, %v5876
  %v5879 = vsel %vm153, %v5871, %v5878
  %v5881 = vshrl.u32 %v5596, 16
  %v5883 = vrot.slane %v5881, 7
  %v5885 = vshrl.u32 %v5597, 16
  %v5887 = vrot.slane %v5885, 7
  %v5888 = vshll.u32 %v5597, 16
  %v5890 = vor.u32 %v5887, %v5888
  %v5891 = vsel %vm153, %v5883, %v5890
  %v5893 = vshrl.u32 %v5598, 16
  %v5895 = vrot.slane %v5893, 7
  %v5897 = vshrl.u32 %v5599, 16
  %v5899 = vrot.slane %v5897, 7
  %v5900 = vshll.u32 %v5599, 16
  %v5902 = vor.u32 %v5899, %v5900
  %v5903 = vsel %vm153, %v5895, %v5902
  %v5905 = vshrl.u32 %v5600, 16
  %v5907 = vrot.slane %v5905, 7
  %v5909 = vshrl.u32 %v5601, 16
  %v5911 = vrot.slane %v5909, 7
  %v5912 = vshll.u32 %v5601, 16
  %v5914 = vor.u32 %v5911, %v5912
  %v5915 = vsel %vm153, %v5907, %v5914
  %v5917 = vshrl.u32 %v5602, 16
  %v5919 = vrot.slane %v5917, 7
  %v5921 = vshrl.u32 %v5603, 16
  %v5923 = vrot.slane %v5921, 7
  %v5924 = vshll.u32 %v5603, 16
  %v5926 = vor.u32 %v5923, %v5924
  %v5927 = vsel %vm153, %v5919, %v5926
  %v5929 = vshrl.u32 %v5604, 16
  %v5931 = vrot.slane %v5929, 7
  %v5933 = vshrl.u32 %v5605, 16
  %v5935 = vrot.slane %v5933, 7
  %v5936 = vshll.u32 %v5605, 16
  %v5938 = vor.u32 %v5935, %v5936
  %v5939 = vsel %vm153, %v5931, %v5938
  %v5941 = vshrl.u32 %v5606, 16
  %v5943 = vrot.slane %v5941, 7
  %v5945 = vshrl.u32 %v5607, 16
  %v5947 = vrot.slane %v5945, 7
  %v5948 = vshll.u32 %v5607, 16
  %v5950 = vor.u32 %v5947, %v5948
  %v5951 = vsel %vm153, %v5943, %v5950
  %v5953 = vshrl.u32 %v5608, 16
  %v5955 = vrot.slane %v5953, 7
  %v5957 = vshrl.u32 %v5609, 16
  %v5959 = vrot.slane %v5957, 7
  %v5960 = vshll.u32 %v5609, 16
  %v5962 = vor.u32 %v5959, %v5960
  %v5963 = vsel %vm153, %v5955, %v5962
  %v5965 = vshrl.u32 %v5610, 16
  %v5967 = vrot.slane %v5965, 7
  %v5969 = vshrl.u32 %v5611, 16
  %v5971 = vrot.slane %v5969, 7
  %v5972 = vshll.u32 %v5611, 16
  %v5974 = vor.u32 %v5971, %v5972
  %v5975 = vsel %vm153, %v5967, %v5974
  %v5977 = vshrl.u32 %v5612, 16
  %v5979 = vrot.slane %v5977, 7
  %v5981 = vshrl.u32 %v5613, 16
  %v5983 = vrot.slane %v5981, 7
  %v5984 = vshll.u32 %v5613, 16
  %v5986 = vor.u32 %v5983, %v5984
  %v5987 = vsel %vm153, %v5979, %v5986
  %v5989 = vshrl.u32 %v5614, 16
  %v5991 = vrot.slane %v5989, 7
  %v5993 = vshrl.u32 %v5615, 16
  %v5995 = vrot.slane %v5993, 7
  %v5996 = vshll.u32 %v5615, 16
  %v5998 = vor.u32 %v5995, %v5996
  %v5999 = vsel %vm153, %v5991, %v5998
  %6032 = vst.msk [vmem:[#allocation3] sm:$0xff] %vm27, %v5627
  %6033 = vst.msk [vmem:[#allocation3 + $0x8] sm:$0xff] %vm27, %v5639
  %6034 = vst.msk [vmem:[#allocation3 + $0x10] sm:$0xff] %vm27, %v5651
  %6035 = vst.msk [vmem:[#allocation3 + $0x18] sm:$0xff] %vm27, %v5663
  %6036 = vst.msk [vmem:[#allocation3 + $0x20] sm:$0xff] %vm27, %v5675
  %6037 = vst.msk [vmem:[#allocation3 + $0x28] sm:$0xff] %vm27, %v5687
  %6038 = vst.msk [vmem:[#allocation3 + $0x30] sm:$0xff] %vm27, %v5699
  %6039 = vst.msk [vmem:[#allocation3 + $0x38] sm:$0xff] %vm27, %v5711
  %6040 = vst.msk [vmem:[#allocation3 + $0x40] sm:$0xff] %vm27, %v5723
  %6041 = vst.msk [vmem:[#allocation3 + $0x48] sm:$0xff] %vm27, %v5735
  %6042 = vst.msk [vmem:[#allocation3 + $0x50] sm:$0xff] %vm27, %v5747
  %6043 = vst.msk [vmem:[#allocation3 + $0x58] sm:$0xff] %vm27, %v5759
  %6044 = vst.msk [vmem:[#allocation3 + $0x60] sm:$0xff] %vm27, %v5771
  %6045 = vst.msk [vmem:[#allocation3 + $0x68] sm:$0xff] %vm27, %v5783
  %6046 = vst.msk [vmem:[#allocation3 + $0x70] sm:$0xff] %vm27, %v5795
  %6047 = vst.msk [vmem:[#allocation3 + $0x78] sm:$0xff] %vm27, %v5807
  %6048 = vst.msk [vmem:[#allocation3 + $0x80] sm:$0xff] %vm27, %v5819
  %6049 = vst.msk [vmem:[#allocation3 + $0x88] sm:$0xff] %vm27, %v5831
  %6050 = vst.msk [vmem:[#allocation3 + $0x90] sm:$0xff] %vm27, %v5843
  %6051 = vst.msk [vmem:[#allocation3 + $0x98] sm:$0xff] %vm27, %v5855
  %6052 = vst.msk [vmem:[#allocation3 + $0xa0] sm:$0xff] %vm27, %v5867
  %6053 = vst.msk [vmem:[#allocation3 + $0xa8] sm:$0xff] %vm27, %v5879
  %6054 = vst.msk [vmem:[#allocation3 + $0xb0] sm:$0xff] %vm27, %v5891
  %6055 = vst.msk [vmem:[#allocation3 + $0xb8] sm:$0xff] %vm27, %v5903
  %6056 = vst.msk [vmem:[#allocation3 + $0xc0] sm:$0xff] %vm27, %v5915
  %6057 = vst.msk [vmem:[#allocation3 + $0xc8] sm:$0xff] %vm27, %v5927
  %6058 = vst.msk [vmem:[#allocation3 + $0xd0] sm:$0xff] %vm27, %v5939
  %6059 = vst.msk [vmem:[#allocation3 + $0xd8] sm:$0xff] %vm27, %v5951
  %6060 = vst.msk [vmem:[#allocation3 + $0xe0] sm:$0xff] %vm27, %v5963
  %6061 = vst.msk [vmem:[#allocation3 + $0xe8] sm:$0xff] %vm27, %v5975
  %6062 = vst.msk [vmem:[#allocation3 + $0xf0] sm:$0xff] %vm27, %v5987
  %6063 = vst.msk [vmem:[#allocation3 + $0xf8] sm:$0xff] %vm27, %v5999
  %v6064 = vld [vmem:[#allocation2 + $0x8] sm:$0xff]
  %v6065 = vld [vmem:[#allocation2 + $0x20] sm:$0xff]
  %v6066 = vld [vmem:[#allocation2 + $0x38] sm:$0xff]
  %v6067 = vld [vmem:[#allocation2 + $0x50] sm:$0xff]
  %v6068 = vld [vmem:[#allocation2 + $0x68] sm:$0xff]
  %v6069 = vld [vmem:[#allocation2 + $0x80] sm:$0xff]
  %v6070 = vld [vmem:[#allocation2 + $0x98] sm:$0xff]
  %v6071 = vld [vmem:[#allocation2 + $0xb0] sm:$0xff]
  %v6072 = vld [vmem:[#allocation2 + $0xc8] sm:$0xff]
  %v6073 = vld [vmem:[#allocation2 + $0xe0] sm:$0xff]
  %v6074 = vld [vmem:[#allocation2 + $0xf8] sm:$0xff]
  %v6075 = vld [vmem:[#allocation2 + $0x110] sm:$0xff]
  %v6076 = vld [vmem:[#allocation2 + $0x128] sm:$0xff]
  %v6077 = vld [vmem:[#allocation2 + $0x140] sm:$0xff]
  %v6078 = vld [vmem:[#allocation2 + $0x158] sm:$0xff]
  %v6079 = vld [vmem:[#allocation2 + $0x170] sm:$0xff]
  %v6080 = vld [vmem:[#allocation2 + $0x1b8] sm:$0xff]
  %v6081 = vld [vmem:[#allocation2 + $0x1d0] sm:$0xff]
  %v6082 = vld [vmem:[#allocation2 + $0x1e8] sm:$0xff]
  %v6083 = vld [vmem:[#allocation2 + $0x200] sm:$0xff]
  %v6084 = vld [vmem:[#allocation2 + $0x218] sm:$0xff]
  %v6085 = vld [vmem:[#allocation2 + $0x230] sm:$0xff]
  %v6086 = vld [vmem:[#allocation2 + $0x248] sm:$0xff]
  %v6087 = vld [vmem:[#allocation2 + $0x260] sm:$0xff]
  %v6088 = vld [vmem:[#allocation2 + $0x278] sm:$0xff]
  %v6089 = vld [vmem:[#allocation2 + $0x290] sm:$0xff]
  %v6090 = vld [vmem:[#allocation2 + $0x2a8] sm:$0xff]
  %v6091 = vld [vmem:[#allocation2 + $0x2c0] sm:$0xff]
  %v6092 = vld [vmem:[#allocation2 + $0x2d8] sm:$0xff]
  %v6093 = vld [vmem:[#allocation2 + $0x2f0] sm:$0xff]
  %v6094 = vld [vmem:[#allocation2 + $0x308] sm:$0xff]
  %v6095 = vld [vmem:[#allocation2 + $0x320] sm:$0xff]
  %6128 = vrot.lane.b32.xlu0 %v6064, 4
  %v6129 = vpop.permute.xlu0 %6128
  %6130 = vrot.lane.b32.xlu0 %v6065, 4
  %v6131 = vpop.permute.xlu0 %6130
  %6132 = vrot.lane.b32.xlu0 %v6066, 4
  %v6133 = vpop.permute.xlu0 %6132
  %6134 = vrot.lane.b32.xlu0 %v6067, 4
  %v6135 = vpop.permute.xlu0 %6134
  %6136 = vrot.lane.b32.xlu0 %v6068, 4
  %v6137 = vpop.permute.xlu0 %6136
  %6138 = vrot.lane.b32.xlu0 %v6069, 4
  %v6139 = vpop.permute.xlu0 %6138
  %6140 = vrot.lane.b32.xlu0 %v6070, 4
  %v6141 = vpop.permute.xlu0 %6140
  %6142 = vrot.lane.b32.xlu0 %v6071, 4
  %v6143 = vpop.permute.xlu0 %6142
  %6144 = vrot.lane.b32.xlu0 %v6072, 4
  %v6145 = vpop.permute.xlu0 %6144
  %6146 = vrot.lane.b32.xlu0 %v6073, 4
  %v6147 = vpop.permute.xlu0 %6146
  %6148 = vrot.lane.b32.xlu0 %v6074, 4
  %v6149 = vpop.permute.xlu0 %6148
  %6150 = vrot.lane.b32.xlu0 %v6075, 4
  %v6151 = vpop.permute.xlu0 %6150
  %6152 = vrot.lane.b32.xlu0 %v6076, 4
  %v6153 = vpop.permute.xlu0 %6152
  %6154 = vrot.lane.b32.xlu0 %v6077, 4
  %v6155 = vpop.permute.xlu0 %6154
  %6156 = vrot.lane.b32.xlu0 %v6078, 4
  %v6157 = vpop.permute.xlu0 %6156
  %6158 = vrot.lane.b32.xlu0 %v6079, 4
  %v6159 = vpop.permute.xlu0 %6158
  %6160 = vrot.lane.b32.xlu0 %v6080, 4
  %v6161 = vpop.permute.xlu0 %6160
  %6162 = vrot.lane.b32.xlu0 %v6081, 4
  %v6163 = vpop.permute.xlu0 %6162
  %6164 = vrot.lane.b32.xlu0 %v6082, 4
  %v6165 = vpop.permute.xlu0 %6164
  %6166 = vrot.lane.b32.xlu0 %v6083, 4
  %v6167 = vpop.permute.xlu0 %6166
  %6168 = vrot.lane.b32.xlu0 %v6084, 4
  %v6169 = vpop.permute.xlu0 %6168
  %6170 = vrot.lane.b32.xlu0 %v6085, 4
  %v6171 = vpop.permute.xlu0 %6170
  %6172 = vrot.lane.b32.xlu0 %v6086, 4
  %v6173 = vpop.permute.xlu0 %6172
  %6174 = vrot.lane.b32.xlu0 %v6087, 4
  %v6175 = vpop.permute.xlu0 %6174
  %6176 = vrot.lane.b32.xlu0 %v6088, 4
  %v6177 = vpop.permute.xlu0 %6176
  %6178 = vrot.lane.b32.xlu0 %v6089, 4
  %v6179 = vpop.permute.xlu0 %6178
  %6180 = vrot.lane.b32.xlu0 %v6090, 4
  %v6181 = vpop.permute.xlu0 %6180
  %6182 = vrot.lane.b32.xlu0 %v6091, 4
  %v6183 = vpop.permute.xlu0 %6182
  %6184 = vrot.lane.b32.xlu0 %v6092, 4
  %v6185 = vpop.permute.xlu0 %6184
  %6186 = vrot.lane.b32.xlu0 %v6093, 4
  %v6187 = vpop.permute.xlu0 %6186
  %6188 = vrot.lane.b32.xlu0 %v6094, 4
  %v6189 = vpop.permute.xlu0 %6188
  %6190 = vrot.lane.b32.xlu0 %v6095, 4
  %v6191 = vpop.permute.xlu0 %6190
  %6224 = vst.msk [vmem:[#allocation3] sm:$0xff] %vm1257, %v6129
  %6225 = vst.msk [vmem:[#allocation3 + $0x8] sm:$0xff] %vm1257, %v6131
  %6226 = vst.msk [vmem:[#allocation3 + $0x10] sm:$0xff] %vm1257, %v6133
  %6227 = vst.msk [vmem:[#allocation3 + $0x18] sm:$0xff] %vm1257, %v6135
  %6228 = vst.msk [vmem:[#allocation3 + $0x20] sm:$0xff] %vm1257, %v6137
  %6229 = vst.msk [vmem:[#allocation3 + $0x28] sm:$0xff] %vm1257, %v6139
  %6230 = vst.msk [vmem:[#allocation3 + $0x30] sm:$0xff] %vm1257, %v6141
  %6231 = vst.msk [vmem:[#allocation3 + $0x38] sm:$0xff] %vm1257, %v6143
  %6232 = vst.msk [vmem:[#allocation3 + $0x40] sm:$0xff] %vm1257, %v6145
  %6233 = vst.msk [vmem:[#allocation3 + $0x48] sm:$0xff] %vm1257, %v6147
  %6234 = vst.msk [vmem:[#allocation3 + $0x50] sm:$0xff] %vm1257, %v6149
  %6235 = vst.msk [vmem:[#allocation3 + $0x58] sm:$0xff] %vm1257, %v6151
  %6236 = vst.msk [vmem:[#allocation3 + $0x60] sm:$0xff] %vm1257, %v6153
  %6237 = vst.msk [vmem:[#allocation3 + $0x68] sm:$0xff] %vm1257, %v6155
  %6238 = vst.msk [vmem:[#allocation3 + $0x70] sm:$0xff] %vm1257, %v6157
  %6239 = vst.msk [vmem:[#allocation3 + $0x78] sm:$0xff] %vm1257, %v6159
  %6240 = vst.msk [vmem:[#allocation3 + $0x80] sm:$0xff] %vm1257, %v6161
  %6241 = vst.msk [vmem:[#allocation3 + $0x88] sm:$0xff] %vm1257, %v6163
  %6242 = vst.msk [vmem:[#allocation3 + $0x90] sm:$0xff] %vm1257, %v6165
  %6243 = vst.msk [vmem:[#allocation3 + $0x98] sm:$0xff] %vm1257, %v6167
  %6244 = vst.msk [vmem:[#allocation3 + $0xa0] sm:$0xff] %vm1257, %v6169
  %6245 = vst.msk [vmem:[#allocation3 + $0xa8] sm:$0xff] %vm1257, %v6171
  %6246 = vst.msk [vmem:[#allocation3 + $0xb0] sm:$0xff] %vm1257, %v6173
  %6247 = vst.msk [vmem:[#allocation3 + $0xb8] sm:$0xff] %vm1257, %v6175
  %6248 = vst.msk [vmem:[#allocation3 + $0xc0] sm:$0xff] %vm1257, %v6177
  %6249 = vst.msk [vmem:[#allocation3 + $0xc8] sm:$0xff] %vm1257, %v6179
  %6250 = vst.msk [vmem:[#allocation3 + $0xd0] sm:$0xff] %vm1257, %v6181
  %6251 = vst.msk [vmem:[#allocation3 + $0xd8] sm:$0xff] %vm1257, %v6183
  %6252 = vst.msk [vmem:[#allocation3 + $0xe0] sm:$0xff] %vm1257, %v6185
  %6253 = vst.msk [vmem:[#allocation3 + $0xe8] sm:$0xff] %vm1257, %v6187
  %6254 = vst.msk [vmem:[#allocation3 + $0xf0] sm:$0xff] %vm1257, %v6189
  %6255 = vst.msk [vmem:[#allocation3 + $0xf8] sm:$0xff] %vm1257, %v6191
  %v6256 = vld [vmem:[#allocation2 + $0x8] sm:$0xff]
  %v6257 = vld [vmem:[#allocation2 + $0x10] sm:$0x1]
  %v6258 = vld [vmem:[#allocation2 + $0x20] sm:$0xff]
  %v6259 = vld [vmem:[#allocation2 + $0x28] sm:$0x1]
  %v6260 = vld [vmem:[#allocation2 + $0x38] sm:$0xff]
  %v6261 = vld [vmem:[#allocation2 + $0x40] sm:$0x1]
  %v6262 = vld [vmem:[#allocation2 + $0x50] sm:$0xff]
  %v6263 = vld [vmem:[#allocation2 + $0x58] sm:$0x1]
  %v6264 = vld [vmem:[#allocation2 + $0x68] sm:$0xff]
  %v6265 = vld [vmem:[#allocation2 + $0x70] sm:$0x1]
  %v6266 = vld [vmem:[#allocation2 + $0x80] sm:$0xff]
  %v6267 = vld [vmem:[#allocation2 + $0x88] sm:$0x1]
  %v6268 = vld [vmem:[#allocation2 + $0x98] sm:$0xff]
  %v6269 = vld [vmem:[#allocation2 + $0xa0] sm:$0x1]
  %v6270 = vld [vmem:[#allocation2 + $0xb0] sm:$0xff]
  %v6271 = vld [vmem:[#allocation2 + $0xb8] sm:$0x1]
  %v6272 = vld [vmem:[#allocation2 + $0xc8] sm:$0xff]
  %v6273 = vld [vmem:[#allocation2 + $0xd0] sm:$0x1]
  %v6274 = vld [vmem:[#allocation2 + $0xe0] sm:$0xff]
  %v6275 = vld [vmem:[#allocation2 + $0xe8] sm:$0x1]
  %v6276 = vld [vmem:[#allocation2 + $0xf8] sm:$0xff]
  %v6277 = vld [vmem:[#allocation2 + $0x100] sm:$0x1]
  %v6278 = vld [vmem:[#allocation2 + $0x110] sm:$0xff]
  %v6279 = vld [vmem:[#allocation2 + $0x118] sm:$0x1]
  %v6280 = vld [vmem:[#allocation2 + $0x128] sm:$0xff]
  %v6281 = vld [vmem:[#allocation2 + $0x130] sm:$0x1]
  %v6282 = vld [vmem:[#allocation2 + $0x140] sm:$0xff]
  %v6283 = vld [vmem:[#allocation2 + $0x148] sm:$0x1]
  %v6284 = vld [vmem:[#allocation2 + $0x158] sm:$0xff]
  %v6285 = vld [vmem:[#allocation2 + $0x160] sm:$0x1]
  %v6286 = vld [vmem:[#allocation2 + $0x170] sm:$0xff]
  %v6287 = vld [vmem:[#allocation2 + $0x178] sm:$0x1]
  %v6288 = vld [vmem:[#allocation2 + $0x1b8] sm:$0xff]
  %v6289 = vld [vmem:[#allocation2 + $0x1c0] sm:$0x1]
  %v6290 = vld [vmem:[#allocation2 + $0x1d0] sm:$0xff]
  %v6291 = vld [vmem:[#allocation2 + $0x1d8] sm:$0x1]
  %v6292 = vld [vmem:[#allocation2 + $0x1e8] sm:$0xff]
  %v6293 = vld [vmem:[#allocation2 + $0x1f0] sm:$0x1]
  %v6294 = vld [vmem:[#allocation2 + $0x200] sm:$0xff]
  %v6295 = vld [vmem:[#allocation2 + $0x208] sm:$0x1]
  %v6296 = vld [vmem:[#allocation2 + $0x218] sm:$0xff]
  %v6297 = vld [vmem:[#allocation2 + $0x220] sm:$0x1]
  %v6298 = vld [vmem:[#allocation2 + $0x230] sm:$0xff]
  %v6299 = vld [vmem:[#allocation2 + $0x238] sm:$0x1]
  %v6300 = vld [vmem:[#allocation2 + $0x248] sm:$0xff]
  %v6301 = vld [vmem:[#allocation2 + $0x250] sm:$0x1]
  %v6302 = vld [vmem:[#allocation2 + $0x260] sm:$0xff]
  %v6303 = vld [vmem:[#allocation2 + $0x268] sm:$0x1]
  %v6304 = vld [vmem:[#allocation2 + $0x278] sm:$0xff]
  %v6305 = vld [vmem:[#allocation2 + $0x280] sm:$0x1]
  %v6306 = vld [vmem:[#allocation2 + $0x290] sm:$0xff]
  %v6307 = vld [vmem:[#allocation2 + $0x298] sm:$0x1]
  %v6308 = vld [vmem:[#allocation2 + $0x2a8] sm:$0xff]
  %v6309 = vld [vmem:[#allocation2 + $0x2b0] sm:$0x1]
  %v6310 = vld [vmem:[#allocation2 + $0x2c0] sm:$0xff]
  %v6311 = vld [vmem:[#allocation2 + $0x2c8] sm:$0x1]
  %v6312 = vld [vmem:[#allocation2 + $0x2d8] sm:$0xff]
  %v6313 = vld [vmem:[#allocation2 + $0x2e0] sm:$0x1]
  %v6314 = vld [vmem:[#allocation2 + $0x2f0] sm:$0xff]
  %v6315 = vld [vmem:[#allocation2 + $0x2f8] sm:$0x1]
  %v6316 = vld [vmem:[#allocation2 + $0x308] sm:$0xff]
  %v6317 = vld [vmem:[#allocation2 + $0x310] sm:$0x1]
  %v6318 = vld [vmem:[#allocation2 + $0x320] sm:$0xff]
  %v6319 = vld [vmem:[#allocation2 + $0x328] sm:$0x1]
  %v6321 = vshrl.u32 %v6256, 16
  %v6323 = vshll.u32 %v6256, 16
  %v6325 = vrot.slane %v6323, 1
  %v6326 = vor.u32 %v6321, %v6325
  %v6328 = vshll.u32 %v6257, 16
  %v6330 = vrot.slane %v6328, 1
  %v6331 = vsel %vm1354, %v6326, %v6330
  %v6333 = vshrl.u32 %v6258, 16
  %v6335 = vshll.u32 %v6258, 16
  %v6337 = vrot.slane %v6335, 1
  %v6338 = vor.u32 %v6333, %v6337
  %v6340 = vshll.u32 %v6259, 16
  %v6342 = vrot.slane %v6340, 1
  %v6343 = vsel %vm1354, %v6338, %v6342
  %v6345 = vshrl.u32 %v6260, 16
  %v6347 = vshll.u32 %v6260, 16
  %v6349 = vrot.slane %v6347, 1
  %v6350 = vor.u32 %v6345, %v6349
  %v6352 = vshll.u32 %v6261, 16
  %v6354 = vrot.slane %v6352, 1
  %v6355 = vsel %vm1354, %v6350, %v6354
  %v6357 = vshrl.u32 %v6262, 16
  %v6359 = vshll.u32 %v6262, 16
  %v6361 = vrot.slane %v6359, 1
  %v6362 = vor.u32 %v6357, %v6361
  %v6364 = vshll.u32 %v6263, 16
  %v6366 = vrot.slane %v6364, 1
  %v6367 = vsel %vm1354, %v6362, %v6366
  %v6369 = vshrl.u32 %v6264, 16
  %v6371 = vshll.u32 %v6264, 16
  %v6373 = vrot.slane %v6371, 1
  %v6374 = vor.u32 %v6369, %v6373
  %v6376 = vshll.u32 %v6265, 16
  %v6378 = vrot.slane %v6376, 1
  %v6379 = vsel %vm1354, %v6374, %v6378
  %v6381 = vshrl.u32 %v6266, 16
  %v6383 = vshll.u32 %v6266, 16
  %v6385 = vrot.slane %v6383, 1
  %v6386 = vor.u32 %v6381, %v6385
  %v6388 = vshll.u32 %v6267, 16
  %v6390 = vrot.slane %v6388, 1
  %v6391 = vsel %vm1354, %v6386, %v6390
  %v6393 = vshrl.u32 %v6268, 16
  %v6395 = vshll.u32 %v6268, 16
  %v6397 = vrot.slane %v6395, 1
  %v6398 = vor.u32 %v6393, %v6397
  %v6400 = vshll.u32 %v6269, 16
  %v6402 = vrot.slane %v6400, 1
  %v6403 = vsel %vm1354, %v6398, %v6402
  %v6405 = vshrl.u32 %v6270, 16
  %v6407 = vshll.u32 %v6270, 16
  %v6409 = vrot.slane %v6407, 1
  %v6410 = vor.u32 %v6405, %v6409
  %v6412 = vshll.u32 %v6271, 16
  %v6414 = vrot.slane %v6412, 1
  %v6415 = vsel %vm1354, %v6410, %v6414
  %v6417 = vshrl.u32 %v6272, 16
  %v6419 = vshll.u32 %v6272, 16
  %v6421 = vrot.slane %v6419, 1
  %v6422 = vor.u32 %v6417, %v6421
  %v6424 = vshll.u32 %v6273, 16
  %v6426 = vrot.slane %v6424, 1
  %v6427 = vsel %vm1354, %v6422, %v6426
  %v6429 = vshrl.u32 %v6274, 16
  %v6431 = vshll.u32 %v6274, 16
  %v6433 = vrot.slane %v6431, 1
  %v6434 = vor.u32 %v6429, %v6433
  %v6436 = vshll.u32 %v6275, 16
  %v6438 = vrot.slane %v6436, 1
  %v6439 = vsel %vm1354, %v6434, %v6438
  %v6441 = vshrl.u32 %v6276, 16
  %v6443 = vshll.u32 %v6276, 16
  %v6445 = vrot.slane %v6443, 1
  %v6446 = vor.u32 %v6441, %v6445
  %v6448 = vshll.u32 %v6277, 16
  %v6450 = vrot.slane %v6448, 1
  %v6451 = vsel %vm1354, %v6446, %v6450
  %v6453 = vshrl.u32 %v6278, 16
  %v6455 = vshll.u32 %v6278, 16
  %v6457 = vrot.slane %v6455, 1
  %v6458 = vor.u32 %v6453, %v6457
  %v6460 = vshll.u32 %v6279, 16
  %v6462 = vrot.slane %v6460, 1
  %v6463 = vsel %vm1354, %v6458, %v6462
  %v6465 = vshrl.u32 %v6280, 16
  %v6467 = vshll.u32 %v6280, 16
  %v6469 = vrot.slane %v6467, 1
  %v6470 = vor.u32 %v6465, %v6469
  %v6472 = vshll.u32 %v6281, 16
  %v6474 = vrot.slane %v6472, 1
  %v6475 = vsel %vm1354, %v6470, %v6474
  %v6477 = vshrl.u32 %v6282, 16
  %v6479 = vshll.u32 %v6282, 16
  %v6481 = vrot.slane %v6479, 1
  %v6482 = vor.u32 %v6477, %v6481
  %v6484 = vshll.u32 %v6283, 16
  %v6486 = vrot.slane %v6484, 1
  %v6487 = vsel %vm1354, %v6482, %v6486
  %v6489 = vshrl.u32 %v6284, 16
  %v6491 = vshll.u32 %v6284, 16
  %v6493 = vrot.slane %v6491, 1
  %v6494 = vor.u32 %v6489, %v6493
  %v6496 = vshll.u32 %v6285, 16
  %v6498 = vrot.slane %v6496, 1
  %v6499 = vsel %vm1354, %v6494, %v6498
  %v6501 = vshrl.u32 %v6286, 16
  %v6503 = vshll.u32 %v6286, 16
  %v6505 = vrot.slane %v6503, 1
  %v6506 = vor.u32 %v6501, %v6505
  %v6508 = vshll.u32 %v6287, 16
  %v6510 = vrot.slane %v6508, 1
  %v6511 = vsel %vm1354, %v6506, %v6510
  %v6513 = vshrl.u32 %v6288, 16
  %v6515 = vshll.u32 %v6288, 16
  %v6517 = vrot.slane %v6515, 1
  %v6518 = vor.u32 %v6513, %v6517
  %v6520 = vshll.u32 %v6289, 16
  %v6522 = vrot.slane %v6520, 1
  %v6523 = vsel %vm1354, %v6518, %v6522
  %v6525 = vshrl.u32 %v6290, 16
  %v6527 = vshll.u32 %v6290, 16
  %v6529 = vrot.slane %v6527, 1
  %v6530 = vor.u32 %v6525, %v6529
  %v6532 = vshll.u32 %v6291, 16
  %v6534 = vrot.slane %v6532, 1
  %v6535 = vsel %vm1354, %v6530, %v6534
  %v6537 = vshrl.u32 %v6292, 16
  %v6539 = vshll.u32 %v6292, 16
  %v6541 = vrot.slane %v6539, 1
  %v6542 = vor.u32 %v6537, %v6541
  %v6544 = vshll.u32 %v6293, 16
  %v6546 = vrot.slane %v6544, 1
  %v6547 = vsel %vm1354, %v6542, %v6546
  %v6549 = vshrl.u32 %v6294, 16
  %v6551 = vshll.u32 %v6294, 16
  %v6553 = vrot.slane %v6551, 1
  %v6554 = vor.u32 %v6549, %v6553
  %v6556 = vshll.u32 %v6295, 16
  %v6558 = vrot.slane %v6556, 1
  %v6559 = vsel %vm1354, %v6554, %v6558
  %v6561 = vshrl.u32 %v6296, 16
  %v6563 = vshll.u32 %v6296, 16
  %v6565 = vrot.slane %v6563, 1
  %v6566 = vor.u32 %v6561, %v6565
  %v6568 = vshll.u32 %v6297, 16
  %v6570 = vrot.slane %v6568, 1
  %v6571 = vsel %vm1354, %v6566, %v6570
  %v6573 = vshrl.u32 %v6298, 16
  %v6575 = vshll.u32 %v6298, 16
  %v6577 = vrot.slane %v6575, 1
  %v6578 = vor.u32 %v6573, %v6577
  %v6580 = vshll.u32 %v6299, 16
  %v6582 = vrot.slane %v6580, 1
  %v6583 = vsel %vm1354, %v6578, %v6582
  %v6585 = vshrl.u32 %v6300, 16
  %v6587 = vshll.u32 %v6300, 16
  %v6589 = vrot.slane %v6587, 1
  %v6590 = vor.u32 %v6585, %v6589
  %v6592 = vshll.u32 %v6301, 16
  %v6594 = vrot.slane %v6592, 1
  %v6595 = vsel %vm1354, %v6590, %v6594
  %v6597 = vshrl.u32 %v6302, 16
  %v6599 = vshll.u32 %v6302, 16
  %v6601 = vrot.slane %v6599, 1
  %v6602 = vor.u32 %v6597, %v6601
  %v6604 = vshll.u32 %v6303, 16
  %v6606 = vrot.slane %v6604, 1
  %v6607 = vsel %vm1354, %v6602, %v6606
  %v6609 = vshrl.u32 %v6304, 16
  %v6611 = vshll.u32 %v6304, 16
  %v6613 = vrot.slane %v6611, 1
  %v6614 = vor.u32 %v6609, %v6613
  %v6616 = vshll.u32 %v6305, 16
  %v6618 = vrot.slane %v6616, 1
  %v6619 = vsel %vm1354, %v6614, %v6618
  %v6621 = vshrl.u32 %v6306, 16
  %v6623 = vshll.u32 %v6306, 16
  %v6625 = vrot.slane %v6623, 1
  %v6626 = vor.u32 %v6621, %v6625
  %v6628 = vshll.u32 %v6307, 16
  %v6630 = vrot.slane %v6628, 1
  %v6631 = vsel %vm1354, %v6626, %v6630
  %v6633 = vshrl.u32 %v6308, 16
  %v6635 = vshll.u32 %v6308, 16
  %v6637 = vrot.slane %v6635, 1
  %v6638 = vor.u32 %v6633, %v6637
  %v6640 = vshll.u32 %v6309, 16
  %v6642 = vrot.slane %v6640, 1
  %v6643 = vsel %vm1354, %v6638, %v6642
  %v6645 = vshrl.u32 %v6310, 16
  %v6647 = vshll.u32 %v6310, 16
  %v6649 = vrot.slane %v6647, 1
  %v6650 = vor.u32 %v6645, %v6649
  %v6652 = vshll.u32 %v6311, 16
  %v6654 = vrot.slane %v6652, 1
  %v6655 = vsel %vm1354, %v6650, %v6654
  %v6657 = vshrl.u32 %v6312, 16
  %v6659 = vshll.u32 %v6312, 16
  %v6661 = vrot.slane %v6659, 1
  %v6662 = vor.u32 %v6657, %v6661
  %v6664 = vshll.u32 %v6313, 16
  %v6666 = vrot.slane %v6664, 1
  %v6667 = vsel %vm1354, %v6662, %v6666
  %v6669 = vshrl.u32 %v6314, 16
  %v6671 = vshll.u32 %v6314, 16
  %v6673 = vrot.slane %v6671, 1
  %v6674 = vor.u32 %v6669, %v6673
  %v6676 = vshll.u32 %v6315, 16
  %v6678 = vrot.slane %v6676, 1
  %v6679 = vsel %vm1354, %v6674, %v6678
  %v6681 = vshrl.u32 %v6316, 16
  %v6683 = vshll.u32 %v6316, 16
  %v6685 = vrot.slane %v6683, 1
  %v6686 = vor.u32 %v6681, %v6685
  %v6688 = vshll.u32 %v6317, 16
  %v6690 = vrot.slane %v6688, 1
  %v6691 = vsel %vm1354, %v6686, %v6690
  %v6693 = vshrl.u32 %v6318, 16
  %v6695 = vshll.u32 %v6318, 16
  %v6697 = vrot.slane %v6695, 1
  %v6698 = vor.u32 %v6693, %v6697
  %v6700 = vshll.u32 %v6319, 16
  %v6702 = vrot.slane %v6700, 1
  %v6703 = vsel %vm1354, %v6698, %v6702
  %6704 = vrot.lane.b32.xlu0 %v6331, 8
  %v6705 = vpop.permute.xlu0 %6704
  %6706 = vrot.lane.b32.xlu0 %v6343, 8
  %v6707 = vpop.permute.xlu0 %6706
  %6708 = vrot.lane.b32.xlu0 %v6355, 8
  %v6709 = vpop.permute.xlu0 %6708
  %6710 = vrot.lane.b32.xlu0 %v6367, 8
  %v6711 = vpop.permute.xlu0 %6710
  %6712 = vrot.lane.b32.xlu0 %v6379, 8
  %v6713 = vpop.permute.xlu0 %6712
  %6714 = vrot.lane.b32.xlu0 %v6391, 8
  %v6715 = vpop.permute.xlu0 %6714
  %6716 = vrot.lane.b32.xlu0 %v6403, 8
  %v6717 = vpop.permute.xlu0 %6716
  %6718 = vrot.lane.b32.xlu0 %v6415, 8
  %v6719 = vpop.permute.xlu0 %6718
  %6720 = vrot.lane.b32.xlu0 %v6427, 8
  %v6721 = vpop.permute.xlu0 %6720
  %6722 = vrot.lane.b32.xlu0 %v6439, 8
  %v6723 = vpop.permute.xlu0 %6722
  %6724 = vrot.lane.b32.xlu0 %v6451, 8
  %v6725 = vpop.permute.xlu0 %6724
  %6726 = vrot.lane.b32.xlu0 %v6463, 8
  %v6727 = vpop.permute.xlu0 %6726
  %6728 = vrot.lane.b32.xlu0 %v6475, 8
  %v6729 = vpop.permute.xlu0 %6728
  %6730 = vrot.lane.b32.xlu0 %v6487, 8
  %v6731 = vpop.permute.xlu0 %6730
  %6732 = vrot.lane.b32.xlu0 %v6499, 8
  %v6733 = vpop.permute.xlu0 %6732
  %6734 = vrot.lane.b32.xlu0 %v6511, 8
  %v6735 = vpop.permute.xlu0 %6734
  %6736 = vrot.lane.b32.xlu0 %v6523, 8
  %v6737 = vpop.permute.xlu0 %6736
  %6738 = vrot.lane.b32.xlu0 %v6535, 8
  %v6739 = vpop.permute.xlu0 %6738
  %6740 = vrot.lane.b32.xlu0 %v6547, 8
  %v6741 = vpop.permute.xlu0 %6740
  %6742 = vrot.lane.b32.xlu0 %v6559, 8
  %v6743 = vpop.permute.xlu0 %6742
  %6744 = vrot.lane.b32.xlu0 %v6571, 8
  %v6745 = vpop.permute.xlu0 %6744
  %6746 = vrot.lane.b32.xlu0 %v6583, 8
  %v6747 = vpop.permute.xlu0 %6746
  %6748 = vrot.lane.b32.xlu0 %v6595, 8
  %v6749 = vpop.permute.xlu0 %6748
  %6750 = vrot.lane.b32.xlu0 %v6607, 8
  %v6751 = vpop.permute.xlu0 %6750
  %6752 = vrot.lane.b32.xlu0 %v6619, 8
  %v6753 = vpop.permute.xlu0 %6752
  %6754 = vrot.lane.b32.xlu0 %v6631, 8
  %v6755 = vpop.permute.xlu0 %6754
  %6756 = vrot.lane.b32.xlu0 %v6643, 8
  %v6757 = vpop.permute.xlu0 %6756
  %6758 = vrot.lane.b32.xlu0 %v6655, 8
  %v6759 = vpop.permute.xlu0 %6758
  %6760 = vrot.lane.b32.xlu0 %v6667, 8
  %v6761 = vpop.permute.xlu0 %6760
  %6762 = vrot.lane.b32.xlu0 %v6679, 8
  %v6763 = vpop.permute.xlu0 %6762
  %6764 = vrot.lane.b32.xlu0 %v6691, 8
  %v6765 = vpop.permute.xlu0 %6764
  %6766 = vrot.lane.b32.xlu0 %v6703, 8
  %v6767 = vpop.permute.xlu0 %6766
  %6800 = vst.msk [vmem:[#allocation3] sm:$0xff] %vm1835, %v6705
  %6801 = vst.msk [vmem:[#allocation3 + $0x8] sm:$0xff] %vm1835, %v6707
  %6802 = vst.msk [vmem:[#allocation3 + $0x10] sm:$0xff] %vm1835, %v6709
  %6803 = vst.msk [vmem:[#allocation3 + $0x18] sm:$0xff] %vm1835, %v6711
  %6804 = vst.msk [vmem:[#allocation3 + $0x20] sm:$0xff] %vm1835, %v6713
  %6805 = vst.msk [vmem:[#allocation3 + $0x28] sm:$0xff] %vm1835, %v6715
  %6806 = vst.msk [vmem:[#allocation3 + $0x30] sm:$0xff] %vm1835, %v6717
  %6807 = vst.msk [vmem:[#allocation3 + $0x38] sm:$0xff] %vm1835, %v6719
  %6808 = vst.msk [vmem:[#allocation3 + $0x40] sm:$0xff] %vm1835, %v6721
  %6809 = vst.msk [vmem:[#allocation3 + $0x48] sm:$0xff] %vm1835, %v6723
  %6810 = vst.msk [vmem:[#allocation3 + $0x50] sm:$0xff] %vm1835, %v6725
  %6811 = vst.msk [vmem:[#allocation3 + $0x58] sm:$0xff] %vm1835, %v6727
  %6812 = vst.msk [vmem:[#allocation3 + $0x60] sm:$0xff] %vm1835, %v6729
  %6813 = vst.msk [vmem:[#allocation3 + $0x68] sm:$0xff] %vm1835, %v6731
  %6814 = vst.msk [vmem:[#allocation3 + $0x70] sm:$0xff] %vm1835, %v6733
  %6815 = vst.msk [vmem:[#allocation3 + $0x78] sm:$0xff] %vm1835, %v6735
  %6816 = vst.msk [vmem:[#allocation3 + $0x80] sm:$0xff] %vm1835, %v6737
  %6817 = vst.msk [vmem:[#allocation3 + $0x88] sm:$0xff] %vm1835, %v6739
  %6818 = vst.msk [vmem:[#allocation3 + $0x90] sm:$0xff] %vm1835, %v6741
  %6819 = vst.msk [vmem:[#allocation3 + $0x98] sm:$0xff] %vm1835, %v6743
  %6820 = vst.msk [vmem:[#allocation3 + $0xa0] sm:$0xff] %vm1835, %v6745
  %6821 = vst.msk [vmem:[#allocation3 + $0xa8] sm:$0xff] %vm1835, %v6747
  %6822 = vst.msk [vmem:[#allocation3 + $0xb0] sm:$0xff] %vm1835, %v6749
  %6823 = vst.msk [vmem:[#allocation3 + $0xb8] sm:$0xff] %vm1835, %v6751
  %6824 = vst.msk [vmem:[#allocation3 + $0xc0] sm:$0xff] %vm1835, %v6753
  %6825 = vst.msk [vmem:[#allocation3 + $0xc8] sm:$0xff] %vm1835, %v6755
  %6826 = vst.msk [vmem:[#allocation3 + $0xd0] sm:$0xff] %vm1835, %v6757
  %6827 = vst.msk [vmem:[#allocation3 + $0xd8] sm:$0xff] %vm1835, %v6759
  %6828 = vst.msk [vmem:[#allocation3 + $0xe0] sm:$0xff] %vm1835, %v6761
  %6829 = vst.msk [vmem:[#allocation3 + $0xe8] sm:$0xff] %vm1835, %v6763
  %6830 = vst.msk [vmem:[#allocation3 + $0xf0] sm:$0xff] %vm1835, %v6765
  %6831 = vst.msk [vmem:[#allocation3 + $0xf8] sm:$0xff] %vm1835, %v6767
  %v6832 = vld [vmem:[%s552] sm:$0x80]
  %v6833 = vld [vmem:[%s552 + $0x8] sm:$0xff]
  %v6834 = vld [vmem:[%s552 + $0x18] sm:$0x80]
  %v6835 = vld [vmem:[%s552 + $0x20] sm:$0xff]
  %v6836 = vld [vmem:[%s552 + $0x30] sm:$0x80]
  %v6837 = vld [vmem:[%s552 + $0x38] sm:$0xff]
  %v6838 = vld [vmem:[%s552 + $0x48] sm:$0x80]
  %v6839 = vld [vmem:[%s552 + $0x50] sm:$0xff]
  %v6840 = vld [vmem:[%s552 + $0x60] sm:$0x80]
  %v6841 = vld [vmem:[%s552 + $0x68] sm:$0xff]
  %v6842 = vld [vmem:[%s552 + $0x78] sm:$0x80]
  %v6843 = vld [vmem:[%s552 + $0x80] sm:$0xff]
  %v6844 = vld [vmem:[%s552 + $0x90] sm:$0x80]
  %v6845 = vld [vmem:[%s552 + $0x98] sm:$0xff]
  %v6846 = vld [vmem:[%s552 + $0xa8] sm:$0x80]
  %v6847 = vld [vmem:[%s552 + $0xb0] sm:$0xff]
  %v6848 = vld [vmem:[%s552 + $0xc0] sm:$0x80]
  %v6849 = vld [vmem:[%s552 + $0xc8] sm:$0xff]
  %v6850 = vld [vmem:[%s552 + $0xd8] sm:$0x80]
  %v6851 = vld [vmem:[%s552 + $0xe0] sm:$0xff]
  %v6852 = vld [vmem:[%s552 + $0xf0] sm:$0x80]
  %v6853 = vld [vmem:[%s552 + $0xf8] sm:$0xff]
  %v6854 = vld [vmem:[%s552 + $0x108] sm:$0x80]
  %v6855 = vld [vmem:[%s552 + $0x110] sm:$0xff]
  %v6856 = vld [vmem:[%s552 + $0x120] sm:$0x80]
  %v6857 = vld [vmem:[%s552 + $0x128] sm:$0xff]
  %v6858 = vld [vmem:[%s552 + $0x138] sm:$0x80]
  %v6859 = vld [vmem:[%s552 + $0x140] sm:$0xff]
  %v6860 = vld [vmem:[%s552 + $0x150] sm:$0x80]
  %v6861 = vld [vmem:[%s552 + $0x158] sm:$0xff]
  %v6862 = vld [vmem:[%s552 + $0x168] sm:$0x80]
  %v6863 = vld [vmem:[%s552 + $0x170] sm:$0xff]
  %v6864 = vld [vmem:[%s552 + $0x1b0] sm:$0x80]
  %v6865 = vld [vmem:[%s552 + $0x1b8] sm:$0xff]
  %v6866 = vld [vmem:[%s552 + $0x1c8] sm:$0x80]
  %v6867 = vld [vmem:[%s552 + $0x1d0] sm:$0xff]
  %v6868 = vld [vmem:[%s552 + $0x1e0] sm:$0x80]
  %v6869 = vld [vmem:[%s552 + $0x1e8] sm:$0xff]
  %v6870 = vld [vmem:[%s552 + $0x1f8] sm:$0x80]
  %v6871 = vld [vmem:[%s552 + $0x200] sm:$0xff]
  %v6872 = vld [vmem:[%s552 + $0x210] sm:$0x80]
  %v6873 = vld [vmem:[%s552 + $0x218] sm:$0xff]
  %v6874 = vld [vmem:[%s552 + $0x228] sm:$0x80]
  %v6875 = vld [vmem:[%s552 + $0x230] sm:$0xff]
  %v6876 = vld [vmem:[%s552 + $0x240] sm:$0x80]
  %v6877 = vld [vmem:[%s552 + $0x248] sm:$0xff]
  %v6878 = vld [vmem:[%s552 + $0x258] sm:$0x80]
  %v6879 = vld [vmem:[%s552 + $0x260] sm:$0xff]
  %v6880 = vld [vmem:[%s552 + $0x270] sm:$0x80]
  %v6881 = vld [vmem:[%s552 + $0x278] sm:$0xff]
  %v6882 = vld [vmem:[%s552 + $0x288] sm:$0x80]
  %v6883 = vld [vmem:[%s552 + $0x290] sm:$0xff]
  %v6884 = vld [vmem:[%s552 + $0x2a0] sm:$0x80]
  %v6885 = vld [vmem:[%s552 + $0x2a8] sm:$0xff]
  %v6886 = vld [vmem:[%s552 + $0x2b8] sm:$0x80]
  %v6887 = vld [vmem:[%s552 + $0x2c0] sm:$0xff]
  %v6888 = vld [vmem:[%s552 + $0x2d0] sm:$0x80]
  %v6889 = vld [vmem:[%s552 + $0x2d8] sm:$0xff]
  %v6890 = vld [vmem:[%s552 + $0x2e8] sm:$0x80]
  %v6891 = vld [vmem:[%s552 + $0x2f0] sm:$0xff]
  %v6892 = vld [vmem:[%s552 + $0x300] sm:$0x80]
  %v6893 = vld [vmem:[%s552 + $0x308] sm:$0xff]
  %v6894 = vld [vmem:[%s552 + $0x318] sm:$0x80]
  %v6895 = vld [vmem:[%s552 + $0x320] sm:$0xff]
  %v6897 = vshrl.u32 %v6832, 16
  %v6899 = vrot.slane %v6897, 7
  %v6901 = vshrl.u32 %v6833, 16
  %v6903 = vrot.slane %v6901, 7
  %v6904 = vshll.u32 %v6833, 16
  %v6906 = vor.u32 %v6903, %v6904
  %v6907 = vsel %vm153, %v6899, %v6906
  %v6909 = vshrl.u32 %v6834, 16
  %v6911 = vrot.slane %v6909, 7
  %v6913 = vshrl.u32 %v6835, 16
  %v6915 = vrot.slane %v6913, 7
  %v6916 = vshll.u32 %v6835, 16
  %v6918 = vor.u32 %v6915, %v6916
  %v6919 = vsel %vm153, %v6911, %v6918
  %v6921 = vshrl.u32 %v6836, 16
  %v6923 = vrot.slane %v6921, 7
  %v6925 = vshrl.u32 %v6837, 16
  %v6927 = vrot.slane %v6925, 7
  %v6928 = vshll.u32 %v6837, 16
  %v6930 = vor.u32 %v6927, %v6928
  %v6931 = vsel %vm153, %v6923, %v6930
  %v6933 = vshrl.u32 %v6838, 16
  %v6935 = vrot.slane %v6933, 7
  %v6937 = vshrl.u32 %v6839, 16
  %v6939 = vrot.slane %v6937, 7
  %v6940 = vshll.u32 %v6839, 16
  %v6942 = vor.u32 %v6939, %v6940
  %v6943 = vsel %vm153, %v6935, %v6942
  %v6945 = vshrl.u32 %v6840, 16
  %v6947 = vrot.slane %v6945, 7
  %v6949 = vshrl.u32 %v6841, 16
  %v6951 = vrot.slane %v6949, 7
  %v6952 = vshll.u32 %v6841, 16
  %v6954 = vor.u32 %v6951, %v6952
  %v6955 = vsel %vm153, %v6947, %v6954
  %v6957 = vshrl.u32 %v6842, 16
  %v6959 = vrot.slane %v6957, 7
  %v6961 = vshrl.u32 %v6843, 16
  %v6963 = vrot.slane %v6961, 7
  %v6964 = vshll.u32 %v6843, 16
  %v6966 = vor.u32 %v6963, %v6964
  %v6967 = vsel %vm153, %v6959, %v6966
  %v6969 = vshrl.u32 %v6844, 16
  %v6971 = vrot.slane %v6969, 7
  %v6973 = vshrl.u32 %v6845, 16
  %v6975 = vrot.slane %v6973, 7
  %v6976 = vshll.u32 %v6845, 16
  %v6978 = vor.u32 %v6975, %v6976
  %v6979 = vsel %vm153, %v6971, %v6978
  %v6981 = vshrl.u32 %v6846, 16
  %v6983 = vrot.slane %v6981, 7
  %v6985 = vshrl.u32 %v6847, 16
  %v6987 = vrot.slane %v6985, 7
  %v6988 = vshll.u32 %v6847, 16
  %v6990 = vor.u32 %v6987, %v6988
  %v6991 = vsel %vm153, %v6983, %v6990
  %v6993 = vshrl.u32 %v6848, 16
  %v6995 = vrot.slane %v6993, 7
  %v6997 = vshrl.u32 %v6849, 16
  %v6999 = vrot.slane %v6997, 7
  %v7000 = vshll.u32 %v6849, 16
  %v7002 = vor.u32 %v6999, %v7000
  %v7003 = vsel %vm153, %v6995, %v7002
  %v7005 = vshrl.u32 %v6850, 16
  %v7007 = vrot.slane %v7005, 7
  %v7009 = vshrl.u32 %v6851, 16
  %v7011 = vrot.slane %v7009, 7
  %v7012 = vshll.u32 %v6851, 16
  %v7014 = vor.u32 %v7011, %v7012
  %v7015 = vsel %vm153, %v7007, %v7014
  %v7017 = vshrl.u32 %v6852, 16
  %v7019 = vrot.slane %v7017, 7
  %v7021 = vshrl.u32 %v6853, 16
  %v7023 = vrot.slane %v7021, 7
  %v7024 = vshll.u32 %v6853, 16
  %v7026 = vor.u32 %v7023, %v7024
  %v7027 = vsel %vm153, %v7019, %v7026
  %v7029 = vshrl.u32 %v6854, 16
  %v7031 = vrot.slane %v7029, 7
  %v7033 = vshrl.u32 %v6855, 16
  %v7035 = vrot.slane %v7033, 7
  %v7036 = vshll.u32 %v6855, 16
  %v7038 = vor.u32 %v7035, %v7036
  %v7039 = vsel %vm153, %v7031, %v7038
  %v7041 = vshrl.u32 %v6856, 16
  %v7043 = vrot.slane %v7041, 7
  %v7045 = vshrl.u32 %v6857, 16
  %v7047 = vrot.slane %v7045, 7
  %v7048 = vshll.u32 %v6857, 16
  %v7050 = vor.u32 %v7047, %v7048
  %v7051 = vsel %vm153, %v7043, %v7050
  %v7053 = vshrl.u32 %v6858, 16
  %v7055 = vrot.slane %v7053, 7
  %v7057 = vshrl.u32 %v6859, 16
  %v7059 = vrot.slane %v7057, 7
  %v7060 = vshll.u32 %v6859, 16
  %v7062 = vor.u32 %v7059, %v7060
  %v7063 = vsel %vm153, %v7055, %v7062
  %v7065 = vshrl.u32 %v6860, 16
  %v7067 = vrot.slane %v7065, 7
  %v7069 = vshrl.u32 %v6861, 16
  %v7071 = vrot.slane %v7069, 7
  %v7072 = vshll.u32 %v6861, 16
  %v7074 = vor.u32 %v7071, %v7072
  %v7075 = vsel %vm153, %v7067, %v7074
  %v7077 = vshrl.u32 %v6862, 16
  %v7079 = vrot.slane %v7077, 7
  %v7081 = vshrl.u32 %v6863, 16
  %v7083 = vrot.slane %v7081, 7
  %v7084 = vshll.u32 %v6863, 16
  %v7086 = vor.u32 %v7083, %v7084
  %v7087 = vsel %vm153, %v7079, %v7086
  %v7089 = vshrl.u32 %v6864, 16
  %v7091 = vrot.slane %v7089, 7
  %v7093 = vshrl.u32 %v6865, 16
  %v7095 = vrot.slane %v7093, 7
  %v7096 = vshll.u32 %v6865, 16
  %v7098 = vor.u32 %v7095, %v7096
  %v7099 = vsel %vm153, %v7091, %v7098
  %v7101 = vshrl.u32 %v6866, 16
  %v7103 = vrot.slane %v7101, 7
  %v7105 = vshrl.u32 %v6867, 16
  %v7107 = vrot.slane %v7105, 7
  %v7108 = vshll.u32 %v6867, 16
  %v7110 = vor.u32 %v7107, %v7108
  %v7111 = vsel %vm153, %v7103, %v7110
  %v7113 = vshrl.u32 %v6868, 16
  %v7115 = vrot.slane %v7113, 7
  %v7117 = vshrl.u32 %v6869, 16
  %v7119 = vrot.slane %v7117, 7
  %v7120 = vshll.u32 %v6869, 16
  %v7122 = vor.u32 %v7119, %v7120
  %v7123 = vsel %vm153, %v7115, %v7122
  %v7125 = vshrl.u32 %v6870, 16
  %v7127 = vrot.slane %v7125, 7
  %v7129 = vshrl.u32 %v6871, 16
  %v7131 = vrot.slane %v7129, 7
  %v7132 = vshll.u32 %v6871, 16
  %v7134 = vor.u32 %v7131, %v7132
  %v7135 = vsel %vm153, %v7127, %v7134
  %v7137 = vshrl.u32 %v6872, 16
  %v7139 = vrot.slane %v7137, 7
  %v7141 = vshrl.u32 %v6873, 16
  %v7143 = vrot.slane %v7141, 7
  %v7144 = vshll.u32 %v6873, 16
  %v7146 = vor.u32 %v7143, %v7144
  %v7147 = vsel %vm153, %v7139, %v7146
  %v7149 = vshrl.u32 %v6874, 16
  %v7151 = vrot.slane %v7149, 7
  %v7153 = vshrl.u32 %v6875, 16
  %v7155 = vrot.slane %v7153, 7
  %v7156 = vshll.u32 %v6875, 16
  %v7158 = vor.u32 %v7155, %v7156
  %v7159 = vsel %vm153, %v7151, %v7158
  %v7161 = vshrl.u32 %v6876, 16
  %v7163 = vrot.slane %v7161, 7
  %v7165 = vshrl.u32 %v6877, 16
  %v7167 = vrot.slane %v7165, 7
  %v7168 = vshll.u32 %v6877, 16
  %v7170 = vor.u32 %v7167, %v7168
  %v7171 = vsel %vm153, %v7163, %v7170
  %v7173 = vshrl.u32 %v6878, 16
  %v7175 = vrot.slane %v7173, 7
  %v7177 = vshrl.u32 %v6879, 16
  %v7179 = vrot.slane %v7177, 7
  %v7180 = vshll.u32 %v6879, 16
  %v7182 = vor.u32 %v7179, %v7180
  %v7183 = vsel %vm153, %v7175, %v7182
  %v7185 = vshrl.u32 %v6880, 16
  %v7187 = vrot.slane %v7185, 7
  %v7189 = vshrl.u32 %v6881, 16
  %v7191 = vrot.slane %v7189, 7
  %v7192 = vshll.u32 %v6881, 16
  %v7194 = vor.u32 %v7191, %v7192
  %v7195 = vsel %vm153, %v7187, %v7194
  %v7197 = vshrl.u32 %v6882, 16
  %v7199 = vrot.slane %v7197, 7
  %v7201 = vshrl.u32 %v6883, 16
  %v7203 = vrot.slane %v7201, 7
  %v7204 = vshll.u32 %v6883, 16
  %v7206 = vor.u32 %v7203, %v7204
  %v7207 = vsel %vm153, %v7199, %v7206
  %v7209 = vshrl.u32 %v6884, 16
  %v7211 = vrot.slane %v7209, 7
  %v7213 = vshrl.u32 %v6885, 16
  %v7215 = vrot.slane %v7213, 7
  %v7216 = vshll.u32 %v6885, 16
  %v7218 = vor.u32 %v7215, %v7216
  %v7219 = vsel %vm153, %v7211, %v7218
  %v7221 = vshrl.u32 %v6886, 16
  %v7223 = vrot.slane %v7221, 7
  %v7225 = vshrl.u32 %v6887, 16
  %v7227 = vrot.slane %v7225, 7
  %v7228 = vshll.u32 %v6887, 16
  %v7230 = vor.u32 %v7227, %v7228
  %v7231 = vsel %vm153, %v7223, %v7230
  %v7233 = vshrl.u32 %v6888, 16
  %v7235 = vrot.slane %v7233, 7
  %v7237 = vshrl.u32 %v6889, 16
  %v7239 = vrot.slane %v7237, 7
  %v7240 = vshll.u32 %v6889, 16
  %v7242 = vor.u32 %v7239, %v7240
  %v7243 = vsel %vm153, %v7235, %v7242
  %v7245 = vshrl.u32 %v6890, 16
  %v7247 = vrot.slane %v7245, 7
  %v7249 = vshrl.u32 %v6891, 16
  %v7251 = vrot.slane %v7249, 7
  %v7252 = vshll.u32 %v6891, 16
  %v7254 = vor.u32 %v7251, %v7252
  %v7255 = vsel %vm153, %v7247, %v7254
  %v7257 = vshrl.u32 %v6892, 16
  %v7259 = vrot.slane %v7257, 7
  %v7261 = vshrl.u32 %v6893, 16
  %v7263 = vrot.slane %v7261, 7
  %v7264 = vshll.u32 %v6893, 16
  %v7266 = vor.u32 %v7263, %v7264
  %v7267 = vsel %vm153, %v7259, %v7266
  %v7269 = vshrl.u32 %v6894, 16
  %v7271 = vrot.slane %v7269, 7
  %v7273 = vshrl.u32 %v6895, 16
  %v7275 = vrot.slane %v7273, 7
  %v7276 = vshll.u32 %v6895, 16
  %v7278 = vor.u32 %v7275, %v7276
  %v7279 = vsel %vm153, %v7271, %v7278
  %7280 = vrot.lane.b32.xlu0 %v6907, 12
  %v7281 = vpop.permute.xlu0 %7280
  %7282 = vrot.lane.b32.xlu0 %v6919, 12
  %v7283 = vpop.permute.xlu0 %7282
  %7284 = vrot.lane.b32.xlu0 %v6931, 12
  %v7285 = vpop.permute.xlu0 %7284
  %7286 = vrot.lane.b32.xlu0 %v6943, 12
  %v7287 = vpop.permute.xlu0 %7286
  %7288 = vrot.lane.b32.xlu0 %v6955, 12
  %v7289 = vpop.permute.xlu0 %7288
  %7290 = vrot.lane.b32.xlu0 %v6967, 12
  %v7291 = vpop.permute.xlu0 %7290
  %7292 = vrot.lane.b32.xlu0 %v6979, 12
  %v7293 = vpop.permute.xlu0 %7292
  %7294 = vrot.lane.b32.xlu0 %v6991, 12
  %v7295 = vpop.permute.xlu0 %7294
  %7296 = vrot.lane.b32.xlu0 %v7003, 12
  %v7297 = vpop.permute.xlu0 %7296
  %7298 = vrot.lane.b32.xlu0 %v7015, 12
  %v7299 = vpop.permute.xlu0 %7298
  %7300 = vrot.lane.b32.xlu0 %v7027, 12
  %v7301 = vpop.permute.xlu0 %7300
  %7302 = vrot.lane.b32.xlu0 %v7039, 12
  %v7303 = vpop.permute.xlu0 %7302
  %7304 = vrot.lane.b32.xlu0 %v7051, 12
  %v7305 = vpop.permute.xlu0 %7304
  %7306 = vrot.lane.b32.xlu0 %v7063, 12
  %v7307 = vpop.permute.xlu0 %7306
  %7308 = vrot.lane.b32.xlu0 %v7075, 12
  %v7309 = vpop.permute.xlu0 %7308
  %7310 = vrot.lane.b32.xlu0 %v7087, 12
  %v7311 = vpop.permute.xlu0 %7310
  %7312 = vrot.lane.b32.xlu0 %v7099, 12
  %v7313 = vpop.permute.xlu0 %7312
  %7314 = vrot.lane.b32.xlu0 %v7111, 12
  %v7315 = vpop.permute.xlu0 %7314
  %7316 = vrot.lane.b32.xlu0 %v7123, 12
  %v7317 = vpop.permute.xlu0 %7316
  %7318 = vrot.lane.b32.xlu0 %v7135, 12
  %v7319 = vpop.permute.xlu0 %7318
  %7320 = vrot.lane.b32.xlu0 %v7147, 12
  %v7321 = vpop.permute.xlu0 %7320
  %7322 = vrot.lane.b32.xlu0 %v7159, 12
  %v7323 = vpop.permute.xlu0 %7322
  %7324 = vrot.lane.b32.xlu0 %v7171, 12
  %v7325 = vpop.permute.xlu0 %7324
  %7326 = vrot.lane.b32.xlu0 %v7183, 12
  %v7327 = vpop.permute.xlu0 %7326
  %7328 = vrot.lane.b32.xlu0 %v7195, 12
  %v7329 = vpop.permute.xlu0 %7328
  %7330 = vrot.lane.b32.xlu0 %v7207, 12
  %v7331 = vpop.permute.xlu0 %7330
  %7332 = vrot.lane.b32.xlu0 %v7219, 12
  %v7333 = vpop.permute.xlu0 %7332
  %7334 = vrot.lane.b32.xlu0 %v7231, 12
  %v7335 = vpop.permute.xlu0 %7334
  %7336 = vrot.lane.b32.xlu0 %v7243, 12
  %v7337 = vpop.permute.xlu0 %7336
  %7338 = vrot.lane.b32.xlu0 %v7255, 12
  %v7339 = vpop.permute.xlu0 %7338
  %7340 = vrot.lane.b32.xlu0 %v7267, 12
  %v7341 = vpop.permute.xlu0 %7340
  %7342 = vrot.lane.b32.xlu0 %v7279, 12
  %v7343 = vpop.permute.xlu0 %7342
  %7376 = vst.msk [vmem:[#allocation3] sm:$0xff] %vm2412, %v7281
  %7377 = vst.msk [vmem:[#allocation3 + $0x8] sm:$0xff] %vm2412, %v7283
  %7378 = vst.msk [vmem:[#allocation3 + $0x10] sm:$0xff] %vm2412, %v7285
  %7379 = vst.msk [vmem:[#allocation3 + $0x18] sm:$0xff] %vm2412, %v7287
  %7380 = vst.msk [vmem:[#allocation3 + $0x20] sm:$0xff] %vm2412, %v7289
  %7381 = vst.msk [vmem:[#allocation3 + $0x28] sm:$0xff] %vm2412, %v7291
  %7382 = vst.msk [vmem:[#allocation3 + $0x30] sm:$0xff] %vm2412, %v7293
  %7383 = vst.msk [vmem:[#allocation3 + $0x38] sm:$0xff] %vm2412, %v7295
  %7384 = vst.msk [vmem:[#allocation3 + $0x40] sm:$0xff] %vm2412, %v7297
  %7385 = vst.msk [vmem:[#allocation3 + $0x48] sm:$0xff] %vm2412, %v7299
  %7386 = vst.msk [vmem:[#allocation3 + $0x50] sm:$0xff] %vm2412, %v7301
  %7387 = vst.msk [vmem:[#allocation3 + $0x58] sm:$0xff] %vm2412, %v7303
  %7388 = vst.msk [vmem:[#allocation3 + $0x60] sm:$0xff] %vm2412, %v7305
  %7389 = vst.msk [vmem:[#allocation3 + $0x68] sm:$0xff] %vm2412, %v7307
  %7390 = vst.msk [vmem:[#allocation3 + $0x70] sm:$0xff] %vm2412, %v7309
  %7391 = vst.msk [vmem:[#allocation3 + $0x78] sm:$0xff] %vm2412, %v7311
  %7392 = vst.msk [vmem:[#allocation3 + $0x80] sm:$0xff] %vm2412, %v7313
  %7393 = vst.msk [vmem:[#allocation3 + $0x88] sm:$0xff] %vm2412, %v7315
  %7394 = vst.msk [vmem:[#allocation3 + $0x90] sm:$0xff] %vm2412, %v7317
  %7395 = vst.msk [vmem:[#allocation3 + $0x98] sm:$0xff] %vm2412, %v7319
  %7396 = vst.msk [vmem:[#allocation3 + $0xa0] sm:$0xff] %vm2412, %v7321
  %7397 = vst.msk [vmem:[#allocation3 + $0xa8] sm:$0xff] %vm2412, %v7323
  %7398 = vst.msk [vmem:[#allocation3 + $0xb0] sm:$0xff] %vm2412, %v7325
  %7399 = vst.msk [vmem:[#allocation3 + $0xb8] sm:$0xff] %vm2412, %v7327
  %7400 = vst.msk [vmem:[#allocation3 + $0xc0] sm:$0xff] %vm2412, %v7329
  %7401 = vst.msk [vmem:[#allocation3 + $0xc8] sm:$0xff] %vm2412, %v7331
  %7402 = vst.msk [vmem:[#allocation3 + $0xd0] sm:$0xff] %vm2412, %v7333
  %7403 = vst.msk [vmem:[#allocation3 + $0xd8] sm:$0xff] %vm2412, %v7335
  %7404 = vst.msk [vmem:[#allocation3 + $0xe0] sm:$0xff] %vm2412, %v7337
  %7405 = vst.msk [vmem:[#allocation3 + $0xe8] sm:$0xff] %vm2412, %v7339
  %7406 = vst.msk [vmem:[#allocation3 + $0xf0] sm:$0xff] %vm2412, %v7341
  %7407 = vst.msk [vmem:[#allocation3 + $0xf8] sm:$0xff] %vm2412, %v7343
  %v7408 = vld [vmem:[%s552 + $0x8] sm:$0xff]
  %v7409 = vld [vmem:[%s552 + $0x20] sm:$0xff]
  %v7410 = vld [vmem:[%s552 + $0x38] sm:$0xff]
  %v7411 = vld [vmem:[%s552 + $0x50] sm:$0xff]
  %v7412 = vld [vmem:[%s552 + $0x68] sm:$0xff]
  %v7413 = vld [vmem:[%s552 + $0x80] sm:$0xff]
  %v7414 = vld [vmem:[%s552 + $0x98] sm:$0xff]
  %v7415 = vld [vmem:[%s552 + $0xb0] sm:$0xff]
  %v7416 = vld [vmem:[%s552 + $0xc8] sm:$0xff]
  %v7417 = vld [vmem:[%s552 + $0xe0] sm:$0xff]
  %v7418 = vld [vmem:[%s552 + $0xf8] sm:$0xff]
  %v7419 = vld [vmem:[%s552 + $0x110] sm:$0xff]
  %v7420 = vld [vmem:[%s552 + $0x128] sm:$0xff]
  %v7421 = vld [vmem:[%s552 + $0x140] sm:$0xff]
  %v7422 = vld [vmem:[%s552 + $0x158] sm:$0xff]
  %v7423 = vld [vmem:[%s552 + $0x170] sm:$0xff]
  %v7424 = vld [vmem:[%s552 + $0x1b8] sm:$0xff]
  %v7425 = vld [vmem:[%s552 + $0x1d0] sm:$0xff]
  %v7426 = vld [vmem:[%s552 + $0x1e8] sm:$0xff]
  %v7427 = vld [vmem:[%s552 + $0x200] sm:$0xff]
  %v7428 = vld [vmem:[%s552 + $0x218] sm:$0xff]
  %v7429 = vld [vmem:[%s552 + $0x230] sm:$0xff]
  %v7430 = vld [vmem:[%s552 + $0x248] sm:$0xff]
  %v7431 = vld [vmem:[%s552 + $0x260] sm:$0xff]
  %v7432 = vld [vmem:[%s552 + $0x278] sm:$0xff]
  %v7433 = vld [vmem:[%s552 + $0x290] sm:$0xff]
  %v7434 = vld [vmem:[%s552 + $0x2a8] sm:$0xff]
  %v7435 = vld [vmem:[%s552 + $0x2c0] sm:$0xff]
  %v7436 = vld [vmem:[%s552 + $0x2d8] sm:$0xff]
  %v7437 = vld [vmem:[%s552 + $0x2f0] sm:$0xff]
  %v7438 = vld [vmem:[%s552 + $0x308] sm:$0xff]
  %v7439 = vld [vmem:[%s552 + $0x320] sm:$0xff]
  %7472 = vrot.lane.b32.xlu0 %v7408, 16
  %v7473 = vpop.permute.xlu0 %7472
  %7474 = vrot.lane.b32.xlu0 %v7409, 16
  %v7475 = vpop.permute.xlu0 %7474
  %7476 = vrot.lane.b32.xlu0 %v7410, 16
  %v7477 = vpop.permute.xlu0 %7476
  %7478 = vrot.lane.b32.xlu0 %v7411, 16
  %v7479 = vpop.permute.xlu0 %7478
  %7480 = vrot.lane.b32.xlu0 %v7412, 16
  %v7481 = vpop.permute.xlu0 %7480
  %7482 = vrot.lane.b32.xlu0 %v7413, 16
  %v7483 = vpop.permute.xlu0 %7482
  %7484 = vrot.lane.b32.xlu0 %v7414, 16
  %v7485 = vpop.permute.xlu0 %7484
  %7486 = vrot.lane.b32.xlu0 %v7415, 16
  %v7487 = vpop.permute.xlu0 %7486
  %7488 = vrot.lane.b32.xlu0 %v7416, 16
  %v7489 = vpop.permute.xlu0 %7488
  %7490 = vrot.lane.b32.xlu0 %v7417, 16
  %v7491 = vpop.permute.xlu0 %7490
  %7492 = vrot.lane.b32.xlu0 %v7418, 16
  %v7493 = vpop.permute.xlu0 %7492
  %7494 = vrot.lane.b32.xlu0 %v7419, 16
  %v7495 = vpop.permute.xlu0 %7494
  %7496 = vrot.lane.b32.xlu0 %v7420, 16
  %v7497 = vpop.permute.xlu0 %7496
  %7498 = vrot.lane.b32.xlu0 %v7421, 16
  %v7499 = vpop.permute.xlu0 %7498
  %7500 = vrot.lane.b32.xlu0 %v7422, 16
  %v7501 = vpop.permute.xlu0 %7500
  %7502 = vrot.lane.b32.xlu0 %v7423, 16
  %v7503 = vpop.permute.xlu0 %7502
  %7504 = vrot.lane.b32.xlu0 %v7424, 16
  %v7505 = vpop.permute.xlu0 %7504
  %7506 = vrot.lane.b32.xlu0 %v7425, 16
  %v7507 = vpop.permute.xlu0 %7506
  %7508 = vrot.lane.b32.xlu0 %v7426, 16
  %v7509 = vpop.permute.xlu0 %7508
  %7510 = vrot.lane.b32.xlu0 %v7427, 16
  %v7511 = vpop.permute.xlu0 %7510
  %7512 = vrot.lane.b32.xlu0 %v7428, 16
  %v7513 = vpop.permute.xlu0 %7512
  %7514 = vrot.lane.b32.xlu0 %v7429, 16
  %v7515 = vpop.permute.xlu0 %7514
  %7516 = vrot.lane.b32.xlu0 %v7430, 16
  %v7517 = vpop.permute.xlu0 %7516
  %7518 = vrot.lane.b32.xlu0 %v7431, 16
  %v7519 = vpop.permute.xlu0 %7518
  %7520 = vrot.lane.b32.xlu0 %v7432, 16
  %v7521 = vpop.permute.xlu0 %7520
  %7522 = vrot.lane.b32.xlu0 %v7433, 16
  %v7523 = vpop.permute.xlu0 %7522
  %7524 = vrot.lane.b32.xlu0 %v7434, 16
  %v7525 = vpop.permute.xlu0 %7524
  %7526 = vrot.lane.b32.xlu0 %v7435, 16
  %v7527 = vpop.permute.xlu0 %7526
  %7528 = vrot.lane.b32.xlu0 %v7436, 16
  %v7529 = vpop.permute.xlu0 %7528
  %7530 = vrot.lane.b32.xlu0 %v7437, 16
  %v7531 = vpop.permute.xlu0 %7530
  %7532 = vrot.lane.b32.xlu0 %v7438, 16
  %v7533 = vpop.permute.xlu0 %7532
  %7534 = vrot.lane.b32.xlu0 %v7439, 16
  %v7535 = vpop.permute.xlu0 %7534
  %7568 = vst.msk [vmem:[#allocation3] sm:$0xff] %vm2605, %v7473
  %7569 = vst.msk [vmem:[#allocation3 + $0x8] sm:$0xff] %vm2605, %v7475
  %7570 = vst.msk [vmem:[#allocation3 + $0x10] sm:$0xff] %vm2605, %v7477
  %7571 = vst.msk [vmem:[#allocation3 + $0x18] sm:$0xff] %vm2605, %v7479
  %7572 = vst.msk [vmem:[#allocation3 + $0x20] sm:$0xff] %vm2605, %v7481
  %7573 = vst.msk [vmem:[#allocation3 + $0x28] sm:$0xff] %vm2605, %v7483
  %7574 = vst.msk [vmem:[#allocation3 + $0x30] sm:$0xff] %vm2605, %v7485
  %7575 = vst.msk [vmem:[#allocation3 + $0x38] sm:$0xff] %vm2605, %v7487
  %7576 = vst.msk [vmem:[#allocation3 + $0x40] sm:$0xff] %vm2605, %v7489
  %7577 = vst.msk [vmem:[#allocation3 + $0x48] sm:$0xff] %vm2605, %v7491
  %7578 = vst.msk [vmem:[#allocation3 + $0x50] sm:$0xff] %vm2605, %v7493
  %7579 = vst.msk [vmem:[#allocation3 + $0x58] sm:$0xff] %vm2605, %v7495
  %7580 = vst.msk [vmem:[#allocation3 + $0x60] sm:$0xff] %vm2605, %v7497
  %7581 = vst.msk [vmem:[#allocation3 + $0x68] sm:$0xff] %vm2605, %v7499
  %7582 = vst.msk [vmem:[#allocation3 + $0x70] sm:$0xff] %vm2605, %v7501
  %7583 = vst.msk [vmem:[#allocation3 + $0x78] sm:$0xff] %vm2605, %v7503
  %7584 = vst.msk [vmem:[#allocation3 + $0x80] sm:$0xff] %vm2605, %v7505
  %7585 = vst.msk [vmem:[#allocation3 + $0x88] sm:$0xff] %vm2605, %v7507
  %7586 = vst.msk [vmem:[#allocation3 + $0x90] sm:$0xff] %vm2605, %v7509
  %7587 = vst.msk [vmem:[#allocation3 + $0x98] sm:$0xff] %vm2605, %v7511
  %7588 = vst.msk [vmem:[#allocation3 + $0xa0] sm:$0xff] %vm2605, %v7513
  %7589 = vst.msk [vmem:[#allocation3 + $0xa8] sm:$0xff] %vm2605, %v7515
  %7590 = vst.msk [vmem:[#allocation3 + $0xb0] sm:$0xff] %vm2605, %v7517
  %7591 = vst.msk [vmem:[#allocation3 + $0xb8] sm:$0xff] %vm2605, %v7519
  %7592 = vst.msk [vmem:[#allocation3 + $0xc0] sm:$0xff] %vm2605, %v7521
  %7593 = vst.msk [vmem:[#allocation3 + $0xc8] sm:$0xff] %vm2605, %v7523
  %7594 = vst.msk [vmem:[#allocation3 + $0xd0] sm:$0xff] %vm2605, %v7525
  %7595 = vst.msk [vmem:[#allocation3 + $0xd8] sm:$0xff] %vm2605, %v7527
  %7596 = vst.msk [vmem:[#allocation3 + $0xe0] sm:$0xff] %vm2605, %v7529
  %7597 = vst.msk [vmem:[#allocation3 + $0xe8] sm:$0xff] %vm2605, %v7531
  %7598 = vst.msk [vmem:[#allocation3 + $0xf0] sm:$0xff] %vm2605, %v7533
  %7599 = vst.msk [vmem:[#allocation3 + $0xf8] sm:$0xff] %vm2605, %v7535
  %v7600 = vld [vmem:[%s552 + $0x8] sm:$0xff]
  %v7601 = vld [vmem:[%s552 + $0x10] sm:$0x1]
  %v7602 = vld [vmem:[%s552 + $0x20] sm:$0xff]
  %v7603 = vld [vmem:[%s552 + $0x28] sm:$0x1]
  %v7604 = vld [vmem:[%s552 + $0x38] sm:$0xff]
  %v7605 = vld [vmem:[%s552 + $0x40] sm:$0x1]
  %v7606 = vld [vmem:[%s552 + $0x50] sm:$0xff]
  %v7607 = vld [vmem:[%s552 + $0x58] sm:$0x1]
  %v7608 = vld [vmem:[%s552 + $0x68] sm:$0xff]
  %v7609 = vld [vmem:[%s552 + $0x70] sm:$0x1]
  %v7610 = vld [vmem:[%s552 + $0x80] sm:$0xff]
  %v7611 = vld [vmem:[%s552 + $0x88] sm:$0x1]
  %v7612 = vld [vmem:[%s552 + $0x98] sm:$0xff]
  %v7613 = vld [vmem:[%s552 + $0xa0] sm:$0x1]
  %v7614 = vld [vmem:[%s552 + $0xb0] sm:$0xff]
  %v7615 = vld [vmem:[%s552 + $0xb8] sm:$0x1]
  %v7616 = vld [vmem:[%s552 + $0xc8] sm:$0xff]
  %v7617 = vld [vmem:[%s552 + $0xd0] sm:$0x1]
  %v7618 = vld [vmem:[%s552 + $0xe0] sm:$0xff]
  %v7619 = vld [vmem:[%s552 + $0xe8] sm:$0x1]
  %v7620 = vld [vmem:[%s552 + $0xf8] sm:$0xff]
  %v7621 = vld [vmem:[%s552 + $0x100] sm:$0x1]
  %v7622 = vld [vmem:[%s552 + $0x110] sm:$0xff]
  %v7623 = vld [vmem:[%s552 + $0x118] sm:$0x1]
  %v7624 = vld [vmem:[%s552 + $0x128] sm:$0xff]
  %v7625 = vld [vmem:[%s552 + $0x130] sm:$0x1]
  %v7626 = vld [vmem:[%s552 + $0x140] sm:$0xff]
  %v7627 = vld [vmem:[%s552 + $0x148] sm:$0x1]
  %v7628 = vld [vmem:[%s552 + $0x158] sm:$0xff]
  %v7629 = vld [vmem:[%s552 + $0x160] sm:$0x1]
  %v7630 = vld [vmem:[%s552 + $0x170] sm:$0xff]
  %v7631 = vld [vmem:[%s552 + $0x178] sm:$0x1]
  %v7632 = vld [vmem:[%s552 + $0x1b8] sm:$0xff]
  %v7633 = vld [vmem:[%s552 + $0x1c0] sm:$0x1]
  %v7634 = vld [vmem:[%s552 + $0x1d0] sm:$0xff]
  %v7635 = vld [vmem:[%s552 + $0x1d8] sm:$0x1]
  %v7636 = vld [vmem:[%s552 + $0x1e8] sm:$0xff]
  %v7637 = vld [vmem:[%s552 + $0x1f0] sm:$0x1]
  %v7638 = vld [vmem:[%s552 + $0x200] sm:$0xff]
  %v7639 = vld [vmem:[%s552 + $0x208] sm:$0x1]
  %v7640 = vld [vmem:[%s552 + $0x218] sm:$0xff]
  %v7641 = vld [vmem:[%s552 + $0x220] sm:$0x1]
  %v7642 = vld [vmem:[%s552 + $0x230] sm:$0xff]
  %v7643 = vld [vmem:[%s552 + $0x238] sm:$0x1]
  %v7644 = vld [vmem:[%s552 + $0x248] sm:$0xff]
  %v7645 = vld [vmem:[%s552 + $0x250] sm:$0x1]
  %v7646 = vld [vmem:[%s552 + $0x260] sm:$0xff]
  %v7647 = vld [vmem:[%s552 + $0x268] sm:$0x1]
  %v7648 = vld [vmem:[%s552 + $0x278] sm:$0xff]
  %v7649 = vld [vmem:[%s552 + $0x280] sm:$0x1]
  %v7650 = vld [vmem:[%s552 + $0x290] sm:$0xff]
  %v7651 = vld [vmem:[%s552 + $0x298] sm:$0x1]
  %v7652 = vld [vmem:[%s552 + $0x2a8] sm:$0xff]
  %v7653 = vld [vmem:[%s552 + $0x2b0] sm:$0x1]
  %v7654 = vld [vmem:[%s552 + $0x2c0] sm:$0xff]
  %v7655 = vld [vmem:[%s552 + $0x2c8] sm:$0x1]
  %v7656 = vld [vmem:[%s552 + $0x2d8] sm:$0xff]
  %v7657 = vld [vmem:[%s552 + $0x2e0] sm:$0x1]
  %v7658 = vld [vmem:[%s552 + $0x2f0] sm:$0xff]
  %v7659 = vld [vmem:[%s552 + $0x2f8] sm:$0x1]
  %v7660 = vld [vmem:[%s552 + $0x308] sm:$0xff]
  %v7661 = vld [vmem:[%s552 + $0x310] sm:$0x1]
  %v7662 = vld [vmem:[%s552 + $0x320] sm:$0xff]
  %v7663 = vld [vmem:[%s552 + $0x328] sm:$0x1]
  %v7665 = vshrl.u32 %v7600, 16
  %v7667 = vshll.u32 %v7600, 16
  %v7669 = vrot.slane %v7667, 1
  %v7670 = vor.u32 %v7665, %v7669
  %v7672 = vshll.u32 %v7601, 16
  %v7674 = vrot.slane %v7672, 1
  %v7675 = vsel %vm1354, %v7670, %v7674
  %v7677 = vshrl.u32 %v7602, 16
  %v7679 = vshll.u32 %v7602, 16
  %v7681 = vrot.slane %v7679, 1
  %v7682 = vor.u32 %v7677, %v7681
  %v7684 = vshll.u32 %v7603, 16
  %v7686 = vrot.slane %v7684, 1
  %v7687 = vsel %vm1354, %v7682, %v7686
  %v7689 = vshrl.u32 %v7604, 16
  %v7691 = vshll.u32 %v7604, 16
  %v7693 = vrot.slane %v7691, 1
  %v7694 = vor.u32 %v7689, %v7693
  %v7696 = vshll.u32 %v7605, 16
  %v7698 = vrot.slane %v7696, 1
  %v7699 = vsel %vm1354, %v7694, %v7698
  %v7701 = vshrl.u32 %v7606, 16
  %v7703 = vshll.u32 %v7606, 16
  %v7705 = vrot.slane %v7703, 1
  %v7706 = vor.u32 %v7701, %v7705
  %v7708 = vshll.u32 %v7607, 16
  %v7710 = vrot.slane %v7708, 1
  %v7711 = vsel %vm1354, %v7706, %v7710
  %v7713 = vshrl.u32 %v7608, 16
  %v7715 = vshll.u32 %v7608, 16
  %v7717 = vrot.slane %v7715, 1
  %v7718 = vor.u32 %v7713, %v7717
  %v7720 = vshll.u32 %v7609, 16
  %v7722 = vrot.slane %v7720, 1
  %v7723 = vsel %vm1354, %v7718, %v7722
  %v7725 = vshrl.u32 %v7610, 16
  %v7727 = vshll.u32 %v7610, 16
  %v7729 = vrot.slane %v7727, 1
  %v7730 = vor.u32 %v7725, %v7729
  %v7732 = vshll.u32 %v7611, 16
  %v7734 = vrot.slane %v7732, 1
  %v7735 = vsel %vm1354, %v7730, %v7734
  %v7737 = vshrl.u32 %v7612, 16
  %v7739 = vshll.u32 %v7612, 16
  %v7741 = vrot.slane %v7739, 1
  %v7742 = vor.u32 %v7737, %v7741
  %v7744 = vshll.u32 %v7613, 16
  %v7746 = vrot.slane %v7744, 1
  %v7747 = vsel %vm1354, %v7742, %v7746
  %v7749 = vshrl.u32 %v7614, 16
  %v7751 = vshll.u32 %v7614, 16
  %v7753 = vrot.slane %v7751, 1
  %v7754 = vor.u32 %v7749, %v7753
  %v7756 = vshll.u32 %v7615, 16
  %v7758 = vrot.slane %v7756, 1
  %v7759 = vsel %vm1354, %v7754, %v7758
  %v7761 = vshrl.u32 %v7616, 16
  %v7763 = vshll.u32 %v7616, 16
  %v7765 = vrot.slane %v7763, 1
  %v7766 = vor.u32 %v7761, %v7765
  %v7768 = vshll.u32 %v7617, 16
  %v7770 = vrot.slane %v7768, 1
  %v7771 = vsel %vm1354, %v7766, %v7770
  %v7773 = vshrl.u32 %v7618, 16
  %v7775 = vshll.u32 %v7618, 16
  %v7777 = vrot.slane %v7775, 1
  %v7778 = vor.u32 %v7773, %v7777
  %v7780 = vshll.u32 %v7619, 16
  %v7782 = vrot.slane %v7780, 1
  %v7783 = vsel %vm1354, %v7778, %v7782
  %v7785 = vshrl.u32 %v7620, 16
  %v7787 = vshll.u32 %v7620, 16
  %v7789 = vrot.slane %v7787, 1
  %v7790 = vor.u32 %v7785, %v7789
  %v7792 = vshll.u32 %v7621, 16
  %v7794 = vrot.slane %v7792, 1
  %v7795 = vsel %vm1354, %v7790, %v7794
  %v7797 = vshrl.u32 %v7622, 16
  %v7799 = vshll.u32 %v7622, 16
  %v7801 = vrot.slane %v7799, 1
  %v7802 = vor.u32 %v7797, %v7801
  %v7804 = vshll.u32 %v7623, 16
  %v7806 = vrot.slane %v7804, 1
  %v7807 = vsel %vm1354, %v7802, %v7806
  %v7809 = vshrl.u32 %v7624, 16
  %v7811 = vshll.u32 %v7624, 16
  %v7813 = vrot.slane %v7811, 1
  %v7814 = vor.u32 %v7809, %v7813
  %v7816 = vshll.u32 %v7625, 16
  %v7818 = vrot.slane %v7816, 1
  %v7819 = vsel %vm1354, %v7814, %v7818
  %v7821 = vshrl.u32 %v7626, 16
  %v7823 = vshll.u32 %v7626, 16
  %v7825 = vrot.slane %v7823, 1
  %v7826 = vor.u32 %v7821, %v7825
  %v7828 = vshll.u32 %v7627, 16
  %v7830 = vrot.slane %v7828, 1
  %v7831 = vsel %vm1354, %v7826, %v7830
  %v7833 = vshrl.u32 %v7628, 16
  %v7835 = vshll.u32 %v7628, 16
  %v7837 = vrot.slane %v7835, 1
  %v7838 = vor.u32 %v7833, %v7837
  %v7840 = vshll.u32 %v7629, 16
  %v7842 = vrot.slane %v7840, 1
  %v7843 = vsel %vm1354, %v7838, %v7842
  %v7845 = vshrl.u32 %v7630, 16
  %v7847 = vshll.u32 %v7630, 16
  %v7849 = vrot.slane %v7847, 1
  %v7850 = vor.u32 %v7845, %v7849
  %v7852 = vshll.u32 %v7631, 16
  %v7854 = vrot.slane %v7852, 1
  %v7855 = vsel %vm1354, %v7850, %v7854
  %v7857 = vshrl.u32 %v7632, 16
  %v7859 = vshll.u32 %v7632, 16
  %v7861 = vrot.slane %v7859, 1
  %v7862 = vor.u32 %v7857, %v7861
  %v7864 = vshll.u32 %v7633, 16
  %v7866 = vrot.slane %v7864, 1
  %v7867 = vsel %vm1354, %v7862, %v7866
  %v7869 = vshrl.u32 %v7634, 16
  %v7871 = vshll.u32 %v7634, 16
  %v7873 = vrot.slane %v7871, 1
  %v7874 = vor.u32 %v7869, %v7873
  %v7876 = vshll.u32 %v7635, 16
  %v7878 = vrot.slane %v7876, 1
  %v7879 = vsel %vm1354, %v7874, %v7878
  %v7881 = vshrl.u32 %v7636, 16
  %v7883 = vshll.u32 %v7636, 16
  %v7885 = vrot.slane %v7883, 1
  %v7886 = vor.u32 %v7881, %v7885
  %v7888 = vshll.u32 %v7637, 16
  %v7890 = vrot.slane %v7888, 1
  %v7891 = vsel %vm1354, %v7886, %v7890
  %v7893 = vshrl.u32 %v7638, 16
  %v7895 = vshll.u32 %v7638, 16
  %v7897 = vrot.slane %v7895, 1
  %v7898 = vor.u32 %v7893, %v7897
  %v7900 = vshll.u32 %v7639, 16
  %v7902 = vrot.slane %v7900, 1
  %v7903 = vsel %vm1354, %v7898, %v7902
  %v7905 = vshrl.u32 %v7640, 16
  %v7907 = vshll.u32 %v7640, 16
  %v7909 = vrot.slane %v7907, 1
  %v7910 = vor.u32 %v7905, %v7909
  %v7912 = vshll.u32 %v7641, 16
  %v7914 = vrot.slane %v7912, 1
  %v7915 = vsel %vm1354, %v7910, %v7914
  %v7917 = vshrl.u32 %v7642, 16
  %v7919 = vshll.u32 %v7642, 16
  %v7921 = vrot.slane %v7919, 1
  %v7922 = vor.u32 %v7917, %v7921
  %v7924 = vshll.u32 %v7643, 16
  %v7926 = vrot.slane %v7924, 1
  %v7927 = vsel %vm1354, %v7922, %v7926
  %v7929 = vshrl.u32 %v7644, 16
  %v7931 = vshll.u32 %v7644, 16
  %v7933 = vrot.slane %v7931, 1
  %v7934 = vor.u32 %v7929, %v7933
  %v7936 = vshll.u32 %v7645, 16
  %v7938 = vrot.slane %v7936, 1
  %v7939 = vsel %vm1354, %v7934, %v7938
  %v7941 = vshrl.u32 %v7646, 16
  %v7943 = vshll.u32 %v7646, 16
  %v7945 = vrot.slane %v7943, 1
  %v7946 = vor.u32 %v7941, %v7945
  %v7948 = vshll.u32 %v7647, 16
  %v7950 = vrot.slane %v7948, 1
  %v7951 = vsel %vm1354, %v7946, %v7950
  %v7953 = vshrl.u32 %v7648, 16
  %v7955 = vshll.u32 %v7648, 16
  %v7957 = vrot.slane %v7955, 1
  %v7958 = vor.u32 %v7953, %v7957
  %v7960 = vshll.u32 %v7649, 16
  %v7962 = vrot.slane %v7960, 1
  %v7963 = vsel %vm1354, %v7958, %v7962
  %v7965 = vshrl.u32 %v7650, 16
  %v7967 = vshll.u32 %v7650, 16
  %v7969 = vrot.slane %v7967, 1
  %v7970 = vor.u32 %v7965, %v7969
  %v7972 = vshll.u32 %v7651, 16
  %v7974 = vrot.slane %v7972, 1
  %v7975 = vsel %vm1354, %v7970, %v7974
  %v7977 = vshrl.u32 %v7652, 16
  %v7979 = vshll.u32 %v7652, 16
  %v7981 = vrot.slane %v7979, 1
  %v7982 = vor.u32 %v7977, %v7981
  %v7984 = vshll.u32 %v7653, 16
  %v7986 = vrot.slane %v7984, 1
  %v7987 = vsel %vm1354, %v7982, %v7986
  %v7989 = vshrl.u32 %v7654, 16
  %v7991 = vshll.u32 %v7654, 16
  %v7993 = vrot.slane %v7991, 1
  %v7994 = vor.u32 %v7989, %v7993
  %v7996 = vshll.u32 %v7655, 16
  %v7998 = vrot.slane %v7996, 1
  %v7999 = vsel %vm1354, %v7994, %v7998
  %v8001 = vshrl.u32 %v7656, 16
  %v8003 = vshll.u32 %v7656, 16
  %v8005 = vrot.slane %v8003, 1
  %v8006 = vor.u32 %v8001, %v8005
  %v8008 = vshll.u32 %v7657, 16
  %v8010 = vrot.slane %v8008, 1
  %v8011 = vsel %vm1354, %v8006, %v8010
  %v8013 = vshrl.u32 %v7658, 16
  %v8015 = vshll.u32 %v7658, 16
  %v8017 = vrot.slane %v8015, 1
  %v8018 = vor.u32 %v8013, %v8017
  %v8020 = vshll.u32 %v7659, 16
  %v8022 = vrot.slane %v8020, 1
  %v8023 = vsel %vm1354, %v8018, %v8022
  %v8025 = vshrl.u32 %v7660, 16
  %v8027 = vshll.u32 %v7660, 16
  %v8029 = vrot.slane %v8027, 1
  %v8030 = vor.u32 %v8025, %v8029
  %v8032 = vshll.u32 %v7661, 16
  %v8034 = vrot.slane %v8032, 1
  %v8035 = vsel %vm1354, %v8030, %v8034
  %v8037 = vshrl.u32 %v7662, 16
  %v8039 = vshll.u32 %v7662, 16
  %v8041 = vrot.slane %v8039, 1
  %v8042 = vor.u32 %v8037, %v8041
  %v8044 = vshll.u32 %v7663, 16
  %v8046 = vrot.slane %v8044, 1
  %v8047 = vsel %vm1354, %v8042, %v8046
  %8048 = vrot.lane.b32.xlu0 %v7675, 20
  %v8049 = vpop.permute.xlu0 %8048
  %8050 = vrot.lane.b32.xlu0 %v7687, 20
  %v8051 = vpop.permute.xlu0 %8050
  %8052 = vrot.lane.b32.xlu0 %v7699, 20
  %v8053 = vpop.permute.xlu0 %8052
  %8054 = vrot.lane.b32.xlu0 %v7711, 20
  %v8055 = vpop.permute.xlu0 %8054
  %8056 = vrot.lane.b32.xlu0 %v7723, 20
  %v8057 = vpop.permute.xlu0 %8056
  %8058 = vrot.lane.b32.xlu0 %v7735, 20
  %v8059 = vpop.permute.xlu0 %8058
  %8060 = vrot.lane.b32.xlu0 %v7747, 20
  %v8061 = vpop.permute.xlu0 %8060
  %8062 = vrot.lane.b32.xlu0 %v7759, 20
  %v8063 = vpop.permute.xlu0 %8062
  %8064 = vrot.lane.b32.xlu0 %v7771, 20
  %v8065 = vpop.permute.xlu0 %8064
  %8066 = vrot.lane.b32.xlu0 %v7783, 20
  %v8067 = vpop.permute.xlu0 %8066
  %8068 = vrot.lane.b32.xlu0 %v7795, 20
  %v8069 = vpop.permute.xlu0 %8068
  %8070 = vrot.lane.b32.xlu0 %v7807, 20
  %v8071 = vpop.permute.xlu0 %8070
  %8072 = vrot.lane.b32.xlu0 %v7819, 20
  %v8073 = vpop.permute.xlu0 %8072
  %8074 = vrot.lane.b32.xlu0 %v7831, 20
  %v8075 = vpop.permute.xlu0 %8074
  %8076 = vrot.lane.b32.xlu0 %v7843, 20
  %v8077 = vpop.permute.xlu0 %8076
  %8078 = vrot.lane.b32.xlu0 %v7855, 20
  %v8079 = vpop.permute.xlu0 %8078
  %8080 = vrot.lane.b32.xlu0 %v7867, 20
  %v8081 = vpop.permute.xlu0 %8080
  %8082 = vrot.lane.b32.xlu0 %v7879, 20
  %v8083 = vpop.permute.xlu0 %8082
  %8084 = vrot.lane.b32.xlu0 %v7891, 20
  %v8085 = vpop.permute.xlu0 %8084
  %8086 = vrot.lane.b32.xlu0 %v7903, 20
  %v8087 = vpop.permute.xlu0 %8086
  %8088 = vrot.lane.b32.xlu0 %v7915, 20
  %v8089 = vpop.permute.xlu0 %8088
  %8090 = vrot.lane.b32.xlu0 %v7927, 20
  %v8091 = vpop.permute.xlu0 %8090
  %8092 = vrot.lane.b32.xlu0 %v7939, 20
  %v8093 = vpop.permute.xlu0 %8092
  %8094 = vrot.lane.b32.xlu0 %v7951, 20
  %v8095 = vpop.permute.xlu0 %8094
  %8096 = vrot.lane.b32.xlu0 %v7963, 20
  %v8097 = vpop.permute.xlu0 %8096
  %8098 = vrot.lane.b32.xlu0 %v7975, 20
  %v8099 = vpop.permute.xlu0 %8098
  %8100 = vrot.lane.b32.xlu0 %v7987, 20
  %v8101 = vpop.permute.xlu0 %8100
  %8102 = vrot.lane.b32.xlu0 %v7999, 20
  %v8103 = vpop.permute.xlu0 %8102
  %8104 = vrot.lane.b32.xlu0 %v8011, 20
  %v8105 = vpop.permute.xlu0 %8104
  %8106 = vrot.lane.b32.xlu0 %v8023, 20
  %v8107 = vpop.permute.xlu0 %8106
  %8108 = vrot.lane.b32.xlu0 %v8035, 20
  %v8109 = vpop.permute.xlu0 %8108
  %8110 = vrot.lane.b32.xlu0 %v8047, 20
  %v8111 = vpop.permute.xlu0 %8110
  %8144 = vst.msk [vmem:[#allocation3] sm:$0xff] %vm3182, %v8049
  %8145 = vst.msk [vmem:[#allocation3 + $0x8] sm:$0xff] %vm3182, %v8051
  %8146 = vst.msk [vmem:[#allocation3 + $0x10] sm:$0xff] %vm3182, %v8053
  %8147 = vst.msk [vmem:[#allocation3 + $0x18] sm:$0xff] %vm3182, %v8055
  %8148 = vst.msk [vmem:[#allocation3 + $0x20] sm:$0xff] %vm3182, %v8057
  %8149 = vst.msk [vmem:[#allocation3 + $0x28] sm:$0xff] %vm3182, %v8059
  %8150 = vst.msk [vmem:[#allocation3 + $0x30] sm:$0xff] %vm3182, %v8061
  %8151 = vst.msk [vmem:[#allocation3 + $0x38] sm:$0xff] %vm3182, %v8063
  %8152 = vst.msk [vmem:[#allocation3 + $0x40] sm:$0xff] %vm3182, %v8065
  %8153 = vst.msk [vmem:[#allocation3 + $0x48] sm:$0xff] %vm3182, %v8067
  %8154 = vst.msk [vmem:[#allocation3 + $0x50] sm:$0xff] %vm3182, %v8069
  %8155 = vst.msk [vmem:[#allocation3 + $0x58] sm:$0xff] %vm3182, %v8071
  %8156 = vst.msk [vmem:[#allocation3 + $0x60] sm:$0xff] %vm3182, %v8073
  %8157 = vst.msk [vmem:[#allocation3 + $0x68] sm:$0xff] %vm3182, %v8075
  %8158 = vst.msk [vmem:[#allocation3 + $0x70] sm:$0xff] %vm3182, %v8077
  %8159 = vst.msk [vmem:[#allocation3 + $0x78] sm:$0xff] %vm3182, %v8079
  %8160 = vst.msk [vmem:[#allocation3 + $0x80] sm:$0xff] %vm3182, %v8081
  %8161 = vst.msk [vmem:[#allocation3 + $0x88] sm:$0xff] %vm3182, %v8083
  %8162 = vst.msk [vmem:[#allocation3 + $0x90] sm:$0xff] %vm3182, %v8085
  %8163 = vst.msk [vmem:[#allocation3 + $0x98] sm:$0xff] %vm3182, %v8087
  %8164 = vst.msk [vmem:[#allocation3 + $0xa0] sm:$0xff] %vm3182, %v8089
  %8165 = vst.msk [vmem:[#allocation3 + $0xa8] sm:$0xff] %vm3182, %v8091
  %8166 = vst.msk [vmem:[#allocation3 + $0xb0] sm:$0xff] %vm3182, %v8093
  %8167 = vst.msk [vmem:[#allocation3 + $0xb8] sm:$0xff] %vm3182, %v8095
  %8168 = vst.msk [vmem:[#allocation3 + $0xc0] sm:$0xff] %vm3182, %v8097
  %8169 = vst.msk [vmem:[#allocation3 + $0xc8] sm:$0xff] %vm3182, %v8099
  %8170 = vst.msk [vmem:[#allocation3 + $0xd0] sm:$0xff] %vm3182, %v8101
  %8171 = vst.msk [vmem:[#allocation3 + $0xd8] sm:$0xff] %vm3182, %v8103
  %8172 = vst.msk [vmem:[#allocation3 + $0xe0] sm:$0xff] %vm3182, %v8105
  %8173 = vst.msk [vmem:[#allocation3 + $0xe8] sm:$0xff] %vm3182, %v8107
  %8174 = vst.msk [vmem:[#allocation3 + $0xf0] sm:$0xff] %vm3182, %v8109
  %8175 = vst.msk [vmem:[#allocation3 + $0xf8] sm:$0xff] %vm3182, %v8111
  %v8176 = vld [vmem:[%s3215] sm:$0x80]
  %v8177 = vld [vmem:[%s3215 + $0x8] sm:$0xff]
  %v8178 = vld [vmem:[%s3215 + $0x18] sm:$0x80]
  %v8179 = vld [vmem:[%s3215 + $0x20] sm:$0xff]
  %v8180 = vld [vmem:[%s3215 + $0x30] sm:$0x80]
  %v8181 = vld [vmem:[%s3215 + $0x38] sm:$0xff]
  %v8182 = vld [vmem:[%s3215 + $0x48] sm:$0x80]
  %v8183 = vld [vmem:[%s3215 + $0x50] sm:$0xff]
  %v8184 = vld [vmem:[%s3215 + $0x60] sm:$0x80]
  %v8185 = vld [vmem:[%s3215 + $0x68] sm:$0xff]
  %v8186 = vld [vmem:[%s3215 + $0x78] sm:$0x80]
  %v8187 = vld [vmem:[%s3215 + $0x80] sm:$0xff]
  %v8188 = vld [vmem:[%s3215 + $0x90] sm:$0x80]
  %v8189 = vld [vmem:[%s3215 + $0x98] sm:$0xff]
  %v8190 = vld [vmem:[%s3215 + $0xa8] sm:$0x80]
  %v8191 = vld [vmem:[%s3215 + $0xb0] sm:$0xff]
  %v8192 = vld [vmem:[%s3215 + $0xc0] sm:$0x80]
  %v8193 = vld [vmem:[%s3215 + $0xc8] sm:$0xff]
  %v8194 = vld [vmem:[%s3215 + $0xd8] sm:$0x80]
  %v8195 = vld [vmem:[%s3215 + $0xe0] sm:$0xff]
  %v8196 = vld [vmem:[%s3215 + $0xf0] sm:$0x80]
  %v8197 = vld [vmem:[%s3215 + $0xf8] sm:$0xff]
  %v8198 = vld [vmem:[%s3215 + $0x108] sm:$0x80]
  %v8199 = vld [vmem:[%s3215 + $0x110] sm:$0xff]
  %v8200 = vld [vmem:[%s3215 + $0x120] sm:$0x80]
  %v8201 = vld [vmem:[%s3215 + $0x128] sm:$0xff]
  %v8202 = vld [vmem:[%s3215 + $0x138] sm:$0x80]
  %v8203 = vld [vmem:[%s3215 + $0x140] sm:$0xff]
  %v8204 = vld [vmem:[%s3215 + $0x150] sm:$0x80]
  %v8205 = vld [vmem:[%s3215 + $0x158] sm:$0xff]
  %v8206 = vld [vmem:[%s3215 + $0x168] sm:$0x80]
  %v8207 = vld [vmem:[%s3215 + $0x170] sm:$0xff]
  %v8208 = vld [vmem:[%s3215 + $0x1b0] sm:$0x80]
  %v8209 = vld [vmem:[%s3215 + $0x1b8] sm:$0xff]
  %v8210 = vld [vmem:[%s3215 + $0x1c8] sm:$0x80]
  %v8211 = vld [vmem:[%s3215 + $0x1d0] sm:$0xff]
  %v8212 = vld [vmem:[%s3215 + $0x1e0] sm:$0x80]
  %v8213 = vld [vmem:[%s3215 + $0x1e8] sm:$0xff]
  %v8214 = vld [vmem:[%s3215 + $0x1f8] sm:$0x80]
  %v8215 = vld [vmem:[%s3215 + $0x200] sm:$0xff]
  %v8216 = vld [vmem:[%s3215 + $0x210] sm:$0x80]
  %v8217 = vld [vmem:[%s3215 + $0x218] sm:$0xff]
  %v8218 = vld [vmem:[%s3215 + $0x228] sm:$0x80]
  %v8219 = vld [vmem:[%s3215 + $0x230] sm:$0xff]
  %v8220 = vld [vmem:[%s3215 + $0x240] sm:$0x80]
  %v8221 = vld [vmem:[%s3215 + $0x248] sm:$0xff]
  %v8222 = vld [vmem:[%s3215 + $0x258] sm:$0x80]
  %v8223 = vld [vmem:[%s3215 + $0x260] sm:$0xff]
  %v8224 = vld [vmem:[%s3215 + $0x270] sm:$0x80]
  %v8225 = vld [vmem:[%s3215 + $0x278] sm:$0xff]
  %v8226 = vld [vmem:[%s3215 + $0x288] sm:$0x80]
  %v8227 = vld [vmem:[%s3215 + $0x290] sm:$0xff]
  %v8228 = vld [vmem:[%s3215 + $0x2a0] sm:$0x80]
  %v8229 = vld [vmem:[%s3215 + $0x2a8] sm:$0xff]
  %v8230 = vld [vmem:[%s3215 + $0x2b8] sm:$0x80]
  %v8231 = vld [vmem:[%s3215 + $0x2c0] sm:$0xff]
  %v8232 = vld [vmem:[%s3215 + $0x2d0] sm:$0x80]
  %v8233 = vld [vmem:[%s3215 + $0x2d8] sm:$0xff]
  %v8234 = vld [vmem:[%s3215 + $0x2e8] sm:$0x80]
  %v8235 = vld [vmem:[%s3215 + $0x2f0] sm:$0xff]
  %v8236 = vld [vmem:[%s3215 + $0x300] sm:$0x80]
  %v8237 = vld [vmem:[%s3215 + $0x308] sm:$0xff]
  %v8238 = vld [vmem:[%s3215 + $0x318] sm:$0x80]
  %v8239 = vld [vmem:[%s3215 + $0x320] sm:$0xff]
  %v8241 = vshrl.u32 %v8176, 16
  %v8243 = vrot.slane %v8241, 7
  %v8245 = vshrl.u32 %v8177, 16
  %v8247 = vrot.slane %v8245, 7
  %v8248 = vshll.u32 %v8177, 16
  %v8250 = vor.u32 %v8247, %v8248
  %v8251 = vsel %vm153, %v8243, %v8250
  %v8253 = vshrl.u32 %v8178, 16
  %v8255 = vrot.slane %v8253, 7
  %v8257 = vshrl.u32 %v8179, 16
  %v8259 = vrot.slane %v8257, 7
  %v8260 = vshll.u32 %v8179, 16
  %v8262 = vor.u32 %v8259, %v8260
  %v8263 = vsel %vm153, %v8255, %v8262
  %v8265 = vshrl.u32 %v8180, 16
  %v8267 = vrot.slane %v8265, 7
  %v8269 = vshrl.u32 %v8181, 16
  %v8271 = vrot.slane %v8269, 7
  %v8272 = vshll.u32 %v8181, 16
  %v8274 = vor.u32 %v8271, %v8272
  %v8275 = vsel %vm153, %v8267, %v8274
  %v8277 = vshrl.u32 %v8182, 16
  %v8279 = vrot.slane %v8277, 7
  %v8281 = vshrl.u32 %v8183, 16
  %v8283 = vrot.slane %v8281, 7
  %v8284 = vshll.u32 %v8183, 16
  %v8286 = vor.u32 %v8283, %v8284
  %v8287 = vsel %vm153, %v8279, %v8286
  %v8289 = vshrl.u32 %v8184, 16
  %v8291 = vrot.slane %v8289, 7
  %v8293 = vshrl.u32 %v8185, 16
  %v8295 = vrot.slane %v8293, 7
  %v8296 = vshll.u32 %v8185, 16
  %v8298 = vor.u32 %v8295, %v8296
  %v8299 = vsel %vm153, %v8291, %v8298
  %v8301 = vshrl.u32 %v8186, 16
  %v8303 = vrot.slane %v8301, 7
  %v8305 = vshrl.u32 %v8187, 16
  %v8307 = vrot.slane %v8305, 7
  %v8308 = vshll.u32 %v8187, 16
  %v8310 = vor.u32 %v8307, %v8308
  %v8311 = vsel %vm153, %v8303, %v8310
  %v8313 = vshrl.u32 %v8188, 16
  %v8315 = vrot.slane %v8313, 7
  %v8317 = vshrl.u32 %v8189, 16
  %v8319 = vrot.slane %v8317, 7
  %v8320 = vshll.u32 %v8189, 16
  %v8322 = vor.u32 %v8319, %v8320
  %v8323 = vsel %vm153, %v8315, %v8322
  %v8325 = vshrl.u32 %v8190, 16
  %v8327 = vrot.slane %v8325, 7
  %v8329 = vshrl.u32 %v8191, 16
  %v8331 = vrot.slane %v8329, 7
  %v8332 = vshll.u32 %v8191, 16
  %v8334 = vor.u32 %v8331, %v8332
  %v8335 = vsel %vm153, %v8327, %v8334
  %v8337 = vshrl.u32 %v8192, 16
  %v8339 = vrot.slane %v8337, 7
  %v8341 = vshrl.u32 %v8193, 16
  %v8343 = vrot.slane %v8341, 7
  %v8344 = vshll.u32 %v8193, 16
  %v8346 = vor.u32 %v8343, %v8344
  %v8347 = vsel %vm153, %v8339, %v8346
  %v8349 = vshrl.u32 %v8194, 16
  %v8351 = vrot.slane %v8349, 7
  %v8353 = vshrl.u32 %v8195, 16
  %v8355 = vrot.slane %v8353, 7
  %v8356 = vshll.u32 %v8195, 16
  %v8358 = vor.u32 %v8355, %v8356
  %v8359 = vsel %vm153, %v8351, %v8358
  %v8361 = vshrl.u32 %v8196, 16
  %v8363 = vrot.slane %v8361, 7
  %v8365 = vshrl.u32 %v8197, 16
  %v8367 = vrot.slane %v8365, 7
  %v8368 = vshll.u32 %v8197, 16
  %v8370 = vor.u32 %v8367, %v8368
  %v8371 = vsel %vm153, %v8363, %v8370
  %v8373 = vshrl.u32 %v8198, 16
  %v8375 = vrot.slane %v8373, 7
  %v8377 = vshrl.u32 %v8199, 16
  %v8379 = vrot.slane %v8377, 7
  %v8380 = vshll.u32 %v8199, 16
  %v8382 = vor.u32 %v8379, %v8380
  %v8383 = vsel %vm153, %v8375, %v8382
  %v8385 = vshrl.u32 %v8200, 16
  %v8387 = vrot.slane %v8385, 7
  %v8389 = vshrl.u32 %v8201, 16
  %v8391 = vrot.slane %v8389, 7
  %v8392 = vshll.u32 %v8201, 16
  %v8394 = vor.u32 %v8391, %v8392
  %v8395 = vsel %vm153, %v8387, %v8394
  %v8397 = vshrl.u32 %v8202, 16
  %v8399 = vrot.slane %v8397, 7
  %v8401 = vshrl.u32 %v8203, 16
  %v8403 = vrot.slane %v8401, 7
  %v8404 = vshll.u32 %v8203, 16
  %v8406 = vor.u32 %v8403, %v8404
  %v8407 = vsel %vm153, %v8399, %v8406
  %v8409 = vshrl.u32 %v8204, 16
  %v8411 = vrot.slane %v8409, 7
  %v8413 = vshrl.u32 %v8205, 16
  %v8415 = vrot.slane %v8413, 7
  %v8416 = vshll.u32 %v8205, 16
  %v8418 = vor.u32 %v8415, %v8416
  %v8419 = vsel %vm153, %v8411, %v8418
  %v8421 = vshrl.u32 %v8206, 16
  %v8423 = vrot.slane %v8421, 7
  %v8425 = vshrl.u32 %v8207, 16
  %v8427 = vrot.slane %v8425, 7
  %v8428 = vshll.u32 %v8207, 16
  %v8430 = vor.u32 %v8427, %v8428
  %v8431 = vsel %vm153, %v8423, %v8430
  %v8433 = vshrl.u32 %v8208, 16
  %v8435 = vrot.slane %v8433, 7
  %v8437 = vshrl.u32 %v8209, 16
  %v8439 = vrot.slane %v8437, 7
  %v8440 = vshll.u32 %v8209, 16
  %v8442 = vor.u32 %v8439, %v8440
  %v8443 = vsel %vm153, %v8435, %v8442
  %v8445 = vshrl.u32 %v8210, 16
  %v8447 = vrot.slane %v8445, 7
  %v8449 = vshrl.u32 %v8211, 16
  %v8451 = vrot.slane %v8449, 7
  %v8452 = vshll.u32 %v8211, 16
  %v8454 = vor.u32 %v8451, %v8452
  %v8455 = vsel %vm153, %v8447, %v8454
  %v8457 = vshrl.u32 %v8212, 16
  %v8459 = vrot.slane %v8457, 7
  %v8461 = vshrl.u32 %v8213, 16
  %v8463 = vrot.slane %v8461, 7
  %v8464 = vshll.u32 %v8213, 16
  %v8466 = vor.u32 %v8463, %v8464
  %v8467 = vsel %vm153, %v8459, %v8466
  %v8469 = vshrl.u32 %v8214, 16
  %v8471 = vrot.slane %v8469, 7
  %v8473 = vshrl.u32 %v8215, 16
  %v8475 = vrot.slane %v8473, 7
  %v8476 = vshll.u32 %v8215, 16
  %v8478 = vor.u32 %v8475, %v8476
  %v8479 = vsel %vm153, %v8471, %v8478
  %v8481 = vshrl.u32 %v8216, 16
  %v8483 = vrot.slane %v8481, 7
  %v8485 = vshrl.u32 %v8217, 16
  %v8487 = vrot.slane %v8485, 7
  %v8488 = vshll.u32 %v8217, 16
  %v8490 = vor.u32 %v8487, %v8488
  %v8491 = vsel %vm153, %v8483, %v8490
  %v8493 = vshrl.u32 %v8218, 16
  %v8495 = vrot.slane %v8493, 7
  %v8497 = vshrl.u32 %v8219, 16
  %v8499 = vrot.slane %v8497, 7
  %v8500 = vshll.u32 %v8219, 16
  %v8502 = vor.u32 %v8499, %v8500
  %v8503 = vsel %vm153, %v8495, %v8502
  %v8505 = vshrl.u32 %v8220, 16
  %v8507 = vrot.slane %v8505, 7
  %v8509 = vshrl.u32 %v8221, 16
  %v8511 = vrot.slane %v8509, 7
  %v8512 = vshll.u32 %v8221, 16
  %v8514 = vor.u32 %v8511, %v8512
  %v8515 = vsel %vm153, %v8507, %v8514
  %v8517 = vshrl.u32 %v8222, 16
  %v8519 = vrot.slane %v8517, 7
  %v8521 = vshrl.u32 %v8223, 16
  %v8523 = vrot.slane %v8521, 7
  %v8524 = vshll.u32 %v8223, 16
  %v8526 = vor.u32 %v8523, %v8524
  %v8527 = vsel %vm153, %v8519, %v8526
  %v8529 = vshrl.u32 %v8224, 16
  %v8531 = vrot.slane %v8529, 7
  %v8533 = vshrl.u32 %v8225, 16
  %v8535 = vrot.slane %v8533, 7
  %v8536 = vshll.u32 %v8225, 16
  %v8538 = vor.u32 %v8535, %v8536
  %v8539 = vsel %vm153, %v8531, %v8538
  %v8541 = vshrl.u32 %v8226, 16
  %v8543 = vrot.slane %v8541, 7
  %v8545 = vshrl.u32 %v8227, 16
  %v8547 = vrot.slane %v8545, 7
  %v8548 = vshll.u32 %v8227, 16
  %v8550 = vor.u32 %v8547, %v8548
  %v8551 = vsel %vm153, %v8543, %v8550
  %v8553 = vshrl.u32 %v8228, 16
  %v8555 = vrot.slane %v8553, 7
  %v8557 = vshrl.u32 %v8229, 16
  %v8559 = vrot.slane %v8557, 7
  %v8560 = vshll.u32 %v8229, 16
  %v8562 = vor.u32 %v8559, %v8560
  %v8563 = vsel %vm153, %v8555, %v8562
  %v8565 = vshrl.u32 %v8230, 16
  %v8567 = vrot.slane %v8565, 7
  %v8569 = vshrl.u32 %v8231, 16
  %v8571 = vrot.slane %v8569, 7
  %v8572 = vshll.u32 %v8231, 16
  %v8574 = vor.u32 %v8571, %v8572
  %v8575 = vsel %vm153, %v8567, %v8574
  %v8577 = vshrl.u32 %v8232, 16
  %v8579 = vrot.slane %v8577, 7
  %v8581 = vshrl.u32 %v8233, 16
  %v8583 = vrot.slane %v8581, 7
  %v8584 = vshll.u32 %v8233, 16
  %v8586 = vor.u32 %v8583, %v8584
  %v8587 = vsel %vm153, %v8579, %v8586
  %v8589 = vshrl.u32 %v8234, 16
  %v8591 = vrot.slane %v8589, 7
  %v8593 = vshrl.u32 %v8235, 16
  %v8595 = vrot.slane %v8593, 7
  %v8596 = vshll.u32 %v8235, 16
  %v8598 = vor.u32 %v8595, %v8596
  %v8599 = vsel %vm153, %v8591, %v8598
  %v8601 = vshrl.u32 %v8236, 16
  %v8603 = vrot.slane %v8601, 7
  %v8605 = vshrl.u32 %v8237, 16
  %v8607 = vrot.slane %v8605, 7
  %v8608 = vshll.u32 %v8237, 16
  %v8610 = vor.u32 %v8607, %v8608
  %v8611 = vsel %vm153, %v8603, %v8610
  %v8613 = vshrl.u32 %v8238, 16
  %v8615 = vrot.slane %v8613, 7
  %v8617 = vshrl.u32 %v8239, 16
  %v8619 = vrot.slane %v8617, 7
  %v8620 = vshll.u32 %v8239, 16
  %v8622 = vor.u32 %v8619, %v8620
  %v8623 = vsel %vm153, %v8615, %v8622
  %8624 = vrot.lane.b32.xlu0 %v8251, 24
  %v8625 = vpop.permute.xlu0 %8624
  %8626 = vrot.lane.b32.xlu0 %v8263, 24
  %v8627 = vpop.permute.xlu0 %8626
  %8628 = vrot.lane.b32.xlu0 %v8275, 24
  %v8629 = vpop.permute.xlu0 %8628
  %8630 = vrot.lane.b32.xlu0 %v8287, 24
  %v8631 = vpop.permute.xlu0 %8630
  %8632 = vrot.lane.b32.xlu0 %v8299, 24
  %v8633 = vpop.permute.xlu0 %8632
  %8634 = vrot.lane.b32.xlu0 %v8311, 24
  %v8635 = vpop.permute.xlu0 %8634
  %8636 = vrot.lane.b32.xlu0 %v8323, 24
  %v8637 = vpop.permute.xlu0 %8636
  %8638 = vrot.lane.b32.xlu0 %v8335, 24
  %v8639 = vpop.permute.xlu0 %8638
  %8640 = vrot.lane.b32.xlu0 %v8347, 24
  %v8641 = vpop.permute.xlu0 %8640
  %8642 = vrot.lane.b32.xlu0 %v8359, 24
  %v8643 = vpop.permute.xlu0 %8642
  %8644 = vrot.lane.b32.xlu0 %v8371, 24
  %v8645 = vpop.permute.xlu0 %8644
  %8646 = vrot.lane.b32.xlu0 %v8383, 24
  %v8647 = vpop.permute.xlu0 %8646
  %8648 = vrot.lane.b32.xlu0 %v8395, 24
  %v8649 = vpop.permute.xlu0 %8648
  %8650 = vrot.lane.b32.xlu0 %v8407, 24
  %v8651 = vpop.permute.xlu0 %8650
  %8652 = vrot.lane.b32.xlu0 %v8419, 24
  %v8653 = vpop.permute.xlu0 %8652
  %8654 = vrot.lane.b32.xlu0 %v8431, 24
  %v8655 = vpop.permute.xlu0 %8654
  %8656 = vrot.lane.b32.xlu0 %v8443, 24
  %v8657 = vpop.permute.xlu0 %8656
  %8658 = vrot.lane.b32.xlu0 %v8455, 24
  %v8659 = vpop.permute.xlu0 %8658
  %8660 = vrot.lane.b32.xlu0 %v8467, 24
  %v8661 = vpop.permute.xlu0 %8660
  %8662 = vrot.lane.b32.xlu0 %v8479, 24
  %v8663 = vpop.permute.xlu0 %8662
  %8664 = vrot.lane.b32.xlu0 %v8491, 24
  %v8665 = vpop.permute.xlu0 %8664
  %8666 = vrot.lane.b32.xlu0 %v8503, 24
  %v8667 = vpop.permute.xlu0 %8666
  %8668 = vrot.lane.b32.xlu0 %v8515, 24
  %v8669 = vpop.permute.xlu0 %8668
  %8670 = vrot.lane.b32.xlu0 %v8527, 24
  %v8671 = vpop.permute.xlu0 %8670
  %8672 = vrot.lane.b32.xlu0 %v8539, 24
  %v8673 = vpop.permute.xlu0 %8672
  %8674 = vrot.lane.b32.xlu0 %v8551, 24
  %v8675 = vpop.permute.xlu0 %8674
  %8676 = vrot.lane.b32.xlu0 %v8563, 24
  %v8677 = vpop.permute.xlu0 %8676
  %8678 = vrot.lane.b32.xlu0 %v8575, 24
  %v8679 = vpop.permute.xlu0 %8678
  %8680 = vrot.lane.b32.xlu0 %v8587, 24
  %v8681 = vpop.permute.xlu0 %8680
  %8682 = vrot.lane.b32.xlu0 %v8599, 24
  %v8683 = vpop.permute.xlu0 %8682
  %8684 = vrot.lane.b32.xlu0 %v8611, 24
  %v8685 = vpop.permute.xlu0 %8684
  %8686 = vrot.lane.b32.xlu0 %v8623, 24
  %v8687 = vpop.permute.xlu0 %8686
  %8720 = vst.msk [vmem:[#allocation3] sm:$0xff] %vm3760, %v8625
  %8721 = vst.msk [vmem:[#allocation3 + $0x8] sm:$0xff] %vm3760, %v8627
  %8722 = vst.msk [vmem:[#allocation3 + $0x10] sm:$0xff] %vm3760, %v8629
  %8723 = vst.msk [vmem:[#allocation3 + $0x18] sm:$0xff] %vm3760, %v8631
  %8724 = vst.msk [vmem:[#allocation3 + $0x20] sm:$0xff] %vm3760, %v8633
  %8725 = vst.msk [vmem:[#allocation3 + $0x28] sm:$0xff] %vm3760, %v8635
  %8726 = vst.msk [vmem:[#allocation3 + $0x30] sm:$0xff] %vm3760, %v8637
  %8727 = vst.msk [vmem:[#allocation3 + $0x38] sm:$0xff] %vm3760, %v8639
  %8728 = vst.msk [vmem:[#allocation3 + $0x40] sm:$0xff] %vm3760, %v8641
  %8729 = vst.msk [vmem:[#allocation3 + $0x48] sm:$0xff] %vm3760, %v8643
  %8730 = vst.msk [vmem:[#allocation3 + $0x50] sm:$0xff] %vm3760, %v8645
  %8731 = vst.msk [vmem:[#allocation3 + $0x58] sm:$0xff] %vm3760, %v8647
  %8732 = vst.msk [vmem:[#allocation3 + $0x60] sm:$0xff] %vm3760, %v8649
  %8733 = vst.msk [vmem:[#allocation3 + $0x68] sm:$0xff] %vm3760, %v8651
  %8734 = vst.msk [vmem:[#allocation3 + $0x70] sm:$0xff] %vm3760, %v8653
  %8735 = vst.msk [vmem:[#allocation3 + $0x78] sm:$0xff] %vm3760, %v8655
  %8736 = vst.msk [vmem:[#allocation3 + $0x80] sm:$0xff] %vm3760, %v8657
  %8737 = vst.msk [vmem:[#allocation3 + $0x88] sm:$0xff] %vm3760, %v8659
  %8738 = vst.msk [vmem:[#allocation3 + $0x90] sm:$0xff] %vm3760, %v8661
  %8739 = vst.msk [vmem:[#allocation3 + $0x98] sm:$0xff] %vm3760, %v8663
  %8740 = vst.msk [vmem:[#allocation3 + $0xa0] sm:$0xff] %vm3760, %v8665
  %8741 = vst.msk [vmem:[#allocation3 + $0xa8] sm:$0xff] %vm3760, %v8667
  %8742 = vst.msk [vmem:[#allocation3 + $0xb0] sm:$0xff] %vm3760, %v8669
  %8743 = vst.msk [vmem:[#allocation3 + $0xb8] sm:$0xff] %vm3760, %v8671
  %8744 = vst.msk [vmem:[#allocation3 + $0xc0] sm:$0xff] %vm3760, %v8673
  %8745 = vst.msk [vmem:[#allocation3 + $0xc8] sm:$0xff] %vm3760, %v8675
  %8746 = vst.msk [vmem:[#allocation3 + $0xd0] sm:$0xff] %vm3760, %v8677
  %8747 = vst.msk [vmem:[#allocation3 + $0xd8] sm:$0xff] %vm3760, %v8679
  %8748 = vst.msk [vmem:[#allocation3 + $0xe0] sm:$0xff] %vm3760, %v8681
  %8749 = vst.msk [vmem:[#allocation3 + $0xe8] sm:$0xff] %vm3760, %v8683
  %8750 = vst.msk [vmem:[#allocation3 + $0xf0] sm:$0xff] %vm3760, %v8685
  %8751 = vst.msk [vmem:[#allocation3 + $0xf8] sm:$0xff] %vm3760, %v8687
  %v8752 = vld [vmem:[%s3215 + $0x8] sm:$0xff]
  %v8753 = vld [vmem:[%s3215 + $0x20] sm:$0xff]
  %v8754 = vld [vmem:[%s3215 + $0x38] sm:$0xff]
  %v8755 = vld [vmem:[%s3215 + $0x50] sm:$0xff]
  %v8756 = vld [vmem:[%s3215 + $0x68] sm:$0xff]
  %v8757 = vld [vmem:[%s3215 + $0x80] sm:$0xff]
  %v8758 = vld [vmem:[%s3215 + $0x98] sm:$0xff]
  %v8759 = vld [vmem:[%s3215 + $0xb0] sm:$0xff]
  %v8760 = vld [vmem:[%s3215 + $0xc8] sm:$0xff]
  %v8761 = vld [vmem:[%s3215 + $0xe0] sm:$0xff]
  %v8762 = vld [vmem:[%s3215 + $0xf8] sm:$0xff]
  %v8763 = vld [vmem:[%s3215 + $0x110] sm:$0xff]
  %v8764 = vld [vmem:[%s3215 + $0x128] sm:$0xff]
  %v8765 = vld [vmem:[%s3215 + $0x140] sm:$0xff]
  %v8766 = vld [vmem:[%s3215 + $0x158] sm:$0xff]
  %v8767 = vld [vmem:[%s3215 + $0x170] sm:$0xff]
  %v8768 = vld [vmem:[%s3215 + $0x1b8] sm:$0xff]
  %v8769 = vld [vmem:[%s3215 + $0x1d0] sm:$0xff]
  %v8770 = vld [vmem:[%s3215 + $0x1e8] sm:$0xff]
  %v8771 = vld [vmem:[%s3215 + $0x200] sm:$0xff]
  %v8772 = vld [vmem:[%s3215 + $0x218] sm:$0xff]
  %v8773 = vld [vmem:[%s3215 + $0x230] sm:$0xff]
  %v8774 = vld [vmem:[%s3215 + $0x248] sm:$0xff]
  %v8775 = vld [vmem:[%s3215 + $0x260] sm:$0xff]
  %v8776 = vld [vmem:[%s3215 + $0x278] sm:$0xff]
  %v8777 = vld [vmem:[%s3215 + $0x290] sm:$0xff]
  %v8778 = vld [vmem:[%s3215 + $0x2a8] sm:$0xff]
  %v8779 = vld [vmem:[%s3215 + $0x2c0] sm:$0xff]
  %v8780 = vld [vmem:[%s3215 + $0x2d8] sm:$0xff]
  %v8781 = vld [vmem:[%s3215 + $0x2f0] sm:$0xff]
  %v8782 = vld [vmem:[%s3215 + $0x308] sm:$0xff]
  %v8783 = vld [vmem:[%s3215 + $0x320] sm:$0xff]
  %8816 = vrot.lane.b32.xlu0 %v8752, 28
  %v8817 = vpop.permute.xlu0 %8816
  %8818 = vrot.lane.b32.xlu0 %v8753, 28
  %v8819 = vpop.permute.xlu0 %8818
  %8820 = vrot.lane.b32.xlu0 %v8754, 28
  %v8821 = vpop.permute.xlu0 %8820
  %8822 = vrot.lane.b32.xlu0 %v8755, 28
  %v8823 = vpop.permute.xlu0 %8822
  %8824 = vrot.lane.b32.xlu0 %v8756, 28
  %v8825 = vpop.permute.xlu0 %8824
  %8826 = vrot.lane.b32.xlu0 %v8757, 28
  %v8827 = vpop.permute.xlu0 %8826
  %8828 = vrot.lane.b32.xlu0 %v8758, 28
  %v8829 = vpop.permute.xlu0 %8828
  %8830 = vrot.lane.b32.xlu0 %v8759, 28
  %v8831 = vpop.permute.xlu0 %8830
  %8832 = vrot.lane.b32.xlu0 %v8760, 28
  %v8833 = vpop.permute.xlu0 %8832
  %8834 = vrot.lane.b32.xlu0 %v8761, 28
  %v8835 = vpop.permute.xlu0 %8834
  %8836 = vrot.lane.b32.xlu0 %v8762, 28
  %v8837 = vpop.permute.xlu0 %8836
  %8838 = vrot.lane.b32.xlu0 %v8763, 28
  %v8839 = vpop.permute.xlu0 %8838
  %8840 = vrot.lane.b32.xlu0 %v8764, 28
  %v8841 = vpop.permute.xlu0 %8840
  %8842 = vrot.lane.b32.xlu0 %v8765, 28
  %v8843 = vpop.permute.xlu0 %8842
  %8844 = vrot.lane.b32.xlu0 %v8766, 28
  %v8845 = vpop.permute.xlu0 %8844
  %8846 = vrot.lane.b32.xlu0 %v8767, 28
  %v8847 = vpop.permute.xlu0 %8846
  %8848 = vrot.lane.b32.xlu0 %v8768, 28
  %v8849 = vpop.permute.xlu0 %8848
  %8850 = vrot.lane.b32.xlu0 %v8769, 28
  %v8851 = vpop.permute.xlu0 %8850
  %8852 = vrot.lane.b32.xlu0 %v8770, 28
  %v8853 = vpop.permute.xlu0 %8852
  %8854 = vrot.lane.b32.xlu0 %v8771, 28
  %v8855 = vpop.permute.xlu0 %8854
  %8856 = vrot.lane.b32.xlu0 %v8772, 28
  %v8857 = vpop.permute.xlu0 %8856
  %8858 = vrot.lane.b32.xlu0 %v8773, 28
  %v8859 = vpop.permute.xlu0 %8858
  %8860 = vrot.lane.b32.xlu0 %v8774, 28
  %v8861 = vpop.permute.xlu0 %8860
  %8862 = vrot.lane.b32.xlu0 %v8775, 28
  %v8863 = vpop.permute.xlu0 %8862
  %8864 = vrot.lane.b32.xlu0 %v8776, 28
  %v8865 = vpop.permute.xlu0 %8864
  %8866 = vrot.lane.b32.xlu0 %v8777, 28
  %v8867 = vpop.permute.xlu0 %8866
  %8868 = vrot.lane.b32.xlu0 %v8778, 28
  %v8869 = vpop.permute.xlu0 %8868
  %8870 = vrot.lane.b32.xlu0 %v8779, 28
  %v8871 = vpop.permute.xlu0 %8870
  %8872 = vrot.lane.b32.xlu0 %v8780, 28
  %v8873 = vpop.permute.xlu0 %8872
  %8874 = vrot.lane.b32.xlu0 %v8781, 28
  %v8875 = vpop.permute.xlu0 %8874
  %8876 = vrot.lane.b32.xlu0 %v8782, 28
  %v8877 = vpop.permute.xlu0 %8876
  %8878 = vrot.lane.b32.xlu0 %v8783, 28
  %v8879 = vpop.permute.xlu0 %8878
  %8912 = vst.msk [vmem:[#allocation3] sm:$0xff] %vm3953, %v8817
  %8913 = vst.msk [vmem:[#allocation3 + $0x8] sm:$0xff] %vm3953, %v8819
  %8914 = vst.msk [vmem:[#allocation3 + $0x10] sm:$0xff] %vm3953, %v8821
  %8915 = vst.msk [vmem:[#allocation3 + $0x18] sm:$0xff] %vm3953, %v8823
  %8916 = vst.msk [vmem:[#allocation3 + $0x20] sm:$0xff] %vm3953, %v8825
  %8917 = vst.msk [vmem:[#allocation3 + $0x28] sm:$0xff] %vm3953, %v8827
  %8918 = vst.msk [vmem:[#allocation3 + $0x30] sm:$0xff] %vm3953, %v8829
  %8919 = vst.msk [vmem:[#allocation3 + $0x38] sm:$0xff] %vm3953, %v8831
  %8920 = vst.msk [vmem:[#allocation3 + $0x40] sm:$0xff] %vm3953, %v8833
  %8921 = vst.msk [vmem:[#allocation3 + $0x48] sm:$0xff] %vm3953, %v8835
  %8922 = vst.msk [vmem:[#allocation3 + $0x50] sm:$0xff] %vm3953, %v8837
  %8923 = vst.msk [vmem:[#allocation3 + $0x58] sm:$0xff] %vm3953, %v8839
  %8924 = vst.msk [vmem:[#allocation3 + $0x60] sm:$0xff] %vm3953, %v8841
  %8925 = vst.msk [vmem:[#allocation3 + $0x68] sm:$0xff] %vm3953, %v8843
  %8926 = vst.msk [vmem:[#allocation3 + $0x70] sm:$0xff] %vm3953, %v8845
  %8927 = vst.msk [vmem:[#allocation3 + $0x78] sm:$0xff] %vm3953, %v8847
  %8928 = vst.msk [vmem:[#allocation3 + $0x80] sm:$0xff] %vm3953, %v8849
  %8929 = vst.msk [vmem:[#allocation3 + $0x88] sm:$0xff] %vm3953, %v8851
  %8930 = vst.msk [vmem:[#allocation3 + $0x90] sm:$0xff] %vm3953, %v8853
  %8931 = vst.msk [vmem:[#allocation3 + $0x98] sm:$0xff] %vm3953, %v8855
  %8932 = vst.msk [vmem:[#allocation3 + $0xa0] sm:$0xff] %vm3953, %v8857
  %8933 = vst.msk [vmem:[#allocation3 + $0xa8] sm:$0xff] %vm3953, %v8859
  %8934 = vst.msk [vmem:[#allocation3 + $0xb0] sm:$0xff] %vm3953, %v8861
  %8935 = vst.msk [vmem:[#allocation3 + $0xb8] sm:$0xff] %vm3953, %v8863
  %8936 = vst.msk [vmem:[#allocation3 + $0xc0] sm:$0xff] %vm3953, %v8865
  %8937 = vst.msk [vmem:[#allocation3 + $0xc8] sm:$0xff] %vm3953, %v8867
  %8938 = vst.msk [vmem:[#allocation3 + $0xd0] sm:$0xff] %vm3953, %v8869
  %8939 = vst.msk [vmem:[#allocation3 + $0xd8] sm:$0xff] %vm3953, %v8871
  %8940 = vst.msk [vmem:[#allocation3 + $0xe0] sm:$0xff] %vm3953, %v8873
  %8941 = vst.msk [vmem:[#allocation3 + $0xe8] sm:$0xff] %vm3953, %v8875
  %8942 = vst.msk [vmem:[#allocation3 + $0xf0] sm:$0xff] %vm3953, %v8877
  %8943 = vst.msk [vmem:[#allocation3 + $0xf8] sm:$0xff] %vm3953, %v8879
  %v8944 = vld [vmem:[%s3215 + $0x8] sm:$0xff]
  %v8945 = vld [vmem:[%s3215 + $0x10] sm:$0x1]
  %v8946 = vld [vmem:[%s3215 + $0x20] sm:$0xff]
  %v8947 = vld [vmem:[%s3215 + $0x28] sm:$0x1]
  %v8948 = vld [vmem:[%s3215 + $0x38] sm:$0xff]
  %v8949 = vld [vmem:[%s3215 + $0x40] sm:$0x1]
  %v8950 = vld [vmem:[%s3215 + $0x50] sm:$0xff]
  %v8951 = vld [vmem:[%s3215 + $0x58] sm:$0x1]
  %v8952 = vld [vmem:[%s3215 + $0x68] sm:$0xff]
  %v8953 = vld [vmem:[%s3215 + $0x70] sm:$0x1]
  %v8954 = vld [vmem:[%s3215 + $0x80] sm:$0xff]
  %v8955 = vld [vmem:[%s3215 + $0x88] sm:$0x1]
  %v8956 = vld [vmem:[%s3215 + $0x98] sm:$0xff]
  %v8957 = vld [vmem:[%s3215 + $0xa0] sm:$0x1]
  %v8958 = vld [vmem:[%s3215 + $0xb0] sm:$0xff]
  %v8959 = vld [vmem:[%s3215 + $0xb8] sm:$0x1]
  %v8960 = vld [vmem:[%s3215 + $0xc8] sm:$0xff]
  %v8961 = vld [vmem:[%s3215 + $0xd0] sm:$0x1]
  %v8962 = vld [vmem:[%s3215 + $0xe0] sm:$0xff]
  %v8963 = vld [vmem:[%s3215 + $0xe8] sm:$0x1]
  %v8964 = vld [vmem:[%s3215 + $0xf8] sm:$0xff]
  %v8965 = vld [vmem:[%s3215 + $0x100] sm:$0x1]
  %v8966 = vld [vmem:[%s3215 + $0x110] sm:$0xff]
  %v8967 = vld [vmem:[%s3215 + $0x118] sm:$0x1]
  %v8968 = vld [vmem:[%s3215 + $0x128] sm:$0xff]
  %v8969 = vld [vmem:[%s3215 + $0x130] sm:$0x1]
  %v8970 = vld [vmem:[%s3215 + $0x140] sm:$0xff]
  %v8971 = vld [vmem:[%s3215 + $0x148] sm:$0x1]
  %v8972 = vld [vmem:[%s3215 + $0x158] sm:$0xff]
  %v8973 = vld [vmem:[%s3215 + $0x160] sm:$0x1]
  %v8974 = vld [vmem:[%s3215 + $0x170] sm:$0xff]
  %v8975 = vld [vmem:[%s3215 + $0x178] sm:$0x1]
  %v8976 = vld [vmem:[%s3215 + $0x1b8] sm:$0xff]
  %v8977 = vld [vmem:[%s3215 + $0x1c0] sm:$0x1]
  %v8978 = vld [vmem:[%s3215 + $0x1d0] sm:$0xff]
  %v8979 = vld [vmem:[%s3215 + $0x1d8] sm:$0x1]
  %v8980 = vld [vmem:[%s3215 + $0x1e8] sm:$0xff]
  %v8981 = vld [vmem:[%s3215 + $0x1f0] sm:$0x1]
  %v8982 = vld [vmem:[%s3215 + $0x200] sm:$0xff]
  %v8983 = vld [vmem:[%s3215 + $0x208] sm:$0x1]
  %v8984 = vld [vmem:[%s3215 + $0x218] sm:$0xff]
  %v8985 = vld [vmem:[%s3215 + $0x220] sm:$0x1]
  %v8986 = vld [vmem:[%s3215 + $0x230] sm:$0xff]
  %v8987 = vld [vmem:[%s3215 + $0x238] sm:$0x1]
  %v8988 = vld [vmem:[%s3215 + $0x248] sm:$0xff]
  %v8989 = vld [vmem:[%s3215 + $0x250] sm:$0x1]
  %v8990 = vld [vmem:[%s3215 + $0x260] sm:$0xff]
  %v8991 = vld [vmem:[%s3215 + $0x268] sm:$0x1]
  %v8992 = vld [vmem:[%s3215 + $0x278] sm:$0xff]
  %v8993 = vld [vmem:[%s3215 + $0x280] sm:$0x1]
  %v8994 = vld [vmem:[%s3215 + $0x290] sm:$0xff]
  %v8995 = vld [vmem:[%s3215 + $0x298] sm:$0x1]
  %v8996 = vld [vmem:[%s3215 + $0x2a8] sm:$0xff]
  %v8997 = vld [vmem:[%s3215 + $0x2b0] sm:$0x1]
  %v8998 = vld [vmem:[%s3215 + $0x2c0] sm:$0xff]
  %v8999 = vld [vmem:[%s3215 + $0x2c8] sm:$0x1]
  %v9000 = vld [vmem:[%s3215 + $0x2d8] sm:$0xff]
  %v9001 = vld [vmem:[%s3215 + $0x2e0] sm:$0x1]
  %v9002 = vld [vmem:[%s3215 + $0x2f0] sm:$0xff]
  %v9003 = vld [vmem:[%s3215 + $0x2f8] sm:$0x1]
  %v9004 = vld [vmem:[%s3215 + $0x308] sm:$0xff]
  %v9005 = vld [vmem:[%s3215 + $0x310] sm:$0x1]
  %v9006 = vld [vmem:[%s3215 + $0x320] sm:$0xff]
  %v9007 = vld [vmem:[%s3215 + $0x328] sm:$0x1]
  %v9009 = vshrl.u32 %v8944, 16
  %v9011 = vshll.u32 %v8944, 16
  %v9013 = vrot.slane %v9011, 1
  %v9014 = vor.u32 %v9009, %v9013
  %v9016 = vshll.u32 %v8945, 16
  %v9018 = vrot.slane %v9016, 1
  %v9019 = vsel %vm1354, %v9014, %v9018
  %v9021 = vshrl.u32 %v8946, 16
  %v9023 = vshll.u32 %v8946, 16
  %v9025 = vrot.slane %v9023, 1
  %v9026 = vor.u32 %v9021, %v9025
  %v9028 = vshll.u32 %v8947, 16
  %v9030 = vrot.slane %v9028, 1
  %v9031 = vsel %vm1354, %v9026, %v9030
  %v9033 = vshrl.u32 %v8948, 16
  %v9035 = vshll.u32 %v8948, 16
  %v9037 = vrot.slane %v9035, 1
  %v9038 = vor.u32 %v9033, %v9037
  %v9040 = vshll.u32 %v8949, 16
  %v9042 = vrot.slane %v9040, 1
  %v9043 = vsel %vm1354, %v9038, %v9042
  %v9045 = vshrl.u32 %v8950, 16
  %v9047 = vshll.u32 %v8950, 16
  %v9049 = vrot.slane %v9047, 1
  %v9050 = vor.u32 %v9045, %v9049
  %v9052 = vshll.u32 %v8951, 16
  %v9054 = vrot.slane %v9052, 1
  %v9055 = vsel %vm1354, %v9050, %v9054
  %v9057 = vshrl.u32 %v8952, 16
  %v9059 = vshll.u32 %v8952, 16
  %v9061 = vrot.slane %v9059, 1
  %v9062 = vor.u32 %v9057, %v9061
  %v9064 = vshll.u32 %v8953, 16
  %v9066 = vrot.slane %v9064, 1
  %v9067 = vsel %vm1354, %v9062, %v9066
  %v9069 = vshrl.u32 %v8954, 16
  %v9071 = vshll.u32 %v8954, 16
  %v9073 = vrot.slane %v9071, 1
  %v9074 = vor.u32 %v9069, %v9073
  %v9076 = vshll.u32 %v8955, 16
  %v9078 = vrot.slane %v9076, 1
  %v9079 = vsel %vm1354, %v9074, %v9078
  %v9081 = vshrl.u32 %v8956, 16
  %v9083 = vshll.u32 %v8956, 16
  %v9085 = vrot.slane %v9083, 1
  %v9086 = vor.u32 %v9081, %v9085
  %v9088 = vshll.u32 %v8957, 16
  %v9090 = vrot.slane %v9088, 1
  %v9091 = vsel %vm1354, %v9086, %v9090
  %v9093 = vshrl.u32 %v8958, 16
  %v9095 = vshll.u32 %v8958, 16
  %v9097 = vrot.slane %v9095, 1
  %v9098 = vor.u32 %v9093, %v9097
  %v9100 = vshll.u32 %v8959, 16
  %v9102 = vrot.slane %v9100, 1
  %v9103 = vsel %vm1354, %v9098, %v9102
  %v9105 = vshrl.u32 %v8960, 16
  %v9107 = vshll.u32 %v8960, 16
  %v9109 = vrot.slane %v9107, 1
  %v9110 = vor.u32 %v9105, %v9109
  %v9112 = vshll.u32 %v8961, 16
  %v9114 = vrot.slane %v9112, 1
  %v9115 = vsel %vm1354, %v9110, %v9114
  %v9117 = vshrl.u32 %v8962, 16
  %v9119 = vshll.u32 %v8962, 16
  %v9121 = vrot.slane %v9119, 1
  %v9122 = vor.u32 %v9117, %v9121
  %v9124 = vshll.u32 %v8963, 16
  %v9126 = vrot.slane %v9124, 1
  %v9127 = vsel %vm1354, %v9122, %v9126
  %v9129 = vshrl.u32 %v8964, 16
  %v9131 = vshll.u32 %v8964, 16
  %v9133 = vrot.slane %v9131, 1
  %v9134 = vor.u32 %v9129, %v9133
  %v9136 = vshll.u32 %v8965, 16
  %v9138 = vrot.slane %v9136, 1
  %v9139 = vsel %vm1354, %v9134, %v9138
  %v9141 = vshrl.u32 %v8966, 16
  %v9143 = vshll.u32 %v8966, 16
  %v9145 = vrot.slane %v9143, 1
  %v9146 = vor.u32 %v9141, %v9145
  %v9148 = vshll.u32 %v8967, 16
  %v9150 = vrot.slane %v9148, 1
  %v9151 = vsel %vm1354, %v9146, %v9150
  %v9153 = vshrl.u32 %v8968, 16
  %v9155 = vshll.u32 %v8968, 16
  %v9157 = vrot.slane %v9155, 1
  %v9158 = vor.u32 %v9153, %v9157
  %v9160 = vshll.u32 %v8969, 16
  %v9162 = vrot.slane %v9160, 1
  %v9163 = vsel %vm1354, %v9158, %v9162
  %v9165 = vshrl.u32 %v8970, 16
  %v9167 = vshll.u32 %v8970, 16
  %v9169 = vrot.slane %v9167, 1
  %v9170 = vor.u32 %v9165, %v9169
  %v9172 = vshll.u32 %v8971, 16
  %v9174 = vrot.slane %v9172, 1
  %v9175 = vsel %vm1354, %v9170, %v9174
  %v9177 = vshrl.u32 %v8972, 16
  %v9179 = vshll.u32 %v8972, 16
  %v9181 = vrot.slane %v9179, 1
  %v9182 = vor.u32 %v9177, %v9181
  %v9184 = vshll.u32 %v8973, 16
  %v9186 = vrot.slane %v9184, 1
  %v9187 = vsel %vm1354, %v9182, %v9186
  %v9189 = vshrl.u32 %v8974, 16
  %v9191 = vshll.u32 %v8974, 16
  %v9193 = vrot.slane %v9191, 1
  %v9194 = vor.u32 %v9189, %v9193
  %v9196 = vshll.u32 %v8975, 16
  %v9198 = vrot.slane %v9196, 1
  %v9199 = vsel %vm1354, %v9194, %v9198
  %v9201 = vshrl.u32 %v8976, 16
  %v9203 = vshll.u32 %v8976, 16
  %v9205 = vrot.slane %v9203, 1
  %v9206 = vor.u32 %v9201, %v9205
  %v9208 = vshll.u32 %v8977, 16
  %v9210 = vrot.slane %v9208, 1
  %v9211 = vsel %vm1354, %v9206, %v9210
  %v9213 = vshrl.u32 %v8978, 16
  %v9215 = vshll.u32 %v8978, 16
  %v9217 = vrot.slane %v9215, 1
  %v9218 = vor.u32 %v9213, %v9217
  %v9220 = vshll.u32 %v8979, 16
  %v9222 = vrot.slane %v9220, 1
  %v9223 = vsel %vm1354, %v9218, %v9222
  %v9225 = vshrl.u32 %v8980, 16
  %v9227 = vshll.u32 %v8980, 16
  %v9229 = vrot.slane %v9227, 1
  %v9230 = vor.u32 %v9225, %v9229
  %v9232 = vshll.u32 %v8981, 16
  %v9234 = vrot.slane %v9232, 1
  %v9235 = vsel %vm1354, %v9230, %v9234
  %v9237 = vshrl.u32 %v8982, 16
  %v9239 = vshll.u32 %v8982, 16
  %v9241 = vrot.slane %v9239, 1
  %v9242 = vor.u32 %v9237, %v9241
  %v9244 = vshll.u32 %v8983, 16
  %v9246 = vrot.slane %v9244, 1
  %v9247 = vsel %vm1354, %v9242, %v9246
  %v9249 = vshrl.u32 %v8984, 16
  %v9251 = vshll.u32 %v8984, 16
  %v9253 = vrot.slane %v9251, 1
  %v9254 = vor.u32 %v9249, %v9253
  %v9256 = vshll.u32 %v8985, 16
  %v9258 = vrot.slane %v9256, 1
  %v9259 = vsel %vm1354, %v9254, %v9258
  %v9261 = vshrl.u32 %v8986, 16
  %v9263 = vshll.u32 %v8986, 16
  %v9265 = vrot.slane %v9263, 1
  %v9266 = vor.u32 %v9261, %v9265
  %v9268 = vshll.u32 %v8987, 16
  %v9270 = vrot.slane %v9268, 1
  %v9271 = vsel %vm1354, %v9266, %v9270
  %v9273 = vshrl.u32 %v8988, 16
  %v9275 = vshll.u32 %v8988, 16
  %v9277 = vrot.slane %v9275, 1
  %v9278 = vor.u32 %v9273, %v9277
  %v9280 = vshll.u32 %v8989, 16
  %v9282 = vrot.slane %v9280, 1
  %v9283 = vsel %vm1354, %v9278, %v9282
  %v9285 = vshrl.u32 %v8990, 16
  %v9287 = vshll.u32 %v8990, 16
  %v9289 = vrot.slane %v9287, 1
  %v9290 = vor.u32 %v9285, %v9289
  %v9292 = vshll.u32 %v8991, 16
  %v9294 = vrot.slane %v9292, 1
  %v9295 = vsel %vm1354, %v9290, %v9294
  %v9297 = vshrl.u32 %v8992, 16
  %v9299 = vshll.u32 %v8992, 16
  %v9301 = vrot.slane %v9299, 1
  %v9302 = vor.u32 %v9297, %v9301
  %v9304 = vshll.u32 %v8993, 16
  %v9306 = vrot.slane %v9304, 1
  %v9307 = vsel %vm1354, %v9302, %v9306
  %v9309 = vshrl.u32 %v8994, 16
  %v9311 = vshll.u32 %v8994, 16
  %v9313 = vrot.slane %v9311, 1
  %v9314 = vor.u32 %v9309, %v9313
  %v9316 = vshll.u32 %v8995, 16
  %v9318 = vrot.slane %v9316, 1
  %v9319 = vsel %vm1354, %v9314, %v9318
  %v9321 = vshrl.u32 %v8996, 16
  %v9323 = vshll.u32 %v8996, 16
  %v9325 = vrot.slane %v9323, 1
  %v9326 = vor.u32 %v9321, %v9325
  %v9328 = vshll.u32 %v8997, 16
  %v9330 = vrot.slane %v9328, 1
  %v9331 = vsel %vm1354, %v9326, %v9330
  %v9333 = vshrl.u32 %v8998, 16
  %v9335 = vshll.u32 %v8998, 16
  %v9337 = vrot.slane %v9335, 1
  %v9338 = vor.u32 %v9333, %v9337
  %v9340 = vshll.u32 %v8999, 16
  %v9342 = vrot.slane %v9340, 1
  %v9343 = vsel %vm1354, %v9338, %v9342
  %v9345 = vshrl.u32 %v9000, 16
  %v9347 = vshll.u32 %v9000, 16
  %v9349 = vrot.slane %v9347, 1
  %v9350 = vor.u32 %v9345, %v9349
  %v9352 = vshll.u32 %v9001, 16
  %v9354 = vrot.slane %v9352, 1
  %v9355 = vsel %vm1354, %v9350, %v9354
  %v9357 = vshrl.u32 %v9002, 16
  %v9359 = vshll.u32 %v9002, 16
  %v9361 = vrot.slane %v9359, 1
  %v9362 = vor.u32 %v9357, %v9361
  %v9364 = vshll.u32 %v9003, 16
  %v9366 = vrot.slane %v9364, 1
  %v9367 = vsel %vm1354, %v9362, %v9366
  %v9369 = vshrl.u32 %v9004, 16
  %v9371 = vshll.u32 %v9004, 16
  %v9373 = vrot.slane %v9371, 1
  %v9374 = vor.u32 %v9369, %v9373
  %v9376 = vshll.u32 %v9005, 16
  %v9378 = vrot.slane %v9376, 1
  %v9379 = vsel %vm1354, %v9374, %v9378
  %v9381 = vshrl.u32 %v9006, 16
  %v9383 = vshll.u32 %v9006, 16
  %v9385 = vrot.slane %v9383, 1
  %v9386 = vor.u32 %v9381, %v9385
  %v9388 = vshll.u32 %v9007, 16
  %v9390 = vrot.slane %v9388, 1
  %v9391 = vsel %vm1354, %v9386, %v9390
  %9392 = vrot.lane.b32.xlu0 %v9019, 32
  %v9393 = vpop.permute.xlu0 %9392
  %9394 = vrot.lane.b32.xlu0 %v9031, 32
  %v9395 = vpop.permute.xlu0 %9394
  %9396 = vrot.lane.b32.xlu0 %v9043, 32
  %v9397 = vpop.permute.xlu0 %9396
  %9398 = vrot.lane.b32.xlu0 %v9055, 32
  %v9399 = vpop.permute.xlu0 %9398
  %9400 = vrot.lane.b32.xlu0 %v9067, 32
  %v9401 = vpop.permute.xlu0 %9400
  %9402 = vrot.lane.b32.xlu0 %v9079, 32
  %v9403 = vpop.permute.xlu0 %9402
  %9404 = vrot.lane.b32.xlu0 %v9091, 32
  %v9405 = vpop.permute.xlu0 %9404
  %9406 = vrot.lane.b32.xlu0 %v9103, 32
  %v9407 = vpop.permute.xlu0 %9406
  %9408 = vrot.lane.b32.xlu0 %v9115, 32
  %v9409 = vpop.permute.xlu0 %9408
  %9410 = vrot.lane.b32.xlu0 %v9127, 32
  %v9411 = vpop.permute.xlu0 %9410
  %9412 = vrot.lane.b32.xlu0 %v9139, 32
  %v9413 = vpop.permute.xlu0 %9412
  %9414 = vrot.lane.b32.xlu0 %v9151, 32
  %v9415 = vpop.permute.xlu0 %9414
  %9416 = vrot.lane.b32.xlu0 %v9163, 32
  %v9417 = vpop.permute.xlu0 %9416
  %9418 = vrot.lane.b32.xlu0 %v9175, 32
  %v9419 = vpop.permute.xlu0 %9418
  %9420 = vrot.lane.b32.xlu0 %v9187, 32
  %v9421 = vpop.permute.xlu0 %9420
  %9422 = vrot.lane.b32.xlu0 %v9199, 32
  %v9423 = vpop.permute.xlu0 %9422
  %9424 = vrot.lane.b32.xlu0 %v9211, 32
  %v9425 = vpop.permute.xlu0 %9424
  %9426 = vrot.lane.b32.xlu0 %v9223, 32
  %v9427 = vpop.permute.xlu0 %9426
  %9428 = vrot.lane.b32.xlu0 %v9235, 32
  %v9429 = vpop.permute.xlu0 %9428
  %9430 = vrot.lane.b32.xlu0 %v9247, 32
  %v9431 = vpop.permute.xlu0 %9430
  %9432 = vrot.lane.b32.xlu0 %v9259, 32
  %v9433 = vpop.permute.xlu0 %9432
  %9434 = vrot.lane.b32.xlu0 %v9271, 32
  %v9435 = vpop.permute.xlu0 %9434
  %9436 = vrot.lane.b32.xlu0 %v9283, 32
  %v9437 = vpop.permute.xlu0 %9436
  %9438 = vrot.lane.b32.xlu0 %v9295, 32
  %v9439 = vpop.permute.xlu0 %9438
  %9440 = vrot.lane.b32.xlu0 %v9307, 32
  %v9441 = vpop.permute.xlu0 %9440
  %9442 = vrot.lane.b32.xlu0 %v9319, 32
  %v9443 = vpop.permute.xlu0 %9442
  %9444 = vrot.lane.b32.xlu0 %v9331, 32
  %v9445 = vpop.permute.xlu0 %9444
  %9446 = vrot.lane.b32.xlu0 %v9343, 32
  %v9447 = vpop.permute.xlu0 %9446
  %9448 = vrot.lane.b32.xlu0 %v9355, 32
  %v9449 = vpop.permute.xlu0 %9448
  %9450 = vrot.lane.b32.xlu0 %v9367, 32
  %v9451 = vpop.permute.xlu0 %9450
  %9452 = vrot.lane.b32.xlu0 %v9379, 32
  %v9453 = vpop.permute.xlu0 %9452
  %9454 = vrot.lane.b32.xlu0 %v9391, 32
  %v9455 = vpop.permute.xlu0 %9454
  %9488 = vst.msk [vmem:[#allocation3] sm:$0xff] %vm4530, %v9393
  %9489 = vst.msk [vmem:[#allocation3 + $0x8] sm:$0xff] %vm4530, %v9395
  %9490 = vst.msk [vmem:[#allocation3 + $0x10] sm:$0xff] %vm4530, %v9397
  %9491 = vst.msk [vmem:[#allocation3 + $0x18] sm:$0xff] %vm4530, %v9399
  %9492 = vst.msk [vmem:[#allocation3 + $0x20] sm:$0xff] %vm4530, %v9401
  %9493 = vst.msk [vmem:[#allocation3 + $0x28] sm:$0xff] %vm4530, %v9403
  %9494 = vst.msk [vmem:[#allocation3 + $0x30] sm:$0xff] %vm4530, %v9405
  %9495 = vst.msk [vmem:[#allocation3 + $0x38] sm:$0xff] %vm4530, %v9407
  %9496 = vst.msk [vmem:[#allocation3 + $0x40] sm:$0xff] %vm4530, %v9409
  %9497 = vst.msk [vmem:[#allocation3 + $0x48] sm:$0xff] %vm4530, %v9411
  %9498 = vst.msk [vmem:[#allocation3 + $0x50] sm:$0xff] %vm4530, %v9413
  %9499 = vst.msk [vmem:[#allocation3 + $0x58] sm:$0xff] %vm4530, %v9415
  %9500 = vst.msk [vmem:[#allocation3 + $0x60] sm:$0xff] %vm4530, %v9417
  %9501 = vst.msk [vmem:[#allocation3 + $0x68] sm:$0xff] %vm4530, %v9419
  %9502 = vst.msk [vmem:[#allocation3 + $0x70] sm:$0xff] %vm4530, %v9421
  %9503 = vst.msk [vmem:[#allocation3 + $0x78] sm:$0xff] %vm4530, %v9423
  %9504 = vst.msk [vmem:[#allocation3 + $0x80] sm:$0xff] %vm4530, %v9425
  %9505 = vst.msk [vmem:[#allocation3 + $0x88] sm:$0xff] %vm4530, %v9427
  %9506 = vst.msk [vmem:[#allocation3 + $0x90] sm:$0xff] %vm4530, %v9429
  %9507 = vst.msk [vmem:[#allocation3 + $0x98] sm:$0xff] %vm4530, %v9431
  %9508 = vst.msk [vmem:[#allocation3 + $0xa0] sm:$0xff] %vm4530, %v9433
  %9509 = vst.msk [vmem:[#allocation3 + $0xa8] sm:$0xff] %vm4530, %v9435
  %9510 = vst.msk [vmem:[#allocation3 + $0xb0] sm:$0xff] %vm4530, %v9437
  %9511 = vst.msk [vmem:[#allocation3 + $0xb8] sm:$0xff] %vm4530, %v9439
  %9512 = vst.msk [vmem:[#allocation3 + $0xc0] sm:$0xff] %vm4530, %v9441
  %9513 = vst.msk [vmem:[#allocation3 + $0xc8] sm:$0xff] %vm4530, %v9443
  %9514 = vst.msk [vmem:[#allocation3 + $0xd0] sm:$0xff] %vm4530, %v9445
  %9515 = vst.msk [vmem:[#allocation3 + $0xd8] sm:$0xff] %vm4530, %v9447
  %9516 = vst.msk [vmem:[#allocation3 + $0xe0] sm:$0xff] %vm4530, %v9449
  %9517 = vst.msk [vmem:[#allocation3 + $0xe8] sm:$0xff] %vm4530, %v9451
  %9518 = vst.msk [vmem:[#allocation3 + $0xf0] sm:$0xff] %vm4530, %v9453
  %9519 = vst.msk [vmem:[#allocation3 + $0xf8] sm:$0xff] %vm4530, %v9455
  %v9520 = vld [vmem:[#allocation3] sm:$0xff]
  %v9521 = vld [vmem:[#allocation3 + $0x8] sm:$0xff]
  %v9522 = vld [vmem:[#allocation3 + $0x10] sm:$0xff]
  %v9523 = vld [vmem:[#allocation3 + $0x18] sm:$0xff]
  %v9524 = vld [vmem:[#allocation3 + $0x20] sm:$0xff]
  %v9525 = vld [vmem:[#allocation3 + $0x28] sm:$0xff]
  %v9526 = vld [vmem:[#allocation3 + $0x30] sm:$0xff]
  %v9527 = vld [vmem:[#allocation3 + $0x38] sm:$0xff]
  %v9528 = vld [vmem:[#allocation3 + $0x40] sm:$0xff]
  %v9529 = vld [vmem:[#allocation3 + $0x48] sm:$0xff]
  %v9530 = vld [vmem:[#allocation3 + $0x50] sm:$0xff]
  %v9531 = vld [vmem:[#allocation3 + $0x58] sm:$0xff]
  %v9532 = vld [vmem:[#allocation3 + $0x60] sm:$0xff]
  %v9533 = vld [vmem:[#allocation3 + $0x68] sm:$0xff]
  %v9534 = vld [vmem:[#allocation3 + $0x70] sm:$0xff]
  %v9535 = vld [vmem:[#allocation3 + $0x78] sm:$0xff]
  %v9536 = vld [vmem:[#allocation3 + $0x80] sm:$0xff]
  %v9537 = vld [vmem:[#allocation3 + $0x88] sm:$0xff]
  %v9538 = vld [vmem:[#allocation3 + $0x90] sm:$0xff]
  %v9539 = vld [vmem:[#allocation3 + $0x98] sm:$0xff]
  %v9540 = vld [vmem:[#allocation3 + $0xa0] sm:$0xff]
  %v9541 = vld [vmem:[#allocation3 + $0xa8] sm:$0xff]
  %v9542 = vld [vmem:[#allocation3 + $0xb0] sm:$0xff]
  %v9543 = vld [vmem:[#allocation3 + $0xb8] sm:$0xff]
  %v9544 = vld [vmem:[#allocation3 + $0xc0] sm:$0xff]
  %v9545 = vld [vmem:[#allocation3 + $0xc8] sm:$0xff]
  %v9546 = vld [vmem:[#allocation3 + $0xd0] sm:$0xff]
  %v9547 = vld [vmem:[#allocation3 + $0xd8] sm:$0xff]
  %v9548 = vld [vmem:[#allocation3 + $0xe0] sm:$0xff]
  %v9549 = vld [vmem:[#allocation3 + $0xe8] sm:$0xff]
  %v9550 = vld [vmem:[#allocation3 + $0xf0] sm:$0xff]
  %v9551 = vld [vmem:[#allocation3 + $0xf8] sm:$0xff]
  %v9552 = vld [vmem:[%s4] sm:$0xf]
  %v9553 = vld [vmem:[%s4 + $0x4] sm:$0xf]
  %v9554 = vld [vmem:[%s4 + $0x8] sm:$0xf]
  %v9555 = vld [vmem:[%s4 + $0xc] sm:$0xf]
  %v9556 = vld [vmem:[%s4 + $0x10] sm:$0xf]
  %v9557 = vld [vmem:[%s4 + $0x14] sm:$0xf]
  %v9558 = vld [vmem:[%s4 + $0x18] sm:$0xf]
  %v9559 = vld [vmem:[%s4 + $0x1c] sm:$0xf]
  %v9560 = vld [vmem:[%s4 + $0x20] sm:$0xf]
  %v9561 = vld [vmem:[%s4 + $0x24] sm:$0xf]
  %v9562 = vld [vmem:[%s4 + $0x28] sm:$0xf]
  %v9563 = vld [vmem:[%s4 + $0x2c] sm:$0xf]
  %v9564 = vld [vmem:[%s4 + $0x30] sm:$0xf]
  %v9565 = vld [vmem:[%s4 + $0x34] sm:$0xf]
  %v9566 = vld [vmem:[%s4 + $0x38] sm:$0xf]
  %v9567 = vld [vmem:[%s4 + $0x3c] sm:$0xf]
  %v9584 = vunpack.c.l.b16 %v9552
  %v9585 = vunpack.c.l.b16 %v9553
  %v9586 = vunpack.c.l.b16 %v9554
  %v9587 = vunpack.c.l.b16 %v9555
  %v9588 = vunpack.c.l.b16 %v9556
  %v9589 = vunpack.c.l.b16 %v9557
  %v9590 = vunpack.c.l.b16 %v9558
  %v9591 = vunpack.c.l.b16 %v9559
  %v9592 = vunpack.c.l.b16 %v9560
  %v9593 = vunpack.c.l.b16 %v9561
  %v9594 = vunpack.c.l.b16 %v9562
  %v9595 = vunpack.c.l.b16 %v9563
  %v9596 = vunpack.c.l.b16 %v9564
  %v9597 = vunpack.c.l.b16 %v9565
  %v9598 = vunpack.c.l.b16 %v9566
  %v9599 = vunpack.c.l.b16 %v9567
  %v9600 = vpack.c.b16 %v9585, %v9584
  %v9601 = vpack.c.b16 %v9587, %v9586
  %v9602 = vpack.c.b16 %v9589, %v9588
  %v9603 = vpack.c.b16 %v9591, %v9590
  %v9604 = vpack.c.b16 %v9593, %v9592
  %v9605 = vpack.c.b16 %v9595, %v9594
  %v9606 = vpack.c.b16 %v9597, %v9596
  %v9607 = vpack.c.b16 %v9599, %v9598
  %9616 = vmatprep.subr.bf16.mxu0 0
  %9617 = vmatpush1.bf16.msra.mxu0 %v9600
  %9618 = vmatprep.subr.bf16.mxu0 0
  %9619 = vmatpush1.bf16.msra.mxu0 %v9601
  %9620 = vmatprep.subr.bf16.mxu0 0
  %9621 = vmatpush1.bf16.msra.mxu0 %v9602
  %9622 = vmatprep.subr.bf16.mxu0 0
  %9623 = vmatpush1.bf16.msra.mxu0 %v9603
  %9624 = vmatprep.subr.bf16.mxu0 0
  %9625 = vmatpush1.bf16.msra.mxu0 %v9604
  %9626 = vmatprep.subr.bf16.mxu0 0
  %9627 = vmatpush1.bf16.msra.mxu0 %v9605
  %9628 = vmatprep.subr.bf16.mxu0 0
  %9629 = vmatpush1.bf16.msra.mxu0 %v9606
  %9630 = vmatprep.subr.bf16.mxu0 0
  %9631 = vmatpush1.bf16.msra.mxu0 %v9607
  %9632 = vmatprep.subr.bf16.mxu0 0
  %9633 = vmatpush1.bf16.msra.mxu0 0
  %9634 = vmatprep.subr.bf16.mxu0 0
  %9635 = vmatpush1.bf16.msra.mxu0 0
  %9636 = vmatprep.subr.bf16.mxu0 0
  %9637 = vmatpush1.bf16.msra.mxu0 0
  %9638 = vmatprep.subr.bf16.mxu0 0
  %9639 = vmatpush1.bf16.msra.mxu0 0
  %9640 = vmatprep.subr.bf16.mxu0 0
  %9641 = vmatpush1.bf16.msra.mxu0 0
  %9642 = vmatprep.subr.bf16.mxu0 0
  %9643 = vmatpush1.bf16.msra.mxu0 0
  %9644 = vmatprep.subr.bf16.mxu0 0
  %9645 = vmatpush1.bf16.msra.mxu0 0
  %9646 = vmatprep.subr.bf16.mxu0 0
  %9647 = vmatpush1.bf16.msra.mxu0 0
  %9648 = vmatprep.mubr.bf16.mxu0 0
  %9649 = vmatmul.mubr.bf16.gmra.mrb[0].mxu0 %v9520
  %v9650 = vpop.f32.mrb[0].mxu0
  %v9651 = vadd.f32 0.0, %v9650
  %v9652 = vpop.f32.mrb[0].mxu0
  %v9653 = vpop.f32.mrb[0].mxu0
  %v9654 = vadd.f32 0.0, %v9653
  %v9655 = vpop.f32.mrb[0].mxu0
  %9656 = vmatprep.mubr.bf16.mxu0 0
  %9657 = vmatmul.mubr.bf16.gmra.mrb[0].mxu0 %v9521
  %v9658 = vpop.f32.mrb[0].mxu0
  %v9659 = vadd.f32 0.0, %v9658
  %v9660 = vpop.f32.mrb[0].mxu0
  %v9661 = vpop.f32.mrb[0].mxu0
  %v9662 = vadd.f32 0.0, %v9661
  %v9663 = vpop.f32.mrb[0].mxu0
  %9664 = vmatprep.mubr.bf16.mxu0 0
  %9665 = vmatmul.mubr.bf16.gmra.mrb[0].mxu0 %v9522
  %v9666 = vpop.f32.mrb[0].mxu0
  %v9667 = vadd.f32 0.0, %v9666
  %v9668 = vpop.f32.mrb[0].mxu0
  %v9669 = vpop.f32.mrb[0].mxu0
  %v9670 = vadd.f32 0.0, %v9669
  %v9671 = vpop.f32.mrb[0].mxu0
  %9672 = vmatprep.mubr.bf16.mxu0 0
  %9673 = vmatmul.mubr.bf16.gmra.mrb[0].mxu0 %v9523
  %v9674 = vpop.f32.mrb[0].mxu0
  %v9675 = vadd.f32 0.0, %v9674
  %v9676 = vpop.f32.mrb[0].mxu0
  %v9677 = vpop.f32.mrb[0].mxu0
  %v9678 = vadd.f32 0.0, %v9677
  %v9679 = vpop.f32.mrb[0].mxu0
  %9680 = vmatprep.mubr.bf16.mxu0 0
  %9681 = vmatmul.mubr.bf16.gmra.mrb[0].mxu0 %v9524
  %v9682 = vpop.f32.mrb[0].mxu0
  %v9683 = vadd.f32 0.0, %v9682
  %v9684 = vpop.f32.mrb[0].mxu0
  %v9685 = vpop.f32.mrb[0].mxu0
  %v9686 = vadd.f32 0.0, %v9685
  %v9687 = vpop.f32.mrb[0].mxu0
  %9688 = vmatprep.mubr.bf16.mxu0 0
  %9689 = vmatmul.mubr.bf16.gmra.mrb[0].mxu0 %v9525
  %v9690 = vpop.f32.mrb[0].mxu0
  %v9691 = vadd.f32 0.0, %v9690
  %v9692 = vpop.f32.mrb[0].mxu0
  %v9693 = vpop.f32.mrb[0].mxu0
  %v9694 = vadd.f32 0.0, %v9693
  %v9695 = vpop.f32.mrb[0].mxu0
  %9696 = vmatprep.mubr.bf16.mxu0 0
  %9697 = vmatmul.mubr.bf16.gmra.mrb[0].mxu0 %v9526
  %v9698 = vpop.f32.mrb[0].mxu0
  %v9699 = vadd.f32 0.0, %v9698
  %v9700 = vpop.f32.mrb[0].mxu0
  %v9701 = vpop.f32.mrb[0].mxu0
  %v9702 = vadd.f32 0.0, %v9701
  %v9703 = vpop.f32.mrb[0].mxu0
  %9704 = vmatprep.mubr.bf16.mxu0 0
  %9705 = vmatmul.mubr.bf16.gmra.mrb[0].mxu0 %v9527
  %v9706 = vpop.f32.mrb[0].mxu0
  %v9707 = vadd.f32 0.0, %v9706
  %v9708 = vpop.f32.mrb[0].mxu0
  %v9709 = vpop.f32.mrb[0].mxu0
  %v9710 = vadd.f32 0.0, %v9709
  %v9711 = vpop.f32.mrb[0].mxu0
  %9712 = vmatprep.mubr.bf16.mxu0 0
  %9713 = vmatmul.mubr.bf16.gmra.mrb[0].mxu0 %v9528
  %v9714 = vpop.f32.mrb[0].mxu0
  %v9715 = vadd.f32 0.0, %v9714
  %v9716 = vpop.f32.mrb[0].mxu0
  %v9717 = vpop.f32.mrb[0].mxu0
  %v9718 = vadd.f32 0.0, %v9717
  %v9719 = vpop.f32.mrb[0].mxu0
  %9720 = vmatprep.mubr.bf16.mxu0 0
  %9721 = vmatmul.mubr.bf16.gmra.mrb[0].mxu0 %v9529
  %v9722 = vpop.f32.mrb[0].mxu0
  %v9723 = vadd.f32 0.0, %v9722
  %v9724 = vpop.f32.mrb[0].mxu0
  %v9725 = vpop.f32.mrb[0].mxu0
  %v9726 = vadd.f32 0.0, %v9725
  %v9727 = vpop.f32.mrb[0].mxu0
  %9728 = vmatprep.mubr.bf16.mxu0 0
  %9729 = vmatmul.mubr.bf16.gmra.mrb[0].mxu0 %v9530
  %v9730 = vpop.f32.mrb[0].mxu0
  %v9731 = vadd.f32 0.0, %v9730
  %v9732 = vpop.f32.mrb[0].mxu0
  %v9733 = vpop.f32.mrb[0].mxu0
  %v9734 = vadd.f32 0.0, %v9733
  %v9735 = vpop.f32.mrb[0].mxu0
  %9736 = vmatprep.mubr.bf16.mxu0 0
  %9737 = vmatmul.mubr.bf16.gmra.mrb[0].mxu0 %v9531
  %v9738 = vpop.f32.mrb[0].mxu0
  %v9739 = vadd.f32 0.0, %v9738
  %v9740 = vpop.f32.mrb[0].mxu0
  %v9741 = vpop.f32.mrb[0].mxu0
  %v9742 = vadd.f32 0.0, %v9741
  %v9743 = vpop.f32.mrb[0].mxu0
  %9744 = vmatprep.mubr.bf16.mxu0 0
  %9745 = vmatmul.mubr.bf16.gmra.mrb[0].mxu0 %v9532
  %v9746 = vpop.f32.mrb[0].mxu0
  %v9747 = vadd.f32 0.0, %v9746
  %v9748 = vpop.f32.mrb[0].mxu0
  %v9749 = vpop.f32.mrb[0].mxu0
  %v9750 = vadd.f32 0.0, %v9749
  %v9751 = vpop.f32.mrb[0].mxu0
  %9752 = vmatprep.mubr.bf16.mxu0 0
  %9753 = vmatmul.mubr.bf16.gmra.mrb[0].mxu0 %v9533
  %v9754 = vpop.f32.mrb[0].mxu0
  %v9755 = vadd.f32 0.0, %v9754
  %v9756 = vpop.f32.mrb[0].mxu0
  %v9757 = vpop.f32.mrb[0].mxu0
  %v9758 = vadd.f32 0.0, %v9757
  %v9759 = vpop.f32.mrb[0].mxu0
  %9760 = vmatprep.mubr.bf16.mxu0 0
  %9761 = vmatmul.mubr.bf16.gmra.mrb[0].mxu0 %v9534
  %v9762 = vpop.f32.mrb[0].mxu0
  %v9763 = vadd.f32 0.0, %v9762
  %v9764 = vpop.f32.mrb[0].mxu0
  %v9765 = vpop.f32.mrb[0].mxu0
  %v9766 = vadd.f32 0.0, %v9765
  %v9767 = vpop.f32.mrb[0].mxu0
  %9768 = vmatprep.mubr.bf16.mxu0 0
  %9769 = vmatmul.mubr.bf16.gmra.mrb[0].mxu0 %v9535
  %v9770 = vpop.f32.mrb[0].mxu0
  %v9771 = vadd.f32 0.0, %v9770
  %v9772 = vpop.f32.mrb[0].mxu0
  %v9773 = vpop.f32.mrb[0].mxu0
  %v9774 = vadd.f32 0.0, %v9773
  %v9775 = vpop.f32.mrb[0].mxu0
  %9776 = vmatprep.mubr.bf16.mxu0 0
  %9777 = vmatmul.mubr.bf16.gmra.mrb[0].mxu0 %v9536
  %v9778 = vpop.f32.mrb[0].mxu0
  %v9779 = vadd.f32 0.0, %v9778
  %v9780 = vpop.f32.mrb[0].mxu0
  %v9781 = vpop.f32.mrb[0].mxu0
  %v9782 = vadd.f32 0.0, %v9781
  %v9783 = vpop.f32.mrb[0].mxu0
  %9784 = vmatprep.mubr.bf16.mxu0 0
  %9785 = vmatmul.mubr.bf16.gmra.mrb[0].mxu0 %v9537
  %v9786 = vpop.f32.mrb[0].mxu0
  %v9787 = vadd.f32 0.0, %v9786
  %v9788 = vpop.f32.mrb[0].mxu0
  %v9789 = vpop.f32.mrb[0].mxu0
  %v9790 = vadd.f32 0.0, %v9789
  %v9791 = vpop.f32.mrb[0].mxu0
  %9792 = vmatprep.mubr.bf16.mxu0 0
  %9793 = vmatmul.mubr.bf16.gmra.mrb[0].mxu0 %v9538
  %v9794 = vpop.f32.mrb[0].mxu0
  %v9795 = vadd.f32 0.0, %v9794
  %v9796 = vpop.f32.mrb[0].mxu0
  %v9797 = vpop.f32.mrb[0].mxu0
  %v9798 = vadd.f32 0.0, %v9797
  %v9799 = vpop.f32.mrb[0].mxu0
  %9800 = vmatprep.mubr.bf16.mxu0 0
  %9801 = vmatmul.mubr.bf16.gmra.mrb[0].mxu0 %v9539
  %v9802 = vpop.f32.mrb[0].mxu0
  %v9803 = vadd.f32 0.0, %v9802
  %v9804 = vpop.f32.mrb[0].mxu0
  %v9805 = vpop.f32.mrb[0].mxu0
  %v9806 = vadd.f32 0.0, %v9805
  %v9807 = vpop.f32.mrb[0].mxu0
  %9808 = vmatprep.mubr.bf16.mxu0 0
  %9809 = vmatmul.mubr.bf16.gmra.mrb[0].mxu0 %v9540
  %v9810 = vpop.f32.mrb[0].mxu0
  %v9811 = vadd.f32 0.0, %v9810
  %v9812 = vpop.f32.mrb[0].mxu0
  %v9813 = vpop.f32.mrb[0].mxu0
  %v9814 = vadd.f32 0.0, %v9813
  %v9815 = vpop.f32.mrb[0].mxu0
  %9816 = vmatprep.mubr.bf16.mxu0 0
  %9817 = vmatmul.mubr.bf16.gmra.mrb[0].mxu0 %v9541
  %v9818 = vpop.f32.mrb[0].mxu0
  %v9819 = vadd.f32 0.0, %v9818
  %v9820 = vpop.f32.mrb[0].mxu0
  %v9821 = vpop.f32.mrb[0].mxu0
  %v9822 = vadd.f32 0.0, %v9821
  %v9823 = vpop.f32.mrb[0].mxu0
  %9824 = vmatprep.mubr.bf16.mxu0 0
  %9825 = vmatmul.mubr.bf16.gmra.mrb[0].mxu0 %v9542
  %v9826 = vpop.f32.mrb[0].mxu0
  %v9827 = vadd.f32 0.0, %v9826
  %v9828 = vpop.f32.mrb[0].mxu0
  %v9829 = vpop.f32.mrb[0].mxu0
  %v9830 = vadd.f32 0.0, %v9829
  %v9831 = vpop.f32.mrb[0].mxu0
  %9832 = vmatprep.mubr.bf16.mxu0 0
  %9833 = vmatmul.mubr.bf16.gmra.mrb[0].mxu0 %v9543
  %v9834 = vpop.f32.mrb[0].mxu0
  %v9835 = vadd.f32 0.0, %v9834
  %v9836 = vpop.f32.mrb[0].mxu0
  %v9837 = vpop.f32.mrb[0].mxu0
  %v9838 = vadd.f32 0.0, %v9837
  %v9839 = vpop.f32.mrb[0].mxu0
  %9840 = vmatprep.mubr.bf16.mxu0 0
  %9841 = vmatmul.mubr.bf16.gmra.mrb[0].mxu0 %v9544
  %v9842 = vpop.f32.mrb[0].mxu0
  %v9843 = vadd.f32 0.0, %v9842
  %v9844 = vpop.f32.mrb[0].mxu0
  %v9845 = vpop.f32.mrb[0].mxu0
  %v9846 = vadd.f32 0.0, %v9845
  %v9847 = vpop.f32.mrb[0].mxu0
  %9848 = vmatprep.mubr.bf16.mxu0 0
  %9849 = vmatmul.mubr.bf16.gmra.mrb[0].mxu0 %v9545
  %v9850 = vpop.f32.mrb[0].mxu0
  %v9851 = vadd.f32 0.0, %v9850
  %v9852 = vpop.f32.mrb[0].mxu0
  %v9853 = vpop.f32.mrb[0].mxu0
  %v9854 = vadd.f32 0.0, %v9853
  %v9855 = vpop.f32.mrb[0].mxu0
  %9856 = vmatprep.mubr.bf16.mxu0 0
  %9857 = vmatmul.mubr.bf16.gmra.mrb[0].mxu0 %v9546
  %v9858 = vpop.f32.mrb[0].mxu0
  %v9859 = vadd.f32 0.0, %v9858
  %v9860 = vpop.f32.mrb[0].mxu0
  %v9861 = vpop.f32.mrb[0].mxu0
  %v9862 = vadd.f32 0.0, %v9861
  %v9863 = vpop.f32.mrb[0].mxu0
  %9864 = vmatprep.mubr.bf16.mxu0 0
  %9865 = vmatmul.mubr.bf16.gmra.mrb[0].mxu0 %v9547
  %v9866 = vpop.f32.mrb[0].mxu0
  %v9867 = vadd.f32 0.0, %v9866
  %v9868 = vpop.f32.mrb[0].mxu0
  %v9869 = vpop.f32.mrb[0].mxu0
  %v9870 = vadd.f32 0.0, %v9869
  %v9871 = vpop.f32.mrb[0].mxu0
  %9872 = vmatprep.mubr.bf16.mxu0 0
  %9873 = vmatmul.mubr.bf16.gmra.mrb[0].mxu0 %v9548
  %v9874 = vpop.f32.mrb[0].mxu0
  %v9875 = vadd.f32 0.0, %v9874
  %v9876 = vpop.f32.mrb[0].mxu0
  %v9877 = vpop.f32.mrb[0].mxu0
  %v9878 = vadd.f32 0.0, %v9877
  %v9879 = vpop.f32.mrb[0].mxu0
  %9880 = vmatprep.mubr.bf16.mxu0 0
  %9881 = vmatmul.mubr.bf16.gmra.mrb[0].mxu0 %v9549
  %v9882 = vpop.f32.mrb[0].mxu0
  %v9883 = vadd.f32 0.0, %v9882
  %v9884 = vpop.f32.mrb[0].mxu0
  %v9885 = vpop.f32.mrb[0].mxu0
  %v9886 = vadd.f32 0.0, %v9885
  %v9887 = vpop.f32.mrb[0].mxu0
  %9888 = vmatprep.mubr.bf16.mxu0 0
  %9889 = vmatmul.mubr.bf16.gmra.mrb[0].mxu0 %v9550
  %v9890 = vpop.f32.mrb[0].mxu0
  %v9891 = vadd.f32 0.0, %v9890
  %v9892 = vpop.f32.mrb[0].mxu0
  %v9893 = vpop.f32.mrb[0].mxu0
  %v9894 = vadd.f32 0.0, %v9893
  %v9895 = vpop.f32.mrb[0].mxu0
  %9896 = vmatprep.mubr.bf16.mxu0 0
  %9897 = vmatmul.mubr.bf16.gmra.mrb[0].mxu0 %v9551
  %v9898 = vpop.f32.mrb[0].mxu0
  %v9899 = vadd.f32 0.0, %v9898
  %v9900 = vpop.f32.mrb[0].mxu0
  %v9901 = vpop.f32.mrb[0].mxu0
  %v9902 = vadd.f32 0.0, %v9901
  %v9903 = vpop.f32.mrb[0].mxu0
  %9904 = vdwg.mxu0
  %v9905 = vld [vmem:[%s5] sm:$0x1]
  %v9906 = vld [vmem:[%s6] sm:$0x1]
  %v9907 = vadd.f32 %v9651, %v9654
  %v9908 = vadd.f32 %v9907, %v9659
  %v9909 = vadd.f32 %v9908, %v9662
  %v9910 = vadd.f32 %v9909, %v9667
  %v9911 = vadd.f32 %v9910, %v9670
  %v9912 = vadd.f32 %v9911, %v9675
  %v9913 = vadd.f32 %v9912, %v9678
  %v9914 = vadd.f32 %v9913, %v9683
  %v9915 = vadd.f32 %v9914, %v9686
  %v9916 = vadd.f32 %v9915, %v9691
  %v9917 = vadd.f32 %v9916, %v9694
  %v9918 = vadd.f32 %v9917, %v9699
  %v9919 = vadd.f32 %v9918, %v9702
  %v9920 = vadd.f32 %v9919, %v9707
  %v9921 = vadd.f32 %v9920, %v9710
  %v9922 = vadd.f32 %v9921, %v9715
  %v9923 = vadd.f32 %v9922, %v9718
  %v9924 = vadd.f32 %v9923, %v9723
  %v9925 = vadd.f32 %v9924, %v9726
  %v9926 = vadd.f32 %v9925, %v9731
  %v9927 = vadd.f32 %v9926, %v9734
  %v9928 = vadd.f32 %v9927, %v9739
  %v9929 = vadd.f32 %v9928, %v9742
  %v9930 = vadd.f32 %v9929, %v9747
  %v9931 = vadd.f32 %v9930, %v9750
  %v9932 = vadd.f32 %v9931, %v9755
  %v9933 = vadd.f32 %v9932, %v9758
  %v9934 = vadd.f32 %v9933, %v9763
  %v9935 = vadd.f32 %v9934, %v9766
  %v9936 = vadd.f32 %v9935, %v9771
  %v9937 = vadd.f32 %v9936, %v9774
  %v9938 = vadd.f32 %v9937, %v9779
  %v9939 = vadd.f32 %v9938, %v9782
  %v9940 = vadd.f32 %v9939, %v9787
  %v9941 = vadd.f32 %v9940, %v9790
  %v9942 = vadd.f32 %v9941, %v9795
  %v9943 = vadd.f32 %v9942, %v9798
  %v9944 = vadd.f32 %v9943, %v9803
  %v9945 = vadd.f32 %v9944, %v9806
  %v9946 = vadd.f32 %v9945, %v9811
  %v9947 = vadd.f32 %v9946, %v9814
  %v9948 = vadd.f32 %v9947, %v9819
  %v9949 = vadd.f32 %v9948, %v9822
  %v9950 = vadd.f32 %v9949, %v9827
  %v9951 = vadd.f32 %v9950, %v9830
  %v9952 = vadd.f32 %v9951, %v9835
  %v9953 = vadd.f32 %v9952, %v9838
  %v9954 = vadd.f32 %v9953, %v9843
  %v9955 = vadd.f32 %v9954, %v9846
  %v9956 = vadd.f32 %v9955, %v9851
  %v9957 = vadd.f32 %v9956, %v9854
  %v9958 = vadd.f32 %v9957, %v9859
  %v9959 = vadd.f32 %v9958, %v9862
  %v9960 = vadd.f32 %v9959, %v9867
  %v9961 = vadd.f32 %v9960, %v9870
  %v9962 = vadd.f32 %v9961, %v9875
  %v9963 = vadd.f32 %v9962, %v9878
  %v9964 = vadd.f32 %v9963, %v9883
  %v9965 = vadd.f32 %v9964, %v9886
  %v9966 = vadd.f32 %v9965, %v9891
  %v9967 = vadd.f32 %v9966, %v9894
  %v9968 = vadd.f32 %v9967, %v9899
  %v9969 = vadd.f32 %v9968, %v9902
  %v9970 = vrot.slane %v9969, 4
  %v9971 = vadd.f32 %v9969, %v9970
  %v9972 = vrot.slane %v9971, 2
  %v9973 = vadd.f32 %v9971, %v9972
  %v9974 = vrot.slane %v9973, 1
  %v9975 = vadd.f32 %v9973, %v9974
  %v9976 = vmul.f32 %v9975, 0.001953125
  %v9977 = vsub.f32 %v9651, %v9976
  %v9978 = vsub.f32 %v9654, %v9976
  %v9979 = vsub.f32 %v9659, %v9976
  %v9980 = vsub.f32 %v9662, %v9976
  %v9981 = vsub.f32 %v9667, %v9976
  %v9982 = vsub.f32 %v9670, %v9976
  %v9983 = vsub.f32 %v9675, %v9976
  %v9984 = vsub.f32 %v9678, %v9976
  %v9985 = vsub.f32 %v9683, %v9976
  %v9986 = vsub.f32 %v9686, %v9976
  %v9987 = vsub.f32 %v9691, %v9976
  %v9988 = vsub.f32 %v9694, %v9976
  %v9989 = vsub.f32 %v9699, %v9976
  %v9990 = vsub.f32 %v9702, %v9976
  %v9991 = vsub.f32 %v9707, %v9976
  %v9992 = vsub.f32 %v9710, %v9976
  %v9993 = vsub.f32 %v9715, %v9976
  %v9994 = vsub.f32 %v9718, %v9976
  %v9995 = vsub.f32 %v9723, %v9976
  %v9996 = vsub.f32 %v9726, %v9976
  %v9997 = vsub.f32 %v9731, %v9976
  %v9998 = vsub.f32 %v9734, %v9976
  %v9999 = vsub.f32 %v9739, %v9976
  %v10000 = vsub.f32 %v9742, %v9976
  %v10001 = vsub.f32 %v9747, %v9976
  %v10002 = vsub.f32 %v9750, %v9976
  %v10003 = vsub.f32 %v9755, %v9976
  %v10004 = vsub.f32 %v9758, %v9976
  %v10005 = vsub.f32 %v9763, %v9976
  %v10006 = vsub.f32 %v9766, %v9976
  %v10007 = vsub.f32 %v9771, %v9976
  %v10008 = vsub.f32 %v9774, %v9976
  %v10009 = vsub.f32 %v9779, %v9976
  %v10010 = vsub.f32 %v9782, %v9976
  %v10011 = vsub.f32 %v9787, %v9976
  %v10012 = vsub.f32 %v9790, %v9976
  %v10013 = vsub.f32 %v9795, %v9976
  %v10014 = vsub.f32 %v9798, %v9976
  %v10015 = vsub.f32 %v9803, %v9976
  %v10016 = vsub.f32 %v9806, %v9976
  %v10017 = vsub.f32 %v9811, %v9976
  %v10018 = vsub.f32 %v9814, %v9976
  %v10019 = vsub.f32 %v9819, %v9976
  %v10020 = vsub.f32 %v9822, %v9976
  %v10021 = vsub.f32 %v9827, %v9976
  %v10022 = vsub.f32 %v9830, %v9976
  %v10023 = vsub.f32 %v9835, %v9976
  %v10024 = vsub.f32 %v9838, %v9976
  %v10025 = vsub.f32 %v9843, %v9976
  %v10026 = vsub.f32 %v9846, %v9976
  %v10027 = vsub.f32 %v9851, %v9976
  %v10028 = vsub.f32 %v9854, %v9976
  %v10029 = vsub.f32 %v9859, %v9976
  %v10030 = vsub.f32 %v9862, %v9976
  %v10031 = vsub.f32 %v9867, %v9976
  %v10032 = vsub.f32 %v9870, %v9976
  %v10033 = vsub.f32 %v9875, %v9976
  %v10034 = vsub.f32 %v9878, %v9976
  %v10035 = vsub.f32 %v9883, %v9976
  %v10036 = vsub.f32 %v9886, %v9976
  %v10037 = vsub.f32 %v9891, %v9976
  %v10038 = vsub.f32 %v9894, %v9976
  %v10039 = vsub.f32 %v9899, %v9976
  %v10040 = vsub.f32 %v9902, %v9976
  %v10041 = vmul.f32 %v9977, %v9977
  %v10042 = vmul.f32 %v9978, %v9978
  %v10043 = vmul.f32 %v9979, %v9979
  %v10044 = vmul.f32 %v9980, %v9980
  %v10045 = vmul.f32 %v9981, %v9981
  %v10046 = vmul.f32 %v9982, %v9982
  %v10047 = vmul.f32 %v9983, %v9983
  %v10048 = vmul.f32 %v9984, %v9984
  %v10049 = vmul.f32 %v9985, %v9985
  %v10050 = vmul.f32 %v9986, %v9986
  %v10051 = vmul.f32 %v9987, %v9987
  %v10052 = vmul.f32 %v9988, %v9988
  %v10053 = vmul.f32 %v9989, %v9989
  %v10054 = vmul.f32 %v9990, %v9990
  %v10055 = vmul.f32 %v9991, %v9991
  %v10056 = vmul.f32 %v9992, %v9992
  %v10057 = vmul.f32 %v9993, %v9993
  %v10058 = vmul.f32 %v9994, %v9994
  %v10059 = vmul.f32 %v9995, %v9995
  %v10060 = vmul.f32 %v9996, %v9996
  %v10061 = vmul.f32 %v9997, %v9997
  %v10062 = vmul.f32 %v9998, %v9998
  %v10063 = vmul.f32 %v9999, %v9999
  %v10064 = vmul.f32 %v10000, %v10000
  %v10065 = vmul.f32 %v10001, %v10001
  %v10066 = vmul.f32 %v10002, %v10002
  %v10067 = vmul.f32 %v10003, %v10003
  %v10068 = vmul.f32 %v10004, %v10004
  %v10069 = vmul.f32 %v10005, %v10005
  %v10070 = vmul.f32 %v10006, %v10006
  %v10071 = vmul.f32 %v10007, %v10007
  %v10072 = vmul.f32 %v10008, %v10008
  %v10073 = vmul.f32 %v10009, %v10009
  %v10074 = vmul.f32 %v10010, %v10010
  %v10075 = vmul.f32 %v10011, %v10011
  %v10076 = vmul.f32 %v10012, %v10012
  %v10077 = vmul.f32 %v10013, %v10013
  %v10078 = vmul.f32 %v10014, %v10014
  %v10079 = vmul.f32 %v10015, %v10015
  %v10080 = vmul.f32 %v10016, %v10016
  %v10081 = vmul.f32 %v10017, %v10017
  %v10082 = vmul.f32 %v10018, %v10018
  %v10083 = vmul.f32 %v10019, %v10019
  %v10084 = vmul.f32 %v10020, %v10020
  %v10085 = vmul.f32 %v10021, %v10021
  %v10086 = vmul.f32 %v10022, %v10022
  %v10087 = vmul.f32 %v10023, %v10023
  %v10088 = vmul.f32 %v10024, %v10024
  %v10089 = vmul.f32 %v10025, %v10025
  %v10090 = vmul.f32 %v10026, %v10026
  %v10091 = vmul.f32 %v10027, %v10027
  %v10092 = vmul.f32 %v10028, %v10028
  %v10093 = vmul.f32 %v10029, %v10029
  %v10094 = vmul.f32 %v10030, %v10030
  %v10095 = vmul.f32 %v10031, %v10031
  %v10096 = vmul.f32 %v10032, %v10032
  %v10097 = vmul.f32 %v10033, %v10033
  %v10098 = vmul.f32 %v10034, %v10034
  %v10099 = vmul.f32 %v10035, %v10035
  %v10100 = vmul.f32 %v10036, %v10036
  %v10101 = vmul.f32 %v10037, %v10037
  %v10102 = vmul.f32 %v10038, %v10038
  %v10103 = vmul.f32 %v10039, %v10039
  %v10104 = vmul.f32 %v10040, %v10040
  %v10105 = vadd.f32 %v10041, %v10042
  %v10106 = vadd.f32 %v10105, %v10043
  %v10107 = vadd.f32 %v10106, %v10044
  %v10108 = vadd.f32 %v10107, %v10045
  %v10109 = vadd.f32 %v10108, %v10046
  %v10110 = vadd.f32 %v10109, %v10047
  %v10111 = vadd.f32 %v10110, %v10048
  %v10112 = vadd.f32 %v10111, %v10049
  %v10113 = vadd.f32 %v10112, %v10050
  %v10114 = vadd.f32 %v10113, %v10051
  %v10115 = vadd.f32 %v10114, %v10052
  %v10116 = vadd.f32 %v10115, %v10053
  %v10117 = vadd.f32 %v10116, %v10054
  %v10118 = vadd.f32 %v10117, %v10055
  %v10119 = vadd.f32 %v10118, %v10056
  %v10120 = vadd.f32 %v10119, %v10057
  %v10121 = vadd.f32 %v10120, %v10058
  %v10122 = vadd.f32 %v10121, %v10059
  %v10123 = vadd.f32 %v10122, %v10060
  %v10124 = vadd.f32 %v10123, %v10061
  %v10125 = vadd.f32 %v10124, %v10062
  %v10126 = vadd.f32 %v10125, %v10063
  %v10127 = vadd.f32 %v10126, %v10064
  %v10128 = vadd.f32 %v10127, %v10065
  %v10129 = vadd.f32 %v10128, %v10066
  %v10130 = vadd.f32 %v10129, %v10067
  %v10131 = vadd.f32 %v10130, %v10068
  %v10132 = vadd.f32 %v10131, %v10069
  %v10133 = vadd.f32 %v10132, %v10070
  %v10134 = vadd.f32 %v10133, %v10071
  %v10135 = vadd.f32 %v10134, %v10072
  %v10136 = vadd.f32 %v10135, %v10073
  %v10137 = vadd.f32 %v10136, %v10074
  %v10138 = vadd.f32 %v10137, %v10075
  %v10139 = vadd.f32 %v10138, %v10076
  %v10140 = vadd.f32 %v10139, %v10077
  %v10141 = vadd.f32 %v10140, %v10078
  %v10142 = vadd.f32 %v10141, %v10079
  %v10143 = vadd.f32 %v10142, %v10080
  %v10144 = vadd.f32 %v10143, %v10081
  %v10145 = vadd.f32 %v10144, %v10082
  %v10146 = vadd.f32 %v10145, %v10083
  %v10147 = vadd.f32 %v10146, %v10084
  %v10148 = vadd.f32 %v10147, %v10085
  %v10149 = vadd.f32 %v10148, %v10086
  %v10150 = vadd.f32 %v10149, %v10087
  %v10151 = vadd.f32 %v10150, %v10088
  %v10152 = vadd.f32 %v10151, %v10089
  %v10153 = vadd.f32 %v10152, %v10090
  %v10154 = vadd.f32 %v10153, %v10091
  %v10155 = vadd.f32 %v10154, %v10092
  %v10156 = vadd.f32 %v10155, %v10093
  %v10157 = vadd.f32 %v10156, %v10094
  %v10158 = vadd.f32 %v10157, %v10095
  %v10159 = vadd.f32 %v10158, %v10096
  %v10160 = vadd.f32 %v10159, %v10097
  %v10161 = vadd.f32 %v10160, %v10098
  %v10162 = vadd.f32 %v10161, %v10099
  %v10163 = vadd.f32 %v10162, %v10100
  %v10164 = vadd.f32 %v10163, %v10101
  %v10165 = vadd.f32 %v10164, %v10102
  %v10166 = vadd.f32 %v10165, %v10103
  %v10167 = vadd.f32 %v10166, %v10104
  %v10168 = vrot.slane %v10167, 4
  %v10169 = vadd.f32 %v10167, %v10168
  %v10170 = vrot.slane %v10169, 2
  %v10171 = vadd.f32 %v10169, %v10170
  %v10172 = vrot.slane %v10171, 1
  %v10173 = vadd.f32 %v10171, %v10172
  %v10174 = vmul.f32 %v10173, 0.001953125
  %v10175 = vadd.f32 %v10174, 1e-05
  %v10176 = vrsqrt.pop %v10175
  %v10177 = vmul.f32 %v9977, %v10176
  %v10178 = vmul.f32 %v9978, %v10176
  %v10179 = vmul.f32 %v9979, %v10176
  %v10180 = vmul.f32 %v9980, %v10176
  %v10181 = vmul.f32 %v9981, %v10176
  %v10182 = vmul.f32 %v9982, %v10176
  %v10183 = vmul.f32 %v9983, %v10176
  %v10184 = vmul.f32 %v9984, %v10176
  %v10185 = vmul.f32 %v9985, %v10176
  %v10186 = vmul.f32 %v9986, %v10176
  %v10187 = vmul.f32 %v9987, %v10176
  %v10188 = vmul.f32 %v9988, %v10176
  %v10189 = vmul.f32 %v9989, %v10176
  %v10190 = vmul.f32 %v9990, %v10176
  %v10191 = vmul.f32 %v9991, %v10176
  %v10192 = vmul.f32 %v9992, %v10176
  %v10193 = vmul.f32 %v9993, %v10176
  %v10194 = vmul.f32 %v9994, %v10176
  %v10195 = vmul.f32 %v9995, %v10176
  %v10196 = vmul.f32 %v9996, %v10176
  %v10197 = vmul.f32 %v9997, %v10176
  %v10198 = vmul.f32 %v9998, %v10176
  %v10199 = vmul.f32 %v9999, %v10176
  %v10200 = vmul.f32 %v10000, %v10176
  %v10201 = vmul.f32 %v10001, %v10176
  %v10202 = vmul.f32 %v10002, %v10176
  %v10203 = vmul.f32 %v10003, %v10176
  %v10204 = vmul.f32 %v10004, %v10176
  %v10205 = vmul.f32 %v10005, %v10176
  %v10206 = vmul.f32 %v10006, %v10176
  %v10207 = vmul.f32 %v10007, %v10176
  %v10208 = vmul.f32 %v10008, %v10176
  %v10209 = vmul.f32 %v10009, %v10176
  %v10210 = vmul.f32 %v10010, %v10176
  %v10211 = vmul.f32 %v10011, %v10176
  %v10212 = vmul.f32 %v10012, %v10176
  %v10213 = vmul.f32 %v10013, %v10176
  %v10214 = vmul.f32 %v10014, %v10176
  %v10215 = vmul.f32 %v10015, %v10176
  %v10216 = vmul.f32 %v10016, %v10176
  %v10217 = vmul.f32 %v10017, %v10176
  %v10218 = vmul.f32 %v10018, %v10176
  %v10219 = vmul.f32 %v10019, %v10176
  %v10220 = vmul.f32 %v10020, %v10176
  %v10221 = vmul.f32 %v10021, %v10176
  %v10222 = vmul.f32 %v10022, %v10176
  %v10223 = vmul.f32 %v10023, %v10176
  %v10224 = vmul.f32 %v10024, %v10176
  %v10225 = vmul.f32 %v10025, %v10176
  %v10226 = vmul.f32 %v10026, %v10176
  %v10227 = vmul.f32 %v10027, %v10176
  %v10228 = vmul.f32 %v10028, %v10176
  %v10229 = vmul.f32 %v10029, %v10176
  %v10230 = vmul.f32 %v10030, %v10176
  %v10231 = vmul.f32 %v10031, %v10176
  %v10232 = vmul.f32 %v10032, %v10176
  %v10233 = vmul.f32 %v10033, %v10176
  %v10234 = vmul.f32 %v10034, %v10176
  %v10235 = vmul.f32 %v10035, %v10176
  %v10236 = vmul.f32 %v10036, %v10176
  %v10237 = vmul.f32 %v10037, %v10176
  %v10238 = vmul.f32 %v10038, %v10176
  %v10239 = vmul.f32 %v10039, %v10176
  %v10240 = vmul.f32 %v10040, %v10176
  %v10242 = vlaneseq
  %v10243 = vshrl.u32 %v10242, 7
  %v10244 = vsub.s32 0, %v10243
  %v10245 = vrot.slane %v9905, %v10244
  %v10247 = vmul.f32 %v10177, %v10245
  %v10248 = vmul.f32 %v10178, %v10245
  %v10249 = vmul.f32 %v10179, %v10245
  %v10250 = vmul.f32 %v10180, %v10245
  %v10251 = vmul.f32 %v10181, %v10245
  %v10252 = vmul.f32 %v10182, %v10245
  %v10253 = vmul.f32 %v10183, %v10245
  %v10254 = vmul.f32 %v10184, %v10245
  %v10255 = vmul.f32 %v10185, %v10245
  %v10256 = vmul.f32 %v10186, %v10245
  %v10257 = vmul.f32 %v10187, %v10245
  %v10258 = vmul.f32 %v10188, %v10245
  %v10259 = vmul.f32 %v10189, %v10245
  %v10260 = vmul.f32 %v10190, %v10245
  %v10261 = vmul.f32 %v10191, %v10245
  %v10262 = vmul.f32 %v10192, %v10245
  %v10263 = vmul.f32 %v10193, %v10245
  %v10264 = vmul.f32 %v10194, %v10245
  %v10265 = vmul.f32 %v10195, %v10245
  %v10266 = vmul.f32 %v10196, %v10245
  %v10267 = vmul.f32 %v10197, %v10245
  %v10268 = vmul.f32 %v10198, %v10245
  %v10269 = vmul.f32 %v10199, %v10245
  %v10270 = vmul.f32 %v10200, %v10245
  %v10271 = vmul.f32 %v10201, %v10245
  %v10272 = vmul.f32 %v10202, %v10245
  %v10273 = vmul.f32 %v10203, %v10245
  %v10274 = vmul.f32 %v10204, %v10245
  %v10275 = vmul.f32 %v10205, %v10245
  %v10276 = vmul.f32 %v10206, %v10245
  %v10277 = vmul.f32 %v10207, %v10245
  %v10278 = vmul.f32 %v10208, %v10245
  %v10279 = vmul.f32 %v10209, %v10245
  %v10280 = vmul.f32 %v10210, %v10245
  %v10281 = vmul.f32 %v10211, %v10245
  %v10282 = vmul.f32 %v10212, %v10245
  %v10283 = vmul.f32 %v10213, %v10245
  %v10284 = vmul.f32 %v10214, %v10245
  %v10285 = vmul.f32 %v10215, %v10245
  %v10286 = vmul.f32 %v10216, %v10245
  %v10287 = vmul.f32 %v10217, %v10245
  %v10288 = vmul.f32 %v10218, %v10245
  %v10289 = vmul.f32 %v10219, %v10245
  %v10290 = vmul.f32 %v10220, %v10245
  %v10291 = vmul.f32 %v10221, %v10245
  %v10292 = vmul.f32 %v10222, %v10245
  %v10293 = vmul.f32 %v10223, %v10245
  %v10294 = vmul.f32 %v10224, %v10245
  %v10295 = vmul.f32 %v10225, %v10245
  %v10296 = vmul.f32 %v10226, %v10245
  %v10297 = vmul.f32 %v10227, %v10245
  %v10298 = vmul.f32 %v10228, %v10245
  %v10299 = vmul.f32 %v10229, %v10245
  %v10300 = vmul.f32 %v10230, %v10245
  %v10301 = vmul.f32 %v10231, %v10245
  %v10302 = vmul.f32 %v10232, %v10245
  %v10303 = vmul.f32 %v10233, %v10245
  %v10304 = vmul.f32 %v10234, %v10245
  %v10305 = vmul.f32 %v10235, %v10245
  %v10306 = vmul.f32 %v10236, %v10245
  %v10307 = vmul.f32 %v10237, %v10245
  %v10308 = vmul.f32 %v10238, %v10245
  %v10309 = vmul.f32 %v10239, %v10245
  %v10310 = vmul.f32 %v10240, %v10245
  %v10312 = vlaneseq
  %v10313 = vshrl.u32 %v10312, 7
  %v10314 = vsub.s32 0, %v10313
  %v10315 = vrot.slane %v9906, %v10314
  %v10317 = vadd.f32 %v10247, %v10315
  %v10318 = vadd.f32 %v10248, %v10315
  %v10319 = vadd.f32 %v10249, %v10315
  %v10320 = vadd.f32 %v10250, %v10315
  %v10321 = vadd.f32 %v10251, %v10315
  %v10322 = vadd.f32 %v10252, %v10315
  %v10323 = vadd.f32 %v10253, %v10315
  %v10324 = vadd.f32 %v10254, %v10315
  %v10325 = vadd.f32 %v10255, %v10315
  %v10326 = vadd.f32 %v10256, %v10315
  %v10327 = vadd.f32 %v10257, %v10315
  %v10328 = vadd.f32 %v10258, %v10315
  %v10329 = vadd.f32 %v10259, %v10315
  %v10330 = vadd.f32 %v10260, %v10315
  %v10331 = vadd.f32 %v10261, %v10315
  %v10332 = vadd.f32 %v10262, %v10315
  %v10333 = vadd.f32 %v10263, %v10315
  %v10334 = vadd.f32 %v10264, %v10315
  %v10335 = vadd.f32 %v10265, %v10315
  %v10336 = vadd.f32 %v10266, %v10315
  %v10337 = vadd.f32 %v10267, %v10315
  %v10338 = vadd.f32 %v10268, %v10315
  %v10339 = vadd.f32 %v10269, %v10315
  %v10340 = vadd.f32 %v10270, %v10315
  %v10341 = vadd.f32 %v10271, %v10315
  %v10342 = vadd.f32 %v10272, %v10315
  %v10343 = vadd.f32 %v10273, %v10315
  %v10344 = vadd.f32 %v10274, %v10315
  %v10345 = vadd.f32 %v10275, %v10315
  %v10346 = vadd.f32 %v10276, %v10315
  %v10347 = vadd.f32 %v10277, %v10315
  %v10348 = vadd.f32 %v10278, %v10315
  %v10349 = vadd.f32 %v10279, %v10315
  %v10350 = vadd.f32 %v10280, %v10315
  %v10351 = vadd.f32 %v10281, %v10315
  %v10352 = vadd.f32 %v10282, %v10315
  %v10353 = vadd.f32 %v10283, %v10315
  %v10354 = vadd.f32 %v10284, %v10315
  %v10355 = vadd.f32 %v10285, %v10315
  %v10356 = vadd.f32 %v10286, %v10315
  %v10357 = vadd.f32 %v10287, %v10315
  %v10358 = vadd.f32 %v10288, %v10315
  %v10359 = vadd.f32 %v10289, %v10315
  %v10360 = vadd.f32 %v10290, %v10315
  %v10361 = vadd.f32 %v10291, %v10315
  %v10362 = vadd.f32 %v10292, %v10315
  %v10363 = vadd.f32 %v10293, %v10315
  %v10364 = vadd.f32 %v10294, %v10315
  %v10365 = vadd.f32 %v10295, %v10315
  %v10366 = vadd.f32 %v10296, %v10315
  %v10367 = vadd.f32 %v10297, %v10315
  %v10368 = vadd.f32 %v10298, %v10315
  %v10369 = vadd.f32 %v10299, %v10315
  %v10370 = vadd.f32 %v10300, %v10315
  %v10371 = vadd.f32 %v10301, %v10315
  %v10372 = vadd.f32 %v10302, %v10315
  %v10373 = vadd.f32 %v10303, %v10315
  %v10374 = vadd.f32 %v10304, %v10315
  %v10375 = vadd.f32 %v10305, %v10315
  %v10376 = vadd.f32 %v10306, %v10315
  %v10377 = vadd.f32 %v10307, %v10315
  %v10378 = vadd.f32 %v10308, %v10315
  %v10379 = vadd.f32 %v10309, %v10315
  %v10380 = vadd.f32 %v10310, %v10315
  %v10381 = vld [vmem:[%s0] sm:$0xf]
  %v10382 = vld [vmem:[%s0 + $0x4] sm:$0xf]
  %v10383 = vld [vmem:[%s0 + $0x8] sm:$0xf]
  %v10384 = vld [vmem:[%s0 + $0xc] sm:$0xf]
  %v10385 = vld [vmem:[%s0 + $0x10] sm:$0xf]
  %v10386 = vld [vmem:[%s0 + $0x14] sm:$0xf]
  %v10387 = vld [vmem:[%s0 + $0x18] sm:$0xf]
  %v10388 = vld [vmem:[%s0 + $0x1c] sm:$0xf]
  %v10389 = vld [vmem:[%s0 + $0x20] sm:$0xf]
  %v10390 = vld [vmem:[%s0 + $0x24] sm:$0xf]
  %v10391 = vld [vmem:[%s0 + $0x28] sm:$0xf]
  %v10392 = vld [vmem:[%s0 + $0x2c] sm:$0xf]
  %v10393 = vld [vmem:[%s0 + $0x30] sm:$0xf]
  %v10394 = vld [vmem:[%s0 + $0x34] sm:$0xf]
  %v10395 = vld [vmem:[%s0 + $0x38] sm:$0xf]
  %v10396 = vld [vmem:[%s0 + $0x3c] sm:$0xf]
  %v10397 = vld [vmem:[%s0 + $0x40] sm:$0xf]
  %v10398 = vld [vmem:[%s0 + $0x44] sm:$0xf]
  %v10399 = vld [vmem:[%s0 + $0x48] sm:$0xf]
  %v10400 = vld [vmem:[%s0 + $0x4c] sm:$0xf]
  %v10401 = vld [vmem:[%s0 + $0x50] sm:$0xf]
  %v10402 = vld [vmem:[%s0 + $0x54] sm:$0xf]
  %v10403 = vld [vmem:[%s0 + $0x58] sm:$0xf]
  %v10404 = vld [vmem:[%s0 + $0x5c] sm:$0xf]
  %v10405 = vld [vmem:[%s0 + $0x60] sm:$0xf]
  %v10406 = vld [vmem:[%s0 + $0x64] sm:$0xf]
  %v10407 = vld [vmem:[%s0 + $0x68] sm:$0xf]
  %v10408 = vld [vmem:[%s0 + $0x6c] sm:$0xf]
  %v10409 = vld [vmem:[%s0 + $0x70] sm:$0xf]
  %v10410 = vld [vmem:[%s0 + $0x74] sm:$0xf]
  %v10411 = vld [vmem:[%s0 + $0x78] sm:$0xf]
  %v10412 = vld [vmem:[%s0 + $0x7c] sm:$0xf]
  %v10413 = vld [vmem:[%s0 + $0x80] sm:$0xf]
  %v10414 = vld [vmem:[%s0 + $0x84] sm:$0xf]
  %v10415 = vld [vmem:[%s0 + $0x88] sm:$0xf]
  %v10416 = vld [vmem:[%s0 + $0x8c] sm:$0xf]
  %v10417 = vld [vmem:[%s0 + $0x90] sm:$0xf]
  %v10418 = vld [vmem:[%s0 + $0x94] sm:$0xf]
  %v10419 = vld [vmem:[%s0 + $0x98] sm:$0xf]
  %v10420 = vld [vmem:[%s0 + $0x9c] sm:$0xf]
  %v10421 = vld [vmem:[%s0 + $0xa0] sm:$0xf]
  %v10422 = vld [vmem:[%s0 + $0xa4] sm:$0xf]
  %v10423 = vld [vmem:[%s0 + $0xa8] sm:$0xf]
  %v10424 = vld [vmem:[%s0 + $0xac] sm:$0xf]
  %v10425 = vld [vmem:[%s0 + $0xb0] sm:$0xf]
  %v10426 = vld [vmem:[%s0 + $0xb4] sm:$0xf]
  %v10427 = vld [vmem:[%s0 + $0xb8] sm:$0xf]
  %v10428 = vld [vmem:[%s0 + $0xbc] sm:$0xf]
  %v10429 = vld [vmem:[%s0 + $0xc0] sm:$0xf]
  %v10430 = vld [vmem:[%s0 + $0xc4] sm:$0xf]
  %v10431 = vld [vmem:[%s0 + $0xc8] sm:$0xf]
  %v10432 = vld [vmem:[%s0 + $0xcc] sm:$0xf]
  %v10433 = vld [vmem:[%s0 + $0xd0] sm:$0xf]
  %v10434 = vld [vmem:[%s0 + $0xd4] sm:$0xf]
  %v10435 = vld [vmem:[%s0 + $0xd8] sm:$0xf]
  %v10436 = vld [vmem:[%s0 + $0xdc] sm:$0xf]
  %v10437 = vld [vmem:[%s0 + $0xe0] sm:$0xf]
  %v10438 = vld [vmem:[%s0 + $0xe4] sm:$0xf]
  %v10439 = vld [vmem:[%s0 + $0xe8] sm:$0xf]
  %v10440 = vld [vmem:[%s0 + $0xec] sm:$0xf]
  %v10441 = vld [vmem:[%s0 + $0xf0] sm:$0xf]
  %v10442 = vld [vmem:[%s0 + $0xf4] sm:$0xf]
  %v10443 = vld [vmem:[%s0 + $0xf8] sm:$0xf]
  %v10444 = vld [vmem:[%s0 + $0xfc] sm:$0xf]
  %v10445 = vunpack.c.l.bf16 %v10381
  %v10446 = vunpack.c.l.bf16 %v10382
  %v10447 = vunpack.c.l.bf16 %v10383
  %v10448 = vunpack.c.l.bf16 %v10384
  %v10449 = vunpack.c.l.bf16 %v10385
  %v10450 = vunpack.c.l.bf16 %v10386
  %v10451 = vunpack.c.l.bf16 %v10387
  %v10452 = vunpack.c.l.bf16 %v10388
  %v10453 = vunpack.c.l.bf16 %v10389
  %v10454 = vunpack.c.l.bf16 %v10390
  %v10455 = vunpack.c.l.bf16 %v10391
  %v10456 = vunpack.c.l.bf16 %v10392
  %v10457 = vunpack.c.l.bf16 %v10393
  %v10458 = vunpack.c.l.bf16 %v10394
  %v10459 = vunpack.c.l.bf16 %v10395
  %v10460 = vunpack.c.l.bf16 %v10396
  %v10461 = vunpack.c.l.bf16 %v10397
  %v10462 = vunpack.c.l.bf16 %v10398
  %v10463 = vunpack.c.l.bf16 %v10399
  %v10464 = vunpack.c.l.bf16 %v10400
  %v10465 = vunpack.c.l.bf16 %v10401
  %v10466 = vunpack.c.l.bf16 %v10402
  %v10467 = vunpack.c.l.bf16 %v10403
  %v10468 = vunpack.c.l.bf16 %v10404
  %v10469 = vunpack.c.l.bf16 %v10405
  %v10470 = vunpack.c.l.bf16 %v10406
  %v10471 = vunpack.c.l.bf16 %v10407
  %v10472 = vunpack.c.l.bf16 %v10408
  %v10473 = vunpack.c.l.bf16 %v10409
  %v10474 = vunpack.c.l.bf16 %v10410
  %v10475 = vunpack.c.l.bf16 %v10411
  %v10476 = vunpack.c.l.bf16 %v10412
  %v10477 = vunpack.c.l.bf16 %v10413
  %v10478 = vunpack.c.l.bf16 %v10414
  %v10479 = vunpack.c.l.bf16 %v10415
  %v10480 = vunpack.c.l.bf16 %v10416
  %v10481 = vunpack.c.l.bf16 %v10417
  %v10482 = vunpack.c.l.bf16 %v10418
  %v10483 = vunpack.c.l.bf16 %v10419
  %v10484 = vunpack.c.l.bf16 %v10420
  %v10485 = vunpack.c.l.bf16 %v10421
  %v10486 = vunpack.c.l.bf16 %v10422
  %v10487 = vunpack.c.l.bf16 %v10423
  %v10488 = vunpack.c.l.bf16 %v10424
  %v10489 = vunpack.c.l.bf16 %v10425
  %v10490 = vunpack.c.l.bf16 %v10426
  %v10491 = vunpack.c.l.bf16 %v10427
  %v10492 = vunpack.c.l.bf16 %v10428
  %v10493 = vunpack.c.l.bf16 %v10429
  %v10494 = vunpack.c.l.bf16 %v10430
  %v10495 = vunpack.c.l.bf16 %v10431
  %v10496 = vunpack.c.l.bf16 %v10432
  %v10497 = vunpack.c.l.bf16 %v10433
  %v10498 = vunpack.c.l.bf16 %v10434
  %v10499 = vunpack.c.l.bf16 %v10435
  %v10500 = vunpack.c.l.bf16 %v10436
  %v10501 = vunpack.c.l.bf16 %v10437
  %v10502 = vunpack.c.l.bf16 %v10438
  %v10503 = vunpack.c.l.bf16 %v10439
  %v10504 = vunpack.c.l.bf16 %v10440
  %v10505 = vunpack.c.l.bf16 %v10441
  %v10506 = vunpack.c.l.bf16 %v10442
  %v10507 = vunpack.c.l.bf16 %v10443
  %v10508 = vunpack.c.l.bf16 %v10444
  %v10509 = vadd.f32 %v10317, %v10445
  %v10510 = vadd.f32 %v10318, %v10446
  %v10511 = vadd.f32 %v10319, %v10447
  %v10512 = vadd.f32 %v10320, %v10448
  %v10513 = vadd.f32 %v10321, %v10449
  %v10514 = vadd.f32 %v10322, %v10450
  %v10515 = vadd.f32 %v10323, %v10451
  %v10516 = vadd.f32 %v10324, %v10452
  %v10517 = vadd.f32 %v10325, %v10453
  %v10518 = vadd.f32 %v10326, %v10454
  %v10519 = vadd.f32 %v10327, %v10455
  %v10520 = vadd.f32 %v10328, %v10456
  %v10521 = vadd.f32 %v10329, %v10457
  %v10522 = vadd.f32 %v10330, %v10458
  %v10523 = vadd.f32 %v10331, %v10459
  %v10524 = vadd.f32 %v10332, %v10460
  %v10525 = vadd.f32 %v10333, %v10461
  %v10526 = vadd.f32 %v10334, %v10462
  %v10527 = vadd.f32 %v10335, %v10463
  %v10528 = vadd.f32 %v10336, %v10464
  %v10529 = vadd.f32 %v10337, %v10465
  %v10530 = vadd.f32 %v10338, %v10466
  %v10531 = vadd.f32 %v10339, %v10467
  %v10532 = vadd.f32 %v10340, %v10468
  %v10533 = vadd.f32 %v10341, %v10469
  %v10534 = vadd.f32 %v10342, %v10470
  %v10535 = vadd.f32 %v10343, %v10471
  %v10536 = vadd.f32 %v10344, %v10472
  %v10537 = vadd.f32 %v10345, %v10473
  %v10538 = vadd.f32 %v10346, %v10474
  %v10539 = vadd.f32 %v10347, %v10475
  %v10540 = vadd.f32 %v10348, %v10476
  %v10541 = vadd.f32 %v10349, %v10477
  %v10542 = vadd.f32 %v10350, %v10478
  %v10543 = vadd.f32 %v10351, %v10479
  %v10544 = vadd.f32 %v10352, %v10480
  %v10545 = vadd.f32 %v10353, %v10481
  %v10546 = vadd.f32 %v10354, %v10482
  %v10547 = vadd.f32 %v10355, %v10483
  %v10548 = vadd.f32 %v10356, %v10484
  %v10549 = vadd.f32 %v10357, %v10485
  %v10550 = vadd.f32 %v10358, %v10486
  %v10551 = vadd.f32 %v10359, %v10487
  %v10552 = vadd.f32 %v10360, %v10488
  %v10553 = vadd.f32 %v10361, %v10489
  %v10554 = vadd.f32 %v10362, %v10490
  %v10555 = vadd.f32 %v10363, %v10491
  %v10556 = vadd.f32 %v10364, %v10492
  %v10557 = vadd.f32 %v10365, %v10493
  %v10558 = vadd.f32 %v10366, %v10494
  %v10559 = vadd.f32 %v10367, %v10495
  %v10560 = vadd.f32 %v10368, %v10496
  %v10561 = vadd.f32 %v10369, %v10497
  %v10562 = vadd.f32 %v10370, %v10498
  %v10563 = vadd.f32 %v10371, %v10499
  %v10564 = vadd.f32 %v10372, %v10500
  %v10565 = vadd.f32 %v10373, %v10501
  %v10566 = vadd.f32 %v10374, %v10502
  %v10567 = vadd.f32 %v10375, %v10503
  %v10568 = vadd.f32 %v10376, %v10504
  %v10569 = vadd.f32 %v10377, %v10505
  %v10570 = vadd.f32 %v10378, %v10506
  %v10571 = vadd.f32 %v10379, %v10507
  %v10572 = vadd.f32 %v10380, %v10508
  %v10573 = vmax.f32 %v10509, 0.0
  %v10574 = vmax.f32 %v10510, 0.0
  %v10575 = vmax.f32 %v10511, 0.0
  %v10576 = vmax.f32 %v10512, 0.0
  %v10577 = vmax.f32 %v10513, 0.0
  %v10578 = vmax.f32 %v10514, 0.0
  %v10579 = vmax.f32 %v10515, 0.0
  %v10580 = vmax.f32 %v10516, 0.0
  %v10581 = vmax.f32 %v10517, 0.0
  %v10582 = vmax.f32 %v10518, 0.0
  %v10583 = vmax.f32 %v10519, 0.0
  %v10584 = vmax.f32 %v10520, 0.0
  %v10585 = vmax.f32 %v10521, 0.0
  %v10586 = vmax.f32 %v10522, 0.0
  %v10587 = vmax.f32 %v10523, 0.0
  %v10588 = vmax.f32 %v10524, 0.0
  %v10589 = vmax.f32 %v10525, 0.0
  %v10590 = vmax.f32 %v10526, 0.0
  %v10591 = vmax.f32 %v10527, 0.0
  %v10592 = vmax.f32 %v10528, 0.0
  %v10593 = vmax.f32 %v10529, 0.0
  %v10594 = vmax.f32 %v10530, 0.0
  %v10595 = vmax.f32 %v10531, 0.0
  %v10596 = vmax.f32 %v10532, 0.0
  %v10597 = vmax.f32 %v10533, 0.0
  %v10598 = vmax.f32 %v10534, 0.0
  %v10599 = vmax.f32 %v10535, 0.0
  %v10600 = vmax.f32 %v10536, 0.0
  %v10601 = vmax.f32 %v10537, 0.0
  %v10602 = vmax.f32 %v10538, 0.0
  %v10603 = vmax.f32 %v10539, 0.0
  %v10604 = vmax.f32 %v10540, 0.0
  %v10605 = vmax.f32 %v10541, 0.0
  %v10606 = vmax.f32 %v10542, 0.0
  %v10607 = vmax.f32 %v10543, 0.0
  %v10608 = vmax.f32 %v10544, 0.0
  %v10609 = vmax.f32 %v10545, 0.0
  %v10610 = vmax.f32 %v10546, 0.0
  %v10611 = vmax.f32 %v10547, 0.0
  %v10612 = vmax.f32 %v10548, 0.0
  %v10613 = vmax.f32 %v10549, 0.0
  %v10614 = vmax.f32 %v10550, 0.0
  %v10615 = vmax.f32 %v10551, 0.0
  %v10616 = vmax.f32 %v10552, 0.0
  %v10617 = vmax.f32 %v10553, 0.0
  %v10618 = vmax.f32 %v10554, 0.0
  %v10619 = vmax.f32 %v10555, 0.0
  %v10620 = vmax.f32 %v10556, 0.0
  %v10621 = vmax.f32 %v10557, 0.0
  %v10622 = vmax.f32 %v10558, 0.0
  %v10623 = vmax.f32 %v10559, 0.0
  %v10624 = vmax.f32 %v10560, 0.0
  %v10625 = vmax.f32 %v10561, 0.0
  %v10626 = vmax.f32 %v10562, 0.0
  %v10627 = vmax.f32 %v10563, 0.0
  %v10628 = vmax.f32 %v10564, 0.0
  %v10629 = vmax.f32 %v10565, 0.0
  %v10630 = vmax.f32 %v10566, 0.0
  %v10631 = vmax.f32 %v10567, 0.0
  %v10632 = vmax.f32 %v10568, 0.0
  %v10633 = vmax.f32 %v10569, 0.0
  %v10634 = vmax.f32 %v10570, 0.0
  %v10635 = vmax.f32 %v10571, 0.0
  %v10636 = vmax.f32 %v10572, 0.0
  %v10637 = vpack.c.bf16 %v10574, %v10573
  %v10638 = vpack.c.bf16 %v10576, %v10575
  %v10639 = vpack.c.bf16 %v10578, %v10577
  %v10640 = vpack.c.bf16 %v10580, %v10579
  %v10641 = vpack.c.bf16 %v10582, %v10581
  %v10642 = vpack.c.bf16 %v10584, %v10583
  %v10643 = vpack.c.bf16 %v10586, %v10585
  %v10644 = vpack.c.bf16 %v10588, %v10587
  %v10645 = vpack.c.bf16 %v10590, %v10589
  %v10646 = vpack.c.bf16 %v10592, %v10591
  %v10647 = vpack.c.bf16 %v10594, %v10593
  %v10648 = vpack.c.bf16 %v10596, %v10595
  %v10649 = vpack.c.bf16 %v10598, %v10597
  %v10650 = vpack.c.bf16 %v10600, %v10599
  %v10651 = vpack.c.bf16 %v10602, %v10601
  %v10652 = vpack.c.bf16 %v10604, %v10603
  %v10653 = vpack.c.bf16 %v10606, %v10605
  %v10654 = vpack.c.bf16 %v10608, %v10607
  %v10655 = vpack.c.bf16 %v10610, %v10609
  %v10656 = vpack.c.bf16 %v10612, %v10611
  %v10657 = vpack.c.bf16 %v10614, %v10613
  %v10658 = vpack.c.bf16 %v10616, %v10615
  %v10659 = vpack.c.bf16 %v10618, %v10617
  %v10660 = vpack.c.bf16 %v10620, %v10619
  %v10661 = vpack.c.bf16 %v10622, %v10621
  %v10662 = vpack.c.bf16 %v10624, %v10623
  %v10663 = vpack.c.bf16 %v10626, %v10625
  %v10664 = vpack.c.bf16 %v10628, %v10627
  %v10665 = vpack.c.bf16 %v10630, %v10629
  %v10666 = vpack.c.bf16 %v10632, %v10631
  %v10667 = vpack.c.bf16 %v10634, %v10633
  %v10668 = vpack.c.bf16 %v10636, %v10635
  %v10701 = vunpack.c.l.b16 %v10637
  %v10702 = vunpack.c.h.b16 %v10637
  %v10703 = vunpack.c.l.b16 %v10638
  %v10704 = vunpack.c.h.b16 %v10638
  %v10705 = vunpack.c.l.b16 %v10639
  %v10706 = vunpack.c.h.b16 %v10639
  %v10707 = vunpack.c.l.b16 %v10640
  %v10708 = vunpack.c.h.b16 %v10640
  %v10709 = vunpack.c.l.b16 %v10641
  %v10710 = vunpack.c.h.b16 %v10641
  %v10711 = vunpack.c.l.b16 %v10642
  %v10712 = vunpack.c.h.b16 %v10642
  %v10713 = vunpack.c.l.b16 %v10643
  %v10714 = vunpack.c.h.b16 %v10643
  %v10715 = vunpack.c.l.b16 %v10644
  %v10716 = vunpack.c.h.b16 %v10644
  %v10717 = vunpack.c.l.b16 %v10645
  %v10718 = vunpack.c.h.b16 %v10645
  %v10719 = vunpack.c.l.b16 %v10646
  %v10720 = vunpack.c.h.b16 %v10646
  %v10721 = vunpack.c.l.b16 %v10647
  %v10722 = vunpack.c.h.b16 %v10647
  %v10723 = vunpack.c.l.b16 %v10648
  %v10724 = vunpack.c.h.b16 %v10648
  %v10725 = vunpack.c.l.b16 %v10649
  %v10726 = vunpack.c.h.b16 %v10649
  %v10727 = vunpack.c.l.b16 %v10650
  %v10728 = vunpack.c.h.b16 %v10650
  %v10729 = vunpack.c.l.b16 %v10651
  %v10730 = vunpack.c.h.b16 %v10651
  %v10731 = vunpack.c.l.b16 %v10652
  %v10732 = vunpack.c.h.b16 %v10652
  %v10733 = vunpack.c.l.b16 %v10653
  %v10734 = vunpack.c.h.b16 %v10653
  %v10735 = vunpack.c.l.b16 %v10654
  %v10736 = vunpack.c.h.b16 %v10654
  %v10737 = vunpack.c.l.b16 %v10655
  %v10738 = vunpack.c.h.b16 %v10655
  %v10739 = vunpack.c.l.b16 %v10656
  %v10740 = vunpack.c.h.b16 %v10656
  %v10741 = vunpack.c.l.b16 %v10657
  %v10742 = vunpack.c.h.b16 %v10657
  %v10743 = vunpack.c.l.b16 %v10658
  %v10744 = vunpack.c.h.b16 %v10658
  %v10745 = vunpack.c.l.b16 %v10659
  %v10746 = vunpack.c.h.b16 %v10659
  %v10747 = vunpack.c.l.b16 %v10660
  %v10748 = vunpack.c.h.b16 %v10660
  %v10749 = vunpack.c.l.b16 %v10661
  %v10750 = vunpack.c.h.b16 %v10661
  %v10751 = vunpack.c.l.b16 %v10662
  %v10752 = vunpack.c.h.b16 %v10662
  %v10753 = vunpack.c.l.b16 %v10663
  %v10754 = vunpack.c.h.b16 %v10663
  %v10755 = vunpack.c.l.b16 %v10664
  %v10756 = vunpack.c.h.b16 %v10664
  %v10757 = vunpack.c.l.b16 %v10665
  %v10758 = vunpack.c.h.b16 %v10665
  %v10759 = vunpack.c.l.b16 %v10666
  %v10760 = vunpack.c.h.b16 %v10666
  %v10761 = vunpack.c.l.b16 %v10667
  %v10762 = vunpack.c.h.b16 %v10667
  %v10763 = vunpack.c.l.b16 %v10668
  %v10764 = vunpack.c.h.b16 %v10668
  %v10765 = vpack.c.b16 %v10701, %v10701
  %v10766 = vpack.c.b16 %v10702, %v10702
  %v10767 = vpack.c.b16 %v10703, %v10703
  %v10768 = vpack.c.b16 %v10704, %v10704
  %v10769 = vpack.c.b16 %v10705, %v10705
  %v10770 = vpack.c.b16 %v10706, %v10706
  %v10771 = vpack.c.b16 %v10707, %v10707
  %v10772 = vpack.c.b16 %v10708, %v10708
  %v10773 = vpack.c.b16 %v10709, %v10709
  %v10774 = vpack.c.b16 %v10710, %v10710
  %v10775 = vpack.c.b16 %v10711, %v10711
  %v10776 = vpack.c.b16 %v10712, %v10712
  %v10777 = vpack.c.b16 %v10713, %v10713
  %v10778 = vpack.c.b16 %v10714, %v10714
  %v10779 = vpack.c.b16 %v10715, %v10715
  %v10780 = vpack.c.b16 %v10716, %v10716
  %v10781 = vpack.c.b16 %v10717, %v10717
  %v10782 = vpack.c.b16 %v10718, %v10718
  %v10783 = vpack.c.b16 %v10719, %v10719
  %v10784 = vpack.c.b16 %v10720, %v10720
  %v10785 = vpack.c.b16 %v10721, %v10721
  %v10786 = vpack.c.b16 %v10722, %v10722
  %v10787 = vpack.c.b16 %v10723, %v10723
  %v10788 = vpack.c.b16 %v10724, %v10724
  %v10789 = vpack.c.b16 %v10725, %v10725
  %v10790 = vpack.c.b16 %v10726, %v10726
  %v10791 = vpack.c.b16 %v10727, %v10727
  %v10792 = vpack.c.b16 %v10728, %v10728
  %v10793 = vpack.c.b16 %v10729, %v10729
  %v10794 = vpack.c.b16 %v10730, %v10730
  %v10795 = vpack.c.b16 %v10731, %v10731
  %v10796 = vpack.c.b16 %v10732, %v10732
  %v10797 = vpack.c.b16 %v10733, %v10733
  %v10798 = vpack.c.b16 %v10734, %v10734
  %v10799 = vpack.c.b16 %v10735, %v10735
  %v10800 = vpack.c.b16 %v10736, %v10736
  %v10801 = vpack.c.b16 %v10737, %v10737
  %v10802 = vpack.c.b16 %v10738, %v10738
  %v10803 = vpack.c.b16 %v10739, %v10739
  %v10804 = vpack.c.b16 %v10740, %v10740
  %v10805 = vpack.c.b16 %v10741, %v10741
  %v10806 = vpack.c.b16 %v10742, %v10742
  %v10807 = vpack.c.b16 %v10743, %v10743
  %v10808 = vpack.c.b16 %v10744, %v10744
  %v10809 = vpack.c.b16 %v10745, %v10745
  %v10810 = vpack.c.b16 %v10746, %v10746
  %v10811 = vpack.c.b16 %v10747, %v10747
  %v10812 = vpack.c.b16 %v10748, %v10748
  %v10813 = vpack.c.b16 %v10749, %v10749
  %v10814 = vpack.c.b16 %v10750, %v10750
  %v10815 = vpack.c.b16 %v10751, %v10751
  %v10816 = vpack.c.b16 %v10752, %v10752
  %v10817 = vpack.c.b16 %v10753, %v10753
  %v10818 = vpack.c.b16 %v10754, %v10754
  %v10819 = vpack.c.b16 %v10755, %v10755
  %v10820 = vpack.c.b16 %v10756, %v10756
  %v10821 = vpack.c.b16 %v10757, %v10757
  %v10822 = vpack.c.b16 %v10758, %v10758
  %v10823 = vpack.c.b16 %v10759, %v10759
  %v10824 = vpack.c.b16 %v10760, %v10760
  %v10825 = vpack.c.b16 %v10761, %v10761
  %v10826 = vpack.c.b16 %v10762, %v10762
  %v10827 = vpack.c.b16 %v10763, %v10763
  %v10828 = vpack.c.b16 %v10764, %v10764
  %vm10893 = vcmask 27648
  %10894 = vst.msk [vmem:[%s7] sm:$0xf] %vm10893, %v10765
  %10895 = vst.msk [vmem:[%s7 + $0x4] sm:$0xf] %vm10893, %v10766
  %10896 = vst.msk [vmem:[%s7 + $0x8] sm:$0xf] %vm10893, %v10767
  %10897 = vst.msk [vmem:[%s7 + $0xc] sm:$0xf] %vm10893, %v10768
  %10898 = vst.msk [vmem:[%s7 + $0x10] sm:$0xf] %vm10893, %v10769
  %10899 = vst.msk [vmem:[%s7 + $0x14] sm:$0xf] %vm10893, %v10770
  %10900 = vst.msk [vmem:[%s7 + $0x18] sm:$0xf] %vm10893, %v10771
  %10901 = vst.msk [vmem:[%s7 + $0x1c] sm:$0xf] %vm10893, %v10772
  %10902 = vst.msk [vmem:[%s7 + $0x20] sm:$0xf] %vm10893, %v10773
  %10903 = vst.msk [vmem:[%s7 + $0x24] sm:$0xf] %vm10893, %v10774
  %10904 = vst.msk [vmem:[%s7 + $0x28] sm:$0xf] %vm10893, %v10775
  %10905 = vst.msk [vmem:[%s7 + $0x2c] sm:$0xf] %vm10893, %v10776
  %10906 = vst.msk [vmem:[%s7 + $0x30] sm:$0xf] %vm10893, %v10777
  %10907 = vst.msk [vmem:[%s7 + $0x34] sm:$0xf] %vm10893, %v10778
  %10908 = vst.msk [vmem:[%s7 + $0x38] sm:$0xf] %vm10893, %v10779
  %10909 = vst.msk [vmem:[%s7 + $0x3c] sm:$0xf] %vm10893, %v10780
  %10910 = vst.msk [vmem:[%s7 + $0x40] sm:$0xf] %vm10893, %v10781
  %10911 = vst.msk [vmem:[%s7 + $0x44] sm:$0xf] %vm10893, %v10782
  %10912 = vst.msk [vmem:[%s7 + $0x48] sm:$0xf] %vm10893, %v10783
  %10913 = vst.msk [vmem:[%s7 + $0x4c] sm:$0xf] %vm10893, %v10784
  %10914 = vst.msk [vmem:[%s7 + $0x50] sm:$0xf] %vm10893, %v10785
  %10915 = vst.msk [vmem:[%s7 + $0x54] sm:$0xf] %vm10893, %v10786
  %10916 = vst.msk [vmem:[%s7 + $0x58] sm:$0xf] %vm10893, %v10787
  %10917 = vst.msk [vmem:[%s7 + $0x5c] sm:$0xf] %vm10893, %v10788
  %10918 = vst.msk [vmem:[%s7 + $0x60] sm:$0xf] %vm10893, %v10789
  %10919 = vst.msk [vmem:[%s7 + $0x64] sm:$0xf] %vm10893, %v10790
  %10920 = vst.msk [vmem:[%s7 + $0x68] sm:$0xf] %vm10893, %v10791
  %10921 = vst.msk [vmem:[%s7 + $0x6c] sm:$0xf] %vm10893, %v10792
  %10922 = vst.msk [vmem:[%s7 + $0x70] sm:$0xf] %vm10893, %v10793
  %10923 = vst.msk [vmem:[%s7 + $0x74] sm:$0xf] %vm10893, %v10794
  %10924 = vst.msk [vmem:[%s7 + $0x78] sm:$0xf] %vm10893, %v10795
  %10925 = vst.msk [vmem:[%s7 + $0x7c] sm:$0xf] %vm10893, %v10796
  %10926 = vst.msk [vmem:[%s7 + $0x80] sm:$0xf] %vm10893, %v10797
  %10927 = vst.msk [vmem:[%s7 + $0x84] sm:$0xf] %vm10893, %v10798
  %10928 = vst.msk [vmem:[%s7 + $0x88] sm:$0xf] %vm10893, %v10799
  %10929 = vst.msk [vmem:[%s7 + $0x8c] sm:$0xf] %vm10893, %v10800
  %10930 = vst.msk [vmem:[%s7 + $0x90] sm:$0xf] %vm10893, %v10801
  %10931 = vst.msk [vmem:[%s7 + $0x94] sm:$0xf] %vm10893, %v10802
  %10932 = vst.msk [vmem:[%s7 + $0x98] sm:$0xf] %vm10893, %v10803
  %10933 = vst.msk [vmem:[%s7 + $0x9c] sm:$0xf] %vm10893, %v10804
  %10934 = vst.msk [vmem:[%s7 + $0xa0] sm:$0xf] %vm10893, %v10805
  %10935 = vst.msk [vmem:[%s7 + $0xa4] sm:$0xf] %vm10893, %v10806
  %10936 = vst.msk [vmem:[%s7 + $0xa8] sm:$0xf] %vm10893, %v10807
  %10937 = vst.msk [vmem:[%s7 + $0xac] sm:$0xf] %vm10893, %v10808
  %10938 = vst.msk [vmem:[%s7 + $0xb0] sm:$0xf] %vm10893, %v10809
  %10939 = vst.msk [vmem:[%s7 + $0xb4] sm:$0xf] %vm10893, %v10810
  %10940 = vst.msk [vmem:[%s7 + $0xb8] sm:$0xf] %vm10893, %v10811
  %10941 = vst.msk [vmem:[%s7 + $0xbc] sm:$0xf] %vm10893, %v10812
  %10942 = vst.msk [vmem:[%s7 + $0xc0] sm:$0xf] %vm10893, %v10813
  %10943 = vst.msk [vmem:[%s7 + $0xc4] sm:$0xf] %vm10893, %v10814
  %10944 = vst.msk [vmem:[%s7 + $0xc8] sm:$0xf] %vm10893, %v10815
  %10945 = vst.msk [vmem:[%s7 + $0xcc] sm:$0xf] %vm10893, %v10816
  %10946 = vst.msk [vmem:[%s7 + $0xd0] sm:$0xf] %vm10893, %v10817
  %10947 = vst.msk [vmem:[%s7 + $0xd4] sm:$0xf] %vm10893, %v10818
  %10948 = vst.msk [vmem:[%s7 + $0xd8] sm:$0xf] %vm10893, %v10819
  %10949 = vst.msk [vmem:[%s7 + $0xdc] sm:$0xf] %vm10893, %v10820
  %10950 = vst.msk [vmem:[%s7 + $0xe0] sm:$0xf] %vm10893, %v10821
  %10951 = vst.msk [vmem:[%s7 + $0xe4] sm:$0xf] %vm10893, %v10822
  %10952 = vst.msk [vmem:[%s7 + $0xe8] sm:$0xf] %vm10893, %v10823
  %10953 = vst.msk [vmem:[%s7 + $0xec] sm:$0xf] %vm10893, %v10824
  %10954 = vst.msk [vmem:[%s7 + $0xf0] sm:$0xf] %vm10893, %v10825
  %10955 = vst.msk [vmem:[%s7 + $0xf4] sm:$0xf] %vm10893, %v10826
  %10956 = vst.msk [vmem:[%s7 + $0xf8] sm:$0xf] %vm10893, %v10827
  %10957 = vst.msk [vmem:[%s7 + $0xfc] sm:$0xf] %vm10893, %v10828
  // Predicated region
  $region30: #{residual_block_forward.1} parent=0 // pred_check
    _
  $region31: #{residual_block_forward.1} parent=0 // pred_check_branch
    %10959 = sbr.rel (0) target = $region33
  $region32: #{residual_block_forward.1} parent=0 // pred_region
    _
  $region33: #{residual_block_forward.1} parent=0 // pred_fallthru
    _
  // Predicated region
  $region34: #{residual_block_forward.1} parent=0 // pred_check
    _
  $region35: #{residual_block_forward.1} parent=0 // pred_check_branch
    %10961 = sbr.rel (0) target = $region37
  $region36: #{residual_block_forward.1} parent=0 // pred_region
    _
  $region37: #{residual_block_forward.1} parent=0 // pred_fallthru
    _

</llo_original>
